<compile_context>
chip_gen: v7x
topology: tpu7x:2x2x1
jax: 0.10.0
libtpu: 0.0.40
codegen_flags: <defaults>
</compile_context>

<pallas_src>
import functools

import jax
import jax.numpy as jnp
import numpy as np
from jax import lax
from jax.experimental import pallas as pl
from jax.experimental.pallas import tpu as pltpu


def _round_up(x, m):
    return ((x + m - 1) // m) * m


def _pick_tk(kdim, cap=2048):
    """K tile size: multiple of 128, <= cap, minimizing (#steps, padded K)."""
    kr = _round_up(kdim, 128)
    if kr <= cap:
        return kr
    best_key, best_c = None, 128
    for c in range(128, cap + 1, 128):
        steps = -(-kr // c)
        key = (steps, steps * c, -c)
        if best_key is None or key < best_key:
            best_key, best_c = key, c
    return best_c


# ----------------------------- Pallas kernel ------------------------------ #

def _conv_gemm_kernel(a_ref, b_ref, bias_ref, o_ref, *acc_refs,
                      neg_slope, tk, nk):
    """(M, K)-tiled GEMM: O = act(A @ B + bias).

    A tile: (tm, tk) bf16, streamed per grid step.
    B:      (k_pad, n_p) bf16, VMEM-resident (constant block index); the
            current K tile is sliced out with pl.ds.
    """
    def epilogue(acc):
        acc = acc + bias_ref[...]                       # (1, n_p) broadcast
        if neg_slope is not None:                       # fused LeakyReLU(0.2)
            acc = jnp.where(acc >= 0.0, acc, jnp.float32(neg_slope) * acc)
        o_ref[...] = acc.astype(o_ref.dtype)

    if nk == 1:
        # Single K step: keep the accumulator in vregs, skip the VMEM scratch.
        epilogue(jnp.dot(a_ref[...], b_ref[...],
                         preferred_element_type=jnp.float32))
    else:
        acc_ref = acc_refs[0]
        j = pl.program_id(1)

        @pl.when(j == 0)
        def _init():
            acc_ref[...] = jnp.zeros_like(acc_ref)

        start = pl.multiple_of(j * tk, 128)
        acc_ref[...] += jnp.dot(a_ref[...], b_ref[pl.ds(start, tk), :],
                                preferred_element_type=jnp.float32)

        @pl.when(j == nk - 1)
        def _fin():
            epilogue(acc_ref[...])


# ------------------------------ JAX glue ---------------------------------- #

def _im2col_3d_cl(x, ksize, stride, pad):
    """Channels-last im2col (bf16 in, bf16 out).

    x: [N, D, H, W, C] -> A: [N*Do*Ho*Wo, k^3*C]  (C fastest in K).
    """
    n, d, h, w, c = x.shape
    if pad > 0:
        x = jnp.pad(x, ((0, 0), (pad, pad), (pad, pad), (pad, pad), (0, 0)))
    dp, hp, wp = d + 2 * pad, h + 2 * pad, w + 2 * pad
    do = (dp - ksize) // stride + 1
    ho = (hp - ksize) // stride + 1
    wo = (wp - ksize) // stride + 1
    cols = []
    for kd in range(ksize):
        for kh in range(ksize):
            for kw in range(ksize):
                cols.append(
                    x[:,
                      kd:kd + stride * do:stride,
                      kh:kh + stride * ho:stride,
                      kw:kw + stride * wo:stride,
                      :])
    cols = jnp.stack(cols, axis=4)                  # [N, Do, Ho, Wo, k^3, C]
    a = cols.reshape(n * do * ho * wo, ksize ** 3 * c)
    return a, (n, do, ho, wo)


def conv3d_cl_pallas(x, bmat, bias, *, c_out, kdim, ksize, n_p, tk, k_pad,
                     stride, pad, neg_slope, out_dtype):
    """Conv3d (PyTorch semantics) on a channels-last bf16 input, GEMM in Pallas.

    x: [N, D, H, W, C_in] bf16; bmat: [k_pad, n_p] bf16 (packed weights);
    bias: [1, n_p] f32.  Returns [N, Do, Ho, Wo, C_out] in out_dtype.
    """
    a, (n, do, ho, wo) = _im2col_3d_cl(x, ksize, stride, pad)
    m = a.shape[0]
    if k_pad != kdim:                                # zero cols contribute 0
        a = jnp.pad(a, ((0, 0), (0, k_pad - kdim)))
    nk = k_pad // tk

    # Tile sizing from an explicit VMEM budget (safe on v5e/v6e/v7x).
    out_isize = jnp.dtype(out_dtype).itemsize
    budget = 40 * 1024 * 1024
    b_bytes = 2 * k_pad * n_p * 2                    # resident B (conservative 2x)
    per_row = 2 * tk * 2 + n_p * (4 + 2 * out_isize)  # A dbuf + acc + out dbuf
    tm = max(128, min(2048, (budget - b_bytes) // per_row))
    if m >= 256:
        tm = min(tm, _round_up(-(-m // 2), 128))     # >=2 M tiles for megacore
    tm = min(tm, _round_up(m, 128))
    tm = max(128, (tm // 128) * 128)
    m_pad = _round_up(m, tm)
    if m_pad != m:
        a = jnp.pad(a, ((0, m_pad - m), (0, 0)))

    grid = (m_pad // tm, nk)
    scratch = [] if nk == 1 else [pltpu.VMEM((tm, n_p), jnp.float32)]

    out = pl.pallas_call(
        functools.partial(_conv_gemm_kernel, neg_slope=neg_slope, tk=tk, nk=nk),
        out_shape=jax.ShapeDtypeStruct((m_pad, n_p), out_dtype),
        grid_spec=pltpu.PrefetchScalarGridSpec(
            num_scalar_prefetch=0,
            grid=grid,
            in_specs=[
                pl.BlockSpec((tm, tk), lambda i, j: (i, j)),       # A tile
                pl.BlockSpec((k_pad, n_p), lambda i, j: (0, 0)),   # B resident
                pl.BlockSpec((1, n_p), lambda i, j: (0, 0)),       # bias
            ],
            out_specs=pl.BlockSpec((tm, n_p), lambda i, j: (i, 0)),
            scratch_shapes=scratch,
        ),
        compiler_params=pltpu.CompilerParams(
            dimension_semantics=("parallel", "arbitrary"),
            vmem_limit_bytes=48 * 1024 * 1024),
    )(a, bmat, bias)

    out = out[:m, :c_out]
    return out.reshape(n, do, ho, wo, c_out)


# ------------------------ Discriminator3D module --------------------------- #

def init_discriminator_params(key, in_ch=1, feats=(64, 128, 256)):
    """Deterministic init matching nn.Conv3d default U(-1/sqrt(fan_in), ...)."""
    params = []
    prev = in_ch
    for f in list(feats) + [None]:
        c_out = 1 if f is None else f
        key, k1, k2 = jax.random.split(key, 3)
        fan_in = prev * 4 ** 3
        bound = 1.0 / float(np.sqrt(fan_in))
        w = jax.random.uniform(k1, (c_out, prev, 4, 4, 4), jnp.float32,
                               -bound, bound)
        b = jax.random.uniform(k2, (c_out,), jnp.float32, -bound, bound)
        params.append((w, b))
        prev = c_out
    return params


def pack_discriminator_params(params):
    """One-time weight packing: [C_out,C_in,k,k,k] -> bf16 [K_pad, C_out_pad]."""
    packed, meta = [], []
    last = len(params) - 1
    for li, (w, b) in enumerate(params):
        c_out, c_in, k, _, _ = w.shape
        kdim = (k ** 3) * c_in
        n_p = _round_up(c_out, 128)          # lane-dense (unmasked) out stores
        tk = _pick_tk(kdim)
        k_pad = _round_up(kdim, tk)
        # K ordering (kd, kh, kw, c_in) matches the im2col column order.
        bmat = w.transpose(2, 3, 4, 1, 0).reshape(kdim, c_out).astype(jnp.bfloat16)
        bmat = jnp.pad(bmat, ((0, k_pad - kdim), (0, n_p - c_out)))
        bias = jnp.pad(b.astype(jnp.float32).reshape(1, c_out),
                       ((0, 0), (0, n_p - c_out)))
        packed.append((bmat, bias))
        is_last = li == last
        meta.append(dict(
            c_out=c_out, kdim=kdim, ksize=k, n_p=n_p, tk=tk, k_pad=k_pad,
            stride=1 if is_last else 2, pad=0 if is_last else 1,
            neg_slope=None if is_last else 0.2,
            out_dtype=jnp.float32 if is_last else jnp.bfloat16))
    return packed, tuple(meta)


def discriminator3d_forward(packed, x, *, meta):
    """x: [N, C, D, H, W] (NCDHW, f32) -> [N, 1, Do, Ho, Wo] (f32)."""
    h = jnp.transpose(x, (0, 2, 3, 4, 1)).astype(jnp.bfloat16)  # NCDHW->NDHWC
    for (bmat, bias), mt in zip(packed, meta):
        h = conv3d_cl_pallas(h, bmat, bias, **mt)
    return jnp.transpose(h, (0, 4, 1, 2, 3)).astype(jnp.float32)


# ------------------------------- reference --------------------------------- #
# Matches the kernel's quantization points (bf16 operands, f32 accumulation,
# bf16 inter-layer activations) so tolerances stay tight.

def _conv3d_ref(x, w, b, stride, pad):
    out = lax.conv_general_dilated(
        x.astype(jnp.bfloat16), w.astype(jnp.bfloat16),
        window_strides=(stride,) * 3, padding=[(pad, pad)] * 3,
        dimension_numbers=("NCDHW", "OIDHW", "NCDHW"),
        preferred_element_type=jnp.float32)
    return out + b.astype(jnp.float32).reshape(1, -1, 1, 1, 1)


def discriminator3d_ref(params, x):
    h = x
    for (w, b) in params[:-1]:
        h = _conv3d_ref(h, w, b, 2, 1)
        h = jnp.where(h >= 0, h, 0.2 * h).astype(jnp.bfloat16)
    w, b = params[-1]
    return _conv3d_ref(h, w, b, 1, 0)


# ---------------------------------- main ----------------------------------- #

if __name__ == "__main__":
    key = jax.random.PRNGKey(0)
    k_params, k_x = jax.random.split(key)

    # 3 stride-2 convs then a 4^3 valid conv -> spatial must be >= 32.
    # feats chosen small but so that BOTH kernel paths run (single-K-step fast
    # path for the early layers, K-tiled accumulator path for the final conv).
    in_ch, feats = 1, (8, 16, 48)
    batch, spatial = 2, 32

    params = init_discriminator_params(k_params, in_ch=in_ch, feats=feats)
    packed, meta = pack_discriminator_params(params)
    x = jax.random.normal(k_x, (batch, in_ch, spatial, spatial, spatial),
                          jnp.float32)

    fwd = jax.jit(functools.partial(discriminator3d_forward, meta=meta))
    out = jax.block_until_ready(fwd(packed, x))

    ref = jax.block_until_ready(discriminator3d_ref(params, x))

    assert out.shape == (batch, 1, 1, 1, 1), out.shape
    np.testing.assert_allclose(np.asarray(out), np.asarray(ref),
                               rtol=2e-2, atol=2e-2)
    print("KERNEL_OK")
</pallas_src>

<mosaic_0001>
module attributes {stable_mosaic.version = 11 : i64} {
  func.func @_conv_gemm_kernel(%arg0: i32, %arg1: i32, %arg2: memref<2048x128xbf16, #tpu.memory_space<vmem>>, %arg3: memref<128x128xbf16, #tpu.memory_space<vmem>>, %arg4: memref<1x128xf32, #tpu.memory_space<vmem>>, %arg5: memref<2048x128xbf16, #tpu.memory_space<vmem>>) attributes {dimension_semantics = [#tpu.dimension_semantics<parallel>, #tpu.dimension_semantics<arbitrary>], iteration_bounds = array<i64: 4, 1>, scalar_prefetch = 0 : i64, scratch_operands = 0 : i64, tpu.core_type = #tpu.core_type<tc>, window_params = [{transform_indices = @transform_0, window_bounds = array<i64: 2048, 128>}, {pipeline_mode = #tpu.pipeline_mode<synchronous>, transform_indices = @transform_1, window_bounds = array<i64: 128, 128>}, {pipeline_mode = #tpu.pipeline_mode<synchronous>, transform_indices = @transform_2, window_bounds = array<i64: 1, 128>}, {transform_indices = @transform_3, window_bounds = array<i64: 2048, 128>}]} {
    %c0 = arith.constant 0 : index
    %c0_0 = arith.constant 0 : index
    %0 = vector.load %arg2[%c0, %c0_0] : memref<2048x128xbf16, #tpu.memory_space<vmem>>, vector<2048x128xbf16>
    %c0_1 = arith.constant 0 : index
    %c0_2 = arith.constant 0 : index
    %1 = vector.load %arg3[%c0_1, %c0_2] : memref<128x128xbf16, #tpu.memory_space<vmem>>, vector<128x128xbf16>
    %cst = arith.constant dense<0.000000e+00> : vector<2048x128xf32>
    %2 = tpu.matmul %0, %1, %cst {dimension_numbers = #tpu.dot_dimension_numbers<[1], [0], [0], [1], [0, 0, 1, 1], [], []>} : vector<2048x128xbf16>, vector<128x128xbf16>, vector<2048x128xf32> -> vector<2048x128xf32>
    %c0_3 = arith.constant 0 : index
    %c0_4 = arith.constant 0 : index
    %3 = vector.load %arg4[%c0_3, %c0_4] : memref<1x128xf32, #tpu.memory_space<vmem>>, vector<1x128xf32>
    %4 = vector.broadcast %3 : vector<1x128xf32> to vector<2048x128xf32>
    %5 = arith.addf %2, %4 : vector<2048x128xf32>
    %cst_5 = arith.constant 0.000000e+00 : f32
    %6 = vector.broadcast %cst_5 : f32 to vector<2048x128xf32>
    %7 = arith.cmpf oge, %5, %6 : vector<2048x128xf32>
    %cst_6 = arith.constant 2.000000e-01 : f32
    %8 = vector.broadcast %cst_6 : f32 to vector<2048x128xf32>
    %9 = arith.mulf %8, %5 : vector<2048x128xf32>
    %10 = arith.select %7, %5, %9 : vector<2048x128xi1>, vector<2048x128xf32>
    %11 = arith.truncf %10 : vector<2048x128xf32> to vector<2048x128xbf16>
    %c0_7 = arith.constant 0 : index
    %c0_8 = arith.constant 0 : index
    %12 = vector.load %arg5[%c0_7, %c0_8] : memref<2048x128xbf16, #tpu.memory_space<vmem>>, vector<2048x128xbf16>
    tpu.vector_store %arg5[%c0_7, %c0_8], %11 {strides = array<i32>} : memref<2048x128xbf16, #tpu.memory_space<vmem>>, vector<2048x128xbf16>,
    return
  }
  func.func @transform_0(%arg0: i32, %arg1: i32) -> (i32, i32) {
    %c0_i32 = arith.constant 0 : i32
    return %arg0, %arg1 : i32, i32
  }
  func.func @transform_1(%arg0: i32, %arg1: i32) -> (i32, i32) {
    %c0_i32 = arith.constant 0 : i32
    %c0_i32_0 = arith.constant 0 : i32
    %c0_i32_1 = arith.constant 0 : i32
    return %c0_i32, %c0_i32_0 : i32, i32
  }
  func.func @transform_2(%arg0: i32, %arg1: i32) -> (i32, i32) {
    %c0_i32 = arith.constant 0 : i32
    %c0_i32_0 = arith.constant 0 : i32
    %c0_i32_1 = arith.constant 0 : i32
    return %c0_i32, %c0_i32_0 : i32, i32
  }
  func.func @transform_3(%arg0: i32, %arg1: i32) -> (i32, i32) {
    %c0_i32 = arith.constant 0 : i32
    %c0_i32_0 = arith.constant 0 : i32
    return %arg0, %c0_i32 : i32, i32
  }
}

module attributes {stable_mosaic.version = 11 : i64} {
  func.func @_conv_gemm_kernel(%arg0: i32, %arg1: i32, %arg2: memref<512x512xbf16, #tpu.memory_space<vmem>>, %arg3: memref<512x128xbf16, #tpu.memory_space<vmem>>, %arg4: memref<1x128xf32, #tpu.memory_space<vmem>>, %arg5: memref<512x128xbf16, #tpu.memory_space<vmem>>) attributes {dimension_semantics = [#tpu.dimension_semantics<parallel>, #tpu.dimension_semantics<arbitrary>], iteration_bounds = array<i64: 2, 1>, scalar_prefetch = 0 : i64, scratch_operands = 0 : i64, tpu.core_type = #tpu.core_type<tc>, window_params = [{transform_indices = @transform_0, window_bounds = array<i64: 512, 512>}, {pipeline_mode = #tpu.pipeline_mode<synchronous>, transform_indices = @transform_1, window_bounds = array<i64: 512, 128>}, {pipeline_mode = #tpu.pipeline_mode<synchronous>, transform_indices = @transform_2, window_bounds = array<i64: 1, 128>}, {transform_indices = @transform_3, window_bounds = array<i64: 512, 128>}]} {
    %c0 = arith.constant 0 : index
    %c0_0 = arith.constant 0 : index
    %0 = vector.load %arg2[%c0, %c0_0] : memref<512x512xbf16, #tpu.memory_space<vmem>>, vector<512x512xbf16>
    %c0_1 = arith.constant 0 : index
    %c0_2 = arith.constant 0 : index
    %1 = vector.load %arg3[%c0_1, %c0_2] : memref<512x128xbf16, #tpu.memory_space<vmem>>, vector<512x128xbf16>
    %cst = arith.constant dense<0.000000e+00> : vector<512x128xf32>
    %2 = tpu.matmul %0, %1, %cst {dimension_numbers = #tpu.dot_dimension_numbers<[1], [0], [0], [1], [0, 0, 1, 1], [], []>} : vector<512x512xbf16>, vector<512x128xbf16>, vector<512x128xf32> -> vector<512x128xf32>
    %c0_3 = arith.constant 0 : index
    %c0_4 = arith.constant 0 : index
    %3 = vector.load %arg4[%c0_3, %c0_4] : memref<1x128xf32, #tpu.memory_space<vmem>>, vector<1x128xf32>
    %4 = vector.broadcast %3 : vector<1x128xf32> to vector<512x128xf32>
    %5 = arith.addf %2, %4 : vector<512x128xf32>
    %cst_5 = arith.constant 0.000000e+00 : f32
    %6 = vector.broadcast %cst_5 : f32 to vector<512x128xf32>
    %7 = arith.cmpf oge, %5, %6 : vector<512x128xf32>
    %cst_6 = arith.constant 2.000000e-01 : f32
    %8 = vector.broadcast %cst_6 : f32 to vector<512x128xf32>
    %9 = arith.mulf %8, %5 : vector<512x128xf32>
    %10 = arith.select %7, %5, %9 : vector<512x128xi1>, vector<512x128xf32>
    %11 = arith.truncf %10 : vector<512x128xf32> to vector<512x128xbf16>
    %c0_7 = arith.constant 0 : index
    %c0_8 = arith.constant 0 : index
    %12 = vector.load %arg5[%c0_7, %c0_8] : memref<512x128xbf16, #tpu.memory_space<vmem>>, vector<512x128xbf16>
    tpu.vector_store %arg5[%c0_7, %c0_8], %11 {strides = array<i32>} : memref<512x128xbf16, #tpu.memory_space<vmem>>, vector<512x128xbf16>,
    return
  }
  func.func @transform_0(%arg0: i32, %arg1: i32) -> (i32, i32) {
    %c0_i32 = arith.constant 0 : i32
    return %arg0, %arg1 : i32, i32
  }
  func.func @transform_1(%arg0: i32, %arg1: i32) -> (i32, i32) {
    %c0_i32 = arith.constant 0 : i32
    %c0_i32_0 = arith.constant 0 : i32
    %c0_i32_1 = arith.constant 0 : i32
    return %c0_i32, %c0_i32_0 : i32, i32
  }
  func.func @transform_2(%arg0: i32, %arg1: i32) -> (i32, i32) {
    %c0_i32 = arith.constant 0 : i32
    %c0_i32_0 = arith.constant 0 : i32
    %c0_i32_1 = arith.constant 0 : i32
    return %c0_i32, %c0_i32_0 : i32, i32
  }
  func.func @transform_3(%arg0: i32, %arg1: i32) -> (i32, i32) {
    %c0_i32 = arith.constant 0 : i32
    %c0_i32_0 = arith.constant 0 : i32
    return %arg0, %c0_i32 : i32, i32
  }
}

module attributes {stable_mosaic.version = 11 : i64} {
  func.func @_conv_gemm_kernel(%arg0: i32, %arg1: i32, %arg2: memref<128x1024xbf16, #tpu.memory_space<vmem>>, %arg3: memref<1024x128xbf16, #tpu.memory_space<vmem>>, %arg4: memref<1x128xf32, #tpu.memory_space<vmem>>, %arg5: memref<128x128xbf16, #tpu.memory_space<vmem>>) attributes {dimension_semantics = [#tpu.dimension_semantics<parallel>, #tpu.dimension_semantics<arbitrary>], iteration_bounds = array<i64: 1, 1>, scalar_prefetch = 0 : i64, scratch_operands = 0 : i64, tpu.core_type = #tpu.core_type<tc>, window_params = [{transform_indices = @transform_0, window_bounds = array<i64: 128, 1024>}, {pipeline_mode = #tpu.pipeline_mode<synchronous>, transform_indices = @transform_1, window_bounds = array<i64: 1024, 128>}, {pipeline_mode = #tpu.pipeline_mode<synchronous>, transform_indices = @transform_2, window_bounds = array<i64: 1, 128>}, {transform_indices = @transform_3, window_bounds = array<i64: 128, 128>}]} {
    %c0 = arith.constant 0 : index
    %c0_0 = arith.constant 0 : index
    %0 = vector.load %arg2[%c0, %c0_0] : memref<128x1024xbf16, #tpu.memory_space<vmem>>, vector<128x1024xbf16>
    %c0_1 = arith.constant 0 : index
    %c0_2 = arith.constant 0 : index
    %1 = vector.load %arg3[%c0_1, %c0_2] : memref<1024x128xbf16, #tpu.memory_space<vmem>>, vector<1024x128xbf16>
    %cst = arith.constant dense<0.000000e+00> : vector<128x128xf32>
    %2 = tpu.matmul %0, %1, %cst {dimension_numbers = #tpu.dot_dimension_numbers<[1], [0], [0], [1], [0, 0, 1, 1], [], []>} : vector<128x1024xbf16>, vector<1024x128xbf16>, vector<128x128xf32> -> vector<128x128xf32>
    %c0_3 = arith.constant 0 : index
    %c0_4 = arith.constant 0 : index
    %3 = vector.load %arg4[%c0_3, %c0_4] : memref<1x128xf32, #tpu.memory_space<vmem>>, vector<1x128xf32>
    %4 = vector.broadcast %3 : vector<1x128xf32> to vector<128x128xf32>
    %5 = arith.addf %2, %4 : vector<128x128xf32>
    %cst_5 = arith.constant 0.000000e+00 : f32
    %6 = vector.broadcast %cst_5 : f32 to vector<128x128xf32>
    %7 = arith.cmpf oge, %5, %6 : vector<128x128xf32>
    %cst_6 = arith.constant 2.000000e-01 : f32
    %8 = vector.broadcast %cst_6 : f32 to vector<128x128xf32>
    %9 = arith.mulf %8, %5 : vector<128x128xf32>
    %10 = arith.select %7, %5, %9 : vector<128x128xi1>, vector<128x128xf32>
    %11 = arith.truncf %10 : vector<128x128xf32> to vector<128x128xbf16>
    %c0_7 = arith.constant 0 : index
    %c0_8 = arith.constant 0 : index
    %12 = vector.load %arg5[%c0_7, %c0_8] : memref<128x128xbf16, #tpu.memory_space<vmem>>, vector<128x128xbf16>
    tpu.vector_store %arg5[%c0_7, %c0_8], %11 {strides = array<i32>} : memref<128x128xbf16, #tpu.memory_space<vmem>>, vector<128x128xbf16>,
    return
  }
  func.func @transform_0(%arg0: i32, %arg1: i32) -> (i32, i32) {
    %c0_i32 = arith.constant 0 : i32
    return %arg0, %arg1 : i32, i32
  }
  func.func @transform_1(%arg0: i32, %arg1: i32) -> (i32, i32) {
    %c0_i32 = arith.constant 0 : i32
    %c0_i32_0 = arith.constant 0 : i32
    %c0_i32_1 = arith.constant 0 : i32
    return %c0_i32, %c0_i32_0 : i32, i32
  }
  func.func @transform_2(%arg0: i32, %arg1: i32) -> (i32, i32) {
    %c0_i32 = arith.constant 0 : i32
    %c0_i32_0 = arith.constant 0 : i32
    %c0_i32_1 = arith.constant 0 : i32
    return %c0_i32, %c0_i32_0 : i32, i32
  }
  func.func @transform_3(%arg0: i32, %arg1: i32) -> (i32, i32) {
    %c0_i32 = arith.constant 0 : i32
    %c0_i32_0 = arith.constant 0 : i32
    return %arg0, %c0_i32 : i32, i32
  }
}

module attributes {stable_mosaic.version = 11 : i64} {
  func.func @_conv_gemm_kernel(%arg0: i32, %arg1: i32, %arg2: memref<128x1536xbf16, #tpu.memory_space<vmem>>, %arg3: memref<3072x128xbf16, #tpu.memory_space<vmem>>, %arg4: memref<1x128xf32, #tpu.memory_space<vmem>>, %arg5: memref<128x128xf32, #tpu.memory_space<vmem>>, %arg6: memref<128x128xf32, #tpu.memory_space<vmem>>) attributes {dimension_semantics = [#tpu.dimension_semantics<parallel>, #tpu.dimension_semantics<arbitrary>], iteration_bounds = array<i64: 1, 2>, scalar_prefetch = 0 : i64, scratch_operands = 1 : i64, tpu.core_type = #tpu.core_type<tc>, window_params = [{transform_indices = @transform_0, window_bounds = array<i64: 128, 1536>}, {pipeline_mode = #tpu.pipeline_mode<synchronous>, transform_indices = @transform_1, window_bounds = array<i64: 3072, 128>}, {pipeline_mode = #tpu.pipeline_mode<synchronous>, transform_indices = @transform_2, window_bounds = array<i64: 1, 128>}, {transform_indices = @transform_3, window_bounds = array<i64: 128, 128>}]} {
    %c0_i32 = arith.constant 0 : i32
    %0 = arith.cmpi eq, %arg1, %c0_i32 : i32
    %1 = arith.extui %0 : i1 to i32
    %c0_i32_0 = arith.constant 0 : i32
    %2 = arith.cmpi ne, %1, %c0_i32_0 : i32
    scf.if %2 {
      %cst_8 = arith.constant 0.000000e+00 : f32
      %15 = vector.broadcast %cst_8 : f32 to vector<128x128xf32>
      %c0_9 = arith.constant 0 : index
      %c0_10 = arith.constant 0 : index
      %16 = vector.load %arg6[%c0_9, %c0_10] : memref<128x128xf32, #tpu.memory_space<vmem>>, vector<128x128xf32>
      tpu.vector_store %arg6[%c0_9, %c0_10], %15 {strides = array<i32>} : memref<128x128xf32, #tpu.memory_space<vmem>>, vector<128x128xf32>,
    } else {
    }
    %c1536_i32 = arith.constant 1536 : i32
    %3 = arith.muli %arg1, %c1536_i32 : i32
    %4 = tpu.assume_multiple %3, 128 : i32
    %c0 = arith.constant 0 : index
    %c0_1 = arith.constant 0 : index
    %5 = vector.load %arg6[%c0, %c0_1] : memref<128x128xf32, #tpu.memory_space<vmem>>, vector<128x128xf32>
    %c0_2 = arith.constant 0 : index
    %c0_3 = arith.constant 0 : index
    %6 = vector.load %arg2[%c0_2, %c0_3] : memref<128x1536xbf16, #tpu.memory_space<vmem>>, vector<128x1536xbf16>
    %7 = arith.index_cast %4 : i32 to index
    %c0_4 = arith.constant 0 : index
    %8 = vector.load %arg3[%7, %c0_4] : memref<3072x128xbf16, #tpu.memory_space<vmem>>, vector<1536x128xbf16>
    %cst = arith.constant dense<0.000000e+00> : vector<128x128xf32>
    %9 = tpu.matmul %6, %8, %cst {dimension_numbers = #tpu.dot_dimension_numbers<[1], [0], [0], [1], [0, 0, 1, 1], [], []>} : vector<128x1536xbf16>, vector<1536x128xbf16>, vector<128x128xf32> -> vector<128x128xf32>
    %10 = arith.addf %5, %9 : vector<128x128xf32>
    %c0_5 = arith.constant 0 : index
    %c0_6 = arith.constant 0 : index
    %11 = vector.load %arg6[%c0_5, %c0_6] : memref<128x128xf32, #tpu.memory_space<vmem>>, vector<128x128xf32>
    tpu.vector_store %arg6[%c0_5, %c0_6], %10 {strides = array<i32>} : memref<128x128xf32, #tpu.memory_space<vmem>>, vector<128x128xf32>,
    %c1_i32 = arith.constant 1 : i32
    %12 = arith.cmpi eq, %arg1, %c1_i32 : i32
    %13 = arith.extui %12 : i1 to i32
    %c0_i32_7 = arith.constant 0 : i32
    %14 = arith.cmpi ne, %13, %c0_i32_7 : i32
    scf.if %14 {
      %c0_8 = arith.constant 0 : index
      %c0_9 = arith.constant 0 : index
      %15 = vector.load %arg6[%c0_8, %c0_9] : memref<128x128xf32, #tpu.memory_space<vmem>>, vector<128x128xf32>
      %c0_10 = arith.constant 0 : index
      %c0_11 = arith.constant 0 : index
      %16 = vector.load %arg4[%c0_10, %c0_11] : memref<1x128xf32, #tpu.memory_space<vmem>>, vector<1x128xf32>
      %17 = vector.broadcast %16 : vector<1x128xf32> to vector<128x128xf32>
      %18 = arith.addf %15, %17 : vector<128x128xf32>
      %c0_12 = arith.constant 0 : index
      %c0_13 = arith.constant 0 : index
      %19 = vector.load %arg5[%c0_12, %c0_13] : memref<128x128xf32, #tpu.memory_space<vmem>>, vector<128x128xf32>
      tpu.vector_store %arg5[%c0_12, %c0_13], %18 {strides = array<i32>} : memref<128x128xf32, #tpu.memory_space<vmem>>, vector<128x128xf32>,
    } else {
    }
    return
  }
  func.func @transform_0(%arg0: i32, %arg1: i32) -> (i32, i32) {
    %c0_i32 = arith.constant 0 : i32
    return %arg0, %arg1 : i32, i32
  }
  func.func @transform_1(%arg0: i32, %arg1: i32) -> (i32, i32) {
    %c0_i32 = arith.constant 0 : i32
    %c0_i32_0 = arith.constant 0 : i32
    %c0_i32_1 = arith.constant 0 : i32
    return %c0_i32, %c0_i32_0 : i32, i32
  }
  func.func @transform_2(%arg0: i32, %arg1: i32) -> (i32, i32) {
    %c0_i32 = arith.constant 0 : i32
    %c0_i32_0 = arith.constant 0 : i32
    %c0_i32_1 = arith.constant 0 : i32
    return %c0_i32, %c0_i32_0 : i32, i32
  }
  func.func @transform_3(%arg0: i32, %arg1: i32) -> (i32, i32) {
    %c0_i32 = arith.constant 0 : i32
    %c0_i32_0 = arith.constant 0 : i32
    return %arg0, %c0_i32 : i32, i32
  }
}

</mosaic_0001>

<llo_original>
// kernel: discriminator3d_forward.4
$region0: #{discriminator3d_forward.4}
  #allocation0 [shape = 'u32[]', space=smem, size = 0x4, offset = 0x4, fixed_abs, tag = 'smem constant byte address 0x4 - core index']
  #allocation1 [shape = 'u32[144,128]{1,0:T(1,128)}', space=vmem, size = 0x12000, scoped, tag = 'internal scratch']
  %s0 = inlined_call_operand.vmem [shape: bf16[8192,128], index: 0, kind: input, shape index: {}]
  %s1 = inlined_call_operand.vmem [shape: bf16[128,128], index: 1, kind: input, shape index: {}]
  %s2 = inlined_call_operand.vmem [shape: f32[1,128], index: 2, kind: input, shape index: {}]
  %s3 = inlined_call_operand.vmem [shape: bf16[8192,128], index: 3, kind: output, shape index: {}]
  %s4 = sld [smem:[#allocation0]]
  $region45: #{discriminator3d_forward.4} parent=0
    _
  %s6 = ssub.s32 1, %s4
  %s7 = scalar_select 0, %s6, %s4
  loop: start=0, step=1, limit=6
  $region2: #{discriminator3d_forward.4} parent=0 // loop_pre_header
    _
  $region3: #{discriminator3d_forward.4} parent=0 // loop_header
    %s9 = sphi 0, %s13
    %p10 = scmp.ge.s32.totalorder %s9, 6
    %s16 = sphi 0, %s28
    %s17 = sphi 0, %s24
    %s18 = sphi 0, %s16
    %s19 = sphi 0, %s17
    %s20 = sphi 0, %s18
    %s21 = sphi 0, %s19
    %s33 = sphi 0, %s35
    %s36 = sphi 0, %s33
    %s37 = sphi 0, %s36
    %s53 = sphi 0, %s37
    %s57 = sphi 0, %s57
    %s59 = sphi 0, %s57
    %s60 = sphi 0, %s59
    %s74 = sphi 0, %s60
    %s78 = sphi 0, %s78
    %s80 = sphi 0, %s78
    %s81 = sphi 0, %s80
    %s95 = sphi 0, %s81
    %s101 = sphi 0, %s103
    %s104 = sphi 0, %s101
    %s105 = sphi 0, %s104
    %s121 = sphi 0, %s105
  $region4: #{discriminator3d_forward.4} parent=0 // loop_header_branch
    %12 = sbr.rel (%p10) target = $region8
  $region5: #{discriminator3d_forward.4} parent=0 // loop_body
    %s14 = ssub.s32 %s9, 1
    %s15 = ssub.s32 %s9, 2
    %s22 = sadd.s32 1, %s17
    %p23 = scmp.ge.s32.totalorder %s22, 1
    %s24 = scalar_select %p23, 0, %s22
    %s25 = sadd.s32 1, %s16
    %s26 = scalar_select %p23, %s25, %s16
    %p27 = scmp.ge.s32.totalorder %s26, 4
    %s28 = scalar_select %p27, 0, %s26
    %s29 = ssub.s32 %s16, %s28
    %s30 = ssub.s32 %s17, %s24
    %s31 = sor.u32 %s29, %s30
    %p32 = scmp.eq.s32.totalorder %s31, 0
    %s34 = sadd.s32 %s33, 1
    %s35 = scalar_select %p32, %s33, %s34
    %p38 = pneg %p32
    %p39 = scmp.eq.s32.totalorder %s9, 3
    %p40 = por %p38, %p39
    %p41 = scmp.ne.s32.totalorder %s33, %s36
    %p42 = scmp.eq.s32.totalorder %s9, 0
    %p43 = por %p41, %p42
    %p44 = scmp.ne.s32.totalorder %s33, %s36
    %p45 = scmp.eq.s32.totalorder %s14, 3
    %p46 = por %p44, %p45
    %p47 = scmp.ne.s32.totalorder %s36, %s37
    %p48 = scmp.eq.s32.totalorder %s14, 0
    %p49 = por %p47, %p48
    %p50 = scmp.ne.s32.totalorder %s36, %s37
    %p51 = scmp.eq.s32.totalorder %s15, 3
    %p52 = por %p50, %p51
    %p54 = scmp.ne.s32.totalorder %s37, %s53
    %p55 = scmp.eq.s32.totalorder %s15, 0
    %p56 = por %p54, %p55
    %s58 = sadd.s32 %s57, 1
    %p61 = scmp.eq.s32.totalorder %s9, 3
    %p62 = scmp.ne.s32.totalorder %s57, %s59
    %p63 = scmp.eq.s32.totalorder %s9, 0
    %p64 = por %p62, %p63
    %p65 = scmp.ne.s32.totalorder %s57, %s59
    %p66 = scmp.eq.s32.totalorder %s14, 3
    %p67 = por %p65, %p66
    %p68 = scmp.ne.s32.totalorder %s59, %s60
    %p69 = scmp.eq.s32.totalorder %s14, 0
    %p70 = por %p68, %p69
    %p71 = scmp.ne.s32.totalorder %s59, %s60
    %p72 = scmp.eq.s32.totalorder %s15, 3
    %p73 = por %p71, %p72
    %p75 = scmp.ne.s32.totalorder %s60, %s74
    %p76 = scmp.eq.s32.totalorder %s15, 0
    %p77 = por %p75, %p76
    %s79 = sadd.s32 %s78, 1
    %p82 = scmp.eq.s32.totalorder %s9, 3
    %p83 = scmp.ne.s32.totalorder %s78, %s80
    %p84 = scmp.eq.s32.totalorder %s9, 0
    %p85 = por %p83, %p84
    %p86 = scmp.ne.s32.totalorder %s78, %s80
    %p87 = scmp.eq.s32.totalorder %s14, 3
    %p88 = por %p86, %p87
    %p89 = scmp.ne.s32.totalorder %s80, %s81
    %p90 = scmp.eq.s32.totalorder %s14, 0
    %p91 = por %p89, %p90
    %p92 = scmp.ne.s32.totalorder %s80, %s81
    %p93 = scmp.eq.s32.totalorder %s15, 3
    %p94 = por %p92, %p93
    %p96 = scmp.ne.s32.totalorder %s81, %s95
    %p97 = scmp.eq.s32.totalorder %s15, 0
    %p98 = por %p96, %p97
    %s99 = ssub.s32 %s16, %s28
    %p100 = scmp.eq.s32.totalorder %s99, 0
    %s102 = sadd.s32 %s101, 1
    %s103 = scalar_select %p100, %s101, %s102
    %p106 = pneg %p100
    %p107 = scmp.eq.s32.totalorder %s9, 3
    %p108 = por %p106, %p107
    %p109 = scmp.ne.s32.totalorder %s101, %s104
    %p110 = scmp.eq.s32.totalorder %s9, 0
    %p111 = por %p109, %p110
    %p112 = scmp.ne.s32.totalorder %s101, %s104
    %p113 = scmp.eq.s32.totalorder %s14, 3
    %p114 = por %p112, %p113
    %p115 = scmp.ne.s32.totalorder %s104, %s105
    %p116 = scmp.eq.s32.totalorder %s14, 0
    %p117 = por %p115, %p116
    %p118 = scmp.ne.s32.totalorder %s104, %s105
    %p119 = scmp.eq.s32.totalorder %s15, 3
    %p120 = por %p118, %p119
    %p122 = scmp.ne.s32.totalorder %s105, %s121
    %p123 = scmp.eq.s32.totalorder %s15, 0
    %p124 = por %p122, %p123
    %p125 = scmp.le.s32.totalorder 1, %s9
    %p126 = scmp.lt.s32.totalorder %s9, 5
    %p127 = pnand %p125, %p126
    %p128 = pneg %p127
    // Predicated region
    $region9: #{discriminator3d_forward.4} parent=5 // pred_check
      _
    $region10: #{discriminator3d_forward.4} parent=5 // pred_check_branch
      %130 = sbr.rel (%p127) target = $region12
    $region11: #{discriminator3d_forward.4} parent=5 // pred_region
      %s131 = ssub.s32 %s9, 1
      // Predicated region
      $region13: #{discriminator3d_forward.4} parent=11 // pred_check
        %p132 = pneg %p70
      $region14: #{discriminator3d_forward.4} parent=11 // pred_check_branch
        %134 = sbr.rel (%p132) target = $region16
      $region15: #{discriminator3d_forward.4} parent=11 // pred_region
        _
      $region16: #{discriminator3d_forward.4} parent=11 // pred_fallthru
        _
      // Predicated region
      $region17: #{discriminator3d_forward.4} parent=11 // pred_check
        %p135 = pneg %p91
      $region18: #{discriminator3d_forward.4} parent=11 // pred_check_branch
        %137 = sbr.rel (%p135) target = $region20
      $region19: #{discriminator3d_forward.4} parent=11 // pred_region
        _
      $region20: #{discriminator3d_forward.4} parent=11 // pred_fallthru
        _
    $region12: #{discriminator3d_forward.4} parent=5 // pred_fallthru
      _
    %p138 = scmp.lt.s32.totalorder %s9, 4
    // Predicated region
    $region21: #{discriminator3d_forward.4} parent=5 // pred_check
      %p139 = pneg %p138
    $region22: #{discriminator3d_forward.4} parent=5 // pred_check_branch
      %141 = sbr.rel (%p139) target = $region24
    $region23: #{discriminator3d_forward.4} parent=5 // pred_region
      // Predicated region
      $region25: #{discriminator3d_forward.4} parent=23 // pred_check
        %p142 = pneg %p43
      $region26: #{discriminator3d_forward.4} parent=23 // pred_check_branch
        %144 = sbr.rel (%p142) target = $region28
      $region27: #{discriminator3d_forward.4} parent=23 // pred_region
        %s145 = smul.u32 256, %s16
        %p146 = scmp.lt.s32.totalorder %s145, 1023
        %s147 = scalar_select %p146, %s145, 1023
        %p148 = scmp.lt.s32.totalorder %s17, 0
        %s149 = scalar_select %p148, %s17, 0
        %s150 = sadd.s32 %s149, %s147
        %s151 = smul.addr %s150, 4
        %s152 = scalar_lea.vmem %s0, %s151
        %s153 = smul.u32 256, %s16
      $region28: #{discriminator3d_forward.4} parent=23 // pred_fallthru
        _
    $region24: #{discriminator3d_forward.4} parent=5 // pred_fallthru
      _
    %p154 = scmp.le.s32.totalorder 1, %s9
    %p155 = scmp.lt.s32.totalorder %s9, 5
    %p156 = pnand %p154, %p155
    %p157 = pneg %p156
    // Predicated region
    $region29: #{discriminator3d_forward.4} parent=5 // pred_check
      _
    $region30: #{discriminator3d_forward.4} parent=5 // pred_check_branch
      %159 = sbr.rel (%p156) target = $region32
    $region31: #{discriminator3d_forward.4} parent=5 // pred_region
      %s160 = ssub.s32 %s9, 1
      %s161 = smul.u32 256, %s18
      %p162 = scmp.lt.s32.totalorder %s161, 1023
      %s163 = scalar_select %p162, %s161, 1023
      %p164 = scmp.lt.s32.totalorder %s19, 0
      %s165 = scalar_select %p164, %s19, 0
      %s166 = sadd.s32 %s165, %s163
      %s167 = smul.addr %s166, 4
      %s168 = scalar_lea.vmem %s0, %s167
      %p169 = pneg %p49
      %p170 = pneg %p46
      %p171 = pneg %p70
      %p172 = pneg %p67
      %p173 = pneg %p91
      %p174 = pneg %p88
      %p175 = pneg %p117
      %p176 = pneg %p114
      %s177 = smul.u32 256, %s18
      %p178 = scmp.lt.s32.totalorder %s177, 1023
      %s179 = scalar_select %p178, %s177, 1023
      %s180 = smul.addr %s179, 4
      %s181 = scalar_lea.vmem %s3, %s180
      %s182 = smul.u32 256, %s18
      %p183 = scmp.lt.s32.totalorder %s182, 1023
      %s184 = scalar_select %p183, %s182, 1023
      %p185 = scmp.lt.s32.totalorder %s19, 0
      %s186 = scalar_select %p185, %s19, 0
      %s187 = sadd.s32 %s186, %s184
      %s188 = smul.addr %s187, 4
      %s189 = scalar_lea.vmem %s0, %s188
      %s190 = smul.u32 256, %s18
      %s191 = smul.u32 256, %s18
      %p192 = scmp.lt.s32.totalorder %s191, 1023
      %s193 = scalar_select %p192, %s191, 1023
      %s194 = smul.addr %s193, 4
      %s195 = scalar_lea.vmem %s3, %s194
      %s196 = smul.u32 256, %s18
      %v198 = vld [vmem:[%s189] sm:$0xf]
      %v199 = vld [vmem:[%s189 + $0x4] sm:$0xf]
      %v200 = vld [vmem:[%s189 + $0x8] sm:$0xf]
      %v201 = vld [vmem:[%s189 + $0xc] sm:$0xf]
      %v202 = vld [vmem:[%s189 + $0x10] sm:$0xf]
      %v203 = vld [vmem:[%s189 + $0x14] sm:$0xf]
      %v204 = vld [vmem:[%s189 + $0x18] sm:$0xf]
      %v205 = vld [vmem:[%s189 + $0x1c] sm:$0xf]
      %v206 = vld [vmem:[%s189 + $0x20] sm:$0xf]
      %v207 = vld [vmem:[%s189 + $0x24] sm:$0xf]
      %v208 = vld [vmem:[%s189 + $0x28] sm:$0xf]
      %v209 = vld [vmem:[%s189 + $0x2c] sm:$0xf]
      %v210 = vld [vmem:[%s189 + $0x30] sm:$0xf]
      %v211 = vld [vmem:[%s189 + $0x34] sm:$0xf]
      %v212 = vld [vmem:[%s189 + $0x38] sm:$0xf]
      %v213 = vld [vmem:[%s189 + $0x3c] sm:$0xf]
      %v214 = vld [vmem:[%s189 + $0x40] sm:$0xf]
      %v215 = vld [vmem:[%s189 + $0x44] sm:$0xf]
      %v216 = vld [vmem:[%s189 + $0x48] sm:$0xf]
      %v217 = vld [vmem:[%s189 + $0x4c] sm:$0xf]
      %v218 = vld [vmem:[%s189 + $0x50] sm:$0xf]
      %v219 = vld [vmem:[%s189 + $0x54] sm:$0xf]
      %v220 = vld [vmem:[%s189 + $0x58] sm:$0xf]
      %v221 = vld [vmem:[%s189 + $0x5c] sm:$0xf]
      %v222 = vld [vmem:[%s189 + $0x60] sm:$0xf]
      %v223 = vld [vmem:[%s189 + $0x64] sm:$0xf]
      %v224 = vld [vmem:[%s189 + $0x68] sm:$0xf]
      %v225 = vld [vmem:[%s189 + $0x6c] sm:$0xf]
      %v226 = vld [vmem:[%s189 + $0x70] sm:$0xf]
      %v227 = vld [vmem:[%s189 + $0x74] sm:$0xf]
      %v228 = vld [vmem:[%s189 + $0x78] sm:$0xf]
      %v229 = vld [vmem:[%s189 + $0x7c] sm:$0xf]
      %v230 = vld [vmem:[%s189 + $0x80] sm:$0xf]
      %v231 = vld [vmem:[%s189 + $0x84] sm:$0xf]
      %v232 = vld [vmem:[%s189 + $0x88] sm:$0xf]
      %v233 = vld [vmem:[%s189 + $0x8c] sm:$0xf]
      %v234 = vld [vmem:[%s189 + $0x90] sm:$0xf]
      %v235 = vld [vmem:[%s189 + $0x94] sm:$0xf]
      %v236 = vld [vmem:[%s189 + $0x98] sm:$0xf]
      %v237 = vld [vmem:[%s189 + $0x9c] sm:$0xf]
      %v238 = vld [vmem:[%s189 + $0xa0] sm:$0xf]
      %v239 = vld [vmem:[%s189 + $0xa4] sm:$0xf]
      %v240 = vld [vmem:[%s189 + $0xa8] sm:$0xf]
      %v241 = vld [vmem:[%s189 + $0xac] sm:$0xf]
      %v242 = vld [vmem:[%s189 + $0xb0] sm:$0xf]
      %v243 = vld [vmem:[%s189 + $0xb4] sm:$0xf]
      %v244 = vld [vmem:[%s189 + $0xb8] sm:$0xf]
      %v245 = vld [vmem:[%s189 + $0xbc] sm:$0xf]
      %v246 = vld [vmem:[%s189 + $0xc0] sm:$0xf]
      %v247 = vld [vmem:[%s189 + $0xc4] sm:$0xf]
      %v248 = vld [vmem:[%s189 + $0xc8] sm:$0xf]
      %v249 = vld [vmem:[%s189 + $0xcc] sm:$0xf]
      %v250 = vld [vmem:[%s189 + $0xd0] sm:$0xf]
      %v251 = vld [vmem:[%s189 + $0xd4] sm:$0xf]
      %v252 = vld [vmem:[%s189 + $0xd8] sm:$0xf]
      %v253 = vld [vmem:[%s189 + $0xdc] sm:$0xf]
      %v254 = vld [vmem:[%s189 + $0xe0] sm:$0xf]
      %v255 = vld [vmem:[%s189 + $0xe4] sm:$0xf]
      %v256 = vld [vmem:[%s189 + $0xe8] sm:$0xf]
      %v257 = vld [vmem:[%s189 + $0xec] sm:$0xf]
      %v258 = vld [vmem:[%s189 + $0xf0] sm:$0xf]
      %v259 = vld [vmem:[%s189 + $0xf4] sm:$0xf]
      %v260 = vld [vmem:[%s189 + $0xf8] sm:$0xf]
      %v261 = vld [vmem:[%s189 + $0xfc] sm:$0xf]
      %v262 = vld [vmem:[%s189 + $0x100] sm:$0xf]
      %v263 = vld [vmem:[%s189 + $0x104] sm:$0xf]
      %v264 = vld [vmem:[%s189 + $0x108] sm:$0xf]
      %v265 = vld [vmem:[%s189 + $0x10c] sm:$0xf]
      %v266 = vld [vmem:[%s189 + $0x110] sm:$0xf]
      %v267 = vld [vmem:[%s189 + $0x114] sm:$0xf]
      %v268 = vld [vmem:[%s189 + $0x118] sm:$0xf]
      %v269 = vld [vmem:[%s189 + $0x11c] sm:$0xf]
      %v270 = vld [vmem:[%s189 + $0x120] sm:$0xf]
      %v271 = vld [vmem:[%s189 + $0x124] sm:$0xf]
      %v272 = vld [vmem:[%s189 + $0x128] sm:$0xf]
      %v273 = vld [vmem:[%s189 + $0x12c] sm:$0xf]
      %v274 = vld [vmem:[%s189 + $0x130] sm:$0xf]
      %v275 = vld [vmem:[%s189 + $0x134] sm:$0xf]
      %v276 = vld [vmem:[%s189 + $0x138] sm:$0xf]
      %v277 = vld [vmem:[%s189 + $0x13c] sm:$0xf]
      %v278 = vld [vmem:[%s189 + $0x140] sm:$0xf]
      %v279 = vld [vmem:[%s189 + $0x144] sm:$0xf]
      %v280 = vld [vmem:[%s189 + $0x148] sm:$0xf]
      %v281 = vld [vmem:[%s189 + $0x14c] sm:$0xf]
      %v282 = vld [vmem:[%s189 + $0x150] sm:$0xf]
      %v283 = vld [vmem:[%s189 + $0x154] sm:$0xf]
      %v284 = vld [vmem:[%s189 + $0x158] sm:$0xf]
      %v285 = vld [vmem:[%s189 + $0x15c] sm:$0xf]
      %v286 = vld [vmem:[%s189 + $0x160] sm:$0xf]
      %v287 = vld [vmem:[%s189 + $0x164] sm:$0xf]
      %v288 = vld [vmem:[%s189 + $0x168] sm:$0xf]
      %v289 = vld [vmem:[%s189 + $0x16c] sm:$0xf]
      %v290 = vld [vmem:[%s189 + $0x170] sm:$0xf]
      %v291 = vld [vmem:[%s189 + $0x174] sm:$0xf]
      %v292 = vld [vmem:[%s189 + $0x178] sm:$0xf]
      %v293 = vld [vmem:[%s189 + $0x17c] sm:$0xf]
      %v294 = vld [vmem:[%s189 + $0x180] sm:$0xf]
      %v295 = vld [vmem:[%s189 + $0x184] sm:$0xf]
      %v296 = vld [vmem:[%s189 + $0x188] sm:$0xf]
      %v297 = vld [vmem:[%s189 + $0x18c] sm:$0xf]
      %v298 = vld [vmem:[%s189 + $0x190] sm:$0xf]
      %v299 = vld [vmem:[%s189 + $0x194] sm:$0xf]
      %v300 = vld [vmem:[%s189 + $0x198] sm:$0xf]
      %v301 = vld [vmem:[%s189 + $0x19c] sm:$0xf]
      %v302 = vld [vmem:[%s189 + $0x1a0] sm:$0xf]
      %v303 = vld [vmem:[%s189 + $0x1a4] sm:$0xf]
      %v304 = vld [vmem:[%s189 + $0x1a8] sm:$0xf]
      %v305 = vld [vmem:[%s189 + $0x1ac] sm:$0xf]
      %v306 = vld [vmem:[%s189 + $0x1b0] sm:$0xf]
      %v307 = vld [vmem:[%s189 + $0x1b4] sm:$0xf]
      %v308 = vld [vmem:[%s189 + $0x1b8] sm:$0xf]
      %v309 = vld [vmem:[%s189 + $0x1bc] sm:$0xf]
      %v310 = vld [vmem:[%s189 + $0x1c0] sm:$0xf]
      %v311 = vld [vmem:[%s189 + $0x1c4] sm:$0xf]
      %v312 = vld [vmem:[%s189 + $0x1c8] sm:$0xf]
      %v313 = vld [vmem:[%s189 + $0x1cc] sm:$0xf]
      %v314 = vld [vmem:[%s189 + $0x1d0] sm:$0xf]
      %v315 = vld [vmem:[%s189 + $0x1d4] sm:$0xf]
      %v316 = vld [vmem:[%s189 + $0x1d8] sm:$0xf]
      %v317 = vld [vmem:[%s189 + $0x1dc] sm:$0xf]
      %v318 = vld [vmem:[%s189 + $0x1e0] sm:$0xf]
      %v319 = vld [vmem:[%s189 + $0x1e4] sm:$0xf]
      %v320 = vld [vmem:[%s189 + $0x1e8] sm:$0xf]
      %v321 = vld [vmem:[%s189 + $0x1ec] sm:$0xf]
      %v322 = vld [vmem:[%s189 + $0x1f0] sm:$0xf]
      %v323 = vld [vmem:[%s189 + $0x1f4] sm:$0xf]
      %v324 = vld [vmem:[%s189 + $0x1f8] sm:$0xf]
      %v325 = vld [vmem:[%s189 + $0x1fc] sm:$0xf]
      %v326 = vld [vmem:[%s189 + $0x200] sm:$0xf]
      %v327 = vld [vmem:[%s189 + $0x204] sm:$0xf]
      %v328 = vld [vmem:[%s189 + $0x208] sm:$0xf]
      %v329 = vld [vmem:[%s189 + $0x20c] sm:$0xf]
      %v330 = vld [vmem:[%s189 + $0x210] sm:$0xf]
      %v331 = vld [vmem:[%s189 + $0x214] sm:$0xf]
      %v332 = vld [vmem:[%s189 + $0x218] sm:$0xf]
      %v333 = vld [vmem:[%s189 + $0x21c] sm:$0xf]
      %v334 = vld [vmem:[%s189 + $0x220] sm:$0xf]
      %v335 = vld [vmem:[%s189 + $0x224] sm:$0xf]
      %v336 = vld [vmem:[%s189 + $0x228] sm:$0xf]
      %v337 = vld [vmem:[%s189 + $0x22c] sm:$0xf]
      %v338 = vld [vmem:[%s189 + $0x230] sm:$0xf]
      %v339 = vld [vmem:[%s189 + $0x234] sm:$0xf]
      %v340 = vld [vmem:[%s189 + $0x238] sm:$0xf]
      %v341 = vld [vmem:[%s189 + $0x23c] sm:$0xf]
      %v342 = vld [vmem:[%s189 + $0x240] sm:$0xf]
      %v343 = vld [vmem:[%s189 + $0x244] sm:$0xf]
      %v344 = vld [vmem:[%s189 + $0x248] sm:$0xf]
      %v345 = vld [vmem:[%s189 + $0x24c] sm:$0xf]
      %v346 = vld [vmem:[%s189 + $0x250] sm:$0xf]
      %v347 = vld [vmem:[%s189 + $0x254] sm:$0xf]
      %v348 = vld [vmem:[%s189 + $0x258] sm:$0xf]
      %v349 = vld [vmem:[%s189 + $0x25c] sm:$0xf]
      %v350 = vld [vmem:[%s189 + $0x260] sm:$0xf]
      %v351 = vld [vmem:[%s189 + $0x264] sm:$0xf]
      %v352 = vld [vmem:[%s189 + $0x268] sm:$0xf]
      %v353 = vld [vmem:[%s189 + $0x26c] sm:$0xf]
      %v354 = vld [vmem:[%s189 + $0x270] sm:$0xf]
      %v355 = vld [vmem:[%s189 + $0x274] sm:$0xf]
      %v356 = vld [vmem:[%s189 + $0x278] sm:$0xf]
      %v357 = vld [vmem:[%s189 + $0x27c] sm:$0xf]
      %v358 = vld [vmem:[%s189 + $0x280] sm:$0xf]
      %v359 = vld [vmem:[%s189 + $0x284] sm:$0xf]
      %v360 = vld [vmem:[%s189 + $0x288] sm:$0xf]
      %v361 = vld [vmem:[%s189 + $0x28c] sm:$0xf]
      %v362 = vld [vmem:[%s189 + $0x290] sm:$0xf]
      %v363 = vld [vmem:[%s189 + $0x294] sm:$0xf]
      %v364 = vld [vmem:[%s189 + $0x298] sm:$0xf]
      %v365 = vld [vmem:[%s189 + $0x29c] sm:$0xf]
      %v366 = vld [vmem:[%s189 + $0x2a0] sm:$0xf]
      %v367 = vld [vmem:[%s189 + $0x2a4] sm:$0xf]
      %v368 = vld [vmem:[%s189 + $0x2a8] sm:$0xf]
      %v369 = vld [vmem:[%s189 + $0x2ac] sm:$0xf]
      %v370 = vld [vmem:[%s189 + $0x2b0] sm:$0xf]
      %v371 = vld [vmem:[%s189 + $0x2b4] sm:$0xf]
      %v372 = vld [vmem:[%s189 + $0x2b8] sm:$0xf]
      %v373 = vld [vmem:[%s189 + $0x2bc] sm:$0xf]
      %v374 = vld [vmem:[%s189 + $0x2c0] sm:$0xf]
      %v375 = vld [vmem:[%s189 + $0x2c4] sm:$0xf]
      %v376 = vld [vmem:[%s189 + $0x2c8] sm:$0xf]
      %v377 = vld [vmem:[%s189 + $0x2cc] sm:$0xf]
      %v378 = vld [vmem:[%s189 + $0x2d0] sm:$0xf]
      %v379 = vld [vmem:[%s189 + $0x2d4] sm:$0xf]
      %v380 = vld [vmem:[%s189 + $0x2d8] sm:$0xf]
      %v381 = vld [vmem:[%s189 + $0x2dc] sm:$0xf]
      %v382 = vld [vmem:[%s189 + $0x2e0] sm:$0xf]
      %v383 = vld [vmem:[%s189 + $0x2e4] sm:$0xf]
      %v384 = vld [vmem:[%s189 + $0x2e8] sm:$0xf]
      %v385 = vld [vmem:[%s189 + $0x2ec] sm:$0xf]
      %v386 = vld [vmem:[%s189 + $0x2f0] sm:$0xf]
      %v387 = vld [vmem:[%s189 + $0x2f4] sm:$0xf]
      %v388 = vld [vmem:[%s189 + $0x2f8] sm:$0xf]
      %v389 = vld [vmem:[%s189 + $0x2fc] sm:$0xf]
      %v390 = vld [vmem:[%s189 + $0x300] sm:$0xf]
      %v391 = vld [vmem:[%s189 + $0x304] sm:$0xf]
      %v392 = vld [vmem:[%s189 + $0x308] sm:$0xf]
      %v393 = vld [vmem:[%s189 + $0x30c] sm:$0xf]
      %v394 = vld [vmem:[%s189 + $0x310] sm:$0xf]
      %v395 = vld [vmem:[%s189 + $0x314] sm:$0xf]
      %v396 = vld [vmem:[%s189 + $0x318] sm:$0xf]
      %v397 = vld [vmem:[%s189 + $0x31c] sm:$0xf]
      %v398 = vld [vmem:[%s189 + $0x320] sm:$0xf]
      %v399 = vld [vmem:[%s189 + $0x324] sm:$0xf]
      %v400 = vld [vmem:[%s189 + $0x328] sm:$0xf]
      %v401 = vld [vmem:[%s189 + $0x32c] sm:$0xf]
      %v402 = vld [vmem:[%s189 + $0x330] sm:$0xf]
      %v403 = vld [vmem:[%s189 + $0x334] sm:$0xf]
      %v404 = vld [vmem:[%s189 + $0x338] sm:$0xf]
      %v405 = vld [vmem:[%s189 + $0x33c] sm:$0xf]
      %v406 = vld [vmem:[%s189 + $0x340] sm:$0xf]
      %v407 = vld [vmem:[%s189 + $0x344] sm:$0xf]
      %v408 = vld [vmem:[%s189 + $0x348] sm:$0xf]
      %v409 = vld [vmem:[%s189 + $0x34c] sm:$0xf]
      %v410 = vld [vmem:[%s189 + $0x350] sm:$0xf]
      %v411 = vld [vmem:[%s189 + $0x354] sm:$0xf]
      %v412 = vld [vmem:[%s189 + $0x358] sm:$0xf]
      %v413 = vld [vmem:[%s189 + $0x35c] sm:$0xf]
      %v414 = vld [vmem:[%s189 + $0x360] sm:$0xf]
      %v415 = vld [vmem:[%s189 + $0x364] sm:$0xf]
      %v416 = vld [vmem:[%s189 + $0x368] sm:$0xf]
      %v417 = vld [vmem:[%s189 + $0x36c] sm:$0xf]
      %v418 = vld [vmem:[%s189 + $0x370] sm:$0xf]
      %v419 = vld [vmem:[%s189 + $0x374] sm:$0xf]
      %v420 = vld [vmem:[%s189 + $0x378] sm:$0xf]
      %v421 = vld [vmem:[%s189 + $0x37c] sm:$0xf]
      %v422 = vld [vmem:[%s189 + $0x380] sm:$0xf]
      %v423 = vld [vmem:[%s189 + $0x384] sm:$0xf]
      %v424 = vld [vmem:[%s189 + $0x388] sm:$0xf]
      %v425 = vld [vmem:[%s189 + $0x38c] sm:$0xf]
      %v426 = vld [vmem:[%s189 + $0x390] sm:$0xf]
      %v427 = vld [vmem:[%s189 + $0x394] sm:$0xf]
      %v428 = vld [vmem:[%s189 + $0x398] sm:$0xf]
      %v429 = vld [vmem:[%s189 + $0x39c] sm:$0xf]
      %v430 = vld [vmem:[%s189 + $0x3a0] sm:$0xf]
      %v431 = vld [vmem:[%s189 + $0x3a4] sm:$0xf]
      %v432 = vld [vmem:[%s189 + $0x3a8] sm:$0xf]
      %v433 = vld [vmem:[%s189 + $0x3ac] sm:$0xf]
      %v434 = vld [vmem:[%s189 + $0x3b0] sm:$0xf]
      %v435 = vld [vmem:[%s189 + $0x3b4] sm:$0xf]
      %v436 = vld [vmem:[%s189 + $0x3b8] sm:$0xf]
      %v437 = vld [vmem:[%s189 + $0x3bc] sm:$0xf]
      %v438 = vld [vmem:[%s189 + $0x3c0] sm:$0xf]
      %v439 = vld [vmem:[%s189 + $0x3c4] sm:$0xf]
      %v440 = vld [vmem:[%s189 + $0x3c8] sm:$0xf]
      %v441 = vld [vmem:[%s189 + $0x3cc] sm:$0xf]
      %v442 = vld [vmem:[%s189 + $0x3d0] sm:$0xf]
      %v443 = vld [vmem:[%s189 + $0x3d4] sm:$0xf]
      %v444 = vld [vmem:[%s189 + $0x3d8] sm:$0xf]
      %v445 = vld [vmem:[%s189 + $0x3dc] sm:$0xf]
      %v446 = vld [vmem:[%s189 + $0x3e0] sm:$0xf]
      %v447 = vld [vmem:[%s189 + $0x3e4] sm:$0xf]
      %v448 = vld [vmem:[%s189 + $0x3e8] sm:$0xf]
      %v449 = vld [vmem:[%s189 + $0x3ec] sm:$0xf]
      %v450 = vld [vmem:[%s189 + $0x3f0] sm:$0xf]
      %v451 = vld [vmem:[%s189 + $0x3f4] sm:$0xf]
      %v452 = vld [vmem:[%s189 + $0x3f8] sm:$0xf]
      %v453 = vld [vmem:[%s189 + $0x3fc] sm:$0xf]
      %v454 = vld [vmem:[%s1] sm:$0xf]
      %v455 = vld [vmem:[%s1 + $0x4] sm:$0xf]
      %v456 = vld [vmem:[%s1 + $0x8] sm:$0xf]
      %v457 = vld [vmem:[%s1 + $0xc] sm:$0xf]
      %v458 = vld [vmem:[%s1 + $0x10] sm:$0xf]
      %v459 = vld [vmem:[%s1 + $0x14] sm:$0xf]
      %v460 = vld [vmem:[%s1 + $0x18] sm:$0xf]
      %v461 = vld [vmem:[%s1 + $0x1c] sm:$0xf]
      %v462 = vld [vmem:[%s1 + $0x20] sm:$0xf]
      %v463 = vld [vmem:[%s1 + $0x24] sm:$0xf]
      %v464 = vld [vmem:[%s1 + $0x28] sm:$0xf]
      %v465 = vld [vmem:[%s1 + $0x2c] sm:$0xf]
      %v466 = vld [vmem:[%s1 + $0x30] sm:$0xf]
      %v467 = vld [vmem:[%s1 + $0x34] sm:$0xf]
      %v468 = vld [vmem:[%s1 + $0x38] sm:$0xf]
      %v469 = vld [vmem:[%s1 + $0x3c] sm:$0xf]
      %v470 = vld [vmem:[%s2] sm:$0x1]
      %v472 = vlaneseq
      %v473 = vshrl.u32 %v472, 7
      %v474 = vsub.s32 0, %v473
      %v475 = vrot.slane %v470, %v474
      %v733 = vunpack.c.l.b16 %v198
      %v734 = vunpack.c.l.b16 %v199
      %v735 = vunpack.c.l.b16 %v200
      %v736 = vunpack.c.l.b16 %v201
      %v737 = vunpack.c.l.b16 %v202
      %v738 = vunpack.c.l.b16 %v203
      %v739 = vunpack.c.l.b16 %v204
      %v740 = vunpack.c.l.b16 %v205
      %v741 = vunpack.c.l.b16 %v206
      %v742 = vunpack.c.l.b16 %v207
      %v743 = vunpack.c.l.b16 %v208
      %v744 = vunpack.c.l.b16 %v209
      %v745 = vunpack.c.l.b16 %v210
      %v746 = vunpack.c.l.b16 %v211
      %v747 = vunpack.c.l.b16 %v212
      %v748 = vunpack.c.l.b16 %v213
      %v749 = vunpack.c.l.b16 %v214
      %v750 = vunpack.c.l.b16 %v215
      %v751 = vunpack.c.l.b16 %v216
      %v752 = vunpack.c.l.b16 %v217
      %v753 = vunpack.c.l.b16 %v218
      %v754 = vunpack.c.l.b16 %v219
      %v755 = vunpack.c.l.b16 %v220
      %v756 = vunpack.c.l.b16 %v221
      %v757 = vunpack.c.l.b16 %v222
      %v758 = vunpack.c.l.b16 %v223
      %v759 = vunpack.c.l.b16 %v224
      %v760 = vunpack.c.l.b16 %v225
      %v761 = vunpack.c.l.b16 %v226
      %v762 = vunpack.c.l.b16 %v227
      %v763 = vunpack.c.l.b16 %v228
      %v764 = vunpack.c.l.b16 %v229
      %v765 = vunpack.c.l.b16 %v230
      %v766 = vunpack.c.l.b16 %v231
      %v767 = vunpack.c.l.b16 %v232
      %v768 = vunpack.c.l.b16 %v233
      %v769 = vunpack.c.l.b16 %v234
      %v770 = vunpack.c.l.b16 %v235
      %v771 = vunpack.c.l.b16 %v236
      %v772 = vunpack.c.l.b16 %v237
      %v773 = vunpack.c.l.b16 %v238
      %v774 = vunpack.c.l.b16 %v239
      %v775 = vunpack.c.l.b16 %v240
      %v776 = vunpack.c.l.b16 %v241
      %v777 = vunpack.c.l.b16 %v242
      %v778 = vunpack.c.l.b16 %v243
      %v779 = vunpack.c.l.b16 %v244
      %v780 = vunpack.c.l.b16 %v245
      %v781 = vunpack.c.l.b16 %v246
      %v782 = vunpack.c.l.b16 %v247
      %v783 = vunpack.c.l.b16 %v248
      %v784 = vunpack.c.l.b16 %v249
      %v785 = vunpack.c.l.b16 %v250
      %v786 = vunpack.c.l.b16 %v251
      %v787 = vunpack.c.l.b16 %v252
      %v788 = vunpack.c.l.b16 %v253
      %v789 = vunpack.c.l.b16 %v254
      %v790 = vunpack.c.l.b16 %v255
      %v791 = vunpack.c.l.b16 %v256
      %v792 = vunpack.c.l.b16 %v257
      %v793 = vunpack.c.l.b16 %v258
      %v794 = vunpack.c.l.b16 %v259
      %v795 = vunpack.c.l.b16 %v260
      %v796 = vunpack.c.l.b16 %v261
      %v797 = vunpack.c.l.b16 %v262
      %v798 = vunpack.c.l.b16 %v263
      %v799 = vunpack.c.l.b16 %v264
      %v800 = vunpack.c.l.b16 %v265
      %v801 = vunpack.c.l.b16 %v266
      %v802 = vunpack.c.l.b16 %v267
      %v803 = vunpack.c.l.b16 %v268
      %v804 = vunpack.c.l.b16 %v269
      %v805 = vunpack.c.l.b16 %v270
      %v806 = vunpack.c.l.b16 %v271
      %v807 = vunpack.c.l.b16 %v272
      %v808 = vunpack.c.l.b16 %v273
      %v809 = vunpack.c.l.b16 %v274
      %v810 = vunpack.c.l.b16 %v275
      %v811 = vunpack.c.l.b16 %v276
      %v812 = vunpack.c.l.b16 %v277
      %v813 = vunpack.c.l.b16 %v278
      %v814 = vunpack.c.l.b16 %v279
      %v815 = vunpack.c.l.b16 %v280
      %v816 = vunpack.c.l.b16 %v281
      %v817 = vunpack.c.l.b16 %v282
      %v818 = vunpack.c.l.b16 %v283
      %v819 = vunpack.c.l.b16 %v284
      %v820 = vunpack.c.l.b16 %v285
      %v821 = vunpack.c.l.b16 %v286
      %v822 = vunpack.c.l.b16 %v287
      %v823 = vunpack.c.l.b16 %v288
      %v824 = vunpack.c.l.b16 %v289
      %v825 = vunpack.c.l.b16 %v290
      %v826 = vunpack.c.l.b16 %v291
      %v827 = vunpack.c.l.b16 %v292
      %v828 = vunpack.c.l.b16 %v293
      %v829 = vunpack.c.l.b16 %v294
      %v830 = vunpack.c.l.b16 %v295
      %v831 = vunpack.c.l.b16 %v296
      %v832 = vunpack.c.l.b16 %v297
      %v833 = vunpack.c.l.b16 %v298
      %v834 = vunpack.c.l.b16 %v299
      %v835 = vunpack.c.l.b16 %v300
      %v836 = vunpack.c.l.b16 %v301
      %v837 = vunpack.c.l.b16 %v302
      %v838 = vunpack.c.l.b16 %v303
      %v839 = vunpack.c.l.b16 %v304
      %v840 = vunpack.c.l.b16 %v305
      %v841 = vunpack.c.l.b16 %v306
      %v842 = vunpack.c.l.b16 %v307
      %v843 = vunpack.c.l.b16 %v308
      %v844 = vunpack.c.l.b16 %v309
      %v845 = vunpack.c.l.b16 %v310
      %v846 = vunpack.c.l.b16 %v311
      %v847 = vunpack.c.l.b16 %v312
      %v848 = vunpack.c.l.b16 %v313
      %v849 = vunpack.c.l.b16 %v314
      %v850 = vunpack.c.l.b16 %v315
      %v851 = vunpack.c.l.b16 %v316
      %v852 = vunpack.c.l.b16 %v317
      %v853 = vunpack.c.l.b16 %v318
      %v854 = vunpack.c.l.b16 %v319
      %v855 = vunpack.c.l.b16 %v320
      %v856 = vunpack.c.l.b16 %v321
      %v857 = vunpack.c.l.b16 %v322
      %v858 = vunpack.c.l.b16 %v323
      %v859 = vunpack.c.l.b16 %v324
      %v860 = vunpack.c.l.b16 %v325
      %v861 = vunpack.c.l.b16 %v326
      %v862 = vunpack.c.l.b16 %v327
      %v863 = vunpack.c.l.b16 %v328
      %v864 = vunpack.c.l.b16 %v329
      %v865 = vunpack.c.l.b16 %v330
      %v866 = vunpack.c.l.b16 %v331
      %v867 = vunpack.c.l.b16 %v332
      %v868 = vunpack.c.l.b16 %v333
      %v869 = vunpack.c.l.b16 %v334
      %v870 = vunpack.c.l.b16 %v335
      %v871 = vunpack.c.l.b16 %v336
      %v872 = vunpack.c.l.b16 %v337
      %v873 = vunpack.c.l.b16 %v338
      %v874 = vunpack.c.l.b16 %v339
      %v875 = vunpack.c.l.b16 %v340
      %v876 = vunpack.c.l.b16 %v341
      %v877 = vunpack.c.l.b16 %v342
      %v878 = vunpack.c.l.b16 %v343
      %v879 = vunpack.c.l.b16 %v344
      %v880 = vunpack.c.l.b16 %v345
      %v881 = vunpack.c.l.b16 %v346
      %v882 = vunpack.c.l.b16 %v347
      %v883 = vunpack.c.l.b16 %v348
      %v884 = vunpack.c.l.b16 %v349
      %v885 = vunpack.c.l.b16 %v350
      %v886 = vunpack.c.l.b16 %v351
      %v887 = vunpack.c.l.b16 %v352
      %v888 = vunpack.c.l.b16 %v353
      %v889 = vunpack.c.l.b16 %v354
      %v890 = vunpack.c.l.b16 %v355
      %v891 = vunpack.c.l.b16 %v356
      %v892 = vunpack.c.l.b16 %v357
      %v893 = vunpack.c.l.b16 %v358
      %v894 = vunpack.c.l.b16 %v359
      %v895 = vunpack.c.l.b16 %v360
      %v896 = vunpack.c.l.b16 %v361
      %v897 = vunpack.c.l.b16 %v362
      %v898 = vunpack.c.l.b16 %v363
      %v899 = vunpack.c.l.b16 %v364
      %v900 = vunpack.c.l.b16 %v365
      %v901 = vunpack.c.l.b16 %v366
      %v902 = vunpack.c.l.b16 %v367
      %v903 = vunpack.c.l.b16 %v368
      %v904 = vunpack.c.l.b16 %v369
      %v905 = vunpack.c.l.b16 %v370
      %v906 = vunpack.c.l.b16 %v371
      %v907 = vunpack.c.l.b16 %v372
      %v908 = vunpack.c.l.b16 %v373
      %v909 = vunpack.c.l.b16 %v374
      %v910 = vunpack.c.l.b16 %v375
      %v911 = vunpack.c.l.b16 %v376
      %v912 = vunpack.c.l.b16 %v377
      %v913 = vunpack.c.l.b16 %v378
      %v914 = vunpack.c.l.b16 %v379
      %v915 = vunpack.c.l.b16 %v380
      %v916 = vunpack.c.l.b16 %v381
      %v917 = vunpack.c.l.b16 %v382
      %v918 = vunpack.c.l.b16 %v383
      %v919 = vunpack.c.l.b16 %v384
      %v920 = vunpack.c.l.b16 %v385
      %v921 = vunpack.c.l.b16 %v386
      %v922 = vunpack.c.l.b16 %v387
      %v923 = vunpack.c.l.b16 %v388
      %v924 = vunpack.c.l.b16 %v389
      %v925 = vunpack.c.l.b16 %v390
      %v926 = vunpack.c.l.b16 %v391
      %v927 = vunpack.c.l.b16 %v392
      %v928 = vunpack.c.l.b16 %v393
      %v929 = vunpack.c.l.b16 %v394
      %v930 = vunpack.c.l.b16 %v395
      %v931 = vunpack.c.l.b16 %v396
      %v932 = vunpack.c.l.b16 %v397
      %v933 = vunpack.c.l.b16 %v398
      %v934 = vunpack.c.l.b16 %v399
      %v935 = vunpack.c.l.b16 %v400
      %v936 = vunpack.c.l.b16 %v401
      %v937 = vunpack.c.l.b16 %v402
      %v938 = vunpack.c.l.b16 %v403
      %v939 = vunpack.c.l.b16 %v404
      %v940 = vunpack.c.l.b16 %v405
      %v941 = vunpack.c.l.b16 %v406
      %v942 = vunpack.c.l.b16 %v407
      %v943 = vunpack.c.l.b16 %v408
      %v944 = vunpack.c.l.b16 %v409
      %v945 = vunpack.c.l.b16 %v410
      %v946 = vunpack.c.l.b16 %v411
      %v947 = vunpack.c.l.b16 %v412
      %v948 = vunpack.c.l.b16 %v413
      %v949 = vunpack.c.l.b16 %v414
      %v950 = vunpack.c.l.b16 %v415
      %v951 = vunpack.c.l.b16 %v416
      %v952 = vunpack.c.l.b16 %v417
      %v953 = vunpack.c.l.b16 %v418
      %v954 = vunpack.c.l.b16 %v419
      %v955 = vunpack.c.l.b16 %v420
      %v956 = vunpack.c.l.b16 %v421
      %v957 = vunpack.c.l.b16 %v422
      %v958 = vunpack.c.l.b16 %v423
      %v959 = vunpack.c.l.b16 %v424
      %v960 = vunpack.c.l.b16 %v425
      %v961 = vunpack.c.l.b16 %v426
      %v962 = vunpack.c.l.b16 %v427
      %v963 = vunpack.c.l.b16 %v428
      %v964 = vunpack.c.l.b16 %v429
      %v965 = vunpack.c.l.b16 %v430
      %v966 = vunpack.c.l.b16 %v431
      %v967 = vunpack.c.l.b16 %v432
      %v968 = vunpack.c.l.b16 %v433
      %v969 = vunpack.c.l.b16 %v434
      %v970 = vunpack.c.l.b16 %v435
      %v971 = vunpack.c.l.b16 %v436
      %v972 = vunpack.c.l.b16 %v437
      %v973 = vunpack.c.l.b16 %v438
      %v974 = vunpack.c.l.b16 %v439
      %v975 = vunpack.c.l.b16 %v440
      %v976 = vunpack.c.l.b16 %v441
      %v977 = vunpack.c.l.b16 %v442
      %v978 = vunpack.c.l.b16 %v443
      %v979 = vunpack.c.l.b16 %v444
      %v980 = vunpack.c.l.b16 %v445
      %v981 = vunpack.c.l.b16 %v446
      %v982 = vunpack.c.l.b16 %v447
      %v983 = vunpack.c.l.b16 %v448
      %v984 = vunpack.c.l.b16 %v449
      %v985 = vunpack.c.l.b16 %v450
      %v986 = vunpack.c.l.b16 %v451
      %v987 = vunpack.c.l.b16 %v452
      %v988 = vunpack.c.l.b16 %v453
      %v989 = vpack.c.b16 %v734, %v733
      %v990 = vpack.c.b16 %v736, %v735
      %v991 = vpack.c.b16 %v738, %v737
      %v992 = vpack.c.b16 %v740, %v739
      %v993 = vpack.c.b16 %v742, %v741
      %v994 = vpack.c.b16 %v744, %v743
      %v995 = vpack.c.b16 %v746, %v745
      %v996 = vpack.c.b16 %v748, %v747
      %v997 = vpack.c.b16 %v750, %v749
      %v998 = vpack.c.b16 %v752, %v751
      %v999 = vpack.c.b16 %v754, %v753
      %v1000 = vpack.c.b16 %v756, %v755
      %v1001 = vpack.c.b16 %v758, %v757
      %v1002 = vpack.c.b16 %v760, %v759
      %v1003 = vpack.c.b16 %v762, %v761
      %v1004 = vpack.c.b16 %v764, %v763
      %v1005 = vpack.c.b16 %v766, %v765
      %v1006 = vpack.c.b16 %v768, %v767
      %v1007 = vpack.c.b16 %v770, %v769
      %v1008 = vpack.c.b16 %v772, %v771
      %v1009 = vpack.c.b16 %v774, %v773
      %v1010 = vpack.c.b16 %v776, %v775
      %v1011 = vpack.c.b16 %v778, %v777
      %v1012 = vpack.c.b16 %v780, %v779
      %v1013 = vpack.c.b16 %v782, %v781
      %v1014 = vpack.c.b16 %v784, %v783
      %v1015 = vpack.c.b16 %v786, %v785
      %v1016 = vpack.c.b16 %v788, %v787
      %v1017 = vpack.c.b16 %v790, %v789
      %v1018 = vpack.c.b16 %v792, %v791
      %v1019 = vpack.c.b16 %v794, %v793
      %v1020 = vpack.c.b16 %v796, %v795
      %v1021 = vpack.c.b16 %v798, %v797
      %v1022 = vpack.c.b16 %v800, %v799
      %v1023 = vpack.c.b16 %v802, %v801
      %v1024 = vpack.c.b16 %v804, %v803
      %v1025 = vpack.c.b16 %v806, %v805
      %v1026 = vpack.c.b16 %v808, %v807
      %v1027 = vpack.c.b16 %v810, %v809
      %v1028 = vpack.c.b16 %v812, %v811
      %v1029 = vpack.c.b16 %v814, %v813
      %v1030 = vpack.c.b16 %v816, %v815
      %v1031 = vpack.c.b16 %v818, %v817
      %v1032 = vpack.c.b16 %v820, %v819
      %v1033 = vpack.c.b16 %v822, %v821
      %v1034 = vpack.c.b16 %v824, %v823
      %v1035 = vpack.c.b16 %v826, %v825
      %v1036 = vpack.c.b16 %v828, %v827
      %v1037 = vpack.c.b16 %v830, %v829
      %v1038 = vpack.c.b16 %v832, %v831
      %v1039 = vpack.c.b16 %v834, %v833
      %v1040 = vpack.c.b16 %v836, %v835
      %v1041 = vpack.c.b16 %v838, %v837
      %v1042 = vpack.c.b16 %v840, %v839
      %v1043 = vpack.c.b16 %v842, %v841
      %v1044 = vpack.c.b16 %v844, %v843
      %v1045 = vpack.c.b16 %v846, %v845
      %v1046 = vpack.c.b16 %v848, %v847
      %v1047 = vpack.c.b16 %v850, %v849
      %v1048 = vpack.c.b16 %v852, %v851
      %v1049 = vpack.c.b16 %v854, %v853
      %v1050 = vpack.c.b16 %v856, %v855
      %v1051 = vpack.c.b16 %v858, %v857
      %v1052 = vpack.c.b16 %v860, %v859
      %v1053 = vpack.c.b16 %v862, %v861
      %v1054 = vpack.c.b16 %v864, %v863
      %v1055 = vpack.c.b16 %v866, %v865
      %v1056 = vpack.c.b16 %v868, %v867
      %v1057 = vpack.c.b16 %v870, %v869
      %v1058 = vpack.c.b16 %v872, %v871
      %v1059 = vpack.c.b16 %v874, %v873
      %v1060 = vpack.c.b16 %v876, %v875
      %v1061 = vpack.c.b16 %v878, %v877
      %v1062 = vpack.c.b16 %v880, %v879
      %v1063 = vpack.c.b16 %v882, %v881
      %v1064 = vpack.c.b16 %v884, %v883
      %v1065 = vpack.c.b16 %v886, %v885
      %v1066 = vpack.c.b16 %v888, %v887
      %v1067 = vpack.c.b16 %v890, %v889
      %v1068 = vpack.c.b16 %v892, %v891
      %v1069 = vpack.c.b16 %v894, %v893
      %v1070 = vpack.c.b16 %v896, %v895
      %v1071 = vpack.c.b16 %v898, %v897
      %v1072 = vpack.c.b16 %v900, %v899
      %v1073 = vpack.c.b16 %v902, %v901
      %v1074 = vpack.c.b16 %v904, %v903
      %v1075 = vpack.c.b16 %v906, %v905
      %v1076 = vpack.c.b16 %v908, %v907
      %v1077 = vpack.c.b16 %v910, %v909
      %v1078 = vpack.c.b16 %v912, %v911
      %v1079 = vpack.c.b16 %v914, %v913
      %v1080 = vpack.c.b16 %v916, %v915
      %v1081 = vpack.c.b16 %v918, %v917
      %v1082 = vpack.c.b16 %v920, %v919
      %v1083 = vpack.c.b16 %v922, %v921
      %v1084 = vpack.c.b16 %v924, %v923
      %v1085 = vpack.c.b16 %v926, %v925
      %v1086 = vpack.c.b16 %v928, %v927
      %v1087 = vpack.c.b16 %v930, %v929
      %v1088 = vpack.c.b16 %v932, %v931
      %v1089 = vpack.c.b16 %v934, %v933
      %v1090 = vpack.c.b16 %v936, %v935
      %v1091 = vpack.c.b16 %v938, %v937
      %v1092 = vpack.c.b16 %v940, %v939
      %v1093 = vpack.c.b16 %v942, %v941
      %v1094 = vpack.c.b16 %v944, %v943
      %v1095 = vpack.c.b16 %v946, %v945
      %v1096 = vpack.c.b16 %v948, %v947
      %v1097 = vpack.c.b16 %v950, %v949
      %v1098 = vpack.c.b16 %v952, %v951
      %v1099 = vpack.c.b16 %v954, %v953
      %v1100 = vpack.c.b16 %v956, %v955
      %v1101 = vpack.c.b16 %v958, %v957
      %v1102 = vpack.c.b16 %v960, %v959
      %v1103 = vpack.c.b16 %v962, %v961
      %v1104 = vpack.c.b16 %v964, %v963
      %v1105 = vpack.c.b16 %v966, %v965
      %v1106 = vpack.c.b16 %v968, %v967
      %v1107 = vpack.c.b16 %v970, %v969
      %v1108 = vpack.c.b16 %v972, %v971
      %v1109 = vpack.c.b16 %v974, %v973
      %v1110 = vpack.c.b16 %v976, %v975
      %v1111 = vpack.c.b16 %v978, %v977
      %v1112 = vpack.c.b16 %v980, %v979
      %v1113 = vpack.c.b16 %v982, %v981
      %v1114 = vpack.c.b16 %v984, %v983
      %v1115 = vpack.c.b16 %v986, %v985
      %v1116 = vpack.c.b16 %v988, %v987
      %v1261 = vunpack.c.l.b16 %v454
      %v1262 = vunpack.c.l.b16 %v455
      %v1263 = vunpack.c.l.b16 %v456
      %v1264 = vunpack.c.l.b16 %v457
      %v1265 = vunpack.c.l.b16 %v458
      %v1266 = vunpack.c.l.b16 %v459
      %v1267 = vunpack.c.l.b16 %v460
      %v1268 = vunpack.c.l.b16 %v461
      %v1269 = vunpack.c.l.b16 %v462
      %v1270 = vunpack.c.l.b16 %v463
      %v1271 = vunpack.c.l.b16 %v464
      %v1272 = vunpack.c.l.b16 %v465
      %v1273 = vunpack.c.l.b16 %v466
      %v1274 = vunpack.c.l.b16 %v467
      %v1275 = vunpack.c.l.b16 %v468
      %v1276 = vunpack.c.l.b16 %v469
      %v1277 = vpack.c.b16 %v1262, %v1261
      %v1278 = vpack.c.b16 %v1264, %v1263
      %v1279 = vpack.c.b16 %v1266, %v1265
      %v1280 = vpack.c.b16 %v1268, %v1267
      %v1281 = vpack.c.b16 %v1270, %v1269
      %v1282 = vpack.c.b16 %v1272, %v1271
      %v1283 = vpack.c.b16 %v1274, %v1273
      %v1284 = vpack.c.b16 %v1276, %v1275
      %1293 = vmatprep.subr.bf16.mxu0 0
      %1294 = vmatpush1.bf16.msra.mxu0 %v1277
      %1295 = vmatprep.subr.bf16.mxu0 0
      %1296 = vmatpush1.bf16.msra.mxu0 %v1278
      %1297 = vmatprep.subr.bf16.mxu0 0
      %1298 = vmatpush1.bf16.msra.mxu0 %v1279
      %1299 = vmatprep.subr.bf16.mxu0 0
      %1300 = vmatpush1.bf16.msra.mxu0 %v1280
      %1301 = vmatprep.subr.bf16.mxu0 0
      %1302 = vmatpush1.bf16.msra.mxu0 %v1281
      %1303 = vmatprep.subr.bf16.mxu0 0
      %1304 = vmatpush1.bf16.msra.mxu0 %v1282
      %1305 = vmatprep.subr.bf16.mxu0 0
      %1306 = vmatpush1.bf16.msra.mxu0 %v1283
      %1307 = vmatprep.subr.bf16.mxu0 0
      %1308 = vmatpush1.bf16.msra.mxu0 %v1284
      %1309 = vmatprep.subr.bf16.mxu0 0
      %1310 = vmatpush1.bf16.msra.mxu0 0
      %1311 = vmatprep.subr.bf16.mxu0 0
      %1312 = vmatpush1.bf16.msra.mxu0 0
      %1313 = vmatprep.subr.bf16.mxu0 0
      %1314 = vmatpush1.bf16.msra.mxu0 0
      %1315 = vmatprep.subr.bf16.mxu0 0
      %1316 = vmatpush1.bf16.msra.mxu0 0
      %1317 = vmatprep.subr.bf16.mxu0 0
      %1318 = vmatpush1.bf16.msra.mxu0 0
      %1319 = vmatprep.subr.bf16.mxu0 0
      %1320 = vmatpush1.bf16.msra.mxu0 0
      %1321 = vmatprep.subr.bf16.mxu0 0
      %1322 = vmatpush1.bf16.msra.mxu0 0
      %1323 = vmatprep.subr.bf16.mxu0 0
      %1324 = vmatpush1.bf16.msra.mxu0 0
      %1325 = vmatprep.mubr.bf16.mxu0 0
      %1326 = vmatmul.mubr.bf16.gmra.mrb[0].mxu0 %v989
      %v1327 = vpop.f32.mrb[0].mxu0
      %v1328 = vadd.f32 %v475, %v1327
      %v1329 = vpop.f32.mrb[0].mxu0
      %v1330 = vpop.f32.mrb[0].mxu0
      %v1331 = vadd.f32 %v475, %v1330
      %v1332 = vpop.f32.mrb[0].mxu0
      %1333 = vmatprep.mubr.bf16.mxu0 0
      %1334 = vmatmul.mubr.bf16.gmra.mrb[0].mxu0 %v990
      %v1335 = vpop.f32.mrb[0].mxu0
      %v1336 = vadd.f32 %v475, %v1335
      %v1337 = vpop.f32.mrb[0].mxu0
      %v1338 = vpop.f32.mrb[0].mxu0
      %v1339 = vadd.f32 %v475, %v1338
      %v1340 = vpop.f32.mrb[0].mxu0
      %1341 = vmatprep.mubr.bf16.mxu0 0
      %1342 = vmatmul.mubr.bf16.gmra.mrb[0].mxu0 %v991
      %v1343 = vpop.f32.mrb[0].mxu0
      %v1344 = vadd.f32 %v475, %v1343
      %v1345 = vpop.f32.mrb[0].mxu0
      %v1346 = vpop.f32.mrb[0].mxu0
      %v1347 = vadd.f32 %v475, %v1346
      %v1348 = vpop.f32.mrb[0].mxu0
      %1349 = vmatprep.mubr.bf16.mxu0 0
      %1350 = vmatmul.mubr.bf16.gmra.mrb[0].mxu0 %v992
      %v1351 = vpop.f32.mrb[0].mxu0
      %v1352 = vadd.f32 %v475, %v1351
      %v1353 = vpop.f32.mrb[0].mxu0
      %v1354 = vpop.f32.mrb[0].mxu0
      %v1355 = vadd.f32 %v475, %v1354
      %v1356 = vpop.f32.mrb[0].mxu0
      %1357 = vmatprep.mubr.bf16.mxu0 0
      %1358 = vmatmul.mubr.bf16.gmra.mrb[0].mxu0 %v993
      %v1359 = vpop.f32.mrb[0].mxu0
      %v1360 = vadd.f32 %v475, %v1359
      %v1361 = vpop.f32.mrb[0].mxu0
      %v1362 = vpop.f32.mrb[0].mxu0
      %v1363 = vadd.f32 %v475, %v1362
      %v1364 = vpop.f32.mrb[0].mxu0
      %1365 = vmatprep.mubr.bf16.mxu0 0
      %1366 = vmatmul.mubr.bf16.gmra.mrb[0].mxu0 %v994
      %v1367 = vpop.f32.mrb[0].mxu0
      %v1368 = vadd.f32 %v475, %v1367
      %v1369 = vpop.f32.mrb[0].mxu0
      %v1370 = vpop.f32.mrb[0].mxu0
      %v1371 = vadd.f32 %v475, %v1370
      %v1372 = vpop.f32.mrb[0].mxu0
      %1373 = vmatprep.mubr.bf16.mxu0 0
      %1374 = vmatmul.mubr.bf16.gmra.mrb[0].mxu0 %v995
      %v1375 = vpop.f32.mrb[0].mxu0
      %v1376 = vadd.f32 %v475, %v1375
      %v1377 = vpop.f32.mrb[0].mxu0
      %v1378 = vpop.f32.mrb[0].mxu0
      %v1379 = vadd.f32 %v475, %v1378
      %v1380 = vpop.f32.mrb[0].mxu0
      %1381 = vmatprep.mubr.bf16.mxu0 0
      %1382 = vmatmul.mubr.bf16.gmra.mrb[0].mxu0 %v996
      %v1383 = vpop.f32.mrb[0].mxu0
      %v1384 = vadd.f32 %v475, %v1383
      %v1385 = vpop.f32.mrb[0].mxu0
      %v1386 = vpop.f32.mrb[0].mxu0
      %v1387 = vadd.f32 %v475, %v1386
      %v1388 = vpop.f32.mrb[0].mxu0
      %1389 = vmatprep.mubr.bf16.mxu0 0
      %1390 = vmatmul.mubr.bf16.gmra.mrb[0].mxu0 %v997
      %v1391 = vpop.f32.mrb[0].mxu0
      %v1392 = vadd.f32 %v475, %v1391
      %v1393 = vpop.f32.mrb[0].mxu0
      %v1394 = vpop.f32.mrb[0].mxu0
      %v1395 = vadd.f32 %v475, %v1394
      %v1396 = vpop.f32.mrb[0].mxu0
      %1397 = vmatprep.mubr.bf16.mxu0 0
      %1398 = vmatmul.mubr.bf16.gmra.mrb[0].mxu0 %v998
      %v1399 = vpop.f32.mrb[0].mxu0
      %v1400 = vadd.f32 %v475, %v1399
      %v1401 = vpop.f32.mrb[0].mxu0
      %v1402 = vpop.f32.mrb[0].mxu0
      %v1403 = vadd.f32 %v475, %v1402
      %v1404 = vpop.f32.mrb[0].mxu0
      %1405 = vmatprep.mubr.bf16.mxu0 0
      %1406 = vmatmul.mubr.bf16.gmra.mrb[0].mxu0 %v999
      %v1407 = vpop.f32.mrb[0].mxu0
      %v1408 = vadd.f32 %v475, %v1407
      %v1409 = vpop.f32.mrb[0].mxu0
      %v1410 = vpop.f32.mrb[0].mxu0
      %v1411 = vadd.f32 %v475, %v1410
      %v1412 = vpop.f32.mrb[0].mxu0
      %1413 = vmatprep.mubr.bf16.mxu0 0
      %1414 = vmatmul.mubr.bf16.gmra.mrb[0].mxu0 %v1000
      %v1415 = vpop.f32.mrb[0].mxu0
      %v1416 = vadd.f32 %v475, %v1415
      %v1417 = vpop.f32.mrb[0].mxu0
      %v1418 = vpop.f32.mrb[0].mxu0
      %v1419 = vadd.f32 %v475, %v1418
      %v1420 = vpop.f32.mrb[0].mxu0
      %1421 = vmatprep.mubr.bf16.mxu0 0
      %1422 = vmatmul.mubr.bf16.gmra.mrb[0].mxu0 %v1001
      %v1423 = vpop.f32.mrb[0].mxu0
      %v1424 = vadd.f32 %v475, %v1423
      %v1425 = vpop.f32.mrb[0].mxu0
      %v1426 = vpop.f32.mrb[0].mxu0
      %v1427 = vadd.f32 %v475, %v1426
      %v1428 = vpop.f32.mrb[0].mxu0
      %1429 = vmatprep.mubr.bf16.mxu0 0
      %1430 = vmatmul.mubr.bf16.gmra.mrb[0].mxu0 %v1002
      %v1431 = vpop.f32.mrb[0].mxu0
      %v1432 = vadd.f32 %v475, %v1431
      %v1433 = vpop.f32.mrb[0].mxu0
      %v1434 = vpop.f32.mrb[0].mxu0
      %v1435 = vadd.f32 %v475, %v1434
      %v1436 = vpop.f32.mrb[0].mxu0
      %1437 = vmatprep.mubr.bf16.mxu0 0
      %1438 = vmatmul.mubr.bf16.gmra.mrb[0].mxu0 %v1003
      %v1439 = vpop.f32.mrb[0].mxu0
      %v1440 = vadd.f32 %v475, %v1439
      %v1441 = vpop.f32.mrb[0].mxu0
      %v1442 = vpop.f32.mrb[0].mxu0
      %v1443 = vadd.f32 %v475, %v1442
      %v1444 = vpop.f32.mrb[0].mxu0
      %1445 = vmatprep.mubr.bf16.mxu0 0
      %1446 = vmatmul.mubr.bf16.gmra.mrb[0].mxu0 %v1004
      %v1447 = vpop.f32.mrb[0].mxu0
      %v1448 = vadd.f32 %v475, %v1447
      %v1449 = vpop.f32.mrb[0].mxu0
      %v1450 = vpop.f32.mrb[0].mxu0
      %v1451 = vadd.f32 %v475, %v1450
      %v1452 = vpop.f32.mrb[0].mxu0
      %1453 = vmatprep.mubr.bf16.mxu0 0
      %1454 = vmatmul.mubr.bf16.gmra.mrb[0].mxu0 %v1005
      %v1455 = vpop.f32.mrb[0].mxu0
      %v1456 = vadd.f32 %v475, %v1455
      %v1457 = vpop.f32.mrb[0].mxu0
      %v1458 = vpop.f32.mrb[0].mxu0
      %v1459 = vadd.f32 %v475, %v1458
      %v1460 = vpop.f32.mrb[0].mxu0
      %1461 = vmatprep.mubr.bf16.mxu0 0
      %1462 = vmatmul.mubr.bf16.gmra.mrb[0].mxu0 %v1006
      %v1463 = vpop.f32.mrb[0].mxu0
      %v1464 = vadd.f32 %v475, %v1463
      %v1465 = vpop.f32.mrb[0].mxu0
      %v1466 = vpop.f32.mrb[0].mxu0
      %v1467 = vadd.f32 %v475, %v1466
      %v1468 = vpop.f32.mrb[0].mxu0
      %1469 = vmatprep.mubr.bf16.mxu0 0
      %1470 = vmatmul.mubr.bf16.gmra.mrb[0].mxu0 %v1007
      %v1471 = vpop.f32.mrb[0].mxu0
      %v1472 = vadd.f32 %v475, %v1471
      %v1473 = vpop.f32.mrb[0].mxu0
      %v1474 = vpop.f32.mrb[0].mxu0
      %v1475 = vadd.f32 %v475, %v1474
      %v1476 = vpop.f32.mrb[0].mxu0
      %1477 = vmatprep.mubr.bf16.mxu0 0
      %1478 = vmatmul.mubr.bf16.gmra.mrb[0].mxu0 %v1008
      %v1479 = vpop.f32.mrb[0].mxu0
      %v1480 = vadd.f32 %v475, %v1479
      %v1481 = vpop.f32.mrb[0].mxu0
      %v1482 = vpop.f32.mrb[0].mxu0
      %v1483 = vadd.f32 %v475, %v1482
      %v1484 = vpop.f32.mrb[0].mxu0
      %1485 = vmatprep.mubr.bf16.mxu0 0
      %1486 = vmatmul.mubr.bf16.gmra.mrb[0].mxu0 %v1009
      %v1487 = vpop.f32.mrb[0].mxu0
      %v1488 = vadd.f32 %v475, %v1487
      %v1489 = vpop.f32.mrb[0].mxu0
      %v1490 = vpop.f32.mrb[0].mxu0
      %v1491 = vadd.f32 %v475, %v1490
      %v1492 = vpop.f32.mrb[0].mxu0
      %1493 = vmatprep.mubr.bf16.mxu0 0
      %1494 = vmatmul.mubr.bf16.gmra.mrb[0].mxu0 %v1010
      %v1495 = vpop.f32.mrb[0].mxu0
      %v1496 = vadd.f32 %v475, %v1495
      %v1497 = vpop.f32.mrb[0].mxu0
      %v1498 = vpop.f32.mrb[0].mxu0
      %v1499 = vadd.f32 %v475, %v1498
      %v1500 = vpop.f32.mrb[0].mxu0
      %1501 = vmatprep.mubr.bf16.mxu0 0
      %1502 = vmatmul.mubr.bf16.gmra.mrb[0].mxu0 %v1011
      %v1503 = vpop.f32.mrb[0].mxu0
      %v1504 = vadd.f32 %v475, %v1503
      %v1505 = vpop.f32.mrb[0].mxu0
      %v1506 = vpop.f32.mrb[0].mxu0
      %v1507 = vadd.f32 %v475, %v1506
      %v1508 = vpop.f32.mrb[0].mxu0
      %1509 = vmatprep.mubr.bf16.mxu0 0
      %1510 = vmatmul.mubr.bf16.gmra.mrb[0].mxu0 %v1012
      %v1511 = vpop.f32.mrb[0].mxu0
      %v1512 = vadd.f32 %v475, %v1511
      %v1513 = vpop.f32.mrb[0].mxu0
      %v1514 = vpop.f32.mrb[0].mxu0
      %v1515 = vadd.f32 %v475, %v1514
      %v1516 = vpop.f32.mrb[0].mxu0
      %1517 = vmatprep.mubr.bf16.mxu0 0
      %1518 = vmatmul.mubr.bf16.gmra.mrb[0].mxu0 %v1013
      %v1519 = vpop.f32.mrb[0].mxu0
      %v1520 = vadd.f32 %v475, %v1519
      %v1521 = vpop.f32.mrb[0].mxu0
      %v1522 = vpop.f32.mrb[0].mxu0
      %v1523 = vadd.f32 %v475, %v1522
      %v1524 = vpop.f32.mrb[0].mxu0
      %1525 = vmatprep.mubr.bf16.mxu0 0
      %1526 = vmatmul.mubr.bf16.gmra.mrb[0].mxu0 %v1014
      %v1527 = vpop.f32.mrb[0].mxu0
      %v1528 = vadd.f32 %v475, %v1527
      %v1529 = vpop.f32.mrb[0].mxu0
      %v1530 = vpop.f32.mrb[0].mxu0
      %v1531 = vadd.f32 %v475, %v1530
      %v1532 = vpop.f32.mrb[0].mxu0
      %1533 = vmatprep.mubr.bf16.mxu0 0
      %1534 = vmatmul.mubr.bf16.gmra.mrb[0].mxu0 %v1015
      %v1535 = vpop.f32.mrb[0].mxu0
      %v1536 = vadd.f32 %v475, %v1535
      %v1537 = vpop.f32.mrb[0].mxu0
      %v1538 = vpop.f32.mrb[0].mxu0
      %v1539 = vadd.f32 %v475, %v1538
      %v1540 = vpop.f32.mrb[0].mxu0
      %1541 = vmatprep.mubr.bf16.mxu0 0
      %1542 = vmatmul.mubr.bf16.gmra.mrb[0].mxu0 %v1016
      %v1543 = vpop.f32.mrb[0].mxu0
      %v1544 = vadd.f32 %v475, %v1543
      %v1545 = vpop.f32.mrb[0].mxu0
      %v1546 = vpop.f32.mrb[0].mxu0
      %v1547 = vadd.f32 %v475, %v1546
      %v1548 = vpop.f32.mrb[0].mxu0
      %1549 = vmatprep.mubr.bf16.mxu0 0
      %1550 = vmatmul.mubr.bf16.gmra.mrb[0].mxu0 %v1017
      %v1551 = vpop.f32.mrb[0].mxu0
      %v1552 = vadd.f32 %v475, %v1551
      %v1553 = vpop.f32.mrb[0].mxu0
      %v1554 = vpop.f32.mrb[0].mxu0
      %v1555 = vadd.f32 %v475, %v1554
      %v1556 = vpop.f32.mrb[0].mxu0
      %1557 = vmatprep.mubr.bf16.mxu0 0
      %1558 = vmatmul.mubr.bf16.gmra.mrb[0].mxu0 %v1018
      %v1559 = vpop.f32.mrb[0].mxu0
      %v1560 = vadd.f32 %v475, %v1559
      %v1561 = vpop.f32.mrb[0].mxu0
      %v1562 = vpop.f32.mrb[0].mxu0
      %v1563 = vadd.f32 %v475, %v1562
      %v1564 = vpop.f32.mrb[0].mxu0
      %1565 = vmatprep.mubr.bf16.mxu0 0
      %1566 = vmatmul.mubr.bf16.gmra.mrb[0].mxu0 %v1019
      %v1567 = vpop.f32.mrb[0].mxu0
      %v1568 = vadd.f32 %v475, %v1567
      %v1569 = vpop.f32.mrb[0].mxu0
      %v1570 = vpop.f32.mrb[0].mxu0
      %v1571 = vadd.f32 %v475, %v1570
      %v1572 = vpop.f32.mrb[0].mxu0
      %1573 = vmatprep.mubr.bf16.mxu0 0
      %1574 = vmatmul.mubr.bf16.gmra.mrb[0].mxu0 %v1020
      %v1575 = vpop.f32.mrb[0].mxu0
      %v1576 = vadd.f32 %v475, %v1575
      %v1577 = vpop.f32.mrb[0].mxu0
      %v1578 = vpop.f32.mrb[0].mxu0
      %v1579 = vadd.f32 %v475, %v1578
      %v1580 = vpop.f32.mrb[0].mxu0
      %1581 = vmatprep.mubr.bf16.mxu0 0
      %1582 = vmatmul.mubr.bf16.gmra.mrb[0].mxu0 %v1021
      %v1583 = vpop.f32.mrb[0].mxu0
      %v1584 = vadd.f32 %v475, %v1583
      %v1585 = vpop.f32.mrb[0].mxu0
      %v1586 = vpop.f32.mrb[0].mxu0
      %v1587 = vadd.f32 %v475, %v1586
      %v1588 = vpop.f32.mrb[0].mxu0
      %1589 = vmatprep.mubr.bf16.mxu0 0
      %1590 = vmatmul.mubr.bf16.gmra.mrb[0].mxu0 %v1022
      %v1591 = vpop.f32.mrb[0].mxu0
      %v1592 = vadd.f32 %v475, %v1591
      %v1593 = vpop.f32.mrb[0].mxu0
      %v1594 = vpop.f32.mrb[0].mxu0
      %v1595 = vadd.f32 %v475, %v1594
      %v1596 = vpop.f32.mrb[0].mxu0
      %1597 = vmatprep.mubr.bf16.mxu0 0
      %1598 = vmatmul.mubr.bf16.gmra.mrb[0].mxu0 %v1023
      %v1599 = vpop.f32.mrb[0].mxu0
      %v1600 = vadd.f32 %v475, %v1599
      %v1601 = vpop.f32.mrb[0].mxu0
      %v1602 = vpop.f32.mrb[0].mxu0
      %v1603 = vadd.f32 %v475, %v1602
      %v1604 = vpop.f32.mrb[0].mxu0
      %1605 = vmatprep.mubr.bf16.mxu0 0
      %1606 = vmatmul.mubr.bf16.gmra.mrb[0].mxu0 %v1024
      %v1607 = vpop.f32.mrb[0].mxu0
      %v1608 = vadd.f32 %v475, %v1607
      %v1609 = vpop.f32.mrb[0].mxu0
      %v1610 = vpop.f32.mrb[0].mxu0
      %v1611 = vadd.f32 %v475, %v1610
      %v1612 = vpop.f32.mrb[0].mxu0
      %1613 = vmatprep.mubr.bf16.mxu0 0
      %1614 = vmatmul.mubr.bf16.gmra.mrb[0].mxu0 %v1025
      %v1615 = vpop.f32.mrb[0].mxu0
      %v1616 = vadd.f32 %v475, %v1615
      %v1617 = vpop.f32.mrb[0].mxu0
      %v1618 = vpop.f32.mrb[0].mxu0
      %v1619 = vadd.f32 %v475, %v1618
      %v1620 = vpop.f32.mrb[0].mxu0
      %1621 = vmatprep.mubr.bf16.mxu0 0
      %1622 = vmatmul.mubr.bf16.gmra.mrb[0].mxu0 %v1026
      %v1623 = vpop.f32.mrb[0].mxu0
      %v1624 = vadd.f32 %v475, %v1623
      %v1625 = vpop.f32.mrb[0].mxu0
      %v1626 = vpop.f32.mrb[0].mxu0
      %v1627 = vadd.f32 %v475, %v1626
      %v1628 = vpop.f32.mrb[0].mxu0
      %1629 = vmatprep.mubr.bf16.mxu0 0
      %1630 = vmatmul.mubr.bf16.gmra.mrb[0].mxu0 %v1027
      %v1631 = vpop.f32.mrb[0].mxu0
      %v1632 = vadd.f32 %v475, %v1631
      %v1633 = vpop.f32.mrb[0].mxu0
      %v1634 = vpop.f32.mrb[0].mxu0
      %v1635 = vadd.f32 %v475, %v1634
      %v1636 = vpop.f32.mrb[0].mxu0
      %1637 = vmatprep.mubr.bf16.mxu0 0
      %1638 = vmatmul.mubr.bf16.gmra.mrb[0].mxu0 %v1028
      %v1639 = vpop.f32.mrb[0].mxu0
      %v1640 = vadd.f32 %v475, %v1639
      %v1641 = vpop.f32.mrb[0].mxu0
      %v1642 = vpop.f32.mrb[0].mxu0
      %v1643 = vadd.f32 %v475, %v1642
      %v1644 = vpop.f32.mrb[0].mxu0
      %1645 = vmatprep.mubr.bf16.mxu0 0
      %1646 = vmatmul.mubr.bf16.gmra.mrb[0].mxu0 %v1029
      %v1647 = vpop.f32.mrb[0].mxu0
      %v1648 = vadd.f32 %v475, %v1647
      %v1649 = vpop.f32.mrb[0].mxu0
      %v1650 = vpop.f32.mrb[0].mxu0
      %v1651 = vadd.f32 %v475, %v1650
      %v1652 = vpop.f32.mrb[0].mxu0
      %1653 = vmatprep.mubr.bf16.mxu0 0
      %1654 = vmatmul.mubr.bf16.gmra.mrb[0].mxu0 %v1030
      %v1655 = vpop.f32.mrb[0].mxu0
      %v1656 = vadd.f32 %v475, %v1655
      %v1657 = vpop.f32.mrb[0].mxu0
      %v1658 = vpop.f32.mrb[0].mxu0
      %v1659 = vadd.f32 %v475, %v1658
      %v1660 = vpop.f32.mrb[0].mxu0
      %1661 = vmatprep.mubr.bf16.mxu0 0
      %1662 = vmatmul.mubr.bf16.gmra.mrb[0].mxu0 %v1031
      %v1663 = vpop.f32.mrb[0].mxu0
      %v1664 = vadd.f32 %v475, %v1663
      %v1665 = vpop.f32.mrb[0].mxu0
      %v1666 = vpop.f32.mrb[0].mxu0
      %v1667 = vadd.f32 %v475, %v1666
      %v1668 = vpop.f32.mrb[0].mxu0
      %1669 = vmatprep.mubr.bf16.mxu0 0
      %1670 = vmatmul.mubr.bf16.gmra.mrb[0].mxu0 %v1032
      %v1671 = vpop.f32.mrb[0].mxu0
      %v1672 = vadd.f32 %v475, %v1671
      %v1673 = vpop.f32.mrb[0].mxu0
      %v1674 = vpop.f32.mrb[0].mxu0
      %v1675 = vadd.f32 %v475, %v1674
      %v1676 = vpop.f32.mrb[0].mxu0
      %1677 = vmatprep.mubr.bf16.mxu0 0
      %1678 = vmatmul.mubr.bf16.gmra.mrb[0].mxu0 %v1033
      %v1679 = vpop.f32.mrb[0].mxu0
      %v1680 = vadd.f32 %v475, %v1679
      %v1681 = vpop.f32.mrb[0].mxu0
      %v1682 = vpop.f32.mrb[0].mxu0
      %v1683 = vadd.f32 %v475, %v1682
      %v1684 = vpop.f32.mrb[0].mxu0
      %1685 = vmatprep.mubr.bf16.mxu0 0
      %1686 = vmatmul.mubr.bf16.gmra.mrb[0].mxu0 %v1034
      %v1687 = vpop.f32.mrb[0].mxu0
      %v1688 = vadd.f32 %v475, %v1687
      %v1689 = vpop.f32.mrb[0].mxu0
      %v1690 = vpop.f32.mrb[0].mxu0
      %v1691 = vadd.f32 %v475, %v1690
      %v1692 = vpop.f32.mrb[0].mxu0
      %1693 = vmatprep.mubr.bf16.mxu0 0
      %1694 = vmatmul.mubr.bf16.gmra.mrb[0].mxu0 %v1035
      %v1695 = vpop.f32.mrb[0].mxu0
      %v1696 = vadd.f32 %v475, %v1695
      %v1697 = vpop.f32.mrb[0].mxu0
      %v1698 = vpop.f32.mrb[0].mxu0
      %v1699 = vadd.f32 %v475, %v1698
      %v1700 = vpop.f32.mrb[0].mxu0
      %1701 = vmatprep.mubr.bf16.mxu0 0
      %1702 = vmatmul.mubr.bf16.gmra.mrb[0].mxu0 %v1036
      %v1703 = vpop.f32.mrb[0].mxu0
      %v1704 = vadd.f32 %v475, %v1703
      %v1705 = vpop.f32.mrb[0].mxu0
      %v1706 = vpop.f32.mrb[0].mxu0
      %v1707 = vadd.f32 %v475, %v1706
      %v1708 = vpop.f32.mrb[0].mxu0
      %1709 = vmatprep.mubr.bf16.mxu0 0
      %1710 = vmatmul.mubr.bf16.gmra.mrb[0].mxu0 %v1037
      %v1711 = vpop.f32.mrb[0].mxu0
      %v1712 = vadd.f32 %v475, %v1711
      %v1713 = vpop.f32.mrb[0].mxu0
      %v1714 = vpop.f32.mrb[0].mxu0
      %v1715 = vadd.f32 %v475, %v1714
      %v1716 = vpop.f32.mrb[0].mxu0
      %1717 = vmatprep.mubr.bf16.mxu0 0
      %1718 = vmatmul.mubr.bf16.gmra.mrb[0].mxu0 %v1038
      %v1719 = vpop.f32.mrb[0].mxu0
      %v1720 = vadd.f32 %v475, %v1719
      %v1721 = vpop.f32.mrb[0].mxu0
      %v1722 = vpop.f32.mrb[0].mxu0
      %v1723 = vadd.f32 %v475, %v1722
      %v1724 = vpop.f32.mrb[0].mxu0
      %1725 = vmatprep.mubr.bf16.mxu0 0
      %1726 = vmatmul.mubr.bf16.gmra.mrb[0].mxu0 %v1039
      %v1727 = vpop.f32.mrb[0].mxu0
      %v1728 = vadd.f32 %v475, %v1727
      %v1729 = vpop.f32.mrb[0].mxu0
      %v1730 = vpop.f32.mrb[0].mxu0
      %v1731 = vadd.f32 %v475, %v1730
      %v1732 = vpop.f32.mrb[0].mxu0
      %1733 = vmatprep.mubr.bf16.mxu0 0
      %1734 = vmatmul.mubr.bf16.gmra.mrb[0].mxu0 %v1040
      %v1735 = vpop.f32.mrb[0].mxu0
      %v1736 = vadd.f32 %v475, %v1735
      %v1737 = vpop.f32.mrb[0].mxu0
      %v1738 = vpop.f32.mrb[0].mxu0
      %v1739 = vadd.f32 %v475, %v1738
      %v1740 = vpop.f32.mrb[0].mxu0
      %1741 = vmatprep.mubr.bf16.mxu0 0
      %1742 = vmatmul.mubr.bf16.gmra.mrb[0].mxu0 %v1041
      %v1743 = vpop.f32.mrb[0].mxu0
      %v1744 = vadd.f32 %v475, %v1743
      %v1745 = vpop.f32.mrb[0].mxu0
      %v1746 = vpop.f32.mrb[0].mxu0
      %v1747 = vadd.f32 %v475, %v1746
      %v1748 = vpop.f32.mrb[0].mxu0
      %1749 = vmatprep.mubr.bf16.mxu0 0
      %1750 = vmatmul.mubr.bf16.gmra.mrb[0].mxu0 %v1042
      %v1751 = vpop.f32.mrb[0].mxu0
      %v1752 = vadd.f32 %v475, %v1751
      %v1753 = vpop.f32.mrb[0].mxu0
      %v1754 = vpop.f32.mrb[0].mxu0
      %v1755 = vadd.f32 %v475, %v1754
      %v1756 = vpop.f32.mrb[0].mxu0
      %1757 = vmatprep.mubr.bf16.mxu0 0
      %1758 = vmatmul.mubr.bf16.gmra.mrb[0].mxu0 %v1043
      %v1759 = vpop.f32.mrb[0].mxu0
      %v1760 = vadd.f32 %v475, %v1759
      %v1761 = vpop.f32.mrb[0].mxu0
      %v1762 = vpop.f32.mrb[0].mxu0
      %v1763 = vadd.f32 %v475, %v1762
      %v1764 = vpop.f32.mrb[0].mxu0
      %1765 = vmatprep.mubr.bf16.mxu0 0
      %1766 = vmatmul.mubr.bf16.gmra.mrb[0].mxu0 %v1044
      %v1767 = vpop.f32.mrb[0].mxu0
      %v1768 = vadd.f32 %v475, %v1767
      %v1769 = vpop.f32.mrb[0].mxu0
      %v1770 = vpop.f32.mrb[0].mxu0
      %v1771 = vadd.f32 %v475, %v1770
      %v1772 = vpop.f32.mrb[0].mxu0
      %1773 = vmatprep.mubr.bf16.mxu0 0
      %1774 = vmatmul.mubr.bf16.gmra.mrb[0].mxu0 %v1045
      %v1775 = vpop.f32.mrb[0].mxu0
      %v1776 = vadd.f32 %v475, %v1775
      %v1777 = vpop.f32.mrb[0].mxu0
      %v1778 = vpop.f32.mrb[0].mxu0
      %v1779 = vadd.f32 %v475, %v1778
      %v1780 = vpop.f32.mrb[0].mxu0
      %1781 = vmatprep.mubr.bf16.mxu0 0
      %1782 = vmatmul.mubr.bf16.gmra.mrb[0].mxu0 %v1046
      %v1783 = vpop.f32.mrb[0].mxu0
      %v1784 = vadd.f32 %v475, %v1783
      %v1785 = vpop.f32.mrb[0].mxu0
      %v1786 = vpop.f32.mrb[0].mxu0
      %v1787 = vadd.f32 %v475, %v1786
      %v1788 = vpop.f32.mrb[0].mxu0
      %1789 = vmatprep.mubr.bf16.mxu0 0
      %1790 = vmatmul.mubr.bf16.gmra.mrb[0].mxu0 %v1047
      %v1791 = vpop.f32.mrb[0].mxu0
      %v1792 = vadd.f32 %v475, %v1791
      %v1793 = vpop.f32.mrb[0].mxu0
      %v1794 = vpop.f32.mrb[0].mxu0
      %v1795 = vadd.f32 %v475, %v1794
      %v1796 = vpop.f32.mrb[0].mxu0
      %1797 = vmatprep.mubr.bf16.mxu0 0
      %1798 = vmatmul.mubr.bf16.gmra.mrb[0].mxu0 %v1048
      %v1799 = vpop.f32.mrb[0].mxu0
      %v1800 = vadd.f32 %v475, %v1799
      %v1801 = vpop.f32.mrb[0].mxu0
      %v1802 = vpop.f32.mrb[0].mxu0
      %v1803 = vadd.f32 %v475, %v1802
      %v1804 = vpop.f32.mrb[0].mxu0
      %1805 = vmatprep.mubr.bf16.mxu0 0
      %1806 = vmatmul.mubr.bf16.gmra.mrb[0].mxu0 %v1049
      %v1807 = vpop.f32.mrb[0].mxu0
      %v1808 = vadd.f32 %v475, %v1807
      %v1809 = vpop.f32.mrb[0].mxu0
      %v1810 = vpop.f32.mrb[0].mxu0
      %v1811 = vadd.f32 %v475, %v1810
      %v1812 = vpop.f32.mrb[0].mxu0
      %1813 = vmatprep.mubr.bf16.mxu0 0
      %1814 = vmatmul.mubr.bf16.gmra.mrb[0].mxu0 %v1050
      %v1815 = vpop.f32.mrb[0].mxu0
      %v1816 = vadd.f32 %v475, %v1815
      %v1817 = vpop.f32.mrb[0].mxu0
      %v1818 = vpop.f32.mrb[0].mxu0
      %v1819 = vadd.f32 %v475, %v1818
      %v1820 = vpop.f32.mrb[0].mxu0
      %1821 = vmatprep.mubr.bf16.mxu0 0
      %1822 = vmatmul.mubr.bf16.gmra.mrb[0].mxu0 %v1051
      %v1823 = vpop.f32.mrb[0].mxu0
      %v1824 = vadd.f32 %v475, %v1823
      %v1825 = vpop.f32.mrb[0].mxu0
      %v1826 = vpop.f32.mrb[0].mxu0
      %v1827 = vadd.f32 %v475, %v1826
      %v1828 = vpop.f32.mrb[0].mxu0
      %1829 = vmatprep.mubr.bf16.mxu0 0
      %1830 = vmatmul.mubr.bf16.gmra.mrb[0].mxu0 %v1052
      %v1831 = vpop.f32.mrb[0].mxu0
      %v1832 = vadd.f32 %v475, %v1831
      %v1833 = vpop.f32.mrb[0].mxu0
      %v1834 = vpop.f32.mrb[0].mxu0
      %v1835 = vadd.f32 %v475, %v1834
      %v1836 = vpop.f32.mrb[0].mxu0
      %1837 = vmatprep.mubr.bf16.mxu0 0
      %1838 = vmatmul.mubr.bf16.gmra.mrb[0].mxu0 %v1053
      %v1839 = vpop.f32.mrb[0].mxu0
      %v1840 = vadd.f32 %v475, %v1839
      %v1841 = vpop.f32.mrb[0].mxu0
      %v1842 = vpop.f32.mrb[0].mxu0
      %v1843 = vadd.f32 %v475, %v1842
      %v1844 = vpop.f32.mrb[0].mxu0
      %1845 = vmatprep.mubr.bf16.mxu0 0
      %1846 = vmatmul.mubr.bf16.gmra.mrb[0].mxu0 %v1054
      %v1847 = vpop.f32.mrb[0].mxu0
      %v1848 = vadd.f32 %v475, %v1847
      %v1849 = vpop.f32.mrb[0].mxu0
      %v1850 = vpop.f32.mrb[0].mxu0
      %v1851 = vadd.f32 %v475, %v1850
      %v1852 = vpop.f32.mrb[0].mxu0
      %1853 = vmatprep.mubr.bf16.mxu0 0
      %1854 = vmatmul.mubr.bf16.gmra.mrb[0].mxu0 %v1055
      %v1855 = vpop.f32.mrb[0].mxu0
      %v1856 = vadd.f32 %v475, %v1855
      %v1857 = vpop.f32.mrb[0].mxu0
      %v1858 = vpop.f32.mrb[0].mxu0
      %v1859 = vadd.f32 %v475, %v1858
      %v1860 = vpop.f32.mrb[0].mxu0
      %1861 = vmatprep.mubr.bf16.mxu0 0
      %1862 = vmatmul.mubr.bf16.gmra.mrb[0].mxu0 %v1056
      %v1863 = vpop.f32.mrb[0].mxu0
      %v1864 = vadd.f32 %v475, %v1863
      %v1865 = vpop.f32.mrb[0].mxu0
      %v1866 = vpop.f32.mrb[0].mxu0
      %v1867 = vadd.f32 %v475, %v1866
      %v1868 = vpop.f32.mrb[0].mxu0
      %1869 = vmatprep.mubr.bf16.mxu0 0
      %1870 = vmatmul.mubr.bf16.gmra.mrb[0].mxu0 %v1057
      %v1871 = vpop.f32.mrb[0].mxu0
      %v1872 = vadd.f32 %v475, %v1871
      %v1873 = vpop.f32.mrb[0].mxu0
      %v1874 = vpop.f32.mrb[0].mxu0
      %v1875 = vadd.f32 %v475, %v1874
      %v1876 = vpop.f32.mrb[0].mxu0
      %1877 = vmatprep.mubr.bf16.mxu0 0
      %1878 = vmatmul.mubr.bf16.gmra.mrb[0].mxu0 %v1058
      %v1879 = vpop.f32.mrb[0].mxu0
      %v1880 = vadd.f32 %v475, %v1879
      %v1881 = vpop.f32.mrb[0].mxu0
      %v1882 = vpop.f32.mrb[0].mxu0
      %v1883 = vadd.f32 %v475, %v1882
      %v1884 = vpop.f32.mrb[0].mxu0
      %1885 = vmatprep.mubr.bf16.mxu0 0
      %1886 = vmatmul.mubr.bf16.gmra.mrb[0].mxu0 %v1059
      %v1887 = vpop.f32.mrb[0].mxu0
      %v1888 = vadd.f32 %v475, %v1887
      %v1889 = vpop.f32.mrb[0].mxu0
      %v1890 = vpop.f32.mrb[0].mxu0
      %v1891 = vadd.f32 %v475, %v1890
      %v1892 = vpop.f32.mrb[0].mxu0
      %1893 = vmatprep.mubr.bf16.mxu0 0
      %1894 = vmatmul.mubr.bf16.gmra.mrb[0].mxu0 %v1060
      %v1895 = vpop.f32.mrb[0].mxu0
      %v1896 = vadd.f32 %v475, %v1895
      %v1897 = vpop.f32.mrb[0].mxu0
      %v1898 = vpop.f32.mrb[0].mxu0
      %v1899 = vadd.f32 %v475, %v1898
      %v1900 = vpop.f32.mrb[0].mxu0
      %1901 = vmatprep.mubr.bf16.mxu0 0
      %1902 = vmatmul.mubr.bf16.gmra.mrb[0].mxu0 %v1061
      %v1903 = vpop.f32.mrb[0].mxu0
      %v1904 = vadd.f32 %v475, %v1903
      %v1905 = vpop.f32.mrb[0].mxu0
      %v1906 = vpop.f32.mrb[0].mxu0
      %v1907 = vadd.f32 %v475, %v1906
      %v1908 = vpop.f32.mrb[0].mxu0
      %1909 = vmatprep.mubr.bf16.mxu0 0
      %1910 = vmatmul.mubr.bf16.gmra.mrb[0].mxu0 %v1062
      %v1911 = vpop.f32.mrb[0].mxu0
      %v1912 = vadd.f32 %v475, %v1911
      %v1913 = vpop.f32.mrb[0].mxu0
      %v1914 = vpop.f32.mrb[0].mxu0
      %v1915 = vadd.f32 %v475, %v1914
      %v1916 = vpop.f32.mrb[0].mxu0
      %1917 = vmatprep.mubr.bf16.mxu0 0
      %1918 = vmatmul.mubr.bf16.gmra.mrb[0].mxu0 %v1063
      %v1919 = vpop.f32.mrb[0].mxu0
      %v1920 = vadd.f32 %v475, %v1919
      %v1921 = vpop.f32.mrb[0].mxu0
      %v1922 = vpop.f32.mrb[0].mxu0
      %v1923 = vadd.f32 %v475, %v1922
      %v1924 = vpop.f32.mrb[0].mxu0
      %1925 = vmatprep.mubr.bf16.mxu0 0
      %1926 = vmatmul.mubr.bf16.gmra.mrb[0].mxu0 %v1064
      %v1927 = vpop.f32.mrb[0].mxu0
      %v1928 = vadd.f32 %v475, %v1927
      %v1929 = vpop.f32.mrb[0].mxu0
      %v1930 = vpop.f32.mrb[0].mxu0
      %v1931 = vadd.f32 %v475, %v1930
      %v1932 = vpop.f32.mrb[0].mxu0
      %1933 = vmatprep.mubr.bf16.mxu0 0
      %1934 = vmatmul.mubr.bf16.gmra.mrb[0].mxu0 %v1065
      %v1935 = vpop.f32.mrb[0].mxu0
      %v1936 = vadd.f32 %v475, %v1935
      %v1937 = vpop.f32.mrb[0].mxu0
      %v1938 = vpop.f32.mrb[0].mxu0
      %v1939 = vadd.f32 %v475, %v1938
      %v1940 = vpop.f32.mrb[0].mxu0
      %1941 = vmatprep.mubr.bf16.mxu0 0
      %1942 = vmatmul.mubr.bf16.gmra.mrb[0].mxu0 %v1066
      %v1943 = vpop.f32.mrb[0].mxu0
      %v1944 = vadd.f32 %v475, %v1943
      %v1945 = vpop.f32.mrb[0].mxu0
      %v1946 = vpop.f32.mrb[0].mxu0
      %v1947 = vadd.f32 %v475, %v1946
      %v1948 = vpop.f32.mrb[0].mxu0
      %1949 = vmatprep.mubr.bf16.mxu0 0
      %1950 = vmatmul.mubr.bf16.gmra.mrb[0].mxu0 %v1067
      %v1951 = vpop.f32.mrb[0].mxu0
      %v1952 = vadd.f32 %v475, %v1951
      %v1953 = vpop.f32.mrb[0].mxu0
      %v1954 = vpop.f32.mrb[0].mxu0
      %v1955 = vadd.f32 %v475, %v1954
      %v1956 = vpop.f32.mrb[0].mxu0
      %1957 = vmatprep.mubr.bf16.mxu0 0
      %1958 = vmatmul.mubr.bf16.gmra.mrb[0].mxu0 %v1068
      %v1959 = vpop.f32.mrb[0].mxu0
      %v1960 = vadd.f32 %v475, %v1959
      %v1961 = vpop.f32.mrb[0].mxu0
      %v1962 = vpop.f32.mrb[0].mxu0
      %v1963 = vadd.f32 %v475, %v1962
      %v1964 = vpop.f32.mrb[0].mxu0
      %1965 = vmatprep.mubr.bf16.mxu0 0
      %1966 = vmatmul.mubr.bf16.gmra.mrb[0].mxu0 %v1069
      %v1967 = vpop.f32.mrb[0].mxu0
      %v1968 = vadd.f32 %v475, %v1967
      %v1969 = vpop.f32.mrb[0].mxu0
      %v1970 = vpop.f32.mrb[0].mxu0
      %v1971 = vadd.f32 %v475, %v1970
      %v1972 = vpop.f32.mrb[0].mxu0
      %1973 = vmatprep.mubr.bf16.mxu0 0
      %1974 = vmatmul.mubr.bf16.gmra.mrb[0].mxu0 %v1070
      %v1975 = vpop.f32.mrb[0].mxu0
      %v1976 = vadd.f32 %v475, %v1975
      %v1977 = vpop.f32.mrb[0].mxu0
      %v1978 = vpop.f32.mrb[0].mxu0
      %v1979 = vadd.f32 %v475, %v1978
      %v1980 = vpop.f32.mrb[0].mxu0
      %1981 = vmatprep.mubr.bf16.mxu0 0
      %1982 = vmatmul.mubr.bf16.gmra.mrb[0].mxu0 %v1071
      %v1983 = vpop.f32.mrb[0].mxu0
      %v1984 = vadd.f32 %v475, %v1983
      %v1985 = vpop.f32.mrb[0].mxu0
      %v1986 = vpop.f32.mrb[0].mxu0
      %v1987 = vadd.f32 %v475, %v1986
      %v1988 = vpop.f32.mrb[0].mxu0
      %1989 = vmatprep.mubr.bf16.mxu0 0
      %1990 = vmatmul.mubr.bf16.gmra.mrb[0].mxu0 %v1072
      %v1991 = vpop.f32.mrb[0].mxu0
      %v1992 = vadd.f32 %v475, %v1991
      %v1993 = vpop.f32.mrb[0].mxu0
      %v1994 = vpop.f32.mrb[0].mxu0
      %v1995 = vadd.f32 %v475, %v1994
      %v1996 = vpop.f32.mrb[0].mxu0
      %1997 = vmatprep.mubr.bf16.mxu0 0
      %1998 = vmatmul.mubr.bf16.gmra.mrb[0].mxu0 %v1073
      %v1999 = vpop.f32.mrb[0].mxu0
      %v2000 = vadd.f32 %v475, %v1999
      %v2001 = vpop.f32.mrb[0].mxu0
      %v2002 = vpop.f32.mrb[0].mxu0
      %v2003 = vadd.f32 %v475, %v2002
      %v2004 = vpop.f32.mrb[0].mxu0
      %2005 = vmatprep.mubr.bf16.mxu0 0
      %2006 = vmatmul.mubr.bf16.gmra.mrb[0].mxu0 %v1074
      %v2007 = vpop.f32.mrb[0].mxu0
      %v2008 = vadd.f32 %v475, %v2007
      %v2009 = vpop.f32.mrb[0].mxu0
      %v2010 = vpop.f32.mrb[0].mxu0
      %v2011 = vadd.f32 %v475, %v2010
      %v2012 = vpop.f32.mrb[0].mxu0
      %2013 = vmatprep.mubr.bf16.mxu0 0
      %2014 = vmatmul.mubr.bf16.gmra.mrb[0].mxu0 %v1075
      %v2015 = vpop.f32.mrb[0].mxu0
      %v2016 = vadd.f32 %v475, %v2015
      %v2017 = vpop.f32.mrb[0].mxu0
      %v2018 = vpop.f32.mrb[0].mxu0
      %v2019 = vadd.f32 %v475, %v2018
      %v2020 = vpop.f32.mrb[0].mxu0
      %2021 = vmatprep.mubr.bf16.mxu0 0
      %2022 = vmatmul.mubr.bf16.gmra.mrb[0].mxu0 %v1076
      %v2023 = vpop.f32.mrb[0].mxu0
      %v2024 = vadd.f32 %v475, %v2023
      %v2025 = vpop.f32.mrb[0].mxu0
      %v2026 = vpop.f32.mrb[0].mxu0
      %v2027 = vadd.f32 %v475, %v2026
      %v2028 = vpop.f32.mrb[0].mxu0
      %2029 = vmatprep.mubr.bf16.mxu0 0
      %2030 = vmatmul.mubr.bf16.gmra.mrb[0].mxu0 %v1077
      %v2031 = vpop.f32.mrb[0].mxu0
      %v2032 = vadd.f32 %v475, %v2031
      %v2033 = vpop.f32.mrb[0].mxu0
      %v2034 = vpop.f32.mrb[0].mxu0
      %v2035 = vadd.f32 %v475, %v2034
      %v2036 = vpop.f32.mrb[0].mxu0
      %2037 = vmatprep.mubr.bf16.mxu0 0
      %2038 = vmatmul.mubr.bf16.gmra.mrb[0].mxu0 %v1078
      %v2039 = vpop.f32.mrb[0].mxu0
      %v2040 = vadd.f32 %v475, %v2039
      %v2041 = vpop.f32.mrb[0].mxu0
      %v2042 = vpop.f32.mrb[0].mxu0
      %v2043 = vadd.f32 %v475, %v2042
      %v2044 = vpop.f32.mrb[0].mxu0
      %2045 = vmatprep.mubr.bf16.mxu0 0
      %2046 = vmatmul.mubr.bf16.gmra.mrb[0].mxu0 %v1079
      %v2047 = vpop.f32.mrb[0].mxu0
      %v2048 = vadd.f32 %v475, %v2047
      %v2049 = vpop.f32.mrb[0].mxu0
      %v2050 = vpop.f32.mrb[0].mxu0
      %v2051 = vadd.f32 %v475, %v2050
      %v2052 = vpop.f32.mrb[0].mxu0
      %2053 = vmatprep.mubr.bf16.mxu0 0
      %2054 = vmatmul.mubr.bf16.gmra.mrb[0].mxu0 %v1080
      %v2055 = vpop.f32.mrb[0].mxu0
      %v2056 = vadd.f32 %v475, %v2055
      %v2057 = vpop.f32.mrb[0].mxu0
      %v2058 = vpop.f32.mrb[0].mxu0
      %v2059 = vadd.f32 %v475, %v2058
      %v2060 = vpop.f32.mrb[0].mxu0
      %2061 = vmatprep.mubr.bf16.mxu0 0
      %2062 = vmatmul.mubr.bf16.gmra.mrb[0].mxu0 %v1081
      %v2063 = vpop.f32.mrb[0].mxu0
      %v2064 = vadd.f32 %v475, %v2063
      %v2065 = vpop.f32.mrb[0].mxu0
      %v2066 = vpop.f32.mrb[0].mxu0
      %v2067 = vadd.f32 %v475, %v2066
      %v2068 = vpop.f32.mrb[0].mxu0
      %2069 = vmatprep.mubr.bf16.mxu0 0
      %2070 = vmatmul.mubr.bf16.gmra.mrb[0].mxu0 %v1082
      %v2071 = vpop.f32.mrb[0].mxu0
      %v2072 = vadd.f32 %v475, %v2071
      %v2073 = vpop.f32.mrb[0].mxu0
      %v2074 = vpop.f32.mrb[0].mxu0
      %v2075 = vadd.f32 %v475, %v2074
      %v2076 = vpop.f32.mrb[0].mxu0
      %2077 = vmatprep.mubr.bf16.mxu0 0
      %2078 = vmatmul.mubr.bf16.gmra.mrb[0].mxu0 %v1083
      %v2079 = vpop.f32.mrb[0].mxu0
      %v2080 = vadd.f32 %v475, %v2079
      %v2081 = vpop.f32.mrb[0].mxu0
      %v2082 = vpop.f32.mrb[0].mxu0
      %v2083 = vadd.f32 %v475, %v2082
      %v2084 = vpop.f32.mrb[0].mxu0
      %2085 = vmatprep.mubr.bf16.mxu0 0
      %2086 = vmatmul.mubr.bf16.gmra.mrb[0].mxu0 %v1084
      %v2087 = vpop.f32.mrb[0].mxu0
      %v2088 = vadd.f32 %v475, %v2087
      %v2089 = vpop.f32.mrb[0].mxu0
      %v2090 = vpop.f32.mrb[0].mxu0
      %v2091 = vadd.f32 %v475, %v2090
      %v2092 = vpop.f32.mrb[0].mxu0
      %2093 = vmatprep.mubr.bf16.mxu0 0
      %2094 = vmatmul.mubr.bf16.gmra.mrb[0].mxu0 %v1085
      %v2095 = vpop.f32.mrb[0].mxu0
      %v2096 = vadd.f32 %v475, %v2095
      %v2097 = vpop.f32.mrb[0].mxu0
      %v2098 = vpop.f32.mrb[0].mxu0
      %v2099 = vadd.f32 %v475, %v2098
      %v2100 = vpop.f32.mrb[0].mxu0
      %2101 = vmatprep.mubr.bf16.mxu0 0
      %2102 = vmatmul.mubr.bf16.gmra.mrb[0].mxu0 %v1086
      %v2103 = vpop.f32.mrb[0].mxu0
      %v2104 = vadd.f32 %v475, %v2103
      %v2105 = vpop.f32.mrb[0].mxu0
      %v2106 = vpop.f32.mrb[0].mxu0
      %v2107 = vadd.f32 %v475, %v2106
      %v2108 = vpop.f32.mrb[0].mxu0
      %2109 = vmatprep.mubr.bf16.mxu0 0
      %2110 = vmatmul.mubr.bf16.gmra.mrb[0].mxu0 %v1087
      %v2111 = vpop.f32.mrb[0].mxu0
      %v2112 = vadd.f32 %v475, %v2111
      %v2113 = vpop.f32.mrb[0].mxu0
      %v2114 = vpop.f32.mrb[0].mxu0
      %v2115 = vadd.f32 %v475, %v2114
      %v2116 = vpop.f32.mrb[0].mxu0
      %2117 = vmatprep.mubr.bf16.mxu0 0
      %2118 = vmatmul.mubr.bf16.gmra.mrb[0].mxu0 %v1088
      %v2119 = vpop.f32.mrb[0].mxu0
      %v2120 = vadd.f32 %v475, %v2119
      %v2121 = vpop.f32.mrb[0].mxu0
      %v2122 = vpop.f32.mrb[0].mxu0
      %v2123 = vadd.f32 %v475, %v2122
      %v2124 = vpop.f32.mrb[0].mxu0
      %2125 = vmatprep.mubr.bf16.mxu0 0
      %2126 = vmatmul.mubr.bf16.gmra.mrb[0].mxu0 %v1089
      %v2127 = vpop.f32.mrb[0].mxu0
      %v2128 = vadd.f32 %v475, %v2127
      %v2129 = vpop.f32.mrb[0].mxu0
      %v2130 = vpop.f32.mrb[0].mxu0
      %v2131 = vadd.f32 %v475, %v2130
      %v2132 = vpop.f32.mrb[0].mxu0
      %2133 = vmatprep.mubr.bf16.mxu0 0
      %2134 = vmatmul.mubr.bf16.gmra.mrb[0].mxu0 %v1090
      %v2135 = vpop.f32.mrb[0].mxu0
      %v2136 = vadd.f32 %v475, %v2135
      %v2137 = vpop.f32.mrb[0].mxu0
      %v2138 = vpop.f32.mrb[0].mxu0
      %v2139 = vadd.f32 %v475, %v2138
      %v2140 = vpop.f32.mrb[0].mxu0
      %2141 = vmatprep.mubr.bf16.mxu0 0
      %2142 = vmatmul.mubr.bf16.gmra.mrb[0].mxu0 %v1091
      %v2143 = vpop.f32.mrb[0].mxu0
      %v2144 = vadd.f32 %v475, %v2143
      %v2145 = vpop.f32.mrb[0].mxu0
      %v2146 = vpop.f32.mrb[0].mxu0
      %v2147 = vadd.f32 %v475, %v2146
      %v2148 = vpop.f32.mrb[0].mxu0
      %2149 = vmatprep.mubr.bf16.mxu0 0
      %2150 = vmatmul.mubr.bf16.gmra.mrb[0].mxu0 %v1092
      %v2151 = vpop.f32.mrb[0].mxu0
      %v2152 = vadd.f32 %v475, %v2151
      %v2153 = vpop.f32.mrb[0].mxu0
      %v2154 = vpop.f32.mrb[0].mxu0
      %v2155 = vadd.f32 %v475, %v2154
      %v2156 = vpop.f32.mrb[0].mxu0
      %2157 = vmatprep.mubr.bf16.mxu0 0
      %2158 = vmatmul.mubr.bf16.gmra.mrb[0].mxu0 %v1093
      %v2159 = vpop.f32.mrb[0].mxu0
      %v2160 = vadd.f32 %v475, %v2159
      %v2161 = vpop.f32.mrb[0].mxu0
      %v2162 = vpop.f32.mrb[0].mxu0
      %v2163 = vadd.f32 %v475, %v2162
      %v2164 = vpop.f32.mrb[0].mxu0
      %2165 = vmatprep.mubr.bf16.mxu0 0
      %2166 = vmatmul.mubr.bf16.gmra.mrb[0].mxu0 %v1094
      %v2167 = vpop.f32.mrb[0].mxu0
      %v2168 = vadd.f32 %v475, %v2167
      %v2169 = vpop.f32.mrb[0].mxu0
      %v2170 = vpop.f32.mrb[0].mxu0
      %v2171 = vadd.f32 %v475, %v2170
      %v2172 = vpop.f32.mrb[0].mxu0
      %2173 = vmatprep.mubr.bf16.mxu0 0
      %2174 = vmatmul.mubr.bf16.gmra.mrb[0].mxu0 %v1095
      %v2175 = vpop.f32.mrb[0].mxu0
      %v2176 = vadd.f32 %v475, %v2175
      %v2177 = vpop.f32.mrb[0].mxu0
      %v2178 = vpop.f32.mrb[0].mxu0
      %v2179 = vadd.f32 %v475, %v2178
      %v2180 = vpop.f32.mrb[0].mxu0
      %2181 = vmatprep.mubr.bf16.mxu0 0
      %2182 = vmatmul.mubr.bf16.gmra.mrb[0].mxu0 %v1096
      %v2183 = vpop.f32.mrb[0].mxu0
      %v2184 = vadd.f32 %v475, %v2183
      %v2185 = vpop.f32.mrb[0].mxu0
      %v2186 = vpop.f32.mrb[0].mxu0
      %v2187 = vadd.f32 %v475, %v2186
      %v2188 = vpop.f32.mrb[0].mxu0
      %2189 = vmatprep.mubr.bf16.mxu0 0
      %2190 = vmatmul.mubr.bf16.gmra.mrb[0].mxu0 %v1097
      %v2191 = vpop.f32.mrb[0].mxu0
      %v2192 = vadd.f32 %v475, %v2191
      %v2193 = vpop.f32.mrb[0].mxu0
      %v2194 = vpop.f32.mrb[0].mxu0
      %v2195 = vadd.f32 %v475, %v2194
      %v2196 = vpop.f32.mrb[0].mxu0
      %2197 = vmatprep.mubr.bf16.mxu0 0
      %2198 = vmatmul.mubr.bf16.gmra.mrb[0].mxu0 %v1098
      %v2199 = vpop.f32.mrb[0].mxu0
      %v2200 = vadd.f32 %v475, %v2199
      %v2201 = vpop.f32.mrb[0].mxu0
      %v2202 = vpop.f32.mrb[0].mxu0
      %v2203 = vadd.f32 %v475, %v2202
      %v2204 = vpop.f32.mrb[0].mxu0
      %2205 = vmatprep.mubr.bf16.mxu0 0
      %2206 = vmatmul.mubr.bf16.gmra.mrb[0].mxu0 %v1099
      %v2207 = vpop.f32.mrb[0].mxu0
      %v2208 = vadd.f32 %v475, %v2207
      %v2209 = vpop.f32.mrb[0].mxu0
      %v2210 = vpop.f32.mrb[0].mxu0
      %v2211 = vadd.f32 %v475, %v2210
      %v2212 = vpop.f32.mrb[0].mxu0
      %2213 = vmatprep.mubr.bf16.mxu0 0
      %2214 = vmatmul.mubr.bf16.gmra.mrb[0].mxu0 %v1100
      %v2215 = vpop.f32.mrb[0].mxu0
      %v2216 = vadd.f32 %v475, %v2215
      %v2217 = vpop.f32.mrb[0].mxu0
      %v2218 = vpop.f32.mrb[0].mxu0
      %v2219 = vadd.f32 %v475, %v2218
      %v2220 = vpop.f32.mrb[0].mxu0
      %2221 = vmatprep.mubr.bf16.mxu0 0
      %2222 = vmatmul.mubr.bf16.gmra.mrb[0].mxu0 %v1101
      %v2223 = vpop.f32.mrb[0].mxu0
      %v2224 = vadd.f32 %v475, %v2223
      %v2225 = vpop.f32.mrb[0].mxu0
      %v2226 = vpop.f32.mrb[0].mxu0
      %v2227 = vadd.f32 %v475, %v2226
      %v2228 = vpop.f32.mrb[0].mxu0
      %2229 = vmatprep.mubr.bf16.mxu0 0
      %2230 = vmatmul.mubr.bf16.gmra.mrb[0].mxu0 %v1102
      %v2231 = vpop.f32.mrb[0].mxu0
      %v2232 = vadd.f32 %v475, %v2231
      %v2233 = vpop.f32.mrb[0].mxu0
      %v2234 = vpop.f32.mrb[0].mxu0
      %v2235 = vadd.f32 %v475, %v2234
      %v2236 = vpop.f32.mrb[0].mxu0
      %2237 = vmatprep.mubr.bf16.mxu0 0
      %2238 = vmatmul.mubr.bf16.gmra.mrb[0].mxu0 %v1103
      %v2239 = vpop.f32.mrb[0].mxu0
      %v2240 = vadd.f32 %v475, %v2239
      %v2241 = vpop.f32.mrb[0].mxu0
      %v2242 = vpop.f32.mrb[0].mxu0
      %v2243 = vadd.f32 %v475, %v2242
      %v2244 = vpop.f32.mrb[0].mxu0
      %2245 = vmatprep.mubr.bf16.mxu0 0
      %2246 = vmatmul.mubr.bf16.gmra.mrb[0].mxu0 %v1104
      %v2247 = vpop.f32.mrb[0].mxu0
      %v2248 = vadd.f32 %v475, %v2247
      %v2249 = vpop.f32.mrb[0].mxu0
      %v2250 = vpop.f32.mrb[0].mxu0
      %v2251 = vadd.f32 %v475, %v2250
      %v2252 = vpop.f32.mrb[0].mxu0
      %2253 = vmatprep.mubr.bf16.mxu0 0
      %2254 = vmatmul.mubr.bf16.gmra.mrb[0].mxu0 %v1105
      %v2255 = vpop.f32.mrb[0].mxu0
      %v2256 = vadd.f32 %v475, %v2255
      %v2257 = vpop.f32.mrb[0].mxu0
      %v2258 = vpop.f32.mrb[0].mxu0
      %v2259 = vadd.f32 %v475, %v2258
      %v2260 = vpop.f32.mrb[0].mxu0
      %2261 = vmatprep.mubr.bf16.mxu0 0
      %2262 = vmatmul.mubr.bf16.gmra.mrb[0].mxu0 %v1106
      %v2263 = vpop.f32.mrb[0].mxu0
      %v2264 = vadd.f32 %v475, %v2263
      %v2265 = vpop.f32.mrb[0].mxu0
      %v2266 = vpop.f32.mrb[0].mxu0
      %v2267 = vadd.f32 %v475, %v2266
      %v2268 = vpop.f32.mrb[0].mxu0
      %2269 = vmatprep.mubr.bf16.mxu0 0
      %2270 = vmatmul.mubr.bf16.gmra.mrb[0].mxu0 %v1107
      %v2271 = vpop.f32.mrb[0].mxu0
      %v2272 = vadd.f32 %v475, %v2271
      %v2273 = vpop.f32.mrb[0].mxu0
      %v2274 = vpop.f32.mrb[0].mxu0
      %v2275 = vadd.f32 %v475, %v2274
      %v2276 = vpop.f32.mrb[0].mxu0
      %2277 = vmatprep.mubr.bf16.mxu0 0
      %2278 = vmatmul.mubr.bf16.gmra.mrb[0].mxu0 %v1108
      %v2279 = vpop.f32.mrb[0].mxu0
      %v2280 = vadd.f32 %v475, %v2279
      %v2281 = vpop.f32.mrb[0].mxu0
      %v2282 = vpop.f32.mrb[0].mxu0
      %v2283 = vadd.f32 %v475, %v2282
      %v2284 = vpop.f32.mrb[0].mxu0
      %2285 = vmatprep.mubr.bf16.mxu0 0
      %2286 = vmatmul.mubr.bf16.gmra.mrb[0].mxu0 %v1109
      %v2287 = vpop.f32.mrb[0].mxu0
      %v2288 = vadd.f32 %v475, %v2287
      %v2289 = vpop.f32.mrb[0].mxu0
      %v2290 = vpop.f32.mrb[0].mxu0
      %v2291 = vadd.f32 %v475, %v2290
      %v2292 = vpop.f32.mrb[0].mxu0
      %2293 = vmatprep.mubr.bf16.mxu0 0
      %2294 = vmatmul.mubr.bf16.gmra.mrb[0].mxu0 %v1110
      %v2295 = vpop.f32.mrb[0].mxu0
      %v2296 = vadd.f32 %v475, %v2295
      %v2297 = vpop.f32.mrb[0].mxu0
      %v2298 = vpop.f32.mrb[0].mxu0
      %v2299 = vadd.f32 %v475, %v2298
      %v2300 = vpop.f32.mrb[0].mxu0
      %2301 = vmatprep.mubr.bf16.mxu0 0
      %2302 = vmatmul.mubr.bf16.gmra.mrb[0].mxu0 %v1111
      %v2303 = vpop.f32.mrb[0].mxu0
      %v2304 = vadd.f32 %v475, %v2303
      %v2305 = vpop.f32.mrb[0].mxu0
      %v2306 = vpop.f32.mrb[0].mxu0
      %v2307 = vadd.f32 %v475, %v2306
      %v2308 = vpop.f32.mrb[0].mxu0
      %2309 = vmatprep.mubr.bf16.mxu0 0
      %2310 = vmatmul.mubr.bf16.gmra.mrb[0].mxu0 %v1112
      %v2311 = vpop.f32.mrb[0].mxu0
      %v2312 = vadd.f32 %v475, %v2311
      %v2313 = vpop.f32.mrb[0].mxu0
      %v2314 = vpop.f32.mrb[0].mxu0
      %v2315 = vadd.f32 %v475, %v2314
      %v2316 = vpop.f32.mrb[0].mxu0
      %2317 = vmatprep.mubr.bf16.mxu0 0
      %2318 = vmatmul.mubr.bf16.gmra.mrb[0].mxu0 %v1113
      %v2319 = vpop.f32.mrb[0].mxu0
      %v2320 = vadd.f32 %v475, %v2319
      %v2321 = vpop.f32.mrb[0].mxu0
      %v2322 = vpop.f32.mrb[0].mxu0
      %v2323 = vadd.f32 %v475, %v2322
      %v2324 = vpop.f32.mrb[0].mxu0
      %2325 = vmatprep.mubr.bf16.mxu0 0
      %2326 = vmatmul.mubr.bf16.gmra.mrb[0].mxu0 %v1114
      %v2327 = vpop.f32.mrb[0].mxu0
      %v2328 = vadd.f32 %v475, %v2327
      %v2329 = vpop.f32.mrb[0].mxu0
      %v2330 = vpop.f32.mrb[0].mxu0
      %v2331 = vadd.f32 %v475, %v2330
      %v2332 = vpop.f32.mrb[0].mxu0
      %2333 = vmatprep.mubr.bf16.mxu0 0
      %2334 = vmatmul.mubr.bf16.gmra.mrb[0].mxu0 %v1115
      %v2335 = vpop.f32.mrb[0].mxu0
      %v2336 = vadd.f32 %v475, %v2335
      %v2337 = vpop.f32.mrb[0].mxu0
      %v2338 = vpop.f32.mrb[0].mxu0
      %v2339 = vadd.f32 %v475, %v2338
      %v2340 = vpop.f32.mrb[0].mxu0
      %2341 = vmatprep.mubr.bf16.mxu0 0
      %2342 = vmatmul.mubr.bf16.gmra.mrb[0].mxu0 %v1116
      %v2343 = vpop.f32.mrb[0].mxu0
      %v2344 = vadd.f32 %v475, %v2343
      %v2345 = vpop.f32.mrb[0].mxu0
      %v2346 = vpop.f32.mrb[0].mxu0
      %v2347 = vadd.f32 %v475, %v2346
      %v2348 = vpop.f32.mrb[0].mxu0
      %2349 = vdwg.mxu0
      %vm2350 = vcmp.ge.f32.partialorder %v1328, 0.0
      %vm2351 = vcmp.ge.f32.partialorder %v1331, 0.0
      %vm2352 = vcmp.ge.f32.partialorder %v1336, 0.0
      %vm2353 = vcmp.ge.f32.partialorder %v1339, 0.0
      %vm2354 = vcmp.ge.f32.partialorder %v1344, 0.0
      %vm2355 = vcmp.ge.f32.partialorder %v1347, 0.0
      %vm2356 = vcmp.ge.f32.partialorder %v1352, 0.0
      %vm2357 = vcmp.ge.f32.partialorder %v1355, 0.0
      %vm2358 = vcmp.ge.f32.partialorder %v1360, 0.0
      %vm2359 = vcmp.ge.f32.partialorder %v1363, 0.0
      %vm2360 = vcmp.ge.f32.partialorder %v1368, 0.0
      %vm2361 = vcmp.ge.f32.partialorder %v1371, 0.0
      %vm2362 = vcmp.ge.f32.partialorder %v1376, 0.0
      %vm2363 = vcmp.ge.f32.partialorder %v1379, 0.0
      %vm2364 = vcmp.ge.f32.partialorder %v1384, 0.0
      %vm2365 = vcmp.ge.f32.partialorder %v1387, 0.0
      %vm2366 = vcmp.ge.f32.partialorder %v1392, 0.0
      %vm2367 = vcmp.ge.f32.partialorder %v1395, 0.0
      %vm2368 = vcmp.ge.f32.partialorder %v1400, 0.0
      %vm2369 = vcmp.ge.f32.partialorder %v1403, 0.0
      %vm2370 = vcmp.ge.f32.partialorder %v1408, 0.0
      %vm2371 = vcmp.ge.f32.partialorder %v1411, 0.0
      %vm2372 = vcmp.ge.f32.partialorder %v1416, 0.0
      %vm2373 = vcmp.ge.f32.partialorder %v1419, 0.0
      %vm2374 = vcmp.ge.f32.partialorder %v1424, 0.0
      %vm2375 = vcmp.ge.f32.partialorder %v1427, 0.0
      %vm2376 = vcmp.ge.f32.partialorder %v1432, 0.0
      %vm2377 = vcmp.ge.f32.partialorder %v1435, 0.0
      %vm2378 = vcmp.ge.f32.partialorder %v1440, 0.0
      %vm2379 = vcmp.ge.f32.partialorder %v1443, 0.0
      %vm2380 = vcmp.ge.f32.partialorder %v1448, 0.0
      %vm2381 = vcmp.ge.f32.partialorder %v1451, 0.0
      %vm2382 = vcmp.ge.f32.partialorder %v1456, 0.0
      %vm2383 = vcmp.ge.f32.partialorder %v1459, 0.0
      %vm2384 = vcmp.ge.f32.partialorder %v1464, 0.0
      %vm2385 = vcmp.ge.f32.partialorder %v1467, 0.0
      %vm2386 = vcmp.ge.f32.partialorder %v1472, 0.0
      %vm2387 = vcmp.ge.f32.partialorder %v1475, 0.0
      %vm2388 = vcmp.ge.f32.partialorder %v1480, 0.0
      %vm2389 = vcmp.ge.f32.partialorder %v1483, 0.0
      %vm2390 = vcmp.ge.f32.partialorder %v1488, 0.0
      %vm2391 = vcmp.ge.f32.partialorder %v1491, 0.0
      %vm2392 = vcmp.ge.f32.partialorder %v1496, 0.0
      %vm2393 = vcmp.ge.f32.partialorder %v1499, 0.0
      %vm2394 = vcmp.ge.f32.partialorder %v1504, 0.0
      %vm2395 = vcmp.ge.f32.partialorder %v1507, 0.0
      %vm2396 = vcmp.ge.f32.partialorder %v1512, 0.0
      %vm2397 = vcmp.ge.f32.partialorder %v1515, 0.0
      %vm2398 = vcmp.ge.f32.partialorder %v1520, 0.0
      %vm2399 = vcmp.ge.f32.partialorder %v1523, 0.0
      %vm2400 = vcmp.ge.f32.partialorder %v1528, 0.0
      %vm2401 = vcmp.ge.f32.partialorder %v1531, 0.0
      %vm2402 = vcmp.ge.f32.partialorder %v1536, 0.0
      %vm2403 = vcmp.ge.f32.partialorder %v1539, 0.0
      %vm2404 = vcmp.ge.f32.partialorder %v1544, 0.0
      %vm2405 = vcmp.ge.f32.partialorder %v1547, 0.0
      %vm2406 = vcmp.ge.f32.partialorder %v1552, 0.0
      %vm2407 = vcmp.ge.f32.partialorder %v1555, 0.0
      %vm2408 = vcmp.ge.f32.partialorder %v1560, 0.0
      %vm2409 = vcmp.ge.f32.partialorder %v1563, 0.0
      %vm2410 = vcmp.ge.f32.partialorder %v1568, 0.0
      %vm2411 = vcmp.ge.f32.partialorder %v1571, 0.0
      %vm2412 = vcmp.ge.f32.partialorder %v1576, 0.0
      %vm2413 = vcmp.ge.f32.partialorder %v1579, 0.0
      %vm2414 = vcmp.ge.f32.partialorder %v1584, 0.0
      %vm2415 = vcmp.ge.f32.partialorder %v1587, 0.0
      %vm2416 = vcmp.ge.f32.partialorder %v1592, 0.0
      %vm2417 = vcmp.ge.f32.partialorder %v1595, 0.0
      %vm2418 = vcmp.ge.f32.partialorder %v1600, 0.0
      %vm2419 = vcmp.ge.f32.partialorder %v1603, 0.0
      %vm2420 = vcmp.ge.f32.partialorder %v1608, 0.0
      %vm2421 = vcmp.ge.f32.partialorder %v1611, 0.0
      %vm2422 = vcmp.ge.f32.partialorder %v1616, 0.0
      %vm2423 = vcmp.ge.f32.partialorder %v1619, 0.0
      %vm2424 = vcmp.ge.f32.partialorder %v1624, 0.0
      %vm2425 = vcmp.ge.f32.partialorder %v1627, 0.0
      %vm2426 = vcmp.ge.f32.partialorder %v1632, 0.0
      %vm2427 = vcmp.ge.f32.partialorder %v1635, 0.0
      %vm2428 = vcmp.ge.f32.partialorder %v1640, 0.0
      %vm2429 = vcmp.ge.f32.partialorder %v1643, 0.0
      %vm2430 = vcmp.ge.f32.partialorder %v1648, 0.0
      %vm2431 = vcmp.ge.f32.partialorder %v1651, 0.0
      %vm2432 = vcmp.ge.f32.partialorder %v1656, 0.0
      %vm2433 = vcmp.ge.f32.partialorder %v1659, 0.0
      %vm2434 = vcmp.ge.f32.partialorder %v1664, 0.0
      %vm2435 = vcmp.ge.f32.partialorder %v1667, 0.0
      %vm2436 = vcmp.ge.f32.partialorder %v1672, 0.0
      %vm2437 = vcmp.ge.f32.partialorder %v1675, 0.0
      %vm2438 = vcmp.ge.f32.partialorder %v1680, 0.0
      %vm2439 = vcmp.ge.f32.partialorder %v1683, 0.0
      %vm2440 = vcmp.ge.f32.partialorder %v1688, 0.0
      %vm2441 = vcmp.ge.f32.partialorder %v1691, 0.0
      %vm2442 = vcmp.ge.f32.partialorder %v1696, 0.0
      %vm2443 = vcmp.ge.f32.partialorder %v1699, 0.0
      %vm2444 = vcmp.ge.f32.partialorder %v1704, 0.0
      %vm2445 = vcmp.ge.f32.partialorder %v1707, 0.0
      %vm2446 = vcmp.ge.f32.partialorder %v1712, 0.0
      %vm2447 = vcmp.ge.f32.partialorder %v1715, 0.0
      %vm2448 = vcmp.ge.f32.partialorder %v1720, 0.0
      %vm2449 = vcmp.ge.f32.partialorder %v1723, 0.0
      %vm2450 = vcmp.ge.f32.partialorder %v1728, 0.0
      %vm2451 = vcmp.ge.f32.partialorder %v1731, 0.0
      %vm2452 = vcmp.ge.f32.partialorder %v1736, 0.0
      %vm2453 = vcmp.ge.f32.partialorder %v1739, 0.0
      %vm2454 = vcmp.ge.f32.partialorder %v1744, 0.0
      %vm2455 = vcmp.ge.f32.partialorder %v1747, 0.0
      %vm2456 = vcmp.ge.f32.partialorder %v1752, 0.0
      %vm2457 = vcmp.ge.f32.partialorder %v1755, 0.0
      %vm2458 = vcmp.ge.f32.partialorder %v1760, 0.0
      %vm2459 = vcmp.ge.f32.partialorder %v1763, 0.0
      %vm2460 = vcmp.ge.f32.partialorder %v1768, 0.0
      %vm2461 = vcmp.ge.f32.partialorder %v1771, 0.0
      %vm2462 = vcmp.ge.f32.partialorder %v1776, 0.0
      %vm2463 = vcmp.ge.f32.partialorder %v1779, 0.0
      %vm2464 = vcmp.ge.f32.partialorder %v1784, 0.0
      %vm2465 = vcmp.ge.f32.partialorder %v1787, 0.0
      %vm2466 = vcmp.ge.f32.partialorder %v1792, 0.0
      %vm2467 = vcmp.ge.f32.partialorder %v1795, 0.0
      %vm2468 = vcmp.ge.f32.partialorder %v1800, 0.0
      %vm2469 = vcmp.ge.f32.partialorder %v1803, 0.0
      %vm2470 = vcmp.ge.f32.partialorder %v1808, 0.0
      %vm2471 = vcmp.ge.f32.partialorder %v1811, 0.0
      %vm2472 = vcmp.ge.f32.partialorder %v1816, 0.0
      %vm2473 = vcmp.ge.f32.partialorder %v1819, 0.0
      %vm2474 = vcmp.ge.f32.partialorder %v1824, 0.0
      %vm2475 = vcmp.ge.f32.partialorder %v1827, 0.0
      %vm2476 = vcmp.ge.f32.partialorder %v1832, 0.0
      %vm2477 = vcmp.ge.f32.partialorder %v1835, 0.0
      %vm2478 = vcmp.ge.f32.partialorder %v1840, 0.0
      %vm2479 = vcmp.ge.f32.partialorder %v1843, 0.0
      %vm2480 = vcmp.ge.f32.partialorder %v1848, 0.0
      %vm2481 = vcmp.ge.f32.partialorder %v1851, 0.0
      %vm2482 = vcmp.ge.f32.partialorder %v1856, 0.0
      %vm2483 = vcmp.ge.f32.partialorder %v1859, 0.0
      %vm2484 = vcmp.ge.f32.partialorder %v1864, 0.0
      %vm2485 = vcmp.ge.f32.partialorder %v1867, 0.0
      %vm2486 = vcmp.ge.f32.partialorder %v1872, 0.0
      %vm2487 = vcmp.ge.f32.partialorder %v1875, 0.0
      %vm2488 = vcmp.ge.f32.partialorder %v1880, 0.0
      %vm2489 = vcmp.ge.f32.partialorder %v1883, 0.0
      %vm2490 = vcmp.ge.f32.partialorder %v1888, 0.0
      %vm2491 = vcmp.ge.f32.partialorder %v1891, 0.0
      %vm2492 = vcmp.ge.f32.partialorder %v1896, 0.0
      %vm2493 = vcmp.ge.f32.partialorder %v1899, 0.0
      %vm2494 = vcmp.ge.f32.partialorder %v1904, 0.0
      %vm2495 = vcmp.ge.f32.partialorder %v1907, 0.0
      %vm2496 = vcmp.ge.f32.partialorder %v1912, 0.0
      %vm2497 = vcmp.ge.f32.partialorder %v1915, 0.0
      %vm2498 = vcmp.ge.f32.partialorder %v1920, 0.0
      %vm2499 = vcmp.ge.f32.partialorder %v1923, 0.0
      %vm2500 = vcmp.ge.f32.partialorder %v1928, 0.0
      %vm2501 = vcmp.ge.f32.partialorder %v1931, 0.0
      %vm2502 = vcmp.ge.f32.partialorder %v1936, 0.0
      %vm2503 = vcmp.ge.f32.partialorder %v1939, 0.0
      %vm2504 = vcmp.ge.f32.partialorder %v1944, 0.0
      %vm2505 = vcmp.ge.f32.partialorder %v1947, 0.0
      %vm2506 = vcmp.ge.f32.partialorder %v1952, 0.0
      %vm2507 = vcmp.ge.f32.partialorder %v1955, 0.0
      %vm2508 = vcmp.ge.f32.partialorder %v1960, 0.0
      %vm2509 = vcmp.ge.f32.partialorder %v1963, 0.0
      %vm2510 = vcmp.ge.f32.partialorder %v1968, 0.0
      %vm2511 = vcmp.ge.f32.partialorder %v1971, 0.0
      %vm2512 = vcmp.ge.f32.partialorder %v1976, 0.0
      %vm2513 = vcmp.ge.f32.partialorder %v1979, 0.0
      %vm2514 = vcmp.ge.f32.partialorder %v1984, 0.0
      %vm2515 = vcmp.ge.f32.partialorder %v1987, 0.0
      %vm2516 = vcmp.ge.f32.partialorder %v1992, 0.0
      %vm2517 = vcmp.ge.f32.partialorder %v1995, 0.0
      %vm2518 = vcmp.ge.f32.partialorder %v2000, 0.0
      %vm2519 = vcmp.ge.f32.partialorder %v2003, 0.0
      %vm2520 = vcmp.ge.f32.partialorder %v2008, 0.0
      %vm2521 = vcmp.ge.f32.partialorder %v2011, 0.0
      %vm2522 = vcmp.ge.f32.partialorder %v2016, 0.0
      %vm2523 = vcmp.ge.f32.partialorder %v2019, 0.0
      %vm2524 = vcmp.ge.f32.partialorder %v2024, 0.0
      %vm2525 = vcmp.ge.f32.partialorder %v2027, 0.0
      %vm2526 = vcmp.ge.f32.partialorder %v2032, 0.0
      %vm2527 = vcmp.ge.f32.partialorder %v2035, 0.0
      %vm2528 = vcmp.ge.f32.partialorder %v2040, 0.0
      %vm2529 = vcmp.ge.f32.partialorder %v2043, 0.0
      %vm2530 = vcmp.ge.f32.partialorder %v2048, 0.0
      %vm2531 = vcmp.ge.f32.partialorder %v2051, 0.0
      %vm2532 = vcmp.ge.f32.partialorder %v2056, 0.0
      %vm2533 = vcmp.ge.f32.partialorder %v2059, 0.0
      %vm2534 = vcmp.ge.f32.partialorder %v2064, 0.0
      %vm2535 = vcmp.ge.f32.partialorder %v2067, 0.0
      %vm2536 = vcmp.ge.f32.partialorder %v2072, 0.0
      %vm2537 = vcmp.ge.f32.partialorder %v2075, 0.0
      %vm2538 = vcmp.ge.f32.partialorder %v2080, 0.0
      %vm2539 = vcmp.ge.f32.partialorder %v2083, 0.0
      %vm2540 = vcmp.ge.f32.partialorder %v2088, 0.0
      %vm2541 = vcmp.ge.f32.partialorder %v2091, 0.0
      %vm2542 = vcmp.ge.f32.partialorder %v2096, 0.0
      %vm2543 = vcmp.ge.f32.partialorder %v2099, 0.0
      %vm2544 = vcmp.ge.f32.partialorder %v2104, 0.0
      %vm2545 = vcmp.ge.f32.partialorder %v2107, 0.0
      %vm2546 = vcmp.ge.f32.partialorder %v2112, 0.0
      %vm2547 = vcmp.ge.f32.partialorder %v2115, 0.0
      %vm2548 = vcmp.ge.f32.partialorder %v2120, 0.0
      %vm2549 = vcmp.ge.f32.partialorder %v2123, 0.0
      %vm2550 = vcmp.ge.f32.partialorder %v2128, 0.0
      %vm2551 = vcmp.ge.f32.partialorder %v2131, 0.0
      %vm2552 = vcmp.ge.f32.partialorder %v2136, 0.0
      %vm2553 = vcmp.ge.f32.partialorder %v2139, 0.0
      %vm2554 = vcmp.ge.f32.partialorder %v2144, 0.0
      %vm2555 = vcmp.ge.f32.partialorder %v2147, 0.0
      %vm2556 = vcmp.ge.f32.partialorder %v2152, 0.0
      %vm2557 = vcmp.ge.f32.partialorder %v2155, 0.0
      %vm2558 = vcmp.ge.f32.partialorder %v2160, 0.0
      %vm2559 = vcmp.ge.f32.partialorder %v2163, 0.0
      %vm2560 = vcmp.ge.f32.partialorder %v2168, 0.0
      %vm2561 = vcmp.ge.f32.partialorder %v2171, 0.0
      %vm2562 = vcmp.ge.f32.partialorder %v2176, 0.0
      %vm2563 = vcmp.ge.f32.partialorder %v2179, 0.0
      %vm2564 = vcmp.ge.f32.partialorder %v2184, 0.0
      %vm2565 = vcmp.ge.f32.partialorder %v2187, 0.0
      %vm2566 = vcmp.ge.f32.partialorder %v2192, 0.0
      %vm2567 = vcmp.ge.f32.partialorder %v2195, 0.0
      %vm2568 = vcmp.ge.f32.partialorder %v2200, 0.0
      %vm2569 = vcmp.ge.f32.partialorder %v2203, 0.0
      %vm2570 = vcmp.ge.f32.partialorder %v2208, 0.0
      %vm2571 = vcmp.ge.f32.partialorder %v2211, 0.0
      %vm2572 = vcmp.ge.f32.partialorder %v2216, 0.0
      %vm2573 = vcmp.ge.f32.partialorder %v2219, 0.0
      %vm2574 = vcmp.ge.f32.partialorder %v2224, 0.0
      %vm2575 = vcmp.ge.f32.partialorder %v2227, 0.0
      %vm2576 = vcmp.ge.f32.partialorder %v2232, 0.0
      %vm2577 = vcmp.ge.f32.partialorder %v2235, 0.0
      %vm2578 = vcmp.ge.f32.partialorder %v2240, 0.0
      %vm2579 = vcmp.ge.f32.partialorder %v2243, 0.0
      %vm2580 = vcmp.ge.f32.partialorder %v2248, 0.0
      %vm2581 = vcmp.ge.f32.partialorder %v2251, 0.0
      %vm2582 = vcmp.ge.f32.partialorder %v2256, 0.0
      %vm2583 = vcmp.ge.f32.partialorder %v2259, 0.0
      %vm2584 = vcmp.ge.f32.partialorder %v2264, 0.0
      %vm2585 = vcmp.ge.f32.partialorder %v2267, 0.0
      %vm2586 = vcmp.ge.f32.partialorder %v2272, 0.0
      %vm2587 = vcmp.ge.f32.partialorder %v2275, 0.0
      %vm2588 = vcmp.ge.f32.partialorder %v2280, 0.0
      %vm2589 = vcmp.ge.f32.partialorder %v2283, 0.0
      %vm2590 = vcmp.ge.f32.partialorder %v2288, 0.0
      %vm2591 = vcmp.ge.f32.partialorder %v2291, 0.0
      %vm2592 = vcmp.ge.f32.partialorder %v2296, 0.0
      %vm2593 = vcmp.ge.f32.partialorder %v2299, 0.0
      %vm2594 = vcmp.ge.f32.partialorder %v2304, 0.0
      %vm2595 = vcmp.ge.f32.partialorder %v2307, 0.0
      %vm2596 = vcmp.ge.f32.partialorder %v2312, 0.0
      %vm2597 = vcmp.ge.f32.partialorder %v2315, 0.0
      %vm2598 = vcmp.ge.f32.partialorder %v2320, 0.0
      %vm2599 = vcmp.ge.f32.partialorder %v2323, 0.0
      %vm2600 = vcmp.ge.f32.partialorder %v2328, 0.0
      %vm2601 = vcmp.ge.f32.partialorder %v2331, 0.0
      %vm2602 = vcmp.ge.f32.partialorder %v2336, 0.0
      %vm2603 = vcmp.ge.f32.partialorder %v2339, 0.0
      %vm2604 = vcmp.ge.f32.partialorder %v2344, 0.0
      %vm2605 = vcmp.ge.f32.partialorder %v2347, 0.0
      %v2606 = vmul.f32 %v1328, 0.2
      %v2607 = vmul.f32 %v1331, 0.2
      %v2608 = vmul.f32 %v1336, 0.2
      %v2609 = vmul.f32 %v1339, 0.2
      %v2610 = vmul.f32 %v1344, 0.2
      %v2611 = vmul.f32 %v1347, 0.2
      %v2612 = vmul.f32 %v1352, 0.2
      %v2613 = vmul.f32 %v1355, 0.2
      %v2614 = vmul.f32 %v1360, 0.2
      %v2615 = vmul.f32 %v1363, 0.2
      %v2616 = vmul.f32 %v1368, 0.2
      %v2617 = vmul.f32 %v1371, 0.2
      %v2618 = vmul.f32 %v1376, 0.2
      %v2619 = vmul.f32 %v1379, 0.2
      %v2620 = vmul.f32 %v1384, 0.2
      %v2621 = vmul.f32 %v1387, 0.2
      %v2622 = vmul.f32 %v1392, 0.2
      %v2623 = vmul.f32 %v1395, 0.2
      %v2624 = vmul.f32 %v1400, 0.2
      %v2625 = vmul.f32 %v1403, 0.2
      %v2626 = vmul.f32 %v1408, 0.2
      %v2627 = vmul.f32 %v1411, 0.2
      %v2628 = vmul.f32 %v1416, 0.2
      %v2629 = vmul.f32 %v1419, 0.2
      %v2630 = vmul.f32 %v1424, 0.2
      %v2631 = vmul.f32 %v1427, 0.2
      %v2632 = vmul.f32 %v1432, 0.2
      %v2633 = vmul.f32 %v1435, 0.2
      %v2634 = vmul.f32 %v1440, 0.2
      %v2635 = vmul.f32 %v1443, 0.2
      %v2636 = vmul.f32 %v1448, 0.2
      %v2637 = vmul.f32 %v1451, 0.2
      %v2638 = vmul.f32 %v1456, 0.2
      %v2639 = vmul.f32 %v1459, 0.2
      %v2640 = vmul.f32 %v1464, 0.2
      %v2641 = vmul.f32 %v1467, 0.2
      %v2642 = vmul.f32 %v1472, 0.2
      %v2643 = vmul.f32 %v1475, 0.2
      %v2644 = vmul.f32 %v1480, 0.2
      %v2645 = vmul.f32 %v1483, 0.2
      %v2646 = vmul.f32 %v1488, 0.2
      %v2647 = vmul.f32 %v1491, 0.2
      %v2648 = vmul.f32 %v1496, 0.2
      %v2649 = vmul.f32 %v1499, 0.2
      %v2650 = vmul.f32 %v1504, 0.2
      %v2651 = vmul.f32 %v1507, 0.2
      %v2652 = vmul.f32 %v1512, 0.2
      %v2653 = vmul.f32 %v1515, 0.2
      %v2654 = vmul.f32 %v1520, 0.2
      %v2655 = vmul.f32 %v1523, 0.2
      %v2656 = vmul.f32 %v1528, 0.2
      %v2657 = vmul.f32 %v1531, 0.2
      %v2658 = vmul.f32 %v1536, 0.2
      %v2659 = vmul.f32 %v1539, 0.2
      %v2660 = vmul.f32 %v1544, 0.2
      %v2661 = vmul.f32 %v1547, 0.2
      %v2662 = vmul.f32 %v1552, 0.2
      %v2663 = vmul.f32 %v1555, 0.2
      %v2664 = vmul.f32 %v1560, 0.2
      %v2665 = vmul.f32 %v1563, 0.2
      %v2666 = vmul.f32 %v1568, 0.2
      %v2667 = vmul.f32 %v1571, 0.2
      %v2668 = vmul.f32 %v1576, 0.2
      %v2669 = vmul.f32 %v1579, 0.2
      %v2670 = vmul.f32 %v1584, 0.2
      %v2671 = vmul.f32 %v1587, 0.2
      %v2672 = vmul.f32 %v1592, 0.2
      %v2673 = vmul.f32 %v1595, 0.2
      %v2674 = vmul.f32 %v1600, 0.2
      %v2675 = vmul.f32 %v1603, 0.2
      %v2676 = vmul.f32 %v1608, 0.2
      %v2677 = vmul.f32 %v1611, 0.2
      %v2678 = vmul.f32 %v1616, 0.2
      %v2679 = vmul.f32 %v1619, 0.2
      %v2680 = vmul.f32 %v1624, 0.2
      %v2681 = vmul.f32 %v1627, 0.2
      %v2682 = vmul.f32 %v1632, 0.2
      %v2683 = vmul.f32 %v1635, 0.2
      %v2684 = vmul.f32 %v1640, 0.2
      %v2685 = vmul.f32 %v1643, 0.2
      %v2686 = vmul.f32 %v1648, 0.2
      %v2687 = vmul.f32 %v1651, 0.2
      %v2688 = vmul.f32 %v1656, 0.2
      %v2689 = vmul.f32 %v1659, 0.2
      %v2690 = vmul.f32 %v1664, 0.2
      %v2691 = vmul.f32 %v1667, 0.2
      %v2692 = vmul.f32 %v1672, 0.2
      %v2693 = vmul.f32 %v1675, 0.2
      %v2694 = vmul.f32 %v1680, 0.2
      %v2695 = vmul.f32 %v1683, 0.2
      %v2696 = vmul.f32 %v1688, 0.2
      %v2697 = vmul.f32 %v1691, 0.2
      %v2698 = vmul.f32 %v1696, 0.2
      %v2699 = vmul.f32 %v1699, 0.2
      %v2700 = vmul.f32 %v1704, 0.2
      %v2701 = vmul.f32 %v1707, 0.2
      %v2702 = vmul.f32 %v1712, 0.2
      %v2703 = vmul.f32 %v1715, 0.2
      %v2704 = vmul.f32 %v1720, 0.2
      %v2705 = vmul.f32 %v1723, 0.2
      %v2706 = vmul.f32 %v1728, 0.2
      %v2707 = vmul.f32 %v1731, 0.2
      %v2708 = vmul.f32 %v1736, 0.2
      %v2709 = vmul.f32 %v1739, 0.2
      %v2710 = vmul.f32 %v1744, 0.2
      %v2711 = vmul.f32 %v1747, 0.2
      %v2712 = vmul.f32 %v1752, 0.2
      %v2713 = vmul.f32 %v1755, 0.2
      %v2714 = vmul.f32 %v1760, 0.2
      %v2715 = vmul.f32 %v1763, 0.2
      %v2716 = vmul.f32 %v1768, 0.2
      %v2717 = vmul.f32 %v1771, 0.2
      %v2718 = vmul.f32 %v1776, 0.2
      %v2719 = vmul.f32 %v1779, 0.2
      %v2720 = vmul.f32 %v1784, 0.2
      %v2721 = vmul.f32 %v1787, 0.2
      %v2722 = vmul.f32 %v1792, 0.2
      %v2723 = vmul.f32 %v1795, 0.2
      %v2724 = vmul.f32 %v1800, 0.2
      %v2725 = vmul.f32 %v1803, 0.2
      %v2726 = vmul.f32 %v1808, 0.2
      %v2727 = vmul.f32 %v1811, 0.2
      %v2728 = vmul.f32 %v1816, 0.2
      %v2729 = vmul.f32 %v1819, 0.2
      %v2730 = vmul.f32 %v1824, 0.2
      %v2731 = vmul.f32 %v1827, 0.2
      %v2732 = vmul.f32 %v1832, 0.2
      %v2733 = vmul.f32 %v1835, 0.2
      %v2734 = vmul.f32 %v1840, 0.2
      %v2735 = vmul.f32 %v1843, 0.2
      %v2736 = vmul.f32 %v1848, 0.2
      %v2737 = vmul.f32 %v1851, 0.2
      %v2738 = vmul.f32 %v1856, 0.2
      %v2739 = vmul.f32 %v1859, 0.2
      %v2740 = vmul.f32 %v1864, 0.2
      %v2741 = vmul.f32 %v1867, 0.2
      %v2742 = vmul.f32 %v1872, 0.2
      %v2743 = vmul.f32 %v1875, 0.2
      %v2744 = vmul.f32 %v1880, 0.2
      %v2745 = vmul.f32 %v1883, 0.2
      %v2746 = vmul.f32 %v1888, 0.2
      %v2747 = vmul.f32 %v1891, 0.2
      %v2748 = vmul.f32 %v1896, 0.2
      %v2749 = vmul.f32 %v1899, 0.2
      %v2750 = vmul.f32 %v1904, 0.2
      %v2751 = vmul.f32 %v1907, 0.2
      %v2752 = vmul.f32 %v1912, 0.2
      %v2753 = vmul.f32 %v1915, 0.2
      %v2754 = vmul.f32 %v1920, 0.2
      %v2755 = vmul.f32 %v1923, 0.2
      %v2756 = vmul.f32 %v1928, 0.2
      %v2757 = vmul.f32 %v1931, 0.2
      %v2758 = vmul.f32 %v1936, 0.2
      %v2759 = vmul.f32 %v1939, 0.2
      %v2760 = vmul.f32 %v1944, 0.2
      %v2761 = vmul.f32 %v1947, 0.2
      %v2762 = vmul.f32 %v1952, 0.2
      %v2763 = vmul.f32 %v1955, 0.2
      %v2764 = vmul.f32 %v1960, 0.2
      %v2765 = vmul.f32 %v1963, 0.2
      %v2766 = vmul.f32 %v1968, 0.2
      %v2767 = vmul.f32 %v1971, 0.2
      %v2768 = vmul.f32 %v1976, 0.2
      %v2769 = vmul.f32 %v1979, 0.2
      %v2770 = vmul.f32 %v1984, 0.2
      %v2771 = vmul.f32 %v1987, 0.2
      %v2772 = vmul.f32 %v1992, 0.2
      %v2773 = vmul.f32 %v1995, 0.2
      %v2774 = vmul.f32 %v2000, 0.2
      %v2775 = vmul.f32 %v2003, 0.2
      %v2776 = vmul.f32 %v2008, 0.2
      %v2777 = vmul.f32 %v2011, 0.2
      %v2778 = vmul.f32 %v2016, 0.2
      %v2779 = vmul.f32 %v2019, 0.2
      %v2780 = vmul.f32 %v2024, 0.2
      %v2781 = vmul.f32 %v2027, 0.2
      %v2782 = vmul.f32 %v2032, 0.2
      %v2783 = vmul.f32 %v2035, 0.2
      %v2784 = vmul.f32 %v2040, 0.2
      %v2785 = vmul.f32 %v2043, 0.2
      %v2786 = vmul.f32 %v2048, 0.2
      %v2787 = vmul.f32 %v2051, 0.2
      %v2788 = vmul.f32 %v2056, 0.2
      %v2789 = vmul.f32 %v2059, 0.2
      %v2790 = vmul.f32 %v2064, 0.2
      %v2791 = vmul.f32 %v2067, 0.2
      %v2792 = vmul.f32 %v2072, 0.2
      %v2793 = vmul.f32 %v2075, 0.2
      %v2794 = vmul.f32 %v2080, 0.2
      %v2795 = vmul.f32 %v2083, 0.2
      %v2796 = vmul.f32 %v2088, 0.2
      %v2797 = vmul.f32 %v2091, 0.2
      %v2798 = vmul.f32 %v2096, 0.2
      %v2799 = vmul.f32 %v2099, 0.2
      %v2800 = vmul.f32 %v2104, 0.2
      %v2801 = vmul.f32 %v2107, 0.2
      %v2802 = vmul.f32 %v2112, 0.2
      %v2803 = vmul.f32 %v2115, 0.2
      %v2804 = vmul.f32 %v2120, 0.2
      %v2805 = vmul.f32 %v2123, 0.2
      %v2806 = vmul.f32 %v2128, 0.2
      %v2807 = vmul.f32 %v2131, 0.2
      %v2808 = vmul.f32 %v2136, 0.2
      %v2809 = vmul.f32 %v2139, 0.2
      %v2810 = vmul.f32 %v2144, 0.2
      %v2811 = vmul.f32 %v2147, 0.2
      %v2812 = vmul.f32 %v2152, 0.2
      %v2813 = vmul.f32 %v2155, 0.2
      %v2814 = vmul.f32 %v2160, 0.2
      %v2815 = vmul.f32 %v2163, 0.2
      %v2816 = vmul.f32 %v2168, 0.2
      %v2817 = vmul.f32 %v2171, 0.2
      %v2818 = vmul.f32 %v2176, 0.2
      %v2819 = vmul.f32 %v2179, 0.2
      %v2820 = vmul.f32 %v2184, 0.2
      %v2821 = vmul.f32 %v2187, 0.2
      %v2822 = vmul.f32 %v2192, 0.2
      %v2823 = vmul.f32 %v2195, 0.2
      %v2824 = vmul.f32 %v2200, 0.2
      %v2825 = vmul.f32 %v2203, 0.2
      %v2826 = vmul.f32 %v2208, 0.2
      %v2827 = vmul.f32 %v2211, 0.2
      %v2828 = vmul.f32 %v2216, 0.2
      %v2829 = vmul.f32 %v2219, 0.2
      %v2830 = vmul.f32 %v2224, 0.2
      %v2831 = vmul.f32 %v2227, 0.2
      %v2832 = vmul.f32 %v2232, 0.2
      %v2833 = vmul.f32 %v2235, 0.2
      %v2834 = vmul.f32 %v2240, 0.2
      %v2835 = vmul.f32 %v2243, 0.2
      %v2836 = vmul.f32 %v2248, 0.2
      %v2837 = vmul.f32 %v2251, 0.2
      %v2838 = vmul.f32 %v2256, 0.2
      %v2839 = vmul.f32 %v2259, 0.2
      %v2840 = vmul.f32 %v2264, 0.2
      %v2841 = vmul.f32 %v2267, 0.2
      %v2842 = vmul.f32 %v2272, 0.2
      %v2843 = vmul.f32 %v2275, 0.2
      %v2844 = vmul.f32 %v2280, 0.2
      %v2845 = vmul.f32 %v2283, 0.2
      %v2846 = vmul.f32 %v2288, 0.2
      %v2847 = vmul.f32 %v2291, 0.2
      %v2848 = vmul.f32 %v2296, 0.2
      %v2849 = vmul.f32 %v2299, 0.2
      %v2850 = vmul.f32 %v2304, 0.2
      %v2851 = vmul.f32 %v2307, 0.2
      %v2852 = vmul.f32 %v2312, 0.2
      %v2853 = vmul.f32 %v2315, 0.2
      %v2854 = vmul.f32 %v2320, 0.2
      %v2855 = vmul.f32 %v2323, 0.2
      %v2856 = vmul.f32 %v2328, 0.2
      %v2857 = vmul.f32 %v2331, 0.2
      %v2858 = vmul.f32 %v2336, 0.2
      %v2859 = vmul.f32 %v2339, 0.2
      %v2860 = vmul.f32 %v2344, 0.2
      %v2861 = vmul.f32 %v2347, 0.2
      %v2862 = vsel %vm2350, %v1328, %v2606
      %v2863 = vsel %vm2351, %v1331, %v2607
      %v2864 = vsel %vm2352, %v1336, %v2608
      %v2865 = vsel %vm2353, %v1339, %v2609
      %v2866 = vsel %vm2354, %v1344, %v2610
      %v2867 = vsel %vm2355, %v1347, %v2611
      %v2868 = vsel %vm2356, %v1352, %v2612
      %v2869 = vsel %vm2357, %v1355, %v2613
      %v2870 = vsel %vm2358, %v1360, %v2614
      %v2871 = vsel %vm2359, %v1363, %v2615
      %v2872 = vsel %vm2360, %v1368, %v2616
      %v2873 = vsel %vm2361, %v1371, %v2617
      %v2874 = vsel %vm2362, %v1376, %v2618
      %v2875 = vsel %vm2363, %v1379, %v2619
      %v2876 = vsel %vm2364, %v1384, %v2620
      %v2877 = vsel %vm2365, %v1387, %v2621
      %v2878 = vsel %vm2366, %v1392, %v2622
      %v2879 = vsel %vm2367, %v1395, %v2623
      %v2880 = vsel %vm2368, %v1400, %v2624
      %v2881 = vsel %vm2369, %v1403, %v2625
      %v2882 = vsel %vm2370, %v1408, %v2626
      %v2883 = vsel %vm2371, %v1411, %v2627
      %v2884 = vsel %vm2372, %v1416, %v2628
      %v2885 = vsel %vm2373, %v1419, %v2629
      %v2886 = vsel %vm2374, %v1424, %v2630
      %v2887 = vsel %vm2375, %v1427, %v2631
      %v2888 = vsel %vm2376, %v1432, %v2632
      %v2889 = vsel %vm2377, %v1435, %v2633
      %v2890 = vsel %vm2378, %v1440, %v2634
      %v2891 = vsel %vm2379, %v1443, %v2635
      %v2892 = vsel %vm2380, %v1448, %v2636
      %v2893 = vsel %vm2381, %v1451, %v2637
      %v2894 = vsel %vm2382, %v1456, %v2638
      %v2895 = vsel %vm2383, %v1459, %v2639
      %v2896 = vsel %vm2384, %v1464, %v2640
      %v2897 = vsel %vm2385, %v1467, %v2641
      %v2898 = vsel %vm2386, %v1472, %v2642
      %v2899 = vsel %vm2387, %v1475, %v2643
      %v2900 = vsel %vm2388, %v1480, %v2644
      %v2901 = vsel %vm2389, %v1483, %v2645
      %v2902 = vsel %vm2390, %v1488, %v2646
      %v2903 = vsel %vm2391, %v1491, %v2647
      %v2904 = vsel %vm2392, %v1496, %v2648
      %v2905 = vsel %vm2393, %v1499, %v2649
      %v2906 = vsel %vm2394, %v1504, %v2650
      %v2907 = vsel %vm2395, %v1507, %v2651
      %v2908 = vsel %vm2396, %v1512, %v2652
      %v2909 = vsel %vm2397, %v1515, %v2653
      %v2910 = vsel %vm2398, %v1520, %v2654
      %v2911 = vsel %vm2399, %v1523, %v2655
      %v2912 = vsel %vm2400, %v1528, %v2656
      %v2913 = vsel %vm2401, %v1531, %v2657
      %v2914 = vsel %vm2402, %v1536, %v2658
      %v2915 = vsel %vm2403, %v1539, %v2659
      %v2916 = vsel %vm2404, %v1544, %v2660
      %v2917 = vsel %vm2405, %v1547, %v2661
      %v2918 = vsel %vm2406, %v1552, %v2662
      %v2919 = vsel %vm2407, %v1555, %v2663
      %v2920 = vsel %vm2408, %v1560, %v2664
      %v2921 = vsel %vm2409, %v1563, %v2665
      %v2922 = vsel %vm2410, %v1568, %v2666
      %v2923 = vsel %vm2411, %v1571, %v2667
      %v2924 = vsel %vm2412, %v1576, %v2668
      %v2925 = vsel %vm2413, %v1579, %v2669
      %v2926 = vsel %vm2414, %v1584, %v2670
      %v2927 = vsel %vm2415, %v1587, %v2671
      %v2928 = vsel %vm2416, %v1592, %v2672
      %v2929 = vsel %vm2417, %v1595, %v2673
      %v2930 = vsel %vm2418, %v1600, %v2674
      %v2931 = vsel %vm2419, %v1603, %v2675
      %v2932 = vsel %vm2420, %v1608, %v2676
      %v2933 = vsel %vm2421, %v1611, %v2677
      %v2934 = vsel %vm2422, %v1616, %v2678
      %v2935 = vsel %vm2423, %v1619, %v2679
      %v2936 = vsel %vm2424, %v1624, %v2680
      %v2937 = vsel %vm2425, %v1627, %v2681
      %v2938 = vsel %vm2426, %v1632, %v2682
      %v2939 = vsel %vm2427, %v1635, %v2683
      %v2940 = vsel %vm2428, %v1640, %v2684
      %v2941 = vsel %vm2429, %v1643, %v2685
      %v2942 = vsel %vm2430, %v1648, %v2686
      %v2943 = vsel %vm2431, %v1651, %v2687
      %v2944 = vsel %vm2432, %v1656, %v2688
      %v2945 = vsel %vm2433, %v1659, %v2689
      %v2946 = vsel %vm2434, %v1664, %v2690
      %v2947 = vsel %vm2435, %v1667, %v2691
      %v2948 = vsel %vm2436, %v1672, %v2692
      %v2949 = vsel %vm2437, %v1675, %v2693
      %v2950 = vsel %vm2438, %v1680, %v2694
      %v2951 = vsel %vm2439, %v1683, %v2695
      %v2952 = vsel %vm2440, %v1688, %v2696
      %v2953 = vsel %vm2441, %v1691, %v2697
      %v2954 = vsel %vm2442, %v1696, %v2698
      %v2955 = vsel %vm2443, %v1699, %v2699
      %v2956 = vsel %vm2444, %v1704, %v2700
      %v2957 = vsel %vm2445, %v1707, %v2701
      %v2958 = vsel %vm2446, %v1712, %v2702
      %v2959 = vsel %vm2447, %v1715, %v2703
      %v2960 = vsel %vm2448, %v1720, %v2704
      %v2961 = vsel %vm2449, %v1723, %v2705
      %v2962 = vsel %vm2450, %v1728, %v2706
      %v2963 = vsel %vm2451, %v1731, %v2707
      %v2964 = vsel %vm2452, %v1736, %v2708
      %v2965 = vsel %vm2453, %v1739, %v2709
      %v2966 = vsel %vm2454, %v1744, %v2710
      %v2967 = vsel %vm2455, %v1747, %v2711
      %v2968 = vsel %vm2456, %v1752, %v2712
      %v2969 = vsel %vm2457, %v1755, %v2713
      %v2970 = vsel %vm2458, %v1760, %v2714
      %v2971 = vsel %vm2459, %v1763, %v2715
      %v2972 = vsel %vm2460, %v1768, %v2716
      %v2973 = vsel %vm2461, %v1771, %v2717
      %v2974 = vsel %vm2462, %v1776, %v2718
      %v2975 = vsel %vm2463, %v1779, %v2719
      %v2976 = vsel %vm2464, %v1784, %v2720
      %v2977 = vsel %vm2465, %v1787, %v2721
      %v2978 = vsel %vm2466, %v1792, %v2722
      %v2979 = vsel %vm2467, %v1795, %v2723
      %v2980 = vsel %vm2468, %v1800, %v2724
      %v2981 = vsel %vm2469, %v1803, %v2725
      %v2982 = vsel %vm2470, %v1808, %v2726
      %v2983 = vsel %vm2471, %v1811, %v2727
      %v2984 = vsel %vm2472, %v1816, %v2728
      %v2985 = vsel %vm2473, %v1819, %v2729
      %v2986 = vsel %vm2474, %v1824, %v2730
      %v2987 = vsel %vm2475, %v1827, %v2731
      %v2988 = vsel %vm2476, %v1832, %v2732
      %v2989 = vsel %vm2477, %v1835, %v2733
      %v2990 = vsel %vm2478, %v1840, %v2734
      %v2991 = vsel %vm2479, %v1843, %v2735
      %v2992 = vsel %vm2480, %v1848, %v2736
      %v2993 = vsel %vm2481, %v1851, %v2737
      %v2994 = vsel %vm2482, %v1856, %v2738
      %v2995 = vsel %vm2483, %v1859, %v2739
      %v2996 = vsel %vm2484, %v1864, %v2740
      %v2997 = vsel %vm2485, %v1867, %v2741
      %v2998 = vsel %vm2486, %v1872, %v2742
      %v2999 = vsel %vm2487, %v1875, %v2743
      %v3000 = vsel %vm2488, %v1880, %v2744
      %v3001 = vsel %vm2489, %v1883, %v2745
      %v3002 = vsel %vm2490, %v1888, %v2746
      %v3003 = vsel %vm2491, %v1891, %v2747
      %v3004 = vsel %vm2492, %v1896, %v2748
      %v3005 = vsel %vm2493, %v1899, %v2749
      %v3006 = vsel %vm2494, %v1904, %v2750
      %v3007 = vsel %vm2495, %v1907, %v2751
      %v3008 = vsel %vm2496, %v1912, %v2752
      %v3009 = vsel %vm2497, %v1915, %v2753
      %v3010 = vsel %vm2498, %v1920, %v2754
      %v3011 = vsel %vm2499, %v1923, %v2755
      %v3012 = vsel %vm2500, %v1928, %v2756
      %v3013 = vsel %vm2501, %v1931, %v2757
      %v3014 = vsel %vm2502, %v1936, %v2758
      %v3015 = vsel %vm2503, %v1939, %v2759
      %v3016 = vsel %vm2504, %v1944, %v2760
      %v3017 = vsel %vm2505, %v1947, %v2761
      %v3018 = vsel %vm2506, %v1952, %v2762
      %v3019 = vsel %vm2507, %v1955, %v2763
      %v3020 = vsel %vm2508, %v1960, %v2764
      %v3021 = vsel %vm2509, %v1963, %v2765
      %v3022 = vsel %vm2510, %v1968, %v2766
      %v3023 = vsel %vm2511, %v1971, %v2767
      %v3024 = vsel %vm2512, %v1976, %v2768
      %v3025 = vsel %vm2513, %v1979, %v2769
      %v3026 = vsel %vm2514, %v1984, %v2770
      %v3027 = vsel %vm2515, %v1987, %v2771
      %v3028 = vsel %vm2516, %v1992, %v2772
      %v3029 = vsel %vm2517, %v1995, %v2773
      %v3030 = vsel %vm2518, %v2000, %v2774
      %v3031 = vsel %vm2519, %v2003, %v2775
      %v3032 = vsel %vm2520, %v2008, %v2776
      %v3033 = vsel %vm2521, %v2011, %v2777
      %v3034 = vsel %vm2522, %v2016, %v2778
      %v3035 = vsel %vm2523, %v2019, %v2779
      %v3036 = vsel %vm2524, %v2024, %v2780
      %v3037 = vsel %vm2525, %v2027, %v2781
      %v3038 = vsel %vm2526, %v2032, %v2782
      %v3039 = vsel %vm2527, %v2035, %v2783
      %v3040 = vsel %vm2528, %v2040, %v2784
      %v3041 = vsel %vm2529, %v2043, %v2785
      %v3042 = vsel %vm2530, %v2048, %v2786
      %v3043 = vsel %vm2531, %v2051, %v2787
      %v3044 = vsel %vm2532, %v2056, %v2788
      %v3045 = vsel %vm2533, %v2059, %v2789
      %v3046 = vsel %vm2534, %v2064, %v2790
      %v3047 = vsel %vm2535, %v2067, %v2791
      %v3048 = vsel %vm2536, %v2072, %v2792
      %v3049 = vsel %vm2537, %v2075, %v2793
      %v3050 = vsel %vm2538, %v2080, %v2794
      %v3051 = vsel %vm2539, %v2083, %v2795
      %v3052 = vsel %vm2540, %v2088, %v2796
      %v3053 = vsel %vm2541, %v2091, %v2797
      %v3054 = vsel %vm2542, %v2096, %v2798
      %v3055 = vsel %vm2543, %v2099, %v2799
      %v3056 = vsel %vm2544, %v2104, %v2800
      %v3057 = vsel %vm2545, %v2107, %v2801
      %v3058 = vsel %vm2546, %v2112, %v2802
      %v3059 = vsel %vm2547, %v2115, %v2803
      %v3060 = vsel %vm2548, %v2120, %v2804
      %v3061 = vsel %vm2549, %v2123, %v2805
      %v3062 = vsel %vm2550, %v2128, %v2806
      %v3063 = vsel %vm2551, %v2131, %v2807
      %v3064 = vsel %vm2552, %v2136, %v2808
      %v3065 = vsel %vm2553, %v2139, %v2809
      %v3066 = vsel %vm2554, %v2144, %v2810
      %v3067 = vsel %vm2555, %v2147, %v2811
      %v3068 = vsel %vm2556, %v2152, %v2812
      %v3069 = vsel %vm2557, %v2155, %v2813
      %v3070 = vsel %vm2558, %v2160, %v2814
      %v3071 = vsel %vm2559, %v2163, %v2815
      %v3072 = vsel %vm2560, %v2168, %v2816
      %v3073 = vsel %vm2561, %v2171, %v2817
      %v3074 = vsel %vm2562, %v2176, %v2818
      %v3075 = vsel %vm2563, %v2179, %v2819
      %v3076 = vsel %vm2564, %v2184, %v2820
      %v3077 = vsel %vm2565, %v2187, %v2821
      %v3078 = vsel %vm2566, %v2192, %v2822
      %v3079 = vsel %vm2567, %v2195, %v2823
      %v3080 = vsel %vm2568, %v2200, %v2824
      %v3081 = vsel %vm2569, %v2203, %v2825
      %v3082 = vsel %vm2570, %v2208, %v2826
      %v3083 = vsel %vm2571, %v2211, %v2827
      %v3084 = vsel %vm2572, %v2216, %v2828
      %v3085 = vsel %vm2573, %v2219, %v2829
      %v3086 = vsel %vm2574, %v2224, %v2830
      %v3087 = vsel %vm2575, %v2227, %v2831
      %v3088 = vsel %vm2576, %v2232, %v2832
      %v3089 = vsel %vm2577, %v2235, %v2833
      %v3090 = vsel %vm2578, %v2240, %v2834
      %v3091 = vsel %vm2579, %v2243, %v2835
      %v3092 = vsel %vm2580, %v2248, %v2836
      %v3093 = vsel %vm2581, %v2251, %v2837
      %v3094 = vsel %vm2582, %v2256, %v2838
      %v3095 = vsel %vm2583, %v2259, %v2839
      %v3096 = vsel %vm2584, %v2264, %v2840
      %v3097 = vsel %vm2585, %v2267, %v2841
      %v3098 = vsel %vm2586, %v2272, %v2842
      %v3099 = vsel %vm2587, %v2275, %v2843
      %v3100 = vsel %vm2588, %v2280, %v2844
      %v3101 = vsel %vm2589, %v2283, %v2845
      %v3102 = vsel %vm2590, %v2288, %v2846
      %v3103 = vsel %vm2591, %v2291, %v2847
      %v3104 = vsel %vm2592, %v2296, %v2848
      %v3105 = vsel %vm2593, %v2299, %v2849
      %v3106 = vsel %vm2594, %v2304, %v2850
      %v3107 = vsel %vm2595, %v2307, %v2851
      %v3108 = vsel %vm2596, %v2312, %v2852
      %v3109 = vsel %vm2597, %v2315, %v2853
      %v3110 = vsel %vm2598, %v2320, %v2854
      %v3111 = vsel %vm2599, %v2323, %v2855
      %v3112 = vsel %vm2600, %v2328, %v2856
      %v3113 = vsel %vm2601, %v2331, %v2857
      %v3114 = vsel %vm2602, %v2336, %v2858
      %v3115 = vsel %vm2603, %v2339, %v2859
      %v3116 = vsel %vm2604, %v2344, %v2860
      %v3117 = vsel %vm2605, %v2347, %v2861
      %v3118 = vpack.c.bf16 %v2863, %v2862
      %v3119 = vpack.c.bf16 %v2865, %v2864
      %v3120 = vpack.c.bf16 %v2867, %v2866
      %v3121 = vpack.c.bf16 %v2869, %v2868
      %v3122 = vpack.c.bf16 %v2871, %v2870
      %v3123 = vpack.c.bf16 %v2873, %v2872
      %v3124 = vpack.c.bf16 %v2875, %v2874
      %v3125 = vpack.c.bf16 %v2877, %v2876
      %v3126 = vpack.c.bf16 %v2879, %v2878
      %v3127 = vpack.c.bf16 %v2881, %v2880
      %v3128 = vpack.c.bf16 %v2883, %v2882
      %v3129 = vpack.c.bf16 %v2885, %v2884
      %v3130 = vpack.c.bf16 %v2887, %v2886
      %v3131 = vpack.c.bf16 %v2889, %v2888
      %v3132 = vpack.c.bf16 %v2891, %v2890
      %v3133 = vpack.c.bf16 %v2893, %v2892
      %v3134 = vpack.c.bf16 %v2895, %v2894
      %v3135 = vpack.c.bf16 %v2897, %v2896
      %v3136 = vpack.c.bf16 %v2899, %v2898
      %v3137 = vpack.c.bf16 %v2901, %v2900
      %v3138 = vpack.c.bf16 %v2903, %v2902
      %v3139 = vpack.c.bf16 %v2905, %v2904
      %v3140 = vpack.c.bf16 %v2907, %v2906
      %v3141 = vpack.c.bf16 %v2909, %v2908
      %v3142 = vpack.c.bf16 %v2911, %v2910
      %v3143 = vpack.c.bf16 %v2913, %v2912
      %v3144 = vpack.c.bf16 %v2915, %v2914
      %v3145 = vpack.c.bf16 %v2917, %v2916
      %v3146 = vpack.c.bf16 %v2919, %v2918
      %v3147 = vpack.c.bf16 %v2921, %v2920
      %v3148 = vpack.c.bf16 %v2923, %v2922
      %v3149 = vpack.c.bf16 %v2925, %v2924
      %v3150 = vpack.c.bf16 %v2927, %v2926
      %v3151 = vpack.c.bf16 %v2929, %v2928
      %v3152 = vpack.c.bf16 %v2931, %v2930
      %v3153 = vpack.c.bf16 %v2933, %v2932
      %v3154 = vpack.c.bf16 %v2935, %v2934
      %v3155 = vpack.c.bf16 %v2937, %v2936
      %v3156 = vpack.c.bf16 %v2939, %v2938
      %v3157 = vpack.c.bf16 %v2941, %v2940
      %v3158 = vpack.c.bf16 %v2943, %v2942
      %v3159 = vpack.c.bf16 %v2945, %v2944
      %v3160 = vpack.c.bf16 %v2947, %v2946
      %v3161 = vpack.c.bf16 %v2949, %v2948
      %v3162 = vpack.c.bf16 %v2951, %v2950
      %v3163 = vpack.c.bf16 %v2953, %v2952
      %v3164 = vpack.c.bf16 %v2955, %v2954
      %v3165 = vpack.c.bf16 %v2957, %v2956
      %v3166 = vpack.c.bf16 %v2959, %v2958
      %v3167 = vpack.c.bf16 %v2961, %v2960
      %v3168 = vpack.c.bf16 %v2963, %v2962
      %v3169 = vpack.c.bf16 %v2965, %v2964
      %v3170 = vpack.c.bf16 %v2967, %v2966
      %v3171 = vpack.c.bf16 %v2969, %v2968
      %v3172 = vpack.c.bf16 %v2971, %v2970
      %v3173 = vpack.c.bf16 %v2973, %v2972
      %v3174 = vpack.c.bf16 %v2975, %v2974
      %v3175 = vpack.c.bf16 %v2977, %v2976
      %v3176 = vpack.c.bf16 %v2979, %v2978
      %v3177 = vpack.c.bf16 %v2981, %v2980
      %v3178 = vpack.c.bf16 %v2983, %v2982
      %v3179 = vpack.c.bf16 %v2985, %v2984
      %v3180 = vpack.c.bf16 %v2987, %v2986
      %v3181 = vpack.c.bf16 %v2989, %v2988
      %v3182 = vpack.c.bf16 %v2991, %v2990
      %v3183 = vpack.c.bf16 %v2993, %v2992
      %v3184 = vpack.c.bf16 %v2995, %v2994
      %v3185 = vpack.c.bf16 %v2997, %v2996
      %v3186 = vpack.c.bf16 %v2999, %v2998
      %v3187 = vpack.c.bf16 %v3001, %v3000
      %v3188 = vpack.c.bf16 %v3003, %v3002
      %v3189 = vpack.c.bf16 %v3005, %v3004
      %v3190 = vpack.c.bf16 %v3007, %v3006
      %v3191 = vpack.c.bf16 %v3009, %v3008
      %v3192 = vpack.c.bf16 %v3011, %v3010
      %v3193 = vpack.c.bf16 %v3013, %v3012
      %v3194 = vpack.c.bf16 %v3015, %v3014
      %v3195 = vpack.c.bf16 %v3017, %v3016
      %v3196 = vpack.c.bf16 %v3019, %v3018
      %v3197 = vpack.c.bf16 %v3021, %v3020
      %v3198 = vpack.c.bf16 %v3023, %v3022
      %v3199 = vpack.c.bf16 %v3025, %v3024
      %v3200 = vpack.c.bf16 %v3027, %v3026
      %v3201 = vpack.c.bf16 %v3029, %v3028
      %v3202 = vpack.c.bf16 %v3031, %v3030
      %v3203 = vpack.c.bf16 %v3033, %v3032
      %v3204 = vpack.c.bf16 %v3035, %v3034
      %v3205 = vpack.c.bf16 %v3037, %v3036
      %v3206 = vpack.c.bf16 %v3039, %v3038
      %v3207 = vpack.c.bf16 %v3041, %v3040
      %v3208 = vpack.c.bf16 %v3043, %v3042
      %v3209 = vpack.c.bf16 %v3045, %v3044
      %v3210 = vpack.c.bf16 %v3047, %v3046
      %v3211 = vpack.c.bf16 %v3049, %v3048
      %v3212 = vpack.c.bf16 %v3051, %v3050
      %v3213 = vpack.c.bf16 %v3053, %v3052
      %v3214 = vpack.c.bf16 %v3055, %v3054
      %v3215 = vpack.c.bf16 %v3057, %v3056
      %v3216 = vpack.c.bf16 %v3059, %v3058
      %v3217 = vpack.c.bf16 %v3061, %v3060
      %v3218 = vpack.c.bf16 %v3063, %v3062
      %v3219 = vpack.c.bf16 %v3065, %v3064
      %v3220 = vpack.c.bf16 %v3067, %v3066
      %v3221 = vpack.c.bf16 %v3069, %v3068
      %v3222 = vpack.c.bf16 %v3071, %v3070
      %v3223 = vpack.c.bf16 %v3073, %v3072
      %v3224 = vpack.c.bf16 %v3075, %v3074
      %v3225 = vpack.c.bf16 %v3077, %v3076
      %v3226 = vpack.c.bf16 %v3079, %v3078
      %v3227 = vpack.c.bf16 %v3081, %v3080
      %v3228 = vpack.c.bf16 %v3083, %v3082
      %v3229 = vpack.c.bf16 %v3085, %v3084
      %v3230 = vpack.c.bf16 %v3087, %v3086
      %v3231 = vpack.c.bf16 %v3089, %v3088
      %v3232 = vpack.c.bf16 %v3091, %v3090
      %v3233 = vpack.c.bf16 %v3093, %v3092
      %v3234 = vpack.c.bf16 %v3095, %v3094
      %v3235 = vpack.c.bf16 %v3097, %v3096
      %v3236 = vpack.c.bf16 %v3099, %v3098
      %v3237 = vpack.c.bf16 %v3101, %v3100
      %v3238 = vpack.c.bf16 %v3103, %v3102
      %v3239 = vpack.c.bf16 %v3105, %v3104
      %v3240 = vpack.c.bf16 %v3107, %v3106
      %v3241 = vpack.c.bf16 %v3109, %v3108
      %v3242 = vpack.c.bf16 %v3111, %v3110
      %v3243 = vpack.c.bf16 %v3113, %v3112
      %v3244 = vpack.c.bf16 %v3115, %v3114
      %v3245 = vpack.c.bf16 %v3117, %v3116
      %v3374 = vunpack.c.l.b16 %v3118
      %v3375 = vunpack.c.h.b16 %v3118
      %v3376 = vunpack.c.l.b16 %v3119
      %v3377 = vunpack.c.h.b16 %v3119
      %v3378 = vunpack.c.l.b16 %v3120
      %v3379 = vunpack.c.h.b16 %v3120
      %v3380 = vunpack.c.l.b16 %v3121
      %v3381 = vunpack.c.h.b16 %v3121
      %v3382 = vunpack.c.l.b16 %v3122
      %v3383 = vunpack.c.h.b16 %v3122
      %v3384 = vunpack.c.l.b16 %v3123
      %v3385 = vunpack.c.h.b16 %v3123
      %v3386 = vunpack.c.l.b16 %v3124
      %v3387 = vunpack.c.h.b16 %v3124
      %v3388 = vunpack.c.l.b16 %v3125
      %v3389 = vunpack.c.h.b16 %v3125
      %v3390 = vunpack.c.l.b16 %v3126
      %v3391 = vunpack.c.h.b16 %v3126
      %v3392 = vunpack.c.l.b16 %v3127
      %v3393 = vunpack.c.h.b16 %v3127
      %v3394 = vunpack.c.l.b16 %v3128
      %v3395 = vunpack.c.h.b16 %v3128
      %v3396 = vunpack.c.l.b16 %v3129
      %v3397 = vunpack.c.h.b16 %v3129
      %v3398 = vunpack.c.l.b16 %v3130
      %v3399 = vunpack.c.h.b16 %v3130
      %v3400 = vunpack.c.l.b16 %v3131
      %v3401 = vunpack.c.h.b16 %v3131
      %v3402 = vunpack.c.l.b16 %v3132
      %v3403 = vunpack.c.h.b16 %v3132
      %v3404 = vunpack.c.l.b16 %v3133
      %v3405 = vunpack.c.h.b16 %v3133
      %v3406 = vunpack.c.l.b16 %v3134
      %v3407 = vunpack.c.h.b16 %v3134
      %v3408 = vunpack.c.l.b16 %v3135
      %v3409 = vunpack.c.h.b16 %v3135
      %v3410 = vunpack.c.l.b16 %v3136
      %v3411 = vunpack.c.h.b16 %v3136
      %v3412 = vunpack.c.l.b16 %v3137
      %v3413 = vunpack.c.h.b16 %v3137
      %v3414 = vunpack.c.l.b16 %v3138
      %v3415 = vunpack.c.h.b16 %v3138
      %v3416 = vunpack.c.l.b16 %v3139
      %v3417 = vunpack.c.h.b16 %v3139
      %v3418 = vunpack.c.l.b16 %v3140
      %v3419 = vunpack.c.h.b16 %v3140
      %v3420 = vunpack.c.l.b16 %v3141
      %v3421 = vunpack.c.h.b16 %v3141
      %v3422 = vunpack.c.l.b16 %v3142
      %v3423 = vunpack.c.h.b16 %v3142
      %v3424 = vunpack.c.l.b16 %v3143
      %v3425 = vunpack.c.h.b16 %v3143
      %v3426 = vunpack.c.l.b16 %v3144
      %v3427 = vunpack.c.h.b16 %v3144
      %v3428 = vunpack.c.l.b16 %v3145
      %v3429 = vunpack.c.h.b16 %v3145
      %v3430 = vunpack.c.l.b16 %v3146
      %v3431 = vunpack.c.h.b16 %v3146
      %v3432 = vunpack.c.l.b16 %v3147
      %v3433 = vunpack.c.h.b16 %v3147
      %v3434 = vunpack.c.l.b16 %v3148
      %v3435 = vunpack.c.h.b16 %v3148
      %v3436 = vunpack.c.l.b16 %v3149
      %v3437 = vunpack.c.h.b16 %v3149
      %v3438 = vunpack.c.l.b16 %v3150
      %v3439 = vunpack.c.h.b16 %v3150
      %v3440 = vunpack.c.l.b16 %v3151
      %v3441 = vunpack.c.h.b16 %v3151
      %v3442 = vunpack.c.l.b16 %v3152
      %v3443 = vunpack.c.h.b16 %v3152
      %v3444 = vunpack.c.l.b16 %v3153
      %v3445 = vunpack.c.h.b16 %v3153
      %v3446 = vunpack.c.l.b16 %v3154
      %v3447 = vunpack.c.h.b16 %v3154
      %v3448 = vunpack.c.l.b16 %v3155
      %v3449 = vunpack.c.h.b16 %v3155
      %v3450 = vunpack.c.l.b16 %v3156
      %v3451 = vunpack.c.h.b16 %v3156
      %v3452 = vunpack.c.l.b16 %v3157
      %v3453 = vunpack.c.h.b16 %v3157
      %v3454 = vunpack.c.l.b16 %v3158
      %v3455 = vunpack.c.h.b16 %v3158
      %v3456 = vunpack.c.l.b16 %v3159
      %v3457 = vunpack.c.h.b16 %v3159
      %v3458 = vunpack.c.l.b16 %v3160
      %v3459 = vunpack.c.h.b16 %v3160
      %v3460 = vunpack.c.l.b16 %v3161
      %v3461 = vunpack.c.h.b16 %v3161
      %v3462 = vunpack.c.l.b16 %v3162
      %v3463 = vunpack.c.h.b16 %v3162
      %v3464 = vunpack.c.l.b16 %v3163
      %v3465 = vunpack.c.h.b16 %v3163
      %v3466 = vunpack.c.l.b16 %v3164
      %v3467 = vunpack.c.h.b16 %v3164
      %v3468 = vunpack.c.l.b16 %v3165
      %v3469 = vunpack.c.h.b16 %v3165
      %v3470 = vunpack.c.l.b16 %v3166
      %v3471 = vunpack.c.h.b16 %v3166
      %v3472 = vunpack.c.l.b16 %v3167
      %v3473 = vunpack.c.h.b16 %v3167
      %v3474 = vunpack.c.l.b16 %v3168
      %v3475 = vunpack.c.h.b16 %v3168
      %v3476 = vunpack.c.l.b16 %v3169
      %v3477 = vunpack.c.h.b16 %v3169
      %v3478 = vunpack.c.l.b16 %v3170
      %v3479 = vunpack.c.h.b16 %v3170
      %v3480 = vunpack.c.l.b16 %v3171
      %v3481 = vunpack.c.h.b16 %v3171
      %v3482 = vunpack.c.l.b16 %v3172
      %v3483 = vunpack.c.h.b16 %v3172
      %v3484 = vunpack.c.l.b16 %v3173
      %v3485 = vunpack.c.h.b16 %v3173
      %v3486 = vunpack.c.l.b16 %v3174
      %v3487 = vunpack.c.h.b16 %v3174
      %v3488 = vunpack.c.l.b16 %v3175
      %v3489 = vunpack.c.h.b16 %v3175
      %v3490 = vunpack.c.l.b16 %v3176
      %v3491 = vunpack.c.h.b16 %v3176
      %v3492 = vunpack.c.l.b16 %v3177
      %v3493 = vunpack.c.h.b16 %v3177
      %v3494 = vunpack.c.l.b16 %v3178
      %v3495 = vunpack.c.h.b16 %v3178
      %v3496 = vunpack.c.l.b16 %v3179
      %v3497 = vunpack.c.h.b16 %v3179
      %v3498 = vunpack.c.l.b16 %v3180
      %v3499 = vunpack.c.h.b16 %v3180
      %v3500 = vunpack.c.l.b16 %v3181
      %v3501 = vunpack.c.h.b16 %v3181
      %v3502 = vunpack.c.l.b16 %v3182
      %v3503 = vunpack.c.h.b16 %v3182
      %v3504 = vunpack.c.l.b16 %v3183
      %v3505 = vunpack.c.h.b16 %v3183
      %v3506 = vunpack.c.l.b16 %v3184
      %v3507 = vunpack.c.h.b16 %v3184
      %v3508 = vunpack.c.l.b16 %v3185
      %v3509 = vunpack.c.h.b16 %v3185
      %v3510 = vunpack.c.l.b16 %v3186
      %v3511 = vunpack.c.h.b16 %v3186
      %v3512 = vunpack.c.l.b16 %v3187
      %v3513 = vunpack.c.h.b16 %v3187
      %v3514 = vunpack.c.l.b16 %v3188
      %v3515 = vunpack.c.h.b16 %v3188
      %v3516 = vunpack.c.l.b16 %v3189
      %v3517 = vunpack.c.h.b16 %v3189
      %v3518 = vunpack.c.l.b16 %v3190
      %v3519 = vunpack.c.h.b16 %v3190
      %v3520 = vunpack.c.l.b16 %v3191
      %v3521 = vunpack.c.h.b16 %v3191
      %v3522 = vunpack.c.l.b16 %v3192
      %v3523 = vunpack.c.h.b16 %v3192
      %v3524 = vunpack.c.l.b16 %v3193
      %v3525 = vunpack.c.h.b16 %v3193
      %v3526 = vunpack.c.l.b16 %v3194
      %v3527 = vunpack.c.h.b16 %v3194
      %v3528 = vunpack.c.l.b16 %v3195
      %v3529 = vunpack.c.h.b16 %v3195
      %v3530 = vunpack.c.l.b16 %v3196
      %v3531 = vunpack.c.h.b16 %v3196
      %v3532 = vunpack.c.l.b16 %v3197
      %v3533 = vunpack.c.h.b16 %v3197
      %v3534 = vunpack.c.l.b16 %v3198
      %v3535 = vunpack.c.h.b16 %v3198
      %v3536 = vunpack.c.l.b16 %v3199
      %v3537 = vunpack.c.h.b16 %v3199
      %v3538 = vunpack.c.l.b16 %v3200
      %v3539 = vunpack.c.h.b16 %v3200
      %v3540 = vunpack.c.l.b16 %v3201
      %v3541 = vunpack.c.h.b16 %v3201
      %v3542 = vunpack.c.l.b16 %v3202
      %v3543 = vunpack.c.h.b16 %v3202
      %v3544 = vunpack.c.l.b16 %v3203
      %v3545 = vunpack.c.h.b16 %v3203
      %v3546 = vunpack.c.l.b16 %v3204
      %v3547 = vunpack.c.h.b16 %v3204
      %v3548 = vunpack.c.l.b16 %v3205
      %v3549 = vunpack.c.h.b16 %v3205
      %v3550 = vunpack.c.l.b16 %v3206
      %v3551 = vunpack.c.h.b16 %v3206
      %v3552 = vunpack.c.l.b16 %v3207
      %v3553 = vunpack.c.h.b16 %v3207
      %v3554 = vunpack.c.l.b16 %v3208
      %v3555 = vunpack.c.h.b16 %v3208
      %v3556 = vunpack.c.l.b16 %v3209
      %v3557 = vunpack.c.h.b16 %v3209
      %v3558 = vunpack.c.l.b16 %v3210
      %v3559 = vunpack.c.h.b16 %v3210
      %v3560 = vunpack.c.l.b16 %v3211
      %v3561 = vunpack.c.h.b16 %v3211
      %v3562 = vunpack.c.l.b16 %v3212
      %v3563 = vunpack.c.h.b16 %v3212
      %v3564 = vunpack.c.l.b16 %v3213
      %v3565 = vunpack.c.h.b16 %v3213
      %v3566 = vunpack.c.l.b16 %v3214
      %v3567 = vunpack.c.h.b16 %v3214
      %v3568 = vunpack.c.l.b16 %v3215
      %v3569 = vunpack.c.h.b16 %v3215
      %v3570 = vunpack.c.l.b16 %v3216
      %v3571 = vunpack.c.h.b16 %v3216
      %v3572 = vunpack.c.l.b16 %v3217
      %v3573 = vunpack.c.h.b16 %v3217
      %v3574 = vunpack.c.l.b16 %v3218
      %v3575 = vunpack.c.h.b16 %v3218
      %v3576 = vunpack.c.l.b16 %v3219
      %v3577 = vunpack.c.h.b16 %v3219
      %v3578 = vunpack.c.l.b16 %v3220
      %v3579 = vunpack.c.h.b16 %v3220
      %v3580 = vunpack.c.l.b16 %v3221
      %v3581 = vunpack.c.h.b16 %v3221
      %v3582 = vunpack.c.l.b16 %v3222
      %v3583 = vunpack.c.h.b16 %v3222
      %v3584 = vunpack.c.l.b16 %v3223
      %v3585 = vunpack.c.h.b16 %v3223
      %v3586 = vunpack.c.l.b16 %v3224
      %v3587 = vunpack.c.h.b16 %v3224
      %v3588 = vunpack.c.l.b16 %v3225
      %v3589 = vunpack.c.h.b16 %v3225
      %v3590 = vunpack.c.l.b16 %v3226
      %v3591 = vunpack.c.h.b16 %v3226
      %v3592 = vunpack.c.l.b16 %v3227
      %v3593 = vunpack.c.h.b16 %v3227
      %v3594 = vunpack.c.l.b16 %v3228
      %v3595 = vunpack.c.h.b16 %v3228
      %v3596 = vunpack.c.l.b16 %v3229
      %v3597 = vunpack.c.h.b16 %v3229
      %v3598 = vunpack.c.l.b16 %v3230
      %v3599 = vunpack.c.h.b16 %v3230
      %v3600 = vunpack.c.l.b16 %v3231
      %v3601 = vunpack.c.h.b16 %v3231
      %v3602 = vunpack.c.l.b16 %v3232
      %v3603 = vunpack.c.h.b16 %v3232
      %v3604 = vunpack.c.l.b16 %v3233
      %v3605 = vunpack.c.h.b16 %v3233
      %v3606 = vunpack.c.l.b16 %v3234
      %v3607 = vunpack.c.h.b16 %v3234
      %v3608 = vunpack.c.l.b16 %v3235
      %v3609 = vunpack.c.h.b16 %v3235
      %v3610 = vunpack.c.l.b16 %v3236
      %v3611 = vunpack.c.h.b16 %v3236
      %v3612 = vunpack.c.l.b16 %v3237
      %v3613 = vunpack.c.h.b16 %v3237
      %v3614 = vunpack.c.l.b16 %v3238
      %v3615 = vunpack.c.h.b16 %v3238
      %v3616 = vunpack.c.l.b16 %v3239
      %v3617 = vunpack.c.h.b16 %v3239
      %v3618 = vunpack.c.l.b16 %v3240
      %v3619 = vunpack.c.h.b16 %v3240
      %v3620 = vunpack.c.l.b16 %v3241
      %v3621 = vunpack.c.h.b16 %v3241
      %v3622 = vunpack.c.l.b16 %v3242
      %v3623 = vunpack.c.h.b16 %v3242
      %v3624 = vunpack.c.l.b16 %v3243
      %v3625 = vunpack.c.h.b16 %v3243
      %v3626 = vunpack.c.l.b16 %v3244
      %v3627 = vunpack.c.h.b16 %v3244
      %v3628 = vunpack.c.l.b16 %v3245
      %v3629 = vunpack.c.h.b16 %v3245
      %v3630 = vpack.c.b16 %v3374, %v3374
      %v3631 = vpack.c.b16 %v3375, %v3375
      %v3632 = vpack.c.b16 %v3376, %v3376
      %v3633 = vpack.c.b16 %v3377, %v3377
      %v3634 = vpack.c.b16 %v3378, %v3378
      %v3635 = vpack.c.b16 %v3379, %v3379
      %v3636 = vpack.c.b16 %v3380, %v3380
      %v3637 = vpack.c.b16 %v3381, %v3381
      %v3638 = vpack.c.b16 %v3382, %v3382
      %v3639 = vpack.c.b16 %v3383, %v3383
      %v3640 = vpack.c.b16 %v3384, %v3384
      %v3641 = vpack.c.b16 %v3385, %v3385
      %v3642 = vpack.c.b16 %v3386, %v3386
      %v3643 = vpack.c.b16 %v3387, %v3387
      %v3644 = vpack.c.b16 %v3388, %v3388
      %v3645 = vpack.c.b16 %v3389, %v3389
      %v3646 = vpack.c.b16 %v3390, %v3390
      %v3647 = vpack.c.b16 %v3391, %v3391
      %v3648 = vpack.c.b16 %v3392, %v3392
      %v3649 = vpack.c.b16 %v3393, %v3393
      %v3650 = vpack.c.b16 %v3394, %v3394
      %v3651 = vpack.c.b16 %v3395, %v3395
      %v3652 = vpack.c.b16 %v3396, %v3396
      %v3653 = vpack.c.b16 %v3397, %v3397
      %v3654 = vpack.c.b16 %v3398, %v3398
      %v3655 = vpack.c.b16 %v3399, %v3399
      %v3656 = vpack.c.b16 %v3400, %v3400
      %v3657 = vpack.c.b16 %v3401, %v3401
      %v3658 = vpack.c.b16 %v3402, %v3402
      %v3659 = vpack.c.b16 %v3403, %v3403
      %v3660 = vpack.c.b16 %v3404, %v3404
      %v3661 = vpack.c.b16 %v3405, %v3405
      %v3662 = vpack.c.b16 %v3406, %v3406
      %v3663 = vpack.c.b16 %v3407, %v3407
      %v3664 = vpack.c.b16 %v3408, %v3408
      %v3665 = vpack.c.b16 %v3409, %v3409
      %v3666 = vpack.c.b16 %v3410, %v3410
      %v3667 = vpack.c.b16 %v3411, %v3411
      %v3668 = vpack.c.b16 %v3412, %v3412
      %v3669 = vpack.c.b16 %v3413, %v3413
      %v3670 = vpack.c.b16 %v3414, %v3414
      %v3671 = vpack.c.b16 %v3415, %v3415
      %v3672 = vpack.c.b16 %v3416, %v3416
      %v3673 = vpack.c.b16 %v3417, %v3417
      %v3674 = vpack.c.b16 %v3418, %v3418
      %v3675 = vpack.c.b16 %v3419, %v3419
      %v3676 = vpack.c.b16 %v3420, %v3420
      %v3677 = vpack.c.b16 %v3421, %v3421
      %v3678 = vpack.c.b16 %v3422, %v3422
      %v3679 = vpack.c.b16 %v3423, %v3423
      %v3680 = vpack.c.b16 %v3424, %v3424
      %v3681 = vpack.c.b16 %v3425, %v3425
      %v3682 = vpack.c.b16 %v3426, %v3426
      %v3683 = vpack.c.b16 %v3427, %v3427
      %v3684 = vpack.c.b16 %v3428, %v3428
      %v3685 = vpack.c.b16 %v3429, %v3429
      %v3686 = vpack.c.b16 %v3430, %v3430
      %v3687 = vpack.c.b16 %v3431, %v3431
      %v3688 = vpack.c.b16 %v3432, %v3432
      %v3689 = vpack.c.b16 %v3433, %v3433
      %v3690 = vpack.c.b16 %v3434, %v3434
      %v3691 = vpack.c.b16 %v3435, %v3435
      %v3692 = vpack.c.b16 %v3436, %v3436
      %v3693 = vpack.c.b16 %v3437, %v3437
      %v3694 = vpack.c.b16 %v3438, %v3438
      %v3695 = vpack.c.b16 %v3439, %v3439
      %v3696 = vpack.c.b16 %v3440, %v3440
      %v3697 = vpack.c.b16 %v3441, %v3441
      %v3698 = vpack.c.b16 %v3442, %v3442
      %v3699 = vpack.c.b16 %v3443, %v3443
      %v3700 = vpack.c.b16 %v3444, %v3444
      %v3701 = vpack.c.b16 %v3445, %v3445
      %v3702 = vpack.c.b16 %v3446, %v3446
      %v3703 = vpack.c.b16 %v3447, %v3447
      %v3704 = vpack.c.b16 %v3448, %v3448
      %v3705 = vpack.c.b16 %v3449, %v3449
      %v3706 = vpack.c.b16 %v3450, %v3450
      %v3707 = vpack.c.b16 %v3451, %v3451
      %v3708 = vpack.c.b16 %v3452, %v3452
      %v3709 = vpack.c.b16 %v3453, %v3453
      %v3710 = vpack.c.b16 %v3454, %v3454
      %v3711 = vpack.c.b16 %v3455, %v3455
      %v3712 = vpack.c.b16 %v3456, %v3456
      %v3713 = vpack.c.b16 %v3457, %v3457
      %v3714 = vpack.c.b16 %v3458, %v3458
      %v3715 = vpack.c.b16 %v3459, %v3459
      %v3716 = vpack.c.b16 %v3460, %v3460
      %v3717 = vpack.c.b16 %v3461, %v3461
      %v3718 = vpack.c.b16 %v3462, %v3462
      %v3719 = vpack.c.b16 %v3463, %v3463
      %v3720 = vpack.c.b16 %v3464, %v3464
      %v3721 = vpack.c.b16 %v3465, %v3465
      %v3722 = vpack.c.b16 %v3466, %v3466
      %v3723 = vpack.c.b16 %v3467, %v3467
      %v3724 = vpack.c.b16 %v3468, %v3468
      %v3725 = vpack.c.b16 %v3469, %v3469
      %v3726 = vpack.c.b16 %v3470, %v3470
      %v3727 = vpack.c.b16 %v3471, %v3471
      %v3728 = vpack.c.b16 %v3472, %v3472
      %v3729 = vpack.c.b16 %v3473, %v3473
      %v3730 = vpack.c.b16 %v3474, %v3474
      %v3731 = vpack.c.b16 %v3475, %v3475
      %v3732 = vpack.c.b16 %v3476, %v3476
      %v3733 = vpack.c.b16 %v3477, %v3477
      %v3734 = vpack.c.b16 %v3478, %v3478
      %v3735 = vpack.c.b16 %v3479, %v3479
      %v3736 = vpack.c.b16 %v3480, %v3480
      %v3737 = vpack.c.b16 %v3481, %v3481
      %v3738 = vpack.c.b16 %v3482, %v3482
      %v3739 = vpack.c.b16 %v3483, %v3483
      %v3740 = vpack.c.b16 %v3484, %v3484
      %v3741 = vpack.c.b16 %v3485, %v3485
      %v3742 = vpack.c.b16 %v3486, %v3486
      %v3743 = vpack.c.b16 %v3487, %v3487
      %v3744 = vpack.c.b16 %v3488, %v3488
      %v3745 = vpack.c.b16 %v3489, %v3489
      %v3746 = vpack.c.b16 %v3490, %v3490
      %v3747 = vpack.c.b16 %v3491, %v3491
      %v3748 = vpack.c.b16 %v3492, %v3492
      %v3749 = vpack.c.b16 %v3493, %v3493
      %v3750 = vpack.c.b16 %v3494, %v3494
      %v3751 = vpack.c.b16 %v3495, %v3495
      %v3752 = vpack.c.b16 %v3496, %v3496
      %v3753 = vpack.c.b16 %v3497, %v3497
      %v3754 = vpack.c.b16 %v3498, %v3498
      %v3755 = vpack.c.b16 %v3499, %v3499
      %v3756 = vpack.c.b16 %v3500, %v3500
      %v3757 = vpack.c.b16 %v3501, %v3501
      %v3758 = vpack.c.b16 %v3502, %v3502
      %v3759 = vpack.c.b16 %v3503, %v3503
      %v3760 = vpack.c.b16 %v3504, %v3504
      %v3761 = vpack.c.b16 %v3505, %v3505
      %v3762 = vpack.c.b16 %v3506, %v3506
      %v3763 = vpack.c.b16 %v3507, %v3507
      %v3764 = vpack.c.b16 %v3508, %v3508
      %v3765 = vpack.c.b16 %v3509, %v3509
      %v3766 = vpack.c.b16 %v3510, %v3510
      %v3767 = vpack.c.b16 %v3511, %v3511
      %v3768 = vpack.c.b16 %v3512, %v3512
      %v3769 = vpack.c.b16 %v3513, %v3513
      %v3770 = vpack.c.b16 %v3514, %v3514
      %v3771 = vpack.c.b16 %v3515, %v3515
      %v3772 = vpack.c.b16 %v3516, %v3516
      %v3773 = vpack.c.b16 %v3517, %v3517
      %v3774 = vpack.c.b16 %v3518, %v3518
      %v3775 = vpack.c.b16 %v3519, %v3519
      %v3776 = vpack.c.b16 %v3520, %v3520
      %v3777 = vpack.c.b16 %v3521, %v3521
      %v3778 = vpack.c.b16 %v3522, %v3522
      %v3779 = vpack.c.b16 %v3523, %v3523
      %v3780 = vpack.c.b16 %v3524, %v3524
      %v3781 = vpack.c.b16 %v3525, %v3525
      %v3782 = vpack.c.b16 %v3526, %v3526
      %v3783 = vpack.c.b16 %v3527, %v3527
      %v3784 = vpack.c.b16 %v3528, %v3528
      %v3785 = vpack.c.b16 %v3529, %v3529
      %v3786 = vpack.c.b16 %v3530, %v3530
      %v3787 = vpack.c.b16 %v3531, %v3531
      %v3788 = vpack.c.b16 %v3532, %v3532
      %v3789 = vpack.c.b16 %v3533, %v3533
      %v3790 = vpack.c.b16 %v3534, %v3534
      %v3791 = vpack.c.b16 %v3535, %v3535
      %v3792 = vpack.c.b16 %v3536, %v3536
      %v3793 = vpack.c.b16 %v3537, %v3537
      %v3794 = vpack.c.b16 %v3538, %v3538
      %v3795 = vpack.c.b16 %v3539, %v3539
      %v3796 = vpack.c.b16 %v3540, %v3540
      %v3797 = vpack.c.b16 %v3541, %v3541
      %v3798 = vpack.c.b16 %v3542, %v3542
      %v3799 = vpack.c.b16 %v3543, %v3543
      %v3800 = vpack.c.b16 %v3544, %v3544
      %v3801 = vpack.c.b16 %v3545, %v3545
      %v3802 = vpack.c.b16 %v3546, %v3546
      %v3803 = vpack.c.b16 %v3547, %v3547
      %v3804 = vpack.c.b16 %v3548, %v3548
      %v3805 = vpack.c.b16 %v3549, %v3549
      %v3806 = vpack.c.b16 %v3550, %v3550
      %v3807 = vpack.c.b16 %v3551, %v3551
      %v3808 = vpack.c.b16 %v3552, %v3552
      %v3809 = vpack.c.b16 %v3553, %v3553
      %v3810 = vpack.c.b16 %v3554, %v3554
      %v3811 = vpack.c.b16 %v3555, %v3555
      %v3812 = vpack.c.b16 %v3556, %v3556
      %v3813 = vpack.c.b16 %v3557, %v3557
      %v3814 = vpack.c.b16 %v3558, %v3558
      %v3815 = vpack.c.b16 %v3559, %v3559
      %v3816 = vpack.c.b16 %v3560, %v3560
      %v3817 = vpack.c.b16 %v3561, %v3561
      %v3818 = vpack.c.b16 %v3562, %v3562
      %v3819 = vpack.c.b16 %v3563, %v3563
      %v3820 = vpack.c.b16 %v3564, %v3564
      %v3821 = vpack.c.b16 %v3565, %v3565
      %v3822 = vpack.c.b16 %v3566, %v3566
      %v3823 = vpack.c.b16 %v3567, %v3567
      %v3824 = vpack.c.b16 %v3568, %v3568
      %v3825 = vpack.c.b16 %v3569, %v3569
      %v3826 = vpack.c.b16 %v3570, %v3570
      %v3827 = vpack.c.b16 %v3571, %v3571
      %v3828 = vpack.c.b16 %v3572, %v3572
      %v3829 = vpack.c.b16 %v3573, %v3573
      %v3830 = vpack.c.b16 %v3574, %v3574
      %v3831 = vpack.c.b16 %v3575, %v3575
      %v3832 = vpack.c.b16 %v3576, %v3576
      %v3833 = vpack.c.b16 %v3577, %v3577
      %v3834 = vpack.c.b16 %v3578, %v3578
      %v3835 = vpack.c.b16 %v3579, %v3579
      %v3836 = vpack.c.b16 %v3580, %v3580
      %v3837 = vpack.c.b16 %v3581, %v3581
      %v3838 = vpack.c.b16 %v3582, %v3582
      %v3839 = vpack.c.b16 %v3583, %v3583
      %v3840 = vpack.c.b16 %v3584, %v3584
      %v3841 = vpack.c.b16 %v3585, %v3585
      %v3842 = vpack.c.b16 %v3586, %v3586
      %v3843 = vpack.c.b16 %v3587, %v3587
      %v3844 = vpack.c.b16 %v3588, %v3588
      %v3845 = vpack.c.b16 %v3589, %v3589
      %v3846 = vpack.c.b16 %v3590, %v3590
      %v3847 = vpack.c.b16 %v3591, %v3591
      %v3848 = vpack.c.b16 %v3592, %v3592
      %v3849 = vpack.c.b16 %v3593, %v3593
      %v3850 = vpack.c.b16 %v3594, %v3594
      %v3851 = vpack.c.b16 %v3595, %v3595
      %v3852 = vpack.c.b16 %v3596, %v3596
      %v3853 = vpack.c.b16 %v3597, %v3597
      %v3854 = vpack.c.b16 %v3598, %v3598
      %v3855 = vpack.c.b16 %v3599, %v3599
      %v3856 = vpack.c.b16 %v3600, %v3600
      %v3857 = vpack.c.b16 %v3601, %v3601
      %v3858 = vpack.c.b16 %v3602, %v3602
      %v3859 = vpack.c.b16 %v3603, %v3603
      %v3860 = vpack.c.b16 %v3604, %v3604
      %v3861 = vpack.c.b16 %v3605, %v3605
      %v3862 = vpack.c.b16 %v3606, %v3606
      %v3863 = vpack.c.b16 %v3607, %v3607
      %v3864 = vpack.c.b16 %v3608, %v3608
      %v3865 = vpack.c.b16 %v3609, %v3609
      %v3866 = vpack.c.b16 %v3610, %v3610
      %v3867 = vpack.c.b16 %v3611, %v3611
      %v3868 = vpack.c.b16 %v3612, %v3612
      %v3869 = vpack.c.b16 %v3613, %v3613
      %v3870 = vpack.c.b16 %v3614, %v3614
      %v3871 = vpack.c.b16 %v3615, %v3615
      %v3872 = vpack.c.b16 %v3616, %v3616
      %v3873 = vpack.c.b16 %v3617, %v3617
      %v3874 = vpack.c.b16 %v3618, %v3618
      %v3875 = vpack.c.b16 %v3619, %v3619
      %v3876 = vpack.c.b16 %v3620, %v3620
      %v3877 = vpack.c.b16 %v3621, %v3621
      %v3878 = vpack.c.b16 %v3622, %v3622
      %v3879 = vpack.c.b16 %v3623, %v3623
      %v3880 = vpack.c.b16 %v3624, %v3624
      %v3881 = vpack.c.b16 %v3625, %v3625
      %v3882 = vpack.c.b16 %v3626, %v3626
      %v3883 = vpack.c.b16 %v3627, %v3627
      %v3884 = vpack.c.b16 %v3628, %v3628
      %v3885 = vpack.c.b16 %v3629, %v3629
      %4142 = vst [vmem:[%s195] sm:$0xf] %v3630
      %4143 = vst [vmem:[%s195 + $0x4] sm:$0xf] %v3631
      %4144 = vst [vmem:[%s195 + $0x8] sm:$0xf] %v3632
      %4145 = vst [vmem:[%s195 + $0xc] sm:$0xf] %v3633
      %4146 = vst [vmem:[%s195 + $0x10] sm:$0xf] %v3634
      %4147 = vst [vmem:[%s195 + $0x14] sm:$0xf] %v3635
      %4148 = vst [vmem:[%s195 + $0x18] sm:$0xf] %v3636
      %4149 = vst [vmem:[%s195 + $0x1c] sm:$0xf] %v3637
      %4150 = vst [vmem:[%s195 + $0x20] sm:$0xf] %v3638
      %4151 = vst [vmem:[%s195 + $0x24] sm:$0xf] %v3639
      %4152 = vst [vmem:[%s195 + $0x28] sm:$0xf] %v3640
      %4153 = vst [vmem:[%s195 + $0x2c] sm:$0xf] %v3641
      %4154 = vst [vmem:[%s195 + $0x30] sm:$0xf] %v3642
      %4155 = vst [vmem:[%s195 + $0x34] sm:$0xf] %v3643
      %4156 = vst [vmem:[%s195 + $0x38] sm:$0xf] %v3644
      %4157 = vst [vmem:[%s195 + $0x3c] sm:$0xf] %v3645
      %4158 = vst [vmem:[%s195 + $0x40] sm:$0xf] %v3646
      %4159 = vst [vmem:[%s195 + $0x44] sm:$0xf] %v3647
      %4160 = vst [vmem:[%s195 + $0x48] sm:$0xf] %v3648
      %4161 = vst [vmem:[%s195 + $0x4c] sm:$0xf] %v3649
      %4162 = vst [vmem:[%s195 + $0x50] sm:$0xf] %v3650
      %4163 = vst [vmem:[%s195 + $0x54] sm:$0xf] %v3651
      %4164 = vst [vmem:[%s195 + $0x58] sm:$0xf] %v3652
      %4165 = vst [vmem:[%s195 + $0x5c] sm:$0xf] %v3653
      %4166 = vst [vmem:[%s195 + $0x60] sm:$0xf] %v3654
      %4167 = vst [vmem:[%s195 + $0x64] sm:$0xf] %v3655
      %4168 = vst [vmem:[%s195 + $0x68] sm:$0xf] %v3656
      %4169 = vst [vmem:[%s195 + $0x6c] sm:$0xf] %v3657
      %4170 = vst [vmem:[%s195 + $0x70] sm:$0xf] %v3658
      %4171 = vst [vmem:[%s195 + $0x74] sm:$0xf] %v3659
      %4172 = vst [vmem:[%s195 + $0x78] sm:$0xf] %v3660
      %4173 = vst [vmem:[%s195 + $0x7c] sm:$0xf] %v3661
      %4174 = vst [vmem:[%s195 + $0x80] sm:$0xf] %v3662
      %4175 = vst [vmem:[%s195 + $0x84] sm:$0xf] %v3663
      %4176 = vst [vmem:[%s195 + $0x88] sm:$0xf] %v3664
      %4177 = vst [vmem:[%s195 + $0x8c] sm:$0xf] %v3665
      %4178 = vst [vmem:[%s195 + $0x90] sm:$0xf] %v3666
      %4179 = vst [vmem:[%s195 + $0x94] sm:$0xf] %v3667
      %4180 = vst [vmem:[%s195 + $0x98] sm:$0xf] %v3668
      %4181 = vst [vmem:[%s195 + $0x9c] sm:$0xf] %v3669
      %4182 = vst [vmem:[%s195 + $0xa0] sm:$0xf] %v3670
      %4183 = vst [vmem:[%s195 + $0xa4] sm:$0xf] %v3671
      %4184 = vst [vmem:[%s195 + $0xa8] sm:$0xf] %v3672
      %4185 = vst [vmem:[%s195 + $0xac] sm:$0xf] %v3673
      %4186 = vst [vmem:[%s195 + $0xb0] sm:$0xf] %v3674
      %4187 = vst [vmem:[%s195 + $0xb4] sm:$0xf] %v3675
      %4188 = vst [vmem:[%s195 + $0xb8] sm:$0xf] %v3676
      %4189 = vst [vmem:[%s195 + $0xbc] sm:$0xf] %v3677
      %4190 = vst [vmem:[%s195 + $0xc0] sm:$0xf] %v3678
      %4191 = vst [vmem:[%s195 + $0xc4] sm:$0xf] %v3679
      %4192 = vst [vmem:[%s195 + $0xc8] sm:$0xf] %v3680
      %4193 = vst [vmem:[%s195 + $0xcc] sm:$0xf] %v3681
      %4194 = vst [vmem:[%s195 + $0xd0] sm:$0xf] %v3682
      %4195 = vst [vmem:[%s195 + $0xd4] sm:$0xf] %v3683
      %4196 = vst [vmem:[%s195 + $0xd8] sm:$0xf] %v3684
      %4197 = vst [vmem:[%s195 + $0xdc] sm:$0xf] %v3685
      %4198 = vst [vmem:[%s195 + $0xe0] sm:$0xf] %v3686
      %4199 = vst [vmem:[%s195 + $0xe4] sm:$0xf] %v3687
      %4200 = vst [vmem:[%s195 + $0xe8] sm:$0xf] %v3688
      %4201 = vst [vmem:[%s195 + $0xec] sm:$0xf] %v3689
      %4202 = vst [vmem:[%s195 + $0xf0] sm:$0xf] %v3690
      %4203 = vst [vmem:[%s195 + $0xf4] sm:$0xf] %v3691
      %4204 = vst [vmem:[%s195 + $0xf8] sm:$0xf] %v3692
      %4205 = vst [vmem:[%s195 + $0xfc] sm:$0xf] %v3693
      %4206 = vst [vmem:[%s195 + $0x100] sm:$0xf] %v3694
      %4207 = vst [vmem:[%s195 + $0x104] sm:$0xf] %v3695
      %4208 = vst [vmem:[%s195 + $0x108] sm:$0xf] %v3696
      %4209 = vst [vmem:[%s195 + $0x10c] sm:$0xf] %v3697
      %4210 = vst [vmem:[%s195 + $0x110] sm:$0xf] %v3698
      %4211 = vst [vmem:[%s195 + $0x114] sm:$0xf] %v3699
      %4212 = vst [vmem:[%s195 + $0x118] sm:$0xf] %v3700
      %4213 = vst [vmem:[%s195 + $0x11c] sm:$0xf] %v3701
      %4214 = vst [vmem:[%s195 + $0x120] sm:$0xf] %v3702
      %4215 = vst [vmem:[%s195 + $0x124] sm:$0xf] %v3703
      %4216 = vst [vmem:[%s195 + $0x128] sm:$0xf] %v3704
      %4217 = vst [vmem:[%s195 + $0x12c] sm:$0xf] %v3705
      %4218 = vst [vmem:[%s195 + $0x130] sm:$0xf] %v3706
      %4219 = vst [vmem:[%s195 + $0x134] sm:$0xf] %v3707
      %4220 = vst [vmem:[%s195 + $0x138] sm:$0xf] %v3708
      %4221 = vst [vmem:[%s195 + $0x13c] sm:$0xf] %v3709
      %4222 = vst [vmem:[%s195 + $0x140] sm:$0xf] %v3710
      %4223 = vst [vmem:[%s195 + $0x144] sm:$0xf] %v3711
      %4224 = vst [vmem:[%s195 + $0x148] sm:$0xf] %v3712
      %4225 = vst [vmem:[%s195 + $0x14c] sm:$0xf] %v3713
      %4226 = vst [vmem:[%s195 + $0x150] sm:$0xf] %v3714
      %4227 = vst [vmem:[%s195 + $0x154] sm:$0xf] %v3715
      %4228 = vst [vmem:[%s195 + $0x158] sm:$0xf] %v3716
      %4229 = vst [vmem:[%s195 + $0x15c] sm:$0xf] %v3717
      %4230 = vst [vmem:[%s195 + $0x160] sm:$0xf] %v3718
      %4231 = vst [vmem:[%s195 + $0x164] sm:$0xf] %v3719
      %4232 = vst [vmem:[%s195 + $0x168] sm:$0xf] %v3720
      %4233 = vst [vmem:[%s195 + $0x16c] sm:$0xf] %v3721
      %4234 = vst [vmem:[%s195 + $0x170] sm:$0xf] %v3722
      %4235 = vst [vmem:[%s195 + $0x174] sm:$0xf] %v3723
      %4236 = vst [vmem:[%s195 + $0x178] sm:$0xf] %v3724
      %4237 = vst [vmem:[%s195 + $0x17c] sm:$0xf] %v3725
      %4238 = vst [vmem:[%s195 + $0x180] sm:$0xf] %v3726
      %4239 = vst [vmem:[%s195 + $0x184] sm:$0xf] %v3727
      %4240 = vst [vmem:[%s195 + $0x188] sm:$0xf] %v3728
      %4241 = vst [vmem:[%s195 + $0x18c] sm:$0xf] %v3729
      %4242 = vst [vmem:[%s195 + $0x190] sm:$0xf] %v3730
      %4243 = vst [vmem:[%s195 + $0x194] sm:$0xf] %v3731
      %4244 = vst [vmem:[%s195 + $0x198] sm:$0xf] %v3732
      %4245 = vst [vmem:[%s195 + $0x19c] sm:$0xf] %v3733
      %4246 = vst [vmem:[%s195 + $0x1a0] sm:$0xf] %v3734
      %4247 = vst [vmem:[%s195 + $0x1a4] sm:$0xf] %v3735
      %4248 = vst [vmem:[%s195 + $0x1a8] sm:$0xf] %v3736
      %4249 = vst [vmem:[%s195 + $0x1ac] sm:$0xf] %v3737
      %4250 = vst [vmem:[%s195 + $0x1b0] sm:$0xf] %v3738
      %4251 = vst [vmem:[%s195 + $0x1b4] sm:$0xf] %v3739
      %4252 = vst [vmem:[%s195 + $0x1b8] sm:$0xf] %v3740
      %4253 = vst [vmem:[%s195 + $0x1bc] sm:$0xf] %v3741
      %4254 = vst [vmem:[%s195 + $0x1c0] sm:$0xf] %v3742
      %4255 = vst [vmem:[%s195 + $0x1c4] sm:$0xf] %v3743
      %4256 = vst [vmem:[%s195 + $0x1c8] sm:$0xf] %v3744
      %4257 = vst [vmem:[%s195 + $0x1cc] sm:$0xf] %v3745
      %4258 = vst [vmem:[%s195 + $0x1d0] sm:$0xf] %v3746
      %4259 = vst [vmem:[%s195 + $0x1d4] sm:$0xf] %v3747
      %4260 = vst [vmem:[%s195 + $0x1d8] sm:$0xf] %v3748
      %4261 = vst [vmem:[%s195 + $0x1dc] sm:$0xf] %v3749
      %4262 = vst [vmem:[%s195 + $0x1e0] sm:$0xf] %v3750
      %4263 = vst [vmem:[%s195 + $0x1e4] sm:$0xf] %v3751
      %4264 = vst [vmem:[%s195 + $0x1e8] sm:$0xf] %v3752
      %4265 = vst [vmem:[%s195 + $0x1ec] sm:$0xf] %v3753
      %4266 = vst [vmem:[%s195 + $0x1f0] sm:$0xf] %v3754
      %4267 = vst [vmem:[%s195 + $0x1f4] sm:$0xf] %v3755
      %4268 = vst [vmem:[%s195 + $0x1f8] sm:$0xf] %v3756
      %4269 = vst [vmem:[%s195 + $0x1fc] sm:$0xf] %v3757
      %4270 = vst [vmem:[%s195 + $0x200] sm:$0xf] %v3758
      %4271 = vst [vmem:[%s195 + $0x204] sm:$0xf] %v3759
      %4272 = vst [vmem:[%s195 + $0x208] sm:$0xf] %v3760
      %4273 = vst [vmem:[%s195 + $0x20c] sm:$0xf] %v3761
      %4274 = vst [vmem:[%s195 + $0x210] sm:$0xf] %v3762
      %4275 = vst [vmem:[%s195 + $0x214] sm:$0xf] %v3763
      %4276 = vst [vmem:[%s195 + $0x218] sm:$0xf] %v3764
      %4277 = vst [vmem:[%s195 + $0x21c] sm:$0xf] %v3765
      %4278 = vst [vmem:[%s195 + $0x220] sm:$0xf] %v3766
      %4279 = vst [vmem:[%s195 + $0x224] sm:$0xf] %v3767
      %4280 = vst [vmem:[%s195 + $0x228] sm:$0xf] %v3768
      %4281 = vst [vmem:[%s195 + $0x22c] sm:$0xf] %v3769
      %4282 = vst [vmem:[%s195 + $0x230] sm:$0xf] %v3770
      %4283 = vst [vmem:[%s195 + $0x234] sm:$0xf] %v3771
      %4284 = vst [vmem:[%s195 + $0x238] sm:$0xf] %v3772
      %4285 = vst [vmem:[%s195 + $0x23c] sm:$0xf] %v3773
      %4286 = vst [vmem:[%s195 + $0x240] sm:$0xf] %v3774
      %4287 = vst [vmem:[%s195 + $0x244] sm:$0xf] %v3775
      %4288 = vst [vmem:[%s195 + $0x248] sm:$0xf] %v3776
      %4289 = vst [vmem:[%s195 + $0x24c] sm:$0xf] %v3777
      %4290 = vst [vmem:[%s195 + $0x250] sm:$0xf] %v3778
      %4291 = vst [vmem:[%s195 + $0x254] sm:$0xf] %v3779
      %4292 = vst [vmem:[%s195 + $0x258] sm:$0xf] %v3780
      %4293 = vst [vmem:[%s195 + $0x25c] sm:$0xf] %v3781
      %4294 = vst [vmem:[%s195 + $0x260] sm:$0xf] %v3782
      %4295 = vst [vmem:[%s195 + $0x264] sm:$0xf] %v3783
      %4296 = vst [vmem:[%s195 + $0x268] sm:$0xf] %v3784
      %4297 = vst [vmem:[%s195 + $0x26c] sm:$0xf] %v3785
      %4298 = vst [vmem:[%s195 + $0x270] sm:$0xf] %v3786
      %4299 = vst [vmem:[%s195 + $0x274] sm:$0xf] %v3787
      %4300 = vst [vmem:[%s195 + $0x278] sm:$0xf] %v3788
      %4301 = vst [vmem:[%s195 + $0x27c] sm:$0xf] %v3789
      %4302 = vst [vmem:[%s195 + $0x280] sm:$0xf] %v3790
      %4303 = vst [vmem:[%s195 + $0x284] sm:$0xf] %v3791
      %4304 = vst [vmem:[%s195 + $0x288] sm:$0xf] %v3792
      %4305 = vst [vmem:[%s195 + $0x28c] sm:$0xf] %v3793
      %4306 = vst [vmem:[%s195 + $0x290] sm:$0xf] %v3794
      %4307 = vst [vmem:[%s195 + $0x294] sm:$0xf] %v3795
      %4308 = vst [vmem:[%s195 + $0x298] sm:$0xf] %v3796
      %4309 = vst [vmem:[%s195 + $0x29c] sm:$0xf] %v3797
      %4310 = vst [vmem:[%s195 + $0x2a0] sm:$0xf] %v3798
      %4311 = vst [vmem:[%s195 + $0x2a4] sm:$0xf] %v3799
      %4312 = vst [vmem:[%s195 + $0x2a8] sm:$0xf] %v3800
      %4313 = vst [vmem:[%s195 + $0x2ac] sm:$0xf] %v3801
      %4314 = vst [vmem:[%s195 + $0x2b0] sm:$0xf] %v3802
      %4315 = vst [vmem:[%s195 + $0x2b4] sm:$0xf] %v3803
      %4316 = vst [vmem:[%s195 + $0x2b8] sm:$0xf] %v3804
      %4317 = vst [vmem:[%s195 + $0x2bc] sm:$0xf] %v3805
      %4318 = vst [vmem:[%s195 + $0x2c0] sm:$0xf] %v3806
      %4319 = vst [vmem:[%s195 + $0x2c4] sm:$0xf] %v3807
      %4320 = vst [vmem:[%s195 + $0x2c8] sm:$0xf] %v3808
      %4321 = vst [vmem:[%s195 + $0x2cc] sm:$0xf] %v3809
      %4322 = vst [vmem:[%s195 + $0x2d0] sm:$0xf] %v3810
      %4323 = vst [vmem:[%s195 + $0x2d4] sm:$0xf] %v3811
      %4324 = vst [vmem:[%s195 + $0x2d8] sm:$0xf] %v3812
      %4325 = vst [vmem:[%s195 + $0x2dc] sm:$0xf] %v3813
      %4326 = vst [vmem:[%s195 + $0x2e0] sm:$0xf] %v3814
      %4327 = vst [vmem:[%s195 + $0x2e4] sm:$0xf] %v3815
      %4328 = vst [vmem:[%s195 + $0x2e8] sm:$0xf] %v3816
      %4329 = vst [vmem:[%s195 + $0x2ec] sm:$0xf] %v3817
      %4330 = vst [vmem:[%s195 + $0x2f0] sm:$0xf] %v3818
      %4331 = vst [vmem:[%s195 + $0x2f4] sm:$0xf] %v3819
      %4332 = vst [vmem:[%s195 + $0x2f8] sm:$0xf] %v3820
      %4333 = vst [vmem:[%s195 + $0x2fc] sm:$0xf] %v3821
      %4334 = vst [vmem:[%s195 + $0x300] sm:$0xf] %v3822
      %4335 = vst [vmem:[%s195 + $0x304] sm:$0xf] %v3823
      %4336 = vst [vmem:[%s195 + $0x308] sm:$0xf] %v3824
      %4337 = vst [vmem:[%s195 + $0x30c] sm:$0xf] %v3825
      %4338 = vst [vmem:[%s195 + $0x310] sm:$0xf] %v3826
      %4339 = vst [vmem:[%s195 + $0x314] sm:$0xf] %v3827
      %4340 = vst [vmem:[%s195 + $0x318] sm:$0xf] %v3828
      %4341 = vst [vmem:[%s195 + $0x31c] sm:$0xf] %v3829
      %4342 = vst [vmem:[%s195 + $0x320] sm:$0xf] %v3830
      %4343 = vst [vmem:[%s195 + $0x324] sm:$0xf] %v3831
      %4344 = vst [vmem:[%s195 + $0x328] sm:$0xf] %v3832
      %4345 = vst [vmem:[%s195 + $0x32c] sm:$0xf] %v3833
      %4346 = vst [vmem:[%s195 + $0x330] sm:$0xf] %v3834
      %4347 = vst [vmem:[%s195 + $0x334] sm:$0xf] %v3835
      %4348 = vst [vmem:[%s195 + $0x338] sm:$0xf] %v3836
      %4349 = vst [vmem:[%s195 + $0x33c] sm:$0xf] %v3837
      %4350 = vst [vmem:[%s195 + $0x340] sm:$0xf] %v3838
      %4351 = vst [vmem:[%s195 + $0x344] sm:$0xf] %v3839
      %4352 = vst [vmem:[%s195 + $0x348] sm:$0xf] %v3840
      %4353 = vst [vmem:[%s195 + $0x34c] sm:$0xf] %v3841
      %4354 = vst [vmem:[%s195 + $0x350] sm:$0xf] %v3842
      %4355 = vst [vmem:[%s195 + $0x354] sm:$0xf] %v3843
      %4356 = vst [vmem:[%s195 + $0x358] sm:$0xf] %v3844
      %4357 = vst [vmem:[%s195 + $0x35c] sm:$0xf] %v3845
      %4358 = vst [vmem:[%s195 + $0x360] sm:$0xf] %v3846
      %4359 = vst [vmem:[%s195 + $0x364] sm:$0xf] %v3847
      %4360 = vst [vmem:[%s195 + $0x368] sm:$0xf] %v3848
      %4361 = vst [vmem:[%s195 + $0x36c] sm:$0xf] %v3849
      %4362 = vst [vmem:[%s195 + $0x370] sm:$0xf] %v3850
      %4363 = vst [vmem:[%s195 + $0x374] sm:$0xf] %v3851
      %4364 = vst [vmem:[%s195 + $0x378] sm:$0xf] %v3852
      %4365 = vst [vmem:[%s195 + $0x37c] sm:$0xf] %v3853
      %4366 = vst [vmem:[%s195 + $0x380] sm:$0xf] %v3854
      %4367 = vst [vmem:[%s195 + $0x384] sm:$0xf] %v3855
      %4368 = vst [vmem:[%s195 + $0x388] sm:$0xf] %v3856
      %4369 = vst [vmem:[%s195 + $0x38c] sm:$0xf] %v3857
      %4370 = vst [vmem:[%s195 + $0x390] sm:$0xf] %v3858
      %4371 = vst [vmem:[%s195 + $0x394] sm:$0xf] %v3859
      %4372 = vst [vmem:[%s195 + $0x398] sm:$0xf] %v3860
      %4373 = vst [vmem:[%s195 + $0x39c] sm:$0xf] %v3861
      %4374 = vst [vmem:[%s195 + $0x3a0] sm:$0xf] %v3862
      %4375 = vst [vmem:[%s195 + $0x3a4] sm:$0xf] %v3863
      %4376 = vst [vmem:[%s195 + $0x3a8] sm:$0xf] %v3864
      %4377 = vst [vmem:[%s195 + $0x3ac] sm:$0xf] %v3865
      %4378 = vst [vmem:[%s195 + $0x3b0] sm:$0xf] %v3866
      %4379 = vst [vmem:[%s195 + $0x3b4] sm:$0xf] %v3867
      %4380 = vst [vmem:[%s195 + $0x3b8] sm:$0xf] %v3868
      %4381 = vst [vmem:[%s195 + $0x3bc] sm:$0xf] %v3869
      %4382 = vst [vmem:[%s195 + $0x3c0] sm:$0xf] %v3870
      %4383 = vst [vmem:[%s195 + $0x3c4] sm:$0xf] %v3871
      %4384 = vst [vmem:[%s195 + $0x3c8] sm:$0xf] %v3872
      %4385 = vst [vmem:[%s195 + $0x3cc] sm:$0xf] %v3873
      %4386 = vst [vmem:[%s195 + $0x3d0] sm:$0xf] %v3874
      %4387 = vst [vmem:[%s195 + $0x3d4] sm:$0xf] %v3875
      %4388 = vst [vmem:[%s195 + $0x3d8] sm:$0xf] %v3876
      %4389 = vst [vmem:[%s195 + $0x3dc] sm:$0xf] %v3877
      %4390 = vst [vmem:[%s195 + $0x3e0] sm:$0xf] %v3878
      %4391 = vst [vmem:[%s195 + $0x3e4] sm:$0xf] %v3879
      %4392 = vst [vmem:[%s195 + $0x3e8] sm:$0xf] %v3880
      %4393 = vst [vmem:[%s195 + $0x3ec] sm:$0xf] %v3881
      %4394 = vst [vmem:[%s195 + $0x3f0] sm:$0xf] %v3882
      %4395 = vst [vmem:[%s195 + $0x3f4] sm:$0xf] %v3883
      %4396 = vst [vmem:[%s195 + $0x3f8] sm:$0xf] %v3884
      %4397 = vst [vmem:[%s195 + $0x3fc] sm:$0xf] %v3885
      %s4398 = smul.u32 256, %s18
      %p4399 = scmp.lt.s32.totalorder %s4398, 1023
      %s4400 = scalar_select %p4399, %s4398, 1023
      %s4401 = smul.addr %s4400, 4
      %s4402 = scalar_lea.vmem %s3, %s4401
      // Predicated region
      $region33: #{discriminator3d_forward.4} parent=31 // pred_check
        %p4403 = pneg %p114
      $region34: #{discriminator3d_forward.4} parent=31 // pred_check_branch
        %4405 = sbr.rel (%p4403) target = $region36
      $region35: #{discriminator3d_forward.4} parent=31 // pred_region
        %s4406 = smul.u32 256, %s18
      $region36: #{discriminator3d_forward.4} parent=31 // pred_fallthru
        _
    $region32: #{discriminator3d_forward.4} parent=5 // pred_fallthru
      _
    %p4407 = scmp.le.s32.totalorder 2, %s9
    // Predicated region
    $region37: #{discriminator3d_forward.4} parent=5 // pred_check
      %p4408 = pneg %p4407
    $region38: #{discriminator3d_forward.4} parent=5 // pred_check_branch
      %4410 = sbr.rel (%p4408) target = $region40
    $region39: #{discriminator3d_forward.4} parent=5 // pred_region
      %s4411 = ssub.s32 %s9, 2
      // Predicated region
      $region41: #{discriminator3d_forward.4} parent=39 // pred_check
        %p4412 = pneg %p120
      $region42: #{discriminator3d_forward.4} parent=39 // pred_check_branch
        %4414 = sbr.rel (%p4412) target = $region44
      $region43: #{discriminator3d_forward.4} parent=39 // pred_region
        %s4415 = smul.u32 256, %s20
        %p4416 = scmp.lt.s32.totalorder %s4415, 1023
        %s4417 = scalar_select %p4416, %s4415, 1023
        %s4418 = smul.addr %s4417, 4
        %s4419 = scalar_lea.vmem %s3, %s4418
      $region44: #{discriminator3d_forward.4} parent=39 // pred_fallthru
        _
    $region40: #{discriminator3d_forward.4} parent=5 // pred_fallthru
      _
  $region6: #{discriminator3d_forward.4} parent=0 // loop_footer
    %s13 = sadd.s32 1, %s9
  $region7: #{discriminator3d_forward.4} parent=0 // loop_footer_branch
    %8 = sbr.rel target = $region3
  $region8: #{discriminator3d_forward.4} parent=0 // loop_exit
    _

// kernel: discriminator3d_forward.5
$region0: #{discriminator3d_forward.5}
  #allocation0 [shape = 'u32[]', space=smem, size = 0x4, offset = 0x4, fixed_abs, tag = 'smem constant byte address 0x4 - core index']
  #allocation1 [shape = 'u32[144,128]{1,0:T(1,128)}', space=vmem, size = 0x12000, scoped, tag = 'internal scratch']
  %s0 = inlined_call_operand.vmem [shape: bf16[1024,512], index: 0, kind: input, shape index: {}]
  %s1 = inlined_call_operand.vmem [shape: bf16[512,128], index: 1, kind: input, shape index: {}]
  %s2 = inlined_call_operand.vmem [shape: f32[1,128], index: 2, kind: input, shape index: {}]
  %s3 = inlined_call_operand.vmem [shape: bf16[1024,128], index: 3, kind: output, shape index: {}]
  %s4 = sld [smem:[#allocation0]]
  $region45: #{discriminator3d_forward.5} parent=0
    _
  %s6 = ssub.s32 1, %s4
  %s7 = scalar_select 0, %s6, %s4
  loop: start=0, step=1, limit=4
  $region2: #{discriminator3d_forward.5} parent=0 // loop_pre_header
    _
  $region3: #{discriminator3d_forward.5} parent=0 // loop_header
    %s9 = sphi 0, %s13
    %p10 = scmp.ge.s32.totalorder %s9, 4
    %s16 = sphi 0, %s28
    %s17 = sphi 0, %s24
    %s18 = sphi 0, %s16
    %s19 = sphi 0, %s17
    %s20 = sphi 0, %s18
    %s21 = sphi 0, %s19
    %s33 = sphi 0, %s35
    %s36 = sphi 0, %s33
    %s37 = sphi 0, %s36
    %s53 = sphi 0, %s37
    %s57 = sphi 0, %s57
    %s59 = sphi 0, %s57
    %s60 = sphi 0, %s59
    %s74 = sphi 0, %s60
    %s78 = sphi 0, %s78
    %s80 = sphi 0, %s78
    %s81 = sphi 0, %s80
    %s95 = sphi 0, %s81
    %s101 = sphi 0, %s103
    %s104 = sphi 0, %s101
    %s105 = sphi 0, %s104
    %s121 = sphi 0, %s105
  $region4: #{discriminator3d_forward.5} parent=0 // loop_header_branch
    %12 = sbr.rel (%p10) target = $region8
  $region5: #{discriminator3d_forward.5} parent=0 // loop_body
    %s14 = ssub.s32 %s9, 1
    %s15 = ssub.s32 %s9, 2
    %s22 = sadd.s32 1, %s17
    %p23 = scmp.ge.s32.totalorder %s22, 1
    %s24 = scalar_select %p23, 0, %s22
    %s25 = sadd.s32 1, %s16
    %s26 = scalar_select %p23, %s25, %s16
    %p27 = scmp.ge.s32.totalorder %s26, 2
    %s28 = scalar_select %p27, 0, %s26
    %s29 = ssub.s32 %s16, %s28
    %s30 = ssub.s32 %s17, %s24
    %s31 = sor.u32 %s29, %s30
    %p32 = scmp.eq.s32.totalorder %s31, 0
    %s34 = sadd.s32 %s33, 1
    %s35 = scalar_select %p32, %s33, %s34
    %p38 = pneg %p32
    %p39 = scmp.eq.s32.totalorder %s9, 1
    %p40 = por %p38, %p39
    %p41 = scmp.ne.s32.totalorder %s33, %s36
    %p42 = scmp.eq.s32.totalorder %s9, 0
    %p43 = por %p41, %p42
    %p44 = scmp.ne.s32.totalorder %s33, %s36
    %p45 = scmp.eq.s32.totalorder %s14, 1
    %p46 = por %p44, %p45
    %p47 = scmp.ne.s32.totalorder %s36, %s37
    %p48 = scmp.eq.s32.totalorder %s14, 0
    %p49 = por %p47, %p48
    %p50 = scmp.ne.s32.totalorder %s36, %s37
    %p51 = scmp.eq.s32.totalorder %s15, 1
    %p52 = por %p50, %p51
    %p54 = scmp.ne.s32.totalorder %s37, %s53
    %p55 = scmp.eq.s32.totalorder %s15, 0
    %p56 = por %p54, %p55
    %s58 = sadd.s32 %s57, 1
    %p61 = scmp.eq.s32.totalorder %s9, 1
    %p62 = scmp.ne.s32.totalorder %s57, %s59
    %p63 = scmp.eq.s32.totalorder %s9, 0
    %p64 = por %p62, %p63
    %p65 = scmp.ne.s32.totalorder %s57, %s59
    %p66 = scmp.eq.s32.totalorder %s14, 1
    %p67 = por %p65, %p66
    %p68 = scmp.ne.s32.totalorder %s59, %s60
    %p69 = scmp.eq.s32.totalorder %s14, 0
    %p70 = por %p68, %p69
    %p71 = scmp.ne.s32.totalorder %s59, %s60
    %p72 = scmp.eq.s32.totalorder %s15, 1
    %p73 = por %p71, %p72
    %p75 = scmp.ne.s32.totalorder %s60, %s74
    %p76 = scmp.eq.s32.totalorder %s15, 0
    %p77 = por %p75, %p76
    %s79 = sadd.s32 %s78, 1
    %p82 = scmp.eq.s32.totalorder %s9, 1
    %p83 = scmp.ne.s32.totalorder %s78, %s80
    %p84 = scmp.eq.s32.totalorder %s9, 0
    %p85 = por %p83, %p84
    %p86 = scmp.ne.s32.totalorder %s78, %s80
    %p87 = scmp.eq.s32.totalorder %s14, 1
    %p88 = por %p86, %p87
    %p89 = scmp.ne.s32.totalorder %s80, %s81
    %p90 = scmp.eq.s32.totalorder %s14, 0
    %p91 = por %p89, %p90
    %p92 = scmp.ne.s32.totalorder %s80, %s81
    %p93 = scmp.eq.s32.totalorder %s15, 1
    %p94 = por %p92, %p93
    %p96 = scmp.ne.s32.totalorder %s81, %s95
    %p97 = scmp.eq.s32.totalorder %s15, 0
    %p98 = por %p96, %p97
    %s99 = ssub.s32 %s16, %s28
    %p100 = scmp.eq.s32.totalorder %s99, 0
    %s102 = sadd.s32 %s101, 1
    %s103 = scalar_select %p100, %s101, %s102
    %p106 = pneg %p100
    %p107 = scmp.eq.s32.totalorder %s9, 1
    %p108 = por %p106, %p107
    %p109 = scmp.ne.s32.totalorder %s101, %s104
    %p110 = scmp.eq.s32.totalorder %s9, 0
    %p111 = por %p109, %p110
    %p112 = scmp.ne.s32.totalorder %s101, %s104
    %p113 = scmp.eq.s32.totalorder %s14, 1
    %p114 = por %p112, %p113
    %p115 = scmp.ne.s32.totalorder %s104, %s105
    %p116 = scmp.eq.s32.totalorder %s14, 0
    %p117 = por %p115, %p116
    %p118 = scmp.ne.s32.totalorder %s104, %s105
    %p119 = scmp.eq.s32.totalorder %s15, 1
    %p120 = por %p118, %p119
    %p122 = scmp.ne.s32.totalorder %s105, %s121
    %p123 = scmp.eq.s32.totalorder %s15, 0
    %p124 = por %p122, %p123
    %p125 = scmp.le.s32.totalorder 1, %s9
    %p126 = scmp.lt.s32.totalorder %s9, 3
    %p127 = pnand %p125, %p126
    %p128 = pneg %p127
    // Predicated region
    $region9: #{discriminator3d_forward.5} parent=5 // pred_check
      _
    $region10: #{discriminator3d_forward.5} parent=5 // pred_check_branch
      %130 = sbr.rel (%p127) target = $region12
    $region11: #{discriminator3d_forward.5} parent=5 // pred_region
      %s131 = ssub.s32 %s9, 1
      // Predicated region
      $region13: #{discriminator3d_forward.5} parent=11 // pred_check
        %p132 = pneg %p70
      $region14: #{discriminator3d_forward.5} parent=11 // pred_check_branch
        %134 = sbr.rel (%p132) target = $region16
      $region15: #{discriminator3d_forward.5} parent=11 // pred_region
        _
      $region16: #{discriminator3d_forward.5} parent=11 // pred_fallthru
        _
      // Predicated region
      $region17: #{discriminator3d_forward.5} parent=11 // pred_check
        %p135 = pneg %p91
      $region18: #{discriminator3d_forward.5} parent=11 // pred_check_branch
        %137 = sbr.rel (%p135) target = $region20
      $region19: #{discriminator3d_forward.5} parent=11 // pred_region
        _
      $region20: #{discriminator3d_forward.5} parent=11 // pred_fallthru
        _
    $region12: #{discriminator3d_forward.5} parent=5 // pred_fallthru
      _
    %p138 = scmp.lt.s32.totalorder %s9, 2
    // Predicated region
    $region21: #{discriminator3d_forward.5} parent=5 // pred_check
      %p139 = pneg %p138
    $region22: #{discriminator3d_forward.5} parent=5 // pred_check_branch
      %141 = sbr.rel (%p139) target = $region24
    $region23: #{discriminator3d_forward.5} parent=5 // pred_region
      // Predicated region
      $region25: #{discriminator3d_forward.5} parent=23 // pred_check
        %p142 = pneg %p43
      $region26: #{discriminator3d_forward.5} parent=23 // pred_check_branch
        %144 = sbr.rel (%p142) target = $region28
      $region27: #{discriminator3d_forward.5} parent=23 // pred_region
        %s145 = smul.u32 64, %s16
        %s146 = smul.u32 4, %s17
        %p147 = scmp.lt.s32.totalorder %s145, 127
        %s148 = scalar_select %p147, %s145, 127
        %p149 = scmp.lt.s32.totalorder %s146, 3
        %s150 = scalar_select %p149, %s146, 3
        %s151 = smul.addr %s148, 4
        %s152 = sadd.s32 %s150, %s151
        %s153 = smul.addr %s152, 4
        %s154 = scalar_lea.vmem %s0, %s153
        %s155 = smul.u32 64, %s16
        %s156 = smul.u32 4, %s17
      $region28: #{discriminator3d_forward.5} parent=23 // pred_fallthru
        _
    $region24: #{discriminator3d_forward.5} parent=5 // pred_fallthru
      _
    %p157 = scmp.le.s32.totalorder 1, %s9
    %p158 = scmp.lt.s32.totalorder %s9, 3
    %p159 = pnand %p157, %p158
    %p160 = pneg %p159
    // Predicated region
    $region29: #{discriminator3d_forward.5} parent=5 // pred_check
      _
    $region30: #{discriminator3d_forward.5} parent=5 // pred_check_branch
      %162 = sbr.rel (%p159) target = $region32
    $region31: #{discriminator3d_forward.5} parent=5 // pred_region
      %s163 = ssub.s32 %s9, 1
      %s164 = smul.u32 64, %s18
      %s165 = smul.u32 4, %s19
      %p166 = scmp.lt.s32.totalorder %s164, 127
      %s167 = scalar_select %p166, %s164, 127
      %p168 = scmp.lt.s32.totalorder %s165, 3
      %s169 = scalar_select %p168, %s165, 3
      %s170 = smul.addr %s167, 4
      %s171 = sadd.s32 %s169, %s170
      %s172 = smul.addr %s171, 4
      %s173 = scalar_lea.vmem %s0, %s172
      %p174 = pneg %p49
      %p175 = pneg %p46
      %p176 = pneg %p70
      %p177 = pneg %p67
      %p178 = pneg %p91
      %p179 = pneg %p88
      %p180 = pneg %p117
      %p181 = pneg %p114
      %s182 = smul.u32 64, %s18
      %p183 = scmp.lt.s32.totalorder %s182, 127
      %s184 = scalar_select %p183, %s182, 127
      %s185 = smul.addr %s184, 4
      %s186 = scalar_lea.vmem %s3, %s185
      %s187 = smul.u32 64, %s18
      %s188 = smul.u32 4, %s19
      %p189 = scmp.lt.s32.totalorder %s187, 127
      %s190 = scalar_select %p189, %s187, 127
      %p191 = scmp.lt.s32.totalorder %s188, 3
      %s192 = scalar_select %p191, %s188, 3
      %s193 = smul.addr %s190, 4
      %s194 = sadd.s32 %s192, %s193
      %s195 = smul.addr %s194, 4
      %s196 = scalar_lea.vmem %s0, %s195
      %s197 = smul.u32 64, %s18
      %s198 = smul.u32 4, %s19
      %s199 = smul.u32 64, %s18
      %p200 = scmp.lt.s32.totalorder %s199, 127
      %s201 = scalar_select %p200, %s199, 127
      %s202 = smul.addr %s201, 4
      %s203 = scalar_lea.vmem %s3, %s202
      %s204 = smul.u32 64, %s18
      %v206 = vld [vmem:[%s196] sm:$0xff]
      %v207 = vld [vmem:[%s196 + $0x8] sm:$0xff]
      %v208 = vld [vmem:[%s196 + $0x10] sm:$0xff]
      %v209 = vld [vmem:[%s196 + $0x18] sm:$0xff]
      %v210 = vld [vmem:[%s196 + $0x20] sm:$0xff]
      %v211 = vld [vmem:[%s196 + $0x28] sm:$0xff]
      %v212 = vld [vmem:[%s196 + $0x30] sm:$0xff]
      %v213 = vld [vmem:[%s196 + $0x38] sm:$0xff]
      %v214 = vld [vmem:[%s196 + $0x40] sm:$0xff]
      %v215 = vld [vmem:[%s196 + $0x48] sm:$0xff]
      %v216 = vld [vmem:[%s196 + $0x50] sm:$0xff]
      %v217 = vld [vmem:[%s196 + $0x58] sm:$0xff]
      %v218 = vld [vmem:[%s196 + $0x60] sm:$0xff]
      %v219 = vld [vmem:[%s196 + $0x68] sm:$0xff]
      %v220 = vld [vmem:[%s196 + $0x70] sm:$0xff]
      %v221 = vld [vmem:[%s196 + $0x78] sm:$0xff]
      %v222 = vld [vmem:[%s196 + $0x80] sm:$0xff]
      %v223 = vld [vmem:[%s196 + $0x88] sm:$0xff]
      %v224 = vld [vmem:[%s196 + $0x90] sm:$0xff]
      %v225 = vld [vmem:[%s196 + $0x98] sm:$0xff]
      %v226 = vld [vmem:[%s196 + $0xa0] sm:$0xff]
      %v227 = vld [vmem:[%s196 + $0xa8] sm:$0xff]
      %v228 = vld [vmem:[%s196 + $0xb0] sm:$0xff]
      %v229 = vld [vmem:[%s196 + $0xb8] sm:$0xff]
      %v230 = vld [vmem:[%s196 + $0xc0] sm:$0xff]
      %v231 = vld [vmem:[%s196 + $0xc8] sm:$0xff]
      %v232 = vld [vmem:[%s196 + $0xd0] sm:$0xff]
      %v233 = vld [vmem:[%s196 + $0xd8] sm:$0xff]
      %v234 = vld [vmem:[%s196 + $0xe0] sm:$0xff]
      %v235 = vld [vmem:[%s196 + $0xe8] sm:$0xff]
      %v236 = vld [vmem:[%s196 + $0xf0] sm:$0xff]
      %v237 = vld [vmem:[%s196 + $0xf8] sm:$0xff]
      %v238 = vld [vmem:[%s196 + $0x100] sm:$0xff]
      %v239 = vld [vmem:[%s196 + $0x108] sm:$0xff]
      %v240 = vld [vmem:[%s196 + $0x110] sm:$0xff]
      %v241 = vld [vmem:[%s196 + $0x118] sm:$0xff]
      %v242 = vld [vmem:[%s196 + $0x120] sm:$0xff]
      %v243 = vld [vmem:[%s196 + $0x128] sm:$0xff]
      %v244 = vld [vmem:[%s196 + $0x130] sm:$0xff]
      %v245 = vld [vmem:[%s196 + $0x138] sm:$0xff]
      %v246 = vld [vmem:[%s196 + $0x140] sm:$0xff]
      %v247 = vld [vmem:[%s196 + $0x148] sm:$0xff]
      %v248 = vld [vmem:[%s196 + $0x150] sm:$0xff]
      %v249 = vld [vmem:[%s196 + $0x158] sm:$0xff]
      %v250 = vld [vmem:[%s196 + $0x160] sm:$0xff]
      %v251 = vld [vmem:[%s196 + $0x168] sm:$0xff]
      %v252 = vld [vmem:[%s196 + $0x170] sm:$0xff]
      %v253 = vld [vmem:[%s196 + $0x178] sm:$0xff]
      %v254 = vld [vmem:[%s196 + $0x180] sm:$0xff]
      %v255 = vld [vmem:[%s196 + $0x188] sm:$0xff]
      %v256 = vld [vmem:[%s196 + $0x190] sm:$0xff]
      %v257 = vld [vmem:[%s196 + $0x198] sm:$0xff]
      %v258 = vld [vmem:[%s196 + $0x1a0] sm:$0xff]
      %v259 = vld [vmem:[%s196 + $0x1a8] sm:$0xff]
      %v260 = vld [vmem:[%s196 + $0x1b0] sm:$0xff]
      %v261 = vld [vmem:[%s196 + $0x1b8] sm:$0xff]
      %v262 = vld [vmem:[%s196 + $0x1c0] sm:$0xff]
      %v263 = vld [vmem:[%s196 + $0x1c8] sm:$0xff]
      %v264 = vld [vmem:[%s196 + $0x1d0] sm:$0xff]
      %v265 = vld [vmem:[%s196 + $0x1d8] sm:$0xff]
      %v266 = vld [vmem:[%s196 + $0x1e0] sm:$0xff]
      %v267 = vld [vmem:[%s196 + $0x1e8] sm:$0xff]
      %v268 = vld [vmem:[%s196 + $0x1f0] sm:$0xff]
      %v269 = vld [vmem:[%s196 + $0x1f8] sm:$0xff]
      %v270 = vld [vmem:[%s196 + $0x200] sm:$0xff]
      %v271 = vld [vmem:[%s196 + $0x208] sm:$0xff]
      %v272 = vld [vmem:[%s196 + $0x210] sm:$0xff]
      %v273 = vld [vmem:[%s196 + $0x218] sm:$0xff]
      %v274 = vld [vmem:[%s196 + $0x220] sm:$0xff]
      %v275 = vld [vmem:[%s196 + $0x228] sm:$0xff]
      %v276 = vld [vmem:[%s196 + $0x230] sm:$0xff]
      %v277 = vld [vmem:[%s196 + $0x238] sm:$0xff]
      %v278 = vld [vmem:[%s196 + $0x240] sm:$0xff]
      %v279 = vld [vmem:[%s196 + $0x248] sm:$0xff]
      %v280 = vld [vmem:[%s196 + $0x250] sm:$0xff]
      %v281 = vld [vmem:[%s196 + $0x258] sm:$0xff]
      %v282 = vld [vmem:[%s196 + $0x260] sm:$0xff]
      %v283 = vld [vmem:[%s196 + $0x268] sm:$0xff]
      %v284 = vld [vmem:[%s196 + $0x270] sm:$0xff]
      %v285 = vld [vmem:[%s196 + $0x278] sm:$0xff]
      %v286 = vld [vmem:[%s196 + $0x280] sm:$0xff]
      %v287 = vld [vmem:[%s196 + $0x288] sm:$0xff]
      %v288 = vld [vmem:[%s196 + $0x290] sm:$0xff]
      %v289 = vld [vmem:[%s196 + $0x298] sm:$0xff]
      %v290 = vld [vmem:[%s196 + $0x2a0] sm:$0xff]
      %v291 = vld [vmem:[%s196 + $0x2a8] sm:$0xff]
      %v292 = vld [vmem:[%s196 + $0x2b0] sm:$0xff]
      %v293 = vld [vmem:[%s196 + $0x2b8] sm:$0xff]
      %v294 = vld [vmem:[%s196 + $0x2c0] sm:$0xff]
      %v295 = vld [vmem:[%s196 + $0x2c8] sm:$0xff]
      %v296 = vld [vmem:[%s196 + $0x2d0] sm:$0xff]
      %v297 = vld [vmem:[%s196 + $0x2d8] sm:$0xff]
      %v298 = vld [vmem:[%s196 + $0x2e0] sm:$0xff]
      %v299 = vld [vmem:[%s196 + $0x2e8] sm:$0xff]
      %v300 = vld [vmem:[%s196 + $0x2f0] sm:$0xff]
      %v301 = vld [vmem:[%s196 + $0x2f8] sm:$0xff]
      %v302 = vld [vmem:[%s196 + $0x300] sm:$0xff]
      %v303 = vld [vmem:[%s196 + $0x308] sm:$0xff]
      %v304 = vld [vmem:[%s196 + $0x310] sm:$0xff]
      %v305 = vld [vmem:[%s196 + $0x318] sm:$0xff]
      %v306 = vld [vmem:[%s196 + $0x320] sm:$0xff]
      %v307 = vld [vmem:[%s196 + $0x328] sm:$0xff]
      %v308 = vld [vmem:[%s196 + $0x330] sm:$0xff]
      %v309 = vld [vmem:[%s196 + $0x338] sm:$0xff]
      %v310 = vld [vmem:[%s196 + $0x340] sm:$0xff]
      %v311 = vld [vmem:[%s196 + $0x348] sm:$0xff]
      %v312 = vld [vmem:[%s196 + $0x350] sm:$0xff]
      %v313 = vld [vmem:[%s196 + $0x358] sm:$0xff]
      %v314 = vld [vmem:[%s196 + $0x360] sm:$0xff]
      %v315 = vld [vmem:[%s196 + $0x368] sm:$0xff]
      %v316 = vld [vmem:[%s196 + $0x370] sm:$0xff]
      %v317 = vld [vmem:[%s196 + $0x378] sm:$0xff]
      %v318 = vld [vmem:[%s196 + $0x380] sm:$0xff]
      %v319 = vld [vmem:[%s196 + $0x388] sm:$0xff]
      %v320 = vld [vmem:[%s196 + $0x390] sm:$0xff]
      %v321 = vld [vmem:[%s196 + $0x398] sm:$0xff]
      %v322 = vld [vmem:[%s196 + $0x3a0] sm:$0xff]
      %v323 = vld [vmem:[%s196 + $0x3a8] sm:$0xff]
      %v324 = vld [vmem:[%s196 + $0x3b0] sm:$0xff]
      %v325 = vld [vmem:[%s196 + $0x3b8] sm:$0xff]
      %v326 = vld [vmem:[%s196 + $0x3c0] sm:$0xff]
      %v327 = vld [vmem:[%s196 + $0x3c8] sm:$0xff]
      %v328 = vld [vmem:[%s196 + $0x3d0] sm:$0xff]
      %v329 = vld [vmem:[%s196 + $0x3d8] sm:$0xff]
      %v330 = vld [vmem:[%s196 + $0x3e0] sm:$0xff]
      %v331 = vld [vmem:[%s196 + $0x3e8] sm:$0xff]
      %v332 = vld [vmem:[%s196 + $0x3f0] sm:$0xff]
      %v333 = vld [vmem:[%s196 + $0x3f8] sm:$0xff]
      %v334 = vld [vmem:[%s1] sm:$0xf]
      %v335 = vld [vmem:[%s1 + $0x4] sm:$0xf]
      %v336 = vld [vmem:[%s1 + $0x8] sm:$0xf]
      %v337 = vld [vmem:[%s1 + $0xc] sm:$0xf]
      %v338 = vld [vmem:[%s1 + $0x10] sm:$0xf]
      %v339 = vld [vmem:[%s1 + $0x14] sm:$0xf]
      %v340 = vld [vmem:[%s1 + $0x18] sm:$0xf]
      %v341 = vld [vmem:[%s1 + $0x1c] sm:$0xf]
      %v342 = vld [vmem:[%s1 + $0x20] sm:$0xf]
      %v343 = vld [vmem:[%s1 + $0x24] sm:$0xf]
      %v344 = vld [vmem:[%s1 + $0x28] sm:$0xf]
      %v345 = vld [vmem:[%s1 + $0x2c] sm:$0xf]
      %v346 = vld [vmem:[%s1 + $0x30] sm:$0xf]
      %v347 = vld [vmem:[%s1 + $0x34] sm:$0xf]
      %v348 = vld [vmem:[%s1 + $0x38] sm:$0xf]
      %v349 = vld [vmem:[%s1 + $0x3c] sm:$0xf]
      %v350 = vld [vmem:[%s1 + $0x40] sm:$0xf]
      %v351 = vld [vmem:[%s1 + $0x44] sm:$0xf]
      %v352 = vld [vmem:[%s1 + $0x48] sm:$0xf]
      %v353 = vld [vmem:[%s1 + $0x4c] sm:$0xf]
      %v354 = vld [vmem:[%s1 + $0x50] sm:$0xf]
      %v355 = vld [vmem:[%s1 + $0x54] sm:$0xf]
      %v356 = vld [vmem:[%s1 + $0x58] sm:$0xf]
      %v357 = vld [vmem:[%s1 + $0x5c] sm:$0xf]
      %v358 = vld [vmem:[%s1 + $0x60] sm:$0xf]
      %v359 = vld [vmem:[%s1 + $0x64] sm:$0xf]
      %v360 = vld [vmem:[%s1 + $0x68] sm:$0xf]
      %v361 = vld [vmem:[%s1 + $0x6c] sm:$0xf]
      %v362 = vld [vmem:[%s1 + $0x70] sm:$0xf]
      %v363 = vld [vmem:[%s1 + $0x74] sm:$0xf]
      %v364 = vld [vmem:[%s1 + $0x78] sm:$0xf]
      %v365 = vld [vmem:[%s1 + $0x7c] sm:$0xf]
      %v366 = vld [vmem:[%s1 + $0x80] sm:$0xf]
      %v367 = vld [vmem:[%s1 + $0x84] sm:$0xf]
      %v368 = vld [vmem:[%s1 + $0x88] sm:$0xf]
      %v369 = vld [vmem:[%s1 + $0x8c] sm:$0xf]
      %v370 = vld [vmem:[%s1 + $0x90] sm:$0xf]
      %v371 = vld [vmem:[%s1 + $0x94] sm:$0xf]
      %v372 = vld [vmem:[%s1 + $0x98] sm:$0xf]
      %v373 = vld [vmem:[%s1 + $0x9c] sm:$0xf]
      %v374 = vld [vmem:[%s1 + $0xa0] sm:$0xf]
      %v375 = vld [vmem:[%s1 + $0xa4] sm:$0xf]
      %v376 = vld [vmem:[%s1 + $0xa8] sm:$0xf]
      %v377 = vld [vmem:[%s1 + $0xac] sm:$0xf]
      %v378 = vld [vmem:[%s1 + $0xb0] sm:$0xf]
      %v379 = vld [vmem:[%s1 + $0xb4] sm:$0xf]
      %v380 = vld [vmem:[%s1 + $0xb8] sm:$0xf]
      %v381 = vld [vmem:[%s1 + $0xbc] sm:$0xf]
      %v382 = vld [vmem:[%s1 + $0xc0] sm:$0xf]
      %v383 = vld [vmem:[%s1 + $0xc4] sm:$0xf]
      %v384 = vld [vmem:[%s1 + $0xc8] sm:$0xf]
      %v385 = vld [vmem:[%s1 + $0xcc] sm:$0xf]
      %v386 = vld [vmem:[%s1 + $0xd0] sm:$0xf]
      %v387 = vld [vmem:[%s1 + $0xd4] sm:$0xf]
      %v388 = vld [vmem:[%s1 + $0xd8] sm:$0xf]
      %v389 = vld [vmem:[%s1 + $0xdc] sm:$0xf]
      %v390 = vld [vmem:[%s1 + $0xe0] sm:$0xf]
      %v391 = vld [vmem:[%s1 + $0xe4] sm:$0xf]
      %v392 = vld [vmem:[%s1 + $0xe8] sm:$0xf]
      %v393 = vld [vmem:[%s1 + $0xec] sm:$0xf]
      %v394 = vld [vmem:[%s1 + $0xf0] sm:$0xf]
      %v395 = vld [vmem:[%s1 + $0xf4] sm:$0xf]
      %v396 = vld [vmem:[%s1 + $0xf8] sm:$0xf]
      %v397 = vld [vmem:[%s1 + $0xfc] sm:$0xf]
      %v398 = vld [vmem:[%s2] sm:$0x1]
      %v400 = vlaneseq
      %v401 = vshrl.u32 %v400, 7
      %v402 = vsub.s32 0, %v401
      %v403 = vrot.slane %v398, %v402
      %v533 = vunpack.c.l.b16 %v206
      %v534 = vunpack.c.h.b16 %v206
      %v535 = vunpack.c.l.b16 %v207
      %v536 = vunpack.c.h.b16 %v207
      %v537 = vunpack.c.l.b16 %v208
      %v538 = vunpack.c.h.b16 %v208
      %v539 = vunpack.c.l.b16 %v209
      %v540 = vunpack.c.h.b16 %v209
      %v541 = vunpack.c.l.b16 %v210
      %v542 = vunpack.c.h.b16 %v210
      %v543 = vunpack.c.l.b16 %v211
      %v544 = vunpack.c.h.b16 %v211
      %v545 = vunpack.c.l.b16 %v212
      %v546 = vunpack.c.h.b16 %v212
      %v547 = vunpack.c.l.b16 %v213
      %v548 = vunpack.c.h.b16 %v213
      %v549 = vunpack.c.l.b16 %v214
      %v550 = vunpack.c.h.b16 %v214
      %v551 = vunpack.c.l.b16 %v215
      %v552 = vunpack.c.h.b16 %v215
      %v553 = vunpack.c.l.b16 %v216
      %v554 = vunpack.c.h.b16 %v216
      %v555 = vunpack.c.l.b16 %v217
      %v556 = vunpack.c.h.b16 %v217
      %v557 = vunpack.c.l.b16 %v218
      %v558 = vunpack.c.h.b16 %v218
      %v559 = vunpack.c.l.b16 %v219
      %v560 = vunpack.c.h.b16 %v219
      %v561 = vunpack.c.l.b16 %v220
      %v562 = vunpack.c.h.b16 %v220
      %v563 = vunpack.c.l.b16 %v221
      %v564 = vunpack.c.h.b16 %v221
      %v565 = vunpack.c.l.b16 %v222
      %v566 = vunpack.c.h.b16 %v222
      %v567 = vunpack.c.l.b16 %v223
      %v568 = vunpack.c.h.b16 %v223
      %v569 = vunpack.c.l.b16 %v224
      %v570 = vunpack.c.h.b16 %v224
      %v571 = vunpack.c.l.b16 %v225
      %v572 = vunpack.c.h.b16 %v225
      %v573 = vunpack.c.l.b16 %v226
      %v574 = vunpack.c.h.b16 %v226
      %v575 = vunpack.c.l.b16 %v227
      %v576 = vunpack.c.h.b16 %v227
      %v577 = vunpack.c.l.b16 %v228
      %v578 = vunpack.c.h.b16 %v228
      %v579 = vunpack.c.l.b16 %v229
      %v580 = vunpack.c.h.b16 %v229
      %v581 = vunpack.c.l.b16 %v230
      %v582 = vunpack.c.h.b16 %v230
      %v583 = vunpack.c.l.b16 %v231
      %v584 = vunpack.c.h.b16 %v231
      %v585 = vunpack.c.l.b16 %v232
      %v586 = vunpack.c.h.b16 %v232
      %v587 = vunpack.c.l.b16 %v233
      %v588 = vunpack.c.h.b16 %v233
      %v589 = vunpack.c.l.b16 %v234
      %v590 = vunpack.c.h.b16 %v234
      %v591 = vunpack.c.l.b16 %v235
      %v592 = vunpack.c.h.b16 %v235
      %v593 = vunpack.c.l.b16 %v236
      %v594 = vunpack.c.h.b16 %v236
      %v595 = vunpack.c.l.b16 %v237
      %v596 = vunpack.c.h.b16 %v237
      %v597 = vunpack.c.l.b16 %v238
      %v598 = vunpack.c.h.b16 %v238
      %v599 = vunpack.c.l.b16 %v239
      %v600 = vunpack.c.h.b16 %v239
      %v601 = vunpack.c.l.b16 %v240
      %v602 = vunpack.c.h.b16 %v240
      %v603 = vunpack.c.l.b16 %v241
      %v604 = vunpack.c.h.b16 %v241
      %v605 = vunpack.c.l.b16 %v242
      %v606 = vunpack.c.h.b16 %v242
      %v607 = vunpack.c.l.b16 %v243
      %v608 = vunpack.c.h.b16 %v243
      %v609 = vunpack.c.l.b16 %v244
      %v610 = vunpack.c.h.b16 %v244
      %v611 = vunpack.c.l.b16 %v245
      %v612 = vunpack.c.h.b16 %v245
      %v613 = vunpack.c.l.b16 %v246
      %v614 = vunpack.c.h.b16 %v246
      %v615 = vunpack.c.l.b16 %v247
      %v616 = vunpack.c.h.b16 %v247
      %v617 = vunpack.c.l.b16 %v248
      %v618 = vunpack.c.h.b16 %v248
      %v619 = vunpack.c.l.b16 %v249
      %v620 = vunpack.c.h.b16 %v249
      %v621 = vunpack.c.l.b16 %v250
      %v622 = vunpack.c.h.b16 %v250
      %v623 = vunpack.c.l.b16 %v251
      %v624 = vunpack.c.h.b16 %v251
      %v625 = vunpack.c.l.b16 %v252
      %v626 = vunpack.c.h.b16 %v252
      %v627 = vunpack.c.l.b16 %v253
      %v628 = vunpack.c.h.b16 %v253
      %v629 = vunpack.c.l.b16 %v254
      %v630 = vunpack.c.h.b16 %v254
      %v631 = vunpack.c.l.b16 %v255
      %v632 = vunpack.c.h.b16 %v255
      %v633 = vunpack.c.l.b16 %v256
      %v634 = vunpack.c.h.b16 %v256
      %v635 = vunpack.c.l.b16 %v257
      %v636 = vunpack.c.h.b16 %v257
      %v637 = vunpack.c.l.b16 %v258
      %v638 = vunpack.c.h.b16 %v258
      %v639 = vunpack.c.l.b16 %v259
      %v640 = vunpack.c.h.b16 %v259
      %v641 = vunpack.c.l.b16 %v260
      %v642 = vunpack.c.h.b16 %v260
      %v643 = vunpack.c.l.b16 %v261
      %v644 = vunpack.c.h.b16 %v261
      %v645 = vunpack.c.l.b16 %v262
      %v646 = vunpack.c.h.b16 %v262
      %v647 = vunpack.c.l.b16 %v263
      %v648 = vunpack.c.h.b16 %v263
      %v649 = vunpack.c.l.b16 %v264
      %v650 = vunpack.c.h.b16 %v264
      %v651 = vunpack.c.l.b16 %v265
      %v652 = vunpack.c.h.b16 %v265
      %v653 = vunpack.c.l.b16 %v266
      %v654 = vunpack.c.h.b16 %v266
      %v655 = vunpack.c.l.b16 %v267
      %v656 = vunpack.c.h.b16 %v267
      %v657 = vunpack.c.l.b16 %v268
      %v658 = vunpack.c.h.b16 %v268
      %v659 = vunpack.c.l.b16 %v269
      %v660 = vunpack.c.h.b16 %v269
      %v661 = vunpack.c.l.b16 %v270
      %v662 = vunpack.c.h.b16 %v270
      %v663 = vunpack.c.l.b16 %v271
      %v664 = vunpack.c.h.b16 %v271
      %v665 = vunpack.c.l.b16 %v272
      %v666 = vunpack.c.h.b16 %v272
      %v667 = vunpack.c.l.b16 %v273
      %v668 = vunpack.c.h.b16 %v273
      %v669 = vunpack.c.l.b16 %v274
      %v670 = vunpack.c.h.b16 %v274
      %v671 = vunpack.c.l.b16 %v275
      %v672 = vunpack.c.h.b16 %v275
      %v673 = vunpack.c.l.b16 %v276
      %v674 = vunpack.c.h.b16 %v276
      %v675 = vunpack.c.l.b16 %v277
      %v676 = vunpack.c.h.b16 %v277
      %v677 = vunpack.c.l.b16 %v278
      %v678 = vunpack.c.h.b16 %v278
      %v679 = vunpack.c.l.b16 %v279
      %v680 = vunpack.c.h.b16 %v279
      %v681 = vunpack.c.l.b16 %v280
      %v682 = vunpack.c.h.b16 %v280
      %v683 = vunpack.c.l.b16 %v281
      %v684 = vunpack.c.h.b16 %v281
      %v685 = vunpack.c.l.b16 %v282
      %v686 = vunpack.c.h.b16 %v282
      %v687 = vunpack.c.l.b16 %v283
      %v688 = vunpack.c.h.b16 %v283
      %v689 = vunpack.c.l.b16 %v284
      %v690 = vunpack.c.h.b16 %v284
      %v691 = vunpack.c.l.b16 %v285
      %v692 = vunpack.c.h.b16 %v285
      %v693 = vunpack.c.l.b16 %v286
      %v694 = vunpack.c.h.b16 %v286
      %v695 = vunpack.c.l.b16 %v287
      %v696 = vunpack.c.h.b16 %v287
      %v697 = vunpack.c.l.b16 %v288
      %v698 = vunpack.c.h.b16 %v288
      %v699 = vunpack.c.l.b16 %v289
      %v700 = vunpack.c.h.b16 %v289
      %v701 = vunpack.c.l.b16 %v290
      %v702 = vunpack.c.h.b16 %v290
      %v703 = vunpack.c.l.b16 %v291
      %v704 = vunpack.c.h.b16 %v291
      %v705 = vunpack.c.l.b16 %v292
      %v706 = vunpack.c.h.b16 %v292
      %v707 = vunpack.c.l.b16 %v293
      %v708 = vunpack.c.h.b16 %v293
      %v709 = vunpack.c.l.b16 %v294
      %v710 = vunpack.c.h.b16 %v294
      %v711 = vunpack.c.l.b16 %v295
      %v712 = vunpack.c.h.b16 %v295
      %v713 = vunpack.c.l.b16 %v296
      %v714 = vunpack.c.h.b16 %v296
      %v715 = vunpack.c.l.b16 %v297
      %v716 = vunpack.c.h.b16 %v297
      %v717 = vunpack.c.l.b16 %v298
      %v718 = vunpack.c.h.b16 %v298
      %v719 = vunpack.c.l.b16 %v299
      %v720 = vunpack.c.h.b16 %v299
      %v721 = vunpack.c.l.b16 %v300
      %v722 = vunpack.c.h.b16 %v300
      %v723 = vunpack.c.l.b16 %v301
      %v724 = vunpack.c.h.b16 %v301
      %v725 = vunpack.c.l.b16 %v302
      %v726 = vunpack.c.h.b16 %v302
      %v727 = vunpack.c.l.b16 %v303
      %v728 = vunpack.c.h.b16 %v303
      %v729 = vunpack.c.l.b16 %v304
      %v730 = vunpack.c.h.b16 %v304
      %v731 = vunpack.c.l.b16 %v305
      %v732 = vunpack.c.h.b16 %v305
      %v733 = vunpack.c.l.b16 %v306
      %v734 = vunpack.c.h.b16 %v306
      %v735 = vunpack.c.l.b16 %v307
      %v736 = vunpack.c.h.b16 %v307
      %v737 = vunpack.c.l.b16 %v308
      %v738 = vunpack.c.h.b16 %v308
      %v739 = vunpack.c.l.b16 %v309
      %v740 = vunpack.c.h.b16 %v309
      %v741 = vunpack.c.l.b16 %v310
      %v742 = vunpack.c.h.b16 %v310
      %v743 = vunpack.c.l.b16 %v311
      %v744 = vunpack.c.h.b16 %v311
      %v745 = vunpack.c.l.b16 %v312
      %v746 = vunpack.c.h.b16 %v312
      %v747 = vunpack.c.l.b16 %v313
      %v748 = vunpack.c.h.b16 %v313
      %v749 = vunpack.c.l.b16 %v314
      %v750 = vunpack.c.h.b16 %v314
      %v751 = vunpack.c.l.b16 %v315
      %v752 = vunpack.c.h.b16 %v315
      %v753 = vunpack.c.l.b16 %v316
      %v754 = vunpack.c.h.b16 %v316
      %v755 = vunpack.c.l.b16 %v317
      %v756 = vunpack.c.h.b16 %v317
      %v757 = vunpack.c.l.b16 %v318
      %v758 = vunpack.c.h.b16 %v318
      %v759 = vunpack.c.l.b16 %v319
      %v760 = vunpack.c.h.b16 %v319
      %v761 = vunpack.c.l.b16 %v320
      %v762 = vunpack.c.h.b16 %v320
      %v763 = vunpack.c.l.b16 %v321
      %v764 = vunpack.c.h.b16 %v321
      %v765 = vunpack.c.l.b16 %v322
      %v766 = vunpack.c.h.b16 %v322
      %v767 = vunpack.c.l.b16 %v323
      %v768 = vunpack.c.h.b16 %v323
      %v769 = vunpack.c.l.b16 %v324
      %v770 = vunpack.c.h.b16 %v324
      %v771 = vunpack.c.l.b16 %v325
      %v772 = vunpack.c.h.b16 %v325
      %v773 = vunpack.c.l.b16 %v326
      %v774 = vunpack.c.h.b16 %v326
      %v775 = vunpack.c.l.b16 %v327
      %v776 = vunpack.c.h.b16 %v327
      %v777 = vunpack.c.l.b16 %v328
      %v778 = vunpack.c.h.b16 %v328
      %v779 = vunpack.c.l.b16 %v329
      %v780 = vunpack.c.h.b16 %v329
      %v781 = vunpack.c.l.b16 %v330
      %v782 = vunpack.c.h.b16 %v330
      %v783 = vunpack.c.l.b16 %v331
      %v784 = vunpack.c.h.b16 %v331
      %v785 = vunpack.c.l.b16 %v332
      %v786 = vunpack.c.h.b16 %v332
      %v787 = vunpack.c.l.b16 %v333
      %v788 = vunpack.c.h.b16 %v333
      %v789 = vpack.c.b16 %v537, %v533
      %v790 = vpack.c.b16 %v538, %v534
      %v791 = vpack.c.b16 %v539, %v535
      %v792 = vpack.c.b16 %v540, %v536
      %v793 = vpack.c.b16 %v545, %v541
      %v794 = vpack.c.b16 %v546, %v542
      %v795 = vpack.c.b16 %v547, %v543
      %v796 = vpack.c.b16 %v548, %v544
      %v797 = vpack.c.b16 %v553, %v549
      %v798 = vpack.c.b16 %v554, %v550
      %v799 = vpack.c.b16 %v555, %v551
      %v800 = vpack.c.b16 %v556, %v552
      %v801 = vpack.c.b16 %v561, %v557
      %v802 = vpack.c.b16 %v562, %v558
      %v803 = vpack.c.b16 %v563, %v559
      %v804 = vpack.c.b16 %v564, %v560
      %v805 = vpack.c.b16 %v569, %v565
      %v806 = vpack.c.b16 %v570, %v566
      %v807 = vpack.c.b16 %v571, %v567
      %v808 = vpack.c.b16 %v572, %v568
      %v809 = vpack.c.b16 %v577, %v573
      %v810 = vpack.c.b16 %v578, %v574
      %v811 = vpack.c.b16 %v579, %v575
      %v812 = vpack.c.b16 %v580, %v576
      %v813 = vpack.c.b16 %v585, %v581
      %v814 = vpack.c.b16 %v586, %v582
      %v815 = vpack.c.b16 %v587, %v583
      %v816 = vpack.c.b16 %v588, %v584
      %v817 = vpack.c.b16 %v593, %v589
      %v818 = vpack.c.b16 %v594, %v590
      %v819 = vpack.c.b16 %v595, %v591
      %v820 = vpack.c.b16 %v596, %v592
      %v821 = vpack.c.b16 %v601, %v597
      %v822 = vpack.c.b16 %v602, %v598
      %v823 = vpack.c.b16 %v603, %v599
      %v824 = vpack.c.b16 %v604, %v600
      %v825 = vpack.c.b16 %v609, %v605
      %v826 = vpack.c.b16 %v610, %v606
      %v827 = vpack.c.b16 %v611, %v607
      %v828 = vpack.c.b16 %v612, %v608
      %v829 = vpack.c.b16 %v617, %v613
      %v830 = vpack.c.b16 %v618, %v614
      %v831 = vpack.c.b16 %v619, %v615
      %v832 = vpack.c.b16 %v620, %v616
      %v833 = vpack.c.b16 %v625, %v621
      %v834 = vpack.c.b16 %v626, %v622
      %v835 = vpack.c.b16 %v627, %v623
      %v836 = vpack.c.b16 %v628, %v624
      %v837 = vpack.c.b16 %v633, %v629
      %v838 = vpack.c.b16 %v634, %v630
      %v839 = vpack.c.b16 %v635, %v631
      %v840 = vpack.c.b16 %v636, %v632
      %v841 = vpack.c.b16 %v641, %v637
      %v842 = vpack.c.b16 %v642, %v638
      %v843 = vpack.c.b16 %v643, %v639
      %v844 = vpack.c.b16 %v644, %v640
      %v845 = vpack.c.b16 %v649, %v645
      %v846 = vpack.c.b16 %v650, %v646
      %v847 = vpack.c.b16 %v651, %v647
      %v848 = vpack.c.b16 %v652, %v648
      %v849 = vpack.c.b16 %v657, %v653
      %v850 = vpack.c.b16 %v658, %v654
      %v851 = vpack.c.b16 %v659, %v655
      %v852 = vpack.c.b16 %v660, %v656
      %v853 = vpack.c.b16 %v665, %v661
      %v854 = vpack.c.b16 %v666, %v662
      %v855 = vpack.c.b16 %v667, %v663
      %v856 = vpack.c.b16 %v668, %v664
      %v857 = vpack.c.b16 %v673, %v669
      %v858 = vpack.c.b16 %v674, %v670
      %v859 = vpack.c.b16 %v675, %v671
      %v860 = vpack.c.b16 %v676, %v672
      %v861 = vpack.c.b16 %v681, %v677
      %v862 = vpack.c.b16 %v682, %v678
      %v863 = vpack.c.b16 %v683, %v679
      %v864 = vpack.c.b16 %v684, %v680
      %v865 = vpack.c.b16 %v689, %v685
      %v866 = vpack.c.b16 %v690, %v686
      %v867 = vpack.c.b16 %v691, %v687
      %v868 = vpack.c.b16 %v692, %v688
      %v869 = vpack.c.b16 %v697, %v693
      %v870 = vpack.c.b16 %v698, %v694
      %v871 = vpack.c.b16 %v699, %v695
      %v872 = vpack.c.b16 %v700, %v696
      %v873 = vpack.c.b16 %v705, %v701
      %v874 = vpack.c.b16 %v706, %v702
      %v875 = vpack.c.b16 %v707, %v703
      %v876 = vpack.c.b16 %v708, %v704
      %v877 = vpack.c.b16 %v713, %v709
      %v878 = vpack.c.b16 %v714, %v710
      %v879 = vpack.c.b16 %v715, %v711
      %v880 = vpack.c.b16 %v716, %v712
      %v881 = vpack.c.b16 %v721, %v717
      %v882 = vpack.c.b16 %v722, %v718
      %v883 = vpack.c.b16 %v723, %v719
      %v884 = vpack.c.b16 %v724, %v720
      %v885 = vpack.c.b16 %v729, %v725
      %v886 = vpack.c.b16 %v730, %v726
      %v887 = vpack.c.b16 %v731, %v727
      %v888 = vpack.c.b16 %v732, %v728
      %v889 = vpack.c.b16 %v737, %v733
      %v890 = vpack.c.b16 %v738, %v734
      %v891 = vpack.c.b16 %v739, %v735
      %v892 = vpack.c.b16 %v740, %v736
      %v893 = vpack.c.b16 %v745, %v741
      %v894 = vpack.c.b16 %v746, %v742
      %v895 = vpack.c.b16 %v747, %v743
      %v896 = vpack.c.b16 %v748, %v744
      %v897 = vpack.c.b16 %v753, %v749
      %v898 = vpack.c.b16 %v754, %v750
      %v899 = vpack.c.b16 %v755, %v751
      %v900 = vpack.c.b16 %v756, %v752
      %v901 = vpack.c.b16 %v761, %v757
      %v902 = vpack.c.b16 %v762, %v758
      %v903 = vpack.c.b16 %v763, %v759
      %v904 = vpack.c.b16 %v764, %v760
      %v905 = vpack.c.b16 %v769, %v765
      %v906 = vpack.c.b16 %v770, %v766
      %v907 = vpack.c.b16 %v771, %v767
      %v908 = vpack.c.b16 %v772, %v768
      %v909 = vpack.c.b16 %v777, %v773
      %v910 = vpack.c.b16 %v778, %v774
      %v911 = vpack.c.b16 %v779, %v775
      %v912 = vpack.c.b16 %v780, %v776
      %v913 = vpack.c.b16 %v785, %v781
      %v914 = vpack.c.b16 %v786, %v782
      %v915 = vpack.c.b16 %v787, %v783
      %v916 = vpack.c.b16 %v788, %v784
      %v1109 = vunpack.c.l.b16 %v334
      %v1110 = vunpack.c.l.b16 %v335
      %v1111 = vunpack.c.l.b16 %v336
      %v1112 = vunpack.c.l.b16 %v337
      %v1113 = vunpack.c.l.b16 %v338
      %v1114 = vunpack.c.l.b16 %v339
      %v1115 = vunpack.c.l.b16 %v340
      %v1116 = vunpack.c.l.b16 %v341
      %v1117 = vunpack.c.l.b16 %v342
      %v1118 = vunpack.c.l.b16 %v343
      %v1119 = vunpack.c.l.b16 %v344
      %v1120 = vunpack.c.l.b16 %v345
      %v1121 = vunpack.c.l.b16 %v346
      %v1122 = vunpack.c.l.b16 %v347
      %v1123 = vunpack.c.l.b16 %v348
      %v1124 = vunpack.c.l.b16 %v349
      %v1125 = vunpack.c.l.b16 %v350
      %v1126 = vunpack.c.l.b16 %v351
      %v1127 = vunpack.c.l.b16 %v352
      %v1128 = vunpack.c.l.b16 %v353
      %v1129 = vunpack.c.l.b16 %v354
      %v1130 = vunpack.c.l.b16 %v355
      %v1131 = vunpack.c.l.b16 %v356
      %v1132 = vunpack.c.l.b16 %v357
      %v1133 = vunpack.c.l.b16 %v358
      %v1134 = vunpack.c.l.b16 %v359
      %v1135 = vunpack.c.l.b16 %v360
      %v1136 = vunpack.c.l.b16 %v361
      %v1137 = vunpack.c.l.b16 %v362
      %v1138 = vunpack.c.l.b16 %v363
      %v1139 = vunpack.c.l.b16 %v364
      %v1140 = vunpack.c.l.b16 %v365
      %v1141 = vunpack.c.l.b16 %v366
      %v1142 = vunpack.c.l.b16 %v367
      %v1143 = vunpack.c.l.b16 %v368
      %v1144 = vunpack.c.l.b16 %v369
      %v1145 = vunpack.c.l.b16 %v370
      %v1146 = vunpack.c.l.b16 %v371
      %v1147 = vunpack.c.l.b16 %v372
      %v1148 = vunpack.c.l.b16 %v373
      %v1149 = vunpack.c.l.b16 %v374
      %v1150 = vunpack.c.l.b16 %v375
      %v1151 = vunpack.c.l.b16 %v376
      %v1152 = vunpack.c.l.b16 %v377
      %v1153 = vunpack.c.l.b16 %v378
      %v1154 = vunpack.c.l.b16 %v379
      %v1155 = vunpack.c.l.b16 %v380
      %v1156 = vunpack.c.l.b16 %v381
      %v1157 = vunpack.c.l.b16 %v382
      %v1158 = vunpack.c.l.b16 %v383
      %v1159 = vunpack.c.l.b16 %v384
      %v1160 = vunpack.c.l.b16 %v385
      %v1161 = vunpack.c.l.b16 %v386
      %v1162 = vunpack.c.l.b16 %v387
      %v1163 = vunpack.c.l.b16 %v388
      %v1164 = vunpack.c.l.b16 %v389
      %v1165 = vunpack.c.l.b16 %v390
      %v1166 = vunpack.c.l.b16 %v391
      %v1167 = vunpack.c.l.b16 %v392
      %v1168 = vunpack.c.l.b16 %v393
      %v1169 = vunpack.c.l.b16 %v394
      %v1170 = vunpack.c.l.b16 %v395
      %v1171 = vunpack.c.l.b16 %v396
      %v1172 = vunpack.c.l.b16 %v397
      %v1173 = vpack.c.b16 %v1110, %v1109
      %v1174 = vpack.c.b16 %v1112, %v1111
      %v1175 = vpack.c.b16 %v1114, %v1113
      %v1176 = vpack.c.b16 %v1116, %v1115
      %v1177 = vpack.c.b16 %v1118, %v1117
      %v1178 = vpack.c.b16 %v1120, %v1119
      %v1179 = vpack.c.b16 %v1122, %v1121
      %v1180 = vpack.c.b16 %v1124, %v1123
      %v1181 = vpack.c.b16 %v1126, %v1125
      %v1182 = vpack.c.b16 %v1128, %v1127
      %v1183 = vpack.c.b16 %v1130, %v1129
      %v1184 = vpack.c.b16 %v1132, %v1131
      %v1185 = vpack.c.b16 %v1134, %v1133
      %v1186 = vpack.c.b16 %v1136, %v1135
      %v1187 = vpack.c.b16 %v1138, %v1137
      %v1188 = vpack.c.b16 %v1140, %v1139
      %v1189 = vpack.c.b16 %v1142, %v1141
      %v1190 = vpack.c.b16 %v1144, %v1143
      %v1191 = vpack.c.b16 %v1146, %v1145
      %v1192 = vpack.c.b16 %v1148, %v1147
      %v1193 = vpack.c.b16 %v1150, %v1149
      %v1194 = vpack.c.b16 %v1152, %v1151
      %v1195 = vpack.c.b16 %v1154, %v1153
      %v1196 = vpack.c.b16 %v1156, %v1155
      %v1197 = vpack.c.b16 %v1158, %v1157
      %v1198 = vpack.c.b16 %v1160, %v1159
      %v1199 = vpack.c.b16 %v1162, %v1161
      %v1200 = vpack.c.b16 %v1164, %v1163
      %v1201 = vpack.c.b16 %v1166, %v1165
      %v1202 = vpack.c.b16 %v1168, %v1167
      %v1203 = vpack.c.b16 %v1170, %v1169
      %v1204 = vpack.c.b16 %v1172, %v1171
      %1237 = vmatprep.subr.bf16.mxu0 0
      %1238 = vmatpush1.bf16.msra.mxu0 %v1173
      %1239 = vmatprep.subr.bf16.mxu0 0
      %1240 = vmatpush1.bf16.msra.mxu0 %v1174
      %1241 = vmatprep.subr.bf16.mxu0 0
      %1242 = vmatpush1.bf16.msra.mxu0 %v1175
      %1243 = vmatprep.subr.bf16.mxu0 0
      %1244 = vmatpush1.bf16.msra.mxu0 %v1176
      %1245 = vmatprep.subr.bf16.mxu0 0
      %1246 = vmatpush1.bf16.msra.mxu0 %v1177
      %1247 = vmatprep.subr.bf16.mxu0 0
      %1248 = vmatpush1.bf16.msra.mxu0 %v1178
      %1249 = vmatprep.subr.bf16.mxu0 0
      %1250 = vmatpush1.bf16.msra.mxu0 %v1179
      %1251 = vmatprep.subr.bf16.mxu0 0
      %1252 = vmatpush1.bf16.msra.mxu0 %v1180
      %1253 = vmatprep.subr.bf16.mxu0 0
      %1254 = vmatpush1.bf16.msra.mxu0 %v1181
      %1255 = vmatprep.subr.bf16.mxu0 0
      %1256 = vmatpush1.bf16.msra.mxu0 %v1182
      %1257 = vmatprep.subr.bf16.mxu0 0
      %1258 = vmatpush1.bf16.msra.mxu0 %v1183
      %1259 = vmatprep.subr.bf16.mxu0 0
      %1260 = vmatpush1.bf16.msra.mxu0 %v1184
      %1261 = vmatprep.subr.bf16.mxu0 0
      %1262 = vmatpush1.bf16.msra.mxu0 %v1185
      %1263 = vmatprep.subr.bf16.mxu0 0
      %1264 = vmatpush1.bf16.msra.mxu0 %v1186
      %1265 = vmatprep.subr.bf16.mxu0 0
      %1266 = vmatpush1.bf16.msra.mxu0 %v1187
      %1267 = vmatprep.subr.bf16.mxu0 0
      %1268 = vmatpush1.bf16.msra.mxu0 %v1188
      %1269 = vmatprep.mubr.bf16.mxu0 %v790
      %1270 = vmatmul.mubr.bf16.gmra.mrb[0].mxu0 %v789
      %v1271 = vpop.f32.mrb[0].mxu0
      %v1272 = vadd.f32 %v403, %v1271
      %v1273 = vpop.f32.mrb[0].mxu0
      %v1274 = vpop.f32.mrb[0].mxu0
      %v1275 = vadd.f32 %v403, %v1274
      %v1276 = vpop.f32.mrb[0].mxu0
      %1277 = vmatprep.mubr.bf16.mxu0 %v794
      %1278 = vmatmul.mubr.bf16.gmra.mrb[0].mxu0 %v793
      %v1279 = vpop.f32.mrb[0].mxu0
      %v1280 = vadd.f32 %v403, %v1279
      %v1281 = vpop.f32.mrb[0].mxu0
      %v1282 = vpop.f32.mrb[0].mxu0
      %v1283 = vadd.f32 %v403, %v1282
      %v1284 = vpop.f32.mrb[0].mxu0
      %1285 = vmatprep.mubr.bf16.mxu0 %v798
      %1286 = vmatmul.mubr.bf16.gmra.mrb[0].mxu0 %v797
      %v1287 = vpop.f32.mrb[0].mxu0
      %v1288 = vadd.f32 %v403, %v1287
      %v1289 = vpop.f32.mrb[0].mxu0
      %v1290 = vpop.f32.mrb[0].mxu0
      %v1291 = vadd.f32 %v403, %v1290
      %v1292 = vpop.f32.mrb[0].mxu0
      %1293 = vmatprep.mubr.bf16.mxu0 %v802
      %1294 = vmatmul.mubr.bf16.gmra.mrb[0].mxu0 %v801
      %v1295 = vpop.f32.mrb[0].mxu0
      %v1296 = vadd.f32 %v403, %v1295
      %v1297 = vpop.f32.mrb[0].mxu0
      %v1298 = vpop.f32.mrb[0].mxu0
      %v1299 = vadd.f32 %v403, %v1298
      %v1300 = vpop.f32.mrb[0].mxu0
      %1301 = vmatprep.mubr.bf16.mxu0 %v806
      %1302 = vmatmul.mubr.bf16.gmra.mrb[0].mxu0 %v805
      %v1303 = vpop.f32.mrb[0].mxu0
      %v1304 = vadd.f32 %v403, %v1303
      %v1305 = vpop.f32.mrb[0].mxu0
      %v1306 = vpop.f32.mrb[0].mxu0
      %v1307 = vadd.f32 %v403, %v1306
      %v1308 = vpop.f32.mrb[0].mxu0
      %1309 = vmatprep.mubr.bf16.mxu0 %v810
      %1310 = vmatmul.mubr.bf16.gmra.mrb[0].mxu0 %v809
      %v1311 = vpop.f32.mrb[0].mxu0
      %v1312 = vadd.f32 %v403, %v1311
      %v1313 = vpop.f32.mrb[0].mxu0
      %v1314 = vpop.f32.mrb[0].mxu0
      %v1315 = vadd.f32 %v403, %v1314
      %v1316 = vpop.f32.mrb[0].mxu0
      %1317 = vmatprep.mubr.bf16.mxu0 %v814
      %1318 = vmatmul.mubr.bf16.gmra.mrb[0].mxu0 %v813
      %v1319 = vpop.f32.mrb[0].mxu0
      %v1320 = vadd.f32 %v403, %v1319
      %v1321 = vpop.f32.mrb[0].mxu0
      %v1322 = vpop.f32.mrb[0].mxu0
      %v1323 = vadd.f32 %v403, %v1322
      %v1324 = vpop.f32.mrb[0].mxu0
      %1325 = vmatprep.mubr.bf16.mxu0 %v818
      %1326 = vmatmul.mubr.bf16.gmra.mrb[0].mxu0 %v817
      %v1327 = vpop.f32.mrb[0].mxu0
      %v1328 = vadd.f32 %v403, %v1327
      %v1329 = vpop.f32.mrb[0].mxu0
      %v1330 = vpop.f32.mrb[0].mxu0
      %v1331 = vadd.f32 %v403, %v1330
      %v1332 = vpop.f32.mrb[0].mxu0
      %1333 = vmatprep.mubr.bf16.mxu0 %v822
      %1334 = vmatmul.mubr.bf16.gmra.mrb[0].mxu0 %v821
      %v1335 = vpop.f32.mrb[0].mxu0
      %v1336 = vadd.f32 %v403, %v1335
      %v1337 = vpop.f32.mrb[0].mxu0
      %v1338 = vpop.f32.mrb[0].mxu0
      %v1339 = vadd.f32 %v403, %v1338
      %v1340 = vpop.f32.mrb[0].mxu0
      %1341 = vmatprep.mubr.bf16.mxu0 %v826
      %1342 = vmatmul.mubr.bf16.gmra.mrb[0].mxu0 %v825
      %v1343 = vpop.f32.mrb[0].mxu0
      %v1344 = vadd.f32 %v403, %v1343
      %v1345 = vpop.f32.mrb[0].mxu0
      %v1346 = vpop.f32.mrb[0].mxu0
      %v1347 = vadd.f32 %v403, %v1346
      %v1348 = vpop.f32.mrb[0].mxu0
      %1349 = vmatprep.mubr.bf16.mxu0 %v830
      %1350 = vmatmul.mubr.bf16.gmra.mrb[0].mxu0 %v829
      %v1351 = vpop.f32.mrb[0].mxu0
      %v1352 = vadd.f32 %v403, %v1351
      %v1353 = vpop.f32.mrb[0].mxu0
      %v1354 = vpop.f32.mrb[0].mxu0
      %v1355 = vadd.f32 %v403, %v1354
      %v1356 = vpop.f32.mrb[0].mxu0
      %1357 = vmatprep.mubr.bf16.mxu0 %v834
      %1358 = vmatmul.mubr.bf16.gmra.mrb[0].mxu0 %v833
      %v1359 = vpop.f32.mrb[0].mxu0
      %v1360 = vadd.f32 %v403, %v1359
      %v1361 = vpop.f32.mrb[0].mxu0
      %v1362 = vpop.f32.mrb[0].mxu0
      %v1363 = vadd.f32 %v403, %v1362
      %v1364 = vpop.f32.mrb[0].mxu0
      %1365 = vmatprep.mubr.bf16.mxu0 %v838
      %1366 = vmatmul.mubr.bf16.gmra.mrb[0].mxu0 %v837
      %v1367 = vpop.f32.mrb[0].mxu0
      %v1368 = vadd.f32 %v403, %v1367
      %v1369 = vpop.f32.mrb[0].mxu0
      %v1370 = vpop.f32.mrb[0].mxu0
      %v1371 = vadd.f32 %v403, %v1370
      %v1372 = vpop.f32.mrb[0].mxu0
      %1373 = vmatprep.mubr.bf16.mxu0 %v842
      %1374 = vmatmul.mubr.bf16.gmra.mrb[0].mxu0 %v841
      %v1375 = vpop.f32.mrb[0].mxu0
      %v1376 = vadd.f32 %v403, %v1375
      %v1377 = vpop.f32.mrb[0].mxu0
      %v1378 = vpop.f32.mrb[0].mxu0
      %v1379 = vadd.f32 %v403, %v1378
      %v1380 = vpop.f32.mrb[0].mxu0
      %1381 = vmatprep.mubr.bf16.mxu0 %v846
      %1382 = vmatmul.mubr.bf16.gmra.mrb[0].mxu0 %v845
      %v1383 = vpop.f32.mrb[0].mxu0
      %v1384 = vadd.f32 %v403, %v1383
      %v1385 = vpop.f32.mrb[0].mxu0
      %v1386 = vpop.f32.mrb[0].mxu0
      %v1387 = vadd.f32 %v403, %v1386
      %v1388 = vpop.f32.mrb[0].mxu0
      %1389 = vmatprep.mubr.bf16.mxu0 %v850
      %1390 = vmatmul.mubr.bf16.gmra.mrb[0].mxu0 %v849
      %v1391 = vpop.f32.mrb[0].mxu0
      %v1392 = vadd.f32 %v403, %v1391
      %v1393 = vpop.f32.mrb[0].mxu0
      %v1394 = vpop.f32.mrb[0].mxu0
      %v1395 = vadd.f32 %v403, %v1394
      %v1396 = vpop.f32.mrb[0].mxu0
      %1397 = vmatprep.mubr.bf16.mxu0 %v854
      %1398 = vmatmul.mubr.bf16.gmra.mrb[0].mxu0 %v853
      %v1399 = vpop.f32.mrb[0].mxu0
      %v1400 = vadd.f32 %v403, %v1399
      %v1401 = vpop.f32.mrb[0].mxu0
      %v1402 = vpop.f32.mrb[0].mxu0
      %v1403 = vadd.f32 %v403, %v1402
      %v1404 = vpop.f32.mrb[0].mxu0
      %1405 = vmatprep.mubr.bf16.mxu0 %v858
      %1406 = vmatmul.mubr.bf16.gmra.mrb[0].mxu0 %v857
      %v1407 = vpop.f32.mrb[0].mxu0
      %v1408 = vadd.f32 %v403, %v1407
      %v1409 = vpop.f32.mrb[0].mxu0
      %v1410 = vpop.f32.mrb[0].mxu0
      %v1411 = vadd.f32 %v403, %v1410
      %v1412 = vpop.f32.mrb[0].mxu0
      %1413 = vmatprep.mubr.bf16.mxu0 %v862
      %1414 = vmatmul.mubr.bf16.gmra.mrb[0].mxu0 %v861
      %v1415 = vpop.f32.mrb[0].mxu0
      %v1416 = vadd.f32 %v403, %v1415
      %v1417 = vpop.f32.mrb[0].mxu0
      %v1418 = vpop.f32.mrb[0].mxu0
      %v1419 = vadd.f32 %v403, %v1418
      %v1420 = vpop.f32.mrb[0].mxu0
      %1421 = vmatprep.mubr.bf16.mxu0 %v866
      %1422 = vmatmul.mubr.bf16.gmra.mrb[0].mxu0 %v865
      %v1423 = vpop.f32.mrb[0].mxu0
      %v1424 = vadd.f32 %v403, %v1423
      %v1425 = vpop.f32.mrb[0].mxu0
      %v1426 = vpop.f32.mrb[0].mxu0
      %v1427 = vadd.f32 %v403, %v1426
      %v1428 = vpop.f32.mrb[0].mxu0
      %1429 = vmatprep.mubr.bf16.mxu0 %v870
      %1430 = vmatmul.mubr.bf16.gmra.mrb[0].mxu0 %v869
      %v1431 = vpop.f32.mrb[0].mxu0
      %v1432 = vadd.f32 %v403, %v1431
      %v1433 = vpop.f32.mrb[0].mxu0
      %v1434 = vpop.f32.mrb[0].mxu0
      %v1435 = vadd.f32 %v403, %v1434
      %v1436 = vpop.f32.mrb[0].mxu0
      %1437 = vmatprep.mubr.bf16.mxu0 %v874
      %1438 = vmatmul.mubr.bf16.gmra.mrb[0].mxu0 %v873
      %v1439 = vpop.f32.mrb[0].mxu0
      %v1440 = vadd.f32 %v403, %v1439
      %v1441 = vpop.f32.mrb[0].mxu0
      %v1442 = vpop.f32.mrb[0].mxu0
      %v1443 = vadd.f32 %v403, %v1442
      %v1444 = vpop.f32.mrb[0].mxu0
      %1445 = vmatprep.mubr.bf16.mxu0 %v878
      %1446 = vmatmul.mubr.bf16.gmra.mrb[0].mxu0 %v877
      %v1447 = vpop.f32.mrb[0].mxu0
      %v1448 = vadd.f32 %v403, %v1447
      %v1449 = vpop.f32.mrb[0].mxu0
      %v1450 = vpop.f32.mrb[0].mxu0
      %v1451 = vadd.f32 %v403, %v1450
      %v1452 = vpop.f32.mrb[0].mxu0
      %1453 = vmatprep.mubr.bf16.mxu0 %v882
      %1454 = vmatmul.mubr.bf16.gmra.mrb[0].mxu0 %v881
      %v1455 = vpop.f32.mrb[0].mxu0
      %v1456 = vadd.f32 %v403, %v1455
      %v1457 = vpop.f32.mrb[0].mxu0
      %v1458 = vpop.f32.mrb[0].mxu0
      %v1459 = vadd.f32 %v403, %v1458
      %v1460 = vpop.f32.mrb[0].mxu0
      %1461 = vmatprep.mubr.bf16.mxu0 %v886
      %1462 = vmatmul.mubr.bf16.gmra.mrb[0].mxu0 %v885
      %v1463 = vpop.f32.mrb[0].mxu0
      %v1464 = vadd.f32 %v403, %v1463
      %v1465 = vpop.f32.mrb[0].mxu0
      %v1466 = vpop.f32.mrb[0].mxu0
      %v1467 = vadd.f32 %v403, %v1466
      %v1468 = vpop.f32.mrb[0].mxu0
      %1469 = vmatprep.mubr.bf16.mxu0 %v890
      %1470 = vmatmul.mubr.bf16.gmra.mrb[0].mxu0 %v889
      %v1471 = vpop.f32.mrb[0].mxu0
      %v1472 = vadd.f32 %v403, %v1471
      %v1473 = vpop.f32.mrb[0].mxu0
      %v1474 = vpop.f32.mrb[0].mxu0
      %v1475 = vadd.f32 %v403, %v1474
      %v1476 = vpop.f32.mrb[0].mxu0
      %1477 = vmatprep.mubr.bf16.mxu0 %v894
      %1478 = vmatmul.mubr.bf16.gmra.mrb[0].mxu0 %v893
      %v1479 = vpop.f32.mrb[0].mxu0
      %v1480 = vadd.f32 %v403, %v1479
      %v1481 = vpop.f32.mrb[0].mxu0
      %v1482 = vpop.f32.mrb[0].mxu0
      %v1483 = vadd.f32 %v403, %v1482
      %v1484 = vpop.f32.mrb[0].mxu0
      %1485 = vmatprep.mubr.bf16.mxu0 %v898
      %1486 = vmatmul.mubr.bf16.gmra.mrb[0].mxu0 %v897
      %v1487 = vpop.f32.mrb[0].mxu0
      %v1488 = vadd.f32 %v403, %v1487
      %v1489 = vpop.f32.mrb[0].mxu0
      %v1490 = vpop.f32.mrb[0].mxu0
      %v1491 = vadd.f32 %v403, %v1490
      %v1492 = vpop.f32.mrb[0].mxu0
      %1493 = vmatprep.mubr.bf16.mxu0 %v902
      %1494 = vmatmul.mubr.bf16.gmra.mrb[0].mxu0 %v901
      %v1495 = vpop.f32.mrb[0].mxu0
      %v1496 = vadd.f32 %v403, %v1495
      %v1497 = vpop.f32.mrb[0].mxu0
      %v1498 = vpop.f32.mrb[0].mxu0
      %v1499 = vadd.f32 %v403, %v1498
      %v1500 = vpop.f32.mrb[0].mxu0
      %1501 = vmatprep.mubr.bf16.mxu0 %v906
      %1502 = vmatmul.mubr.bf16.gmra.mrb[0].mxu0 %v905
      %v1503 = vpop.f32.mrb[0].mxu0
      %v1504 = vadd.f32 %v403, %v1503
      %v1505 = vpop.f32.mrb[0].mxu0
      %v1506 = vpop.f32.mrb[0].mxu0
      %v1507 = vadd.f32 %v403, %v1506
      %v1508 = vpop.f32.mrb[0].mxu0
      %1509 = vmatprep.mubr.bf16.mxu0 %v910
      %1510 = vmatmul.mubr.bf16.gmra.mrb[0].mxu0 %v909
      %v1511 = vpop.f32.mrb[0].mxu0
      %v1512 = vadd.f32 %v403, %v1511
      %v1513 = vpop.f32.mrb[0].mxu0
      %v1514 = vpop.f32.mrb[0].mxu0
      %v1515 = vadd.f32 %v403, %v1514
      %v1516 = vpop.f32.mrb[0].mxu0
      %1517 = vmatprep.mubr.bf16.mxu0 %v914
      %1518 = vmatmul.mubr.bf16.gmra.mrb[0].mxu0 %v913
      %v1519 = vpop.f32.mrb[0].mxu0
      %v1520 = vadd.f32 %v403, %v1519
      %v1521 = vpop.f32.mrb[0].mxu0
      %v1522 = vpop.f32.mrb[0].mxu0
      %v1523 = vadd.f32 %v403, %v1522
      %v1524 = vpop.f32.mrb[0].mxu0
      %1525 = vdwg.mxu0
      %1526 = vmatprep.subr.bf16.mxu0 0
      %1527 = vmatpush1.bf16.msra.mxu0 %v1189
      %1528 = vmatprep.subr.bf16.mxu0 0
      %1529 = vmatpush1.bf16.msra.mxu0 %v1190
      %1530 = vmatprep.subr.bf16.mxu0 0
      %1531 = vmatpush1.bf16.msra.mxu0 %v1191
      %1532 = vmatprep.subr.bf16.mxu0 0
      %1533 = vmatpush1.bf16.msra.mxu0 %v1192
      %1534 = vmatprep.subr.bf16.mxu0 0
      %1535 = vmatpush1.bf16.msra.mxu0 %v1193
      %1536 = vmatprep.subr.bf16.mxu0 0
      %1537 = vmatpush1.bf16.msra.mxu0 %v1194
      %1538 = vmatprep.subr.bf16.mxu0 0
      %1539 = vmatpush1.bf16.msra.mxu0 %v1195
      %1540 = vmatprep.subr.bf16.mxu0 0
      %1541 = vmatpush1.bf16.msra.mxu0 %v1196
      %1542 = vmatprep.subr.bf16.mxu0 0
      %1543 = vmatpush1.bf16.msra.mxu0 %v1197
      %1544 = vmatprep.subr.bf16.mxu0 0
      %1545 = vmatpush1.bf16.msra.mxu0 %v1198
      %1546 = vmatprep.subr.bf16.mxu0 0
      %1547 = vmatpush1.bf16.msra.mxu0 %v1199
      %1548 = vmatprep.subr.bf16.mxu0 0
      %1549 = vmatpush1.bf16.msra.mxu0 %v1200
      %1550 = vmatprep.subr.bf16.mxu0 0
      %1551 = vmatpush1.bf16.msra.mxu0 %v1201
      %1552 = vmatprep.subr.bf16.mxu0 0
      %1553 = vmatpush1.bf16.msra.mxu0 %v1202
      %1554 = vmatprep.subr.bf16.mxu0 0
      %1555 = vmatpush1.bf16.msra.mxu0 %v1203
      %1556 = vmatprep.subr.bf16.mxu0 0
      %1557 = vmatpush1.bf16.msra.mxu0 %v1204
      %1558 = vmatprep.mubr.bf16.mxu0 %v792
      %1559 = vmatmul.mubr.bf16.gmra.mrb[0].mxu0 %v791
      %v1560 = vpop.f32.mrb[0].mxu0
      %v1561 = vadd.f32 %v1272, %v1560
      %v1562 = vpop.f32.mrb[0].mxu0
      %v1563 = vpop.f32.mrb[0].mxu0
      %v1564 = vadd.f32 %v1275, %v1563
      %v1565 = vpop.f32.mrb[0].mxu0
      %1566 = vmatprep.mubr.bf16.mxu0 %v796
      %1567 = vmatmul.mubr.bf16.gmra.mrb[0].mxu0 %v795
      %v1568 = vpop.f32.mrb[0].mxu0
      %v1569 = vadd.f32 %v1280, %v1568
      %v1570 = vpop.f32.mrb[0].mxu0
      %v1571 = vpop.f32.mrb[0].mxu0
      %v1572 = vadd.f32 %v1283, %v1571
      %v1573 = vpop.f32.mrb[0].mxu0
      %1574 = vmatprep.mubr.bf16.mxu0 %v800
      %1575 = vmatmul.mubr.bf16.gmra.mrb[0].mxu0 %v799
      %v1576 = vpop.f32.mrb[0].mxu0
      %v1577 = vadd.f32 %v1288, %v1576
      %v1578 = vpop.f32.mrb[0].mxu0
      %v1579 = vpop.f32.mrb[0].mxu0
      %v1580 = vadd.f32 %v1291, %v1579
      %v1581 = vpop.f32.mrb[0].mxu0
      %1582 = vmatprep.mubr.bf16.mxu0 %v804
      %1583 = vmatmul.mubr.bf16.gmra.mrb[0].mxu0 %v803
      %v1584 = vpop.f32.mrb[0].mxu0
      %v1585 = vadd.f32 %v1296, %v1584
      %v1586 = vpop.f32.mrb[0].mxu0
      %v1587 = vpop.f32.mrb[0].mxu0
      %v1588 = vadd.f32 %v1299, %v1587
      %v1589 = vpop.f32.mrb[0].mxu0
      %1590 = vmatprep.mubr.bf16.mxu0 %v808
      %1591 = vmatmul.mubr.bf16.gmra.mrb[0].mxu0 %v807
      %v1592 = vpop.f32.mrb[0].mxu0
      %v1593 = vadd.f32 %v1304, %v1592
      %v1594 = vpop.f32.mrb[0].mxu0
      %v1595 = vpop.f32.mrb[0].mxu0
      %v1596 = vadd.f32 %v1307, %v1595
      %v1597 = vpop.f32.mrb[0].mxu0
      %1598 = vmatprep.mubr.bf16.mxu0 %v812
      %1599 = vmatmul.mubr.bf16.gmra.mrb[0].mxu0 %v811
      %v1600 = vpop.f32.mrb[0].mxu0
      %v1601 = vadd.f32 %v1312, %v1600
      %v1602 = vpop.f32.mrb[0].mxu0
      %v1603 = vpop.f32.mrb[0].mxu0
      %v1604 = vadd.f32 %v1315, %v1603
      %v1605 = vpop.f32.mrb[0].mxu0
      %1606 = vmatprep.mubr.bf16.mxu0 %v816
      %1607 = vmatmul.mubr.bf16.gmra.mrb[0].mxu0 %v815
      %v1608 = vpop.f32.mrb[0].mxu0
      %v1609 = vadd.f32 %v1320, %v1608
      %v1610 = vpop.f32.mrb[0].mxu0
      %v1611 = vpop.f32.mrb[0].mxu0
      %v1612 = vadd.f32 %v1323, %v1611
      %v1613 = vpop.f32.mrb[0].mxu0
      %1614 = vmatprep.mubr.bf16.mxu0 %v820
      %1615 = vmatmul.mubr.bf16.gmra.mrb[0].mxu0 %v819
      %v1616 = vpop.f32.mrb[0].mxu0
      %v1617 = vadd.f32 %v1328, %v1616
      %v1618 = vpop.f32.mrb[0].mxu0
      %v1619 = vpop.f32.mrb[0].mxu0
      %v1620 = vadd.f32 %v1331, %v1619
      %v1621 = vpop.f32.mrb[0].mxu0
      %1622 = vmatprep.mubr.bf16.mxu0 %v824
      %1623 = vmatmul.mubr.bf16.gmra.mrb[0].mxu0 %v823
      %v1624 = vpop.f32.mrb[0].mxu0
      %v1625 = vadd.f32 %v1336, %v1624
      %v1626 = vpop.f32.mrb[0].mxu0
      %v1627 = vpop.f32.mrb[0].mxu0
      %v1628 = vadd.f32 %v1339, %v1627
      %v1629 = vpop.f32.mrb[0].mxu0
      %1630 = vmatprep.mubr.bf16.mxu0 %v828
      %1631 = vmatmul.mubr.bf16.gmra.mrb[0].mxu0 %v827
      %v1632 = vpop.f32.mrb[0].mxu0
      %v1633 = vadd.f32 %v1344, %v1632
      %v1634 = vpop.f32.mrb[0].mxu0
      %v1635 = vpop.f32.mrb[0].mxu0
      %v1636 = vadd.f32 %v1347, %v1635
      %v1637 = vpop.f32.mrb[0].mxu0
      %1638 = vmatprep.mubr.bf16.mxu0 %v832
      %1639 = vmatmul.mubr.bf16.gmra.mrb[0].mxu0 %v831
      %v1640 = vpop.f32.mrb[0].mxu0
      %v1641 = vadd.f32 %v1352, %v1640
      %v1642 = vpop.f32.mrb[0].mxu0
      %v1643 = vpop.f32.mrb[0].mxu0
      %v1644 = vadd.f32 %v1355, %v1643
      %v1645 = vpop.f32.mrb[0].mxu0
      %1646 = vmatprep.mubr.bf16.mxu0 %v836
      %1647 = vmatmul.mubr.bf16.gmra.mrb[0].mxu0 %v835
      %v1648 = vpop.f32.mrb[0].mxu0
      %v1649 = vadd.f32 %v1360, %v1648
      %v1650 = vpop.f32.mrb[0].mxu0
      %v1651 = vpop.f32.mrb[0].mxu0
      %v1652 = vadd.f32 %v1363, %v1651
      %v1653 = vpop.f32.mrb[0].mxu0
      %1654 = vmatprep.mubr.bf16.mxu0 %v840
      %1655 = vmatmul.mubr.bf16.gmra.mrb[0].mxu0 %v839
      %v1656 = vpop.f32.mrb[0].mxu0
      %v1657 = vadd.f32 %v1368, %v1656
      %v1658 = vpop.f32.mrb[0].mxu0
      %v1659 = vpop.f32.mrb[0].mxu0
      %v1660 = vadd.f32 %v1371, %v1659
      %v1661 = vpop.f32.mrb[0].mxu0
      %1662 = vmatprep.mubr.bf16.mxu0 %v844
      %1663 = vmatmul.mubr.bf16.gmra.mrb[0].mxu0 %v843
      %v1664 = vpop.f32.mrb[0].mxu0
      %v1665 = vadd.f32 %v1376, %v1664
      %v1666 = vpop.f32.mrb[0].mxu0
      %v1667 = vpop.f32.mrb[0].mxu0
      %v1668 = vadd.f32 %v1379, %v1667
      %v1669 = vpop.f32.mrb[0].mxu0
      %1670 = vmatprep.mubr.bf16.mxu0 %v848
      %1671 = vmatmul.mubr.bf16.gmra.mrb[0].mxu0 %v847
      %v1672 = vpop.f32.mrb[0].mxu0
      %v1673 = vadd.f32 %v1384, %v1672
      %v1674 = vpop.f32.mrb[0].mxu0
      %v1675 = vpop.f32.mrb[0].mxu0
      %v1676 = vadd.f32 %v1387, %v1675
      %v1677 = vpop.f32.mrb[0].mxu0
      %1678 = vmatprep.mubr.bf16.mxu0 %v852
      %1679 = vmatmul.mubr.bf16.gmra.mrb[0].mxu0 %v851
      %v1680 = vpop.f32.mrb[0].mxu0
      %v1681 = vadd.f32 %v1392, %v1680
      %v1682 = vpop.f32.mrb[0].mxu0
      %v1683 = vpop.f32.mrb[0].mxu0
      %v1684 = vadd.f32 %v1395, %v1683
      %v1685 = vpop.f32.mrb[0].mxu0
      %1686 = vmatprep.mubr.bf16.mxu0 %v856
      %1687 = vmatmul.mubr.bf16.gmra.mrb[0].mxu0 %v855
      %v1688 = vpop.f32.mrb[0].mxu0
      %v1689 = vadd.f32 %v1400, %v1688
      %v1690 = vpop.f32.mrb[0].mxu0
      %v1691 = vpop.f32.mrb[0].mxu0
      %v1692 = vadd.f32 %v1403, %v1691
      %v1693 = vpop.f32.mrb[0].mxu0
      %1694 = vmatprep.mubr.bf16.mxu0 %v860
      %1695 = vmatmul.mubr.bf16.gmra.mrb[0].mxu0 %v859
      %v1696 = vpop.f32.mrb[0].mxu0
      %v1697 = vadd.f32 %v1408, %v1696
      %v1698 = vpop.f32.mrb[0].mxu0
      %v1699 = vpop.f32.mrb[0].mxu0
      %v1700 = vadd.f32 %v1411, %v1699
      %v1701 = vpop.f32.mrb[0].mxu0
      %1702 = vmatprep.mubr.bf16.mxu0 %v864
      %1703 = vmatmul.mubr.bf16.gmra.mrb[0].mxu0 %v863
      %v1704 = vpop.f32.mrb[0].mxu0
      %v1705 = vadd.f32 %v1416, %v1704
      %v1706 = vpop.f32.mrb[0].mxu0
      %v1707 = vpop.f32.mrb[0].mxu0
      %v1708 = vadd.f32 %v1419, %v1707
      %v1709 = vpop.f32.mrb[0].mxu0
      %1710 = vmatprep.mubr.bf16.mxu0 %v868
      %1711 = vmatmul.mubr.bf16.gmra.mrb[0].mxu0 %v867
      %v1712 = vpop.f32.mrb[0].mxu0
      %v1713 = vadd.f32 %v1424, %v1712
      %v1714 = vpop.f32.mrb[0].mxu0
      %v1715 = vpop.f32.mrb[0].mxu0
      %v1716 = vadd.f32 %v1427, %v1715
      %v1717 = vpop.f32.mrb[0].mxu0
      %1718 = vmatprep.mubr.bf16.mxu0 %v872
      %1719 = vmatmul.mubr.bf16.gmra.mrb[0].mxu0 %v871
      %v1720 = vpop.f32.mrb[0].mxu0
      %v1721 = vadd.f32 %v1432, %v1720
      %v1722 = vpop.f32.mrb[0].mxu0
      %v1723 = vpop.f32.mrb[0].mxu0
      %v1724 = vadd.f32 %v1435, %v1723
      %v1725 = vpop.f32.mrb[0].mxu0
      %1726 = vmatprep.mubr.bf16.mxu0 %v876
      %1727 = vmatmul.mubr.bf16.gmra.mrb[0].mxu0 %v875
      %v1728 = vpop.f32.mrb[0].mxu0
      %v1729 = vadd.f32 %v1440, %v1728
      %v1730 = vpop.f32.mrb[0].mxu0
      %v1731 = vpop.f32.mrb[0].mxu0
      %v1732 = vadd.f32 %v1443, %v1731
      %v1733 = vpop.f32.mrb[0].mxu0
      %1734 = vmatprep.mubr.bf16.mxu0 %v880
      %1735 = vmatmul.mubr.bf16.gmra.mrb[0].mxu0 %v879
      %v1736 = vpop.f32.mrb[0].mxu0
      %v1737 = vadd.f32 %v1448, %v1736
      %v1738 = vpop.f32.mrb[0].mxu0
      %v1739 = vpop.f32.mrb[0].mxu0
      %v1740 = vadd.f32 %v1451, %v1739
      %v1741 = vpop.f32.mrb[0].mxu0
      %1742 = vmatprep.mubr.bf16.mxu0 %v884
      %1743 = vmatmul.mubr.bf16.gmra.mrb[0].mxu0 %v883
      %v1744 = vpop.f32.mrb[0].mxu0
      %v1745 = vadd.f32 %v1456, %v1744
      %v1746 = vpop.f32.mrb[0].mxu0
      %v1747 = vpop.f32.mrb[0].mxu0
      %v1748 = vadd.f32 %v1459, %v1747
      %v1749 = vpop.f32.mrb[0].mxu0
      %1750 = vmatprep.mubr.bf16.mxu0 %v888
      %1751 = vmatmul.mubr.bf16.gmra.mrb[0].mxu0 %v887
      %v1752 = vpop.f32.mrb[0].mxu0
      %v1753 = vadd.f32 %v1464, %v1752
      %v1754 = vpop.f32.mrb[0].mxu0
      %v1755 = vpop.f32.mrb[0].mxu0
      %v1756 = vadd.f32 %v1467, %v1755
      %v1757 = vpop.f32.mrb[0].mxu0
      %1758 = vmatprep.mubr.bf16.mxu0 %v892
      %1759 = vmatmul.mubr.bf16.gmra.mrb[0].mxu0 %v891
      %v1760 = vpop.f32.mrb[0].mxu0
      %v1761 = vadd.f32 %v1472, %v1760
      %v1762 = vpop.f32.mrb[0].mxu0
      %v1763 = vpop.f32.mrb[0].mxu0
      %v1764 = vadd.f32 %v1475, %v1763
      %v1765 = vpop.f32.mrb[0].mxu0
      %1766 = vmatprep.mubr.bf16.mxu0 %v896
      %1767 = vmatmul.mubr.bf16.gmra.mrb[0].mxu0 %v895
      %v1768 = vpop.f32.mrb[0].mxu0
      %v1769 = vadd.f32 %v1480, %v1768
      %v1770 = vpop.f32.mrb[0].mxu0
      %v1771 = vpop.f32.mrb[0].mxu0
      %v1772 = vadd.f32 %v1483, %v1771
      %v1773 = vpop.f32.mrb[0].mxu0
      %1774 = vmatprep.mubr.bf16.mxu0 %v900
      %1775 = vmatmul.mubr.bf16.gmra.mrb[0].mxu0 %v899
      %v1776 = vpop.f32.mrb[0].mxu0
      %v1777 = vadd.f32 %v1488, %v1776
      %v1778 = vpop.f32.mrb[0].mxu0
      %v1779 = vpop.f32.mrb[0].mxu0
      %v1780 = vadd.f32 %v1491, %v1779
      %v1781 = vpop.f32.mrb[0].mxu0
      %1782 = vmatprep.mubr.bf16.mxu0 %v904
      %1783 = vmatmul.mubr.bf16.gmra.mrb[0].mxu0 %v903
      %v1784 = vpop.f32.mrb[0].mxu0
      %v1785 = vadd.f32 %v1496, %v1784
      %v1786 = vpop.f32.mrb[0].mxu0
      %v1787 = vpop.f32.mrb[0].mxu0
      %v1788 = vadd.f32 %v1499, %v1787
      %v1789 = vpop.f32.mrb[0].mxu0
      %1790 = vmatprep.mubr.bf16.mxu0 %v908
      %1791 = vmatmul.mubr.bf16.gmra.mrb[0].mxu0 %v907
      %v1792 = vpop.f32.mrb[0].mxu0
      %v1793 = vadd.f32 %v1504, %v1792
      %v1794 = vpop.f32.mrb[0].mxu0
      %v1795 = vpop.f32.mrb[0].mxu0
      %v1796 = vadd.f32 %v1507, %v1795
      %v1797 = vpop.f32.mrb[0].mxu0
      %1798 = vmatprep.mubr.bf16.mxu0 %v912
      %1799 = vmatmul.mubr.bf16.gmra.mrb[0].mxu0 %v911
      %v1800 = vpop.f32.mrb[0].mxu0
      %v1801 = vadd.f32 %v1512, %v1800
      %v1802 = vpop.f32.mrb[0].mxu0
      %v1803 = vpop.f32.mrb[0].mxu0
      %v1804 = vadd.f32 %v1515, %v1803
      %v1805 = vpop.f32.mrb[0].mxu0
      %1806 = vmatprep.mubr.bf16.mxu0 %v916
      %1807 = vmatmul.mubr.bf16.gmra.mrb[0].mxu0 %v915
      %v1808 = vpop.f32.mrb[0].mxu0
      %v1809 = vadd.f32 %v1520, %v1808
      %v1810 = vpop.f32.mrb[0].mxu0
      %v1811 = vpop.f32.mrb[0].mxu0
      %v1812 = vadd.f32 %v1523, %v1811
      %v1813 = vpop.f32.mrb[0].mxu0
      %1814 = vdwg.mxu0
      %vm1815 = vcmp.ge.f32.partialorder %v1561, 0.0
      %vm1816 = vcmp.ge.f32.partialorder %v1564, 0.0
      %vm1817 = vcmp.ge.f32.partialorder %v1569, 0.0
      %vm1818 = vcmp.ge.f32.partialorder %v1572, 0.0
      %vm1819 = vcmp.ge.f32.partialorder %v1577, 0.0
      %vm1820 = vcmp.ge.f32.partialorder %v1580, 0.0
      %vm1821 = vcmp.ge.f32.partialorder %v1585, 0.0
      %vm1822 = vcmp.ge.f32.partialorder %v1588, 0.0
      %vm1823 = vcmp.ge.f32.partialorder %v1593, 0.0
      %vm1824 = vcmp.ge.f32.partialorder %v1596, 0.0
      %vm1825 = vcmp.ge.f32.partialorder %v1601, 0.0
      %vm1826 = vcmp.ge.f32.partialorder %v1604, 0.0
      %vm1827 = vcmp.ge.f32.partialorder %v1609, 0.0
      %vm1828 = vcmp.ge.f32.partialorder %v1612, 0.0
      %vm1829 = vcmp.ge.f32.partialorder %v1617, 0.0
      %vm1830 = vcmp.ge.f32.partialorder %v1620, 0.0
      %vm1831 = vcmp.ge.f32.partialorder %v1625, 0.0
      %vm1832 = vcmp.ge.f32.partialorder %v1628, 0.0
      %vm1833 = vcmp.ge.f32.partialorder %v1633, 0.0
      %vm1834 = vcmp.ge.f32.partialorder %v1636, 0.0
      %vm1835 = vcmp.ge.f32.partialorder %v1641, 0.0
      %vm1836 = vcmp.ge.f32.partialorder %v1644, 0.0
      %vm1837 = vcmp.ge.f32.partialorder %v1649, 0.0
      %vm1838 = vcmp.ge.f32.partialorder %v1652, 0.0
      %vm1839 = vcmp.ge.f32.partialorder %v1657, 0.0
      %vm1840 = vcmp.ge.f32.partialorder %v1660, 0.0
      %vm1841 = vcmp.ge.f32.partialorder %v1665, 0.0
      %vm1842 = vcmp.ge.f32.partialorder %v1668, 0.0
      %vm1843 = vcmp.ge.f32.partialorder %v1673, 0.0
      %vm1844 = vcmp.ge.f32.partialorder %v1676, 0.0
      %vm1845 = vcmp.ge.f32.partialorder %v1681, 0.0
      %vm1846 = vcmp.ge.f32.partialorder %v1684, 0.0
      %vm1847 = vcmp.ge.f32.partialorder %v1689, 0.0
      %vm1848 = vcmp.ge.f32.partialorder %v1692, 0.0
      %vm1849 = vcmp.ge.f32.partialorder %v1697, 0.0
      %vm1850 = vcmp.ge.f32.partialorder %v1700, 0.0
      %vm1851 = vcmp.ge.f32.partialorder %v1705, 0.0
      %vm1852 = vcmp.ge.f32.partialorder %v1708, 0.0
      %vm1853 = vcmp.ge.f32.partialorder %v1713, 0.0
      %vm1854 = vcmp.ge.f32.partialorder %v1716, 0.0
      %vm1855 = vcmp.ge.f32.partialorder %v1721, 0.0
      %vm1856 = vcmp.ge.f32.partialorder %v1724, 0.0
      %vm1857 = vcmp.ge.f32.partialorder %v1729, 0.0
      %vm1858 = vcmp.ge.f32.partialorder %v1732, 0.0
      %vm1859 = vcmp.ge.f32.partialorder %v1737, 0.0
      %vm1860 = vcmp.ge.f32.partialorder %v1740, 0.0
      %vm1861 = vcmp.ge.f32.partialorder %v1745, 0.0
      %vm1862 = vcmp.ge.f32.partialorder %v1748, 0.0
      %vm1863 = vcmp.ge.f32.partialorder %v1753, 0.0
      %vm1864 = vcmp.ge.f32.partialorder %v1756, 0.0
      %vm1865 = vcmp.ge.f32.partialorder %v1761, 0.0
      %vm1866 = vcmp.ge.f32.partialorder %v1764, 0.0
      %vm1867 = vcmp.ge.f32.partialorder %v1769, 0.0
      %vm1868 = vcmp.ge.f32.partialorder %v1772, 0.0
      %vm1869 = vcmp.ge.f32.partialorder %v1777, 0.0
      %vm1870 = vcmp.ge.f32.partialorder %v1780, 0.0
      %vm1871 = vcmp.ge.f32.partialorder %v1785, 0.0
      %vm1872 = vcmp.ge.f32.partialorder %v1788, 0.0
      %vm1873 = vcmp.ge.f32.partialorder %v1793, 0.0
      %vm1874 = vcmp.ge.f32.partialorder %v1796, 0.0
      %vm1875 = vcmp.ge.f32.partialorder %v1801, 0.0
      %vm1876 = vcmp.ge.f32.partialorder %v1804, 0.0
      %vm1877 = vcmp.ge.f32.partialorder %v1809, 0.0
      %vm1878 = vcmp.ge.f32.partialorder %v1812, 0.0
      %v1879 = vmul.f32 %v1561, 0.2
      %v1880 = vmul.f32 %v1564, 0.2
      %v1881 = vmul.f32 %v1569, 0.2
      %v1882 = vmul.f32 %v1572, 0.2
      %v1883 = vmul.f32 %v1577, 0.2
      %v1884 = vmul.f32 %v1580, 0.2
      %v1885 = vmul.f32 %v1585, 0.2
      %v1886 = vmul.f32 %v1588, 0.2
      %v1887 = vmul.f32 %v1593, 0.2
      %v1888 = vmul.f32 %v1596, 0.2
      %v1889 = vmul.f32 %v1601, 0.2
      %v1890 = vmul.f32 %v1604, 0.2
      %v1891 = vmul.f32 %v1609, 0.2
      %v1892 = vmul.f32 %v1612, 0.2
      %v1893 = vmul.f32 %v1617, 0.2
      %v1894 = vmul.f32 %v1620, 0.2
      %v1895 = vmul.f32 %v1625, 0.2
      %v1896 = vmul.f32 %v1628, 0.2
      %v1897 = vmul.f32 %v1633, 0.2
      %v1898 = vmul.f32 %v1636, 0.2
      %v1899 = vmul.f32 %v1641, 0.2
      %v1900 = vmul.f32 %v1644, 0.2
      %v1901 = vmul.f32 %v1649, 0.2
      %v1902 = vmul.f32 %v1652, 0.2
      %v1903 = vmul.f32 %v1657, 0.2
      %v1904 = vmul.f32 %v1660, 0.2
      %v1905 = vmul.f32 %v1665, 0.2
      %v1906 = vmul.f32 %v1668, 0.2
      %v1907 = vmul.f32 %v1673, 0.2
      %v1908 = vmul.f32 %v1676, 0.2
      %v1909 = vmul.f32 %v1681, 0.2
      %v1910 = vmul.f32 %v1684, 0.2
      %v1911 = vmul.f32 %v1689, 0.2
      %v1912 = vmul.f32 %v1692, 0.2
      %v1913 = vmul.f32 %v1697, 0.2
      %v1914 = vmul.f32 %v1700, 0.2
      %v1915 = vmul.f32 %v1705, 0.2
      %v1916 = vmul.f32 %v1708, 0.2
      %v1917 = vmul.f32 %v1713, 0.2
      %v1918 = vmul.f32 %v1716, 0.2
      %v1919 = vmul.f32 %v1721, 0.2
      %v1920 = vmul.f32 %v1724, 0.2
      %v1921 = vmul.f32 %v1729, 0.2
      %v1922 = vmul.f32 %v1732, 0.2
      %v1923 = vmul.f32 %v1737, 0.2
      %v1924 = vmul.f32 %v1740, 0.2
      %v1925 = vmul.f32 %v1745, 0.2
      %v1926 = vmul.f32 %v1748, 0.2
      %v1927 = vmul.f32 %v1753, 0.2
      %v1928 = vmul.f32 %v1756, 0.2
      %v1929 = vmul.f32 %v1761, 0.2
      %v1930 = vmul.f32 %v1764, 0.2
      %v1931 = vmul.f32 %v1769, 0.2
      %v1932 = vmul.f32 %v1772, 0.2
      %v1933 = vmul.f32 %v1777, 0.2
      %v1934 = vmul.f32 %v1780, 0.2
      %v1935 = vmul.f32 %v1785, 0.2
      %v1936 = vmul.f32 %v1788, 0.2
      %v1937 = vmul.f32 %v1793, 0.2
      %v1938 = vmul.f32 %v1796, 0.2
      %v1939 = vmul.f32 %v1801, 0.2
      %v1940 = vmul.f32 %v1804, 0.2
      %v1941 = vmul.f32 %v1809, 0.2
      %v1942 = vmul.f32 %v1812, 0.2
      %v1943 = vsel %vm1815, %v1561, %v1879
      %v1944 = vsel %vm1816, %v1564, %v1880
      %v1945 = vsel %vm1817, %v1569, %v1881
      %v1946 = vsel %vm1818, %v1572, %v1882
      %v1947 = vsel %vm1819, %v1577, %v1883
      %v1948 = vsel %vm1820, %v1580, %v1884
      %v1949 = vsel %vm1821, %v1585, %v1885
      %v1950 = vsel %vm1822, %v1588, %v1886
      %v1951 = vsel %vm1823, %v1593, %v1887
      %v1952 = vsel %vm1824, %v1596, %v1888
      %v1953 = vsel %vm1825, %v1601, %v1889
      %v1954 = vsel %vm1826, %v1604, %v1890
      %v1955 = vsel %vm1827, %v1609, %v1891
      %v1956 = vsel %vm1828, %v1612, %v1892
      %v1957 = vsel %vm1829, %v1617, %v1893
      %v1958 = vsel %vm1830, %v1620, %v1894
      %v1959 = vsel %vm1831, %v1625, %v1895
      %v1960 = vsel %vm1832, %v1628, %v1896
      %v1961 = vsel %vm1833, %v1633, %v1897
      %v1962 = vsel %vm1834, %v1636, %v1898
      %v1963 = vsel %vm1835, %v1641, %v1899
      %v1964 = vsel %vm1836, %v1644, %v1900
      %v1965 = vsel %vm1837, %v1649, %v1901
      %v1966 = vsel %vm1838, %v1652, %v1902
      %v1967 = vsel %vm1839, %v1657, %v1903
      %v1968 = vsel %vm1840, %v1660, %v1904
      %v1969 = vsel %vm1841, %v1665, %v1905
      %v1970 = vsel %vm1842, %v1668, %v1906
      %v1971 = vsel %vm1843, %v1673, %v1907
      %v1972 = vsel %vm1844, %v1676, %v1908
      %v1973 = vsel %vm1845, %v1681, %v1909
      %v1974 = vsel %vm1846, %v1684, %v1910
      %v1975 = vsel %vm1847, %v1689, %v1911
      %v1976 = vsel %vm1848, %v1692, %v1912
      %v1977 = vsel %vm1849, %v1697, %v1913
      %v1978 = vsel %vm1850, %v1700, %v1914
      %v1979 = vsel %vm1851, %v1705, %v1915
      %v1980 = vsel %vm1852, %v1708, %v1916
      %v1981 = vsel %vm1853, %v1713, %v1917
      %v1982 = vsel %vm1854, %v1716, %v1918
      %v1983 = vsel %vm1855, %v1721, %v1919
      %v1984 = vsel %vm1856, %v1724, %v1920
      %v1985 = vsel %vm1857, %v1729, %v1921
      %v1986 = vsel %vm1858, %v1732, %v1922
      %v1987 = vsel %vm1859, %v1737, %v1923
      %v1988 = vsel %vm1860, %v1740, %v1924
      %v1989 = vsel %vm1861, %v1745, %v1925
      %v1990 = vsel %vm1862, %v1748, %v1926
      %v1991 = vsel %vm1863, %v1753, %v1927
      %v1992 = vsel %vm1864, %v1756, %v1928
      %v1993 = vsel %vm1865, %v1761, %v1929
      %v1994 = vsel %vm1866, %v1764, %v1930
      %v1995 = vsel %vm1867, %v1769, %v1931
      %v1996 = vsel %vm1868, %v1772, %v1932
      %v1997 = vsel %vm1869, %v1777, %v1933
      %v1998 = vsel %vm1870, %v1780, %v1934
      %v1999 = vsel %vm1871, %v1785, %v1935
      %v2000 = vsel %vm1872, %v1788, %v1936
      %v2001 = vsel %vm1873, %v1793, %v1937
      %v2002 = vsel %vm1874, %v1796, %v1938
      %v2003 = vsel %vm1875, %v1801, %v1939
      %v2004 = vsel %vm1876, %v1804, %v1940
      %v2005 = vsel %vm1877, %v1809, %v1941
      %v2006 = vsel %vm1878, %v1812, %v1942
      %v2007 = vpack.c.bf16 %v1944, %v1943
      %v2008 = vpack.c.bf16 %v1946, %v1945
      %v2009 = vpack.c.bf16 %v1948, %v1947
      %v2010 = vpack.c.bf16 %v1950, %v1949
      %v2011 = vpack.c.bf16 %v1952, %v1951
      %v2012 = vpack.c.bf16 %v1954, %v1953
      %v2013 = vpack.c.bf16 %v1956, %v1955
      %v2014 = vpack.c.bf16 %v1958, %v1957
      %v2015 = vpack.c.bf16 %v1960, %v1959
      %v2016 = vpack.c.bf16 %v1962, %v1961
      %v2017 = vpack.c.bf16 %v1964, %v1963
      %v2018 = vpack.c.bf16 %v1966, %v1965
      %v2019 = vpack.c.bf16 %v1968, %v1967
      %v2020 = vpack.c.bf16 %v1970, %v1969
      %v2021 = vpack.c.bf16 %v1972, %v1971
      %v2022 = vpack.c.bf16 %v1974, %v1973
      %v2023 = vpack.c.bf16 %v1976, %v1975
      %v2024 = vpack.c.bf16 %v1978, %v1977
      %v2025 = vpack.c.bf16 %v1980, %v1979
      %v2026 = vpack.c.bf16 %v1982, %v1981
      %v2027 = vpack.c.bf16 %v1984, %v1983
      %v2028 = vpack.c.bf16 %v1986, %v1985
      %v2029 = vpack.c.bf16 %v1988, %v1987
      %v2030 = vpack.c.bf16 %v1990, %v1989
      %v2031 = vpack.c.bf16 %v1992, %v1991
      %v2032 = vpack.c.bf16 %v1994, %v1993
      %v2033 = vpack.c.bf16 %v1996, %v1995
      %v2034 = vpack.c.bf16 %v1998, %v1997
      %v2035 = vpack.c.bf16 %v2000, %v1999
      %v2036 = vpack.c.bf16 %v2002, %v2001
      %v2037 = vpack.c.bf16 %v2004, %v2003
      %v2038 = vpack.c.bf16 %v2006, %v2005
      %v2071 = vunpack.c.l.b16 %v2007
      %v2072 = vunpack.c.h.b16 %v2007
      %v2073 = vunpack.c.l.b16 %v2008
      %v2074 = vunpack.c.h.b16 %v2008
      %v2075 = vunpack.c.l.b16 %v2009
      %v2076 = vunpack.c.h.b16 %v2009
      %v2077 = vunpack.c.l.b16 %v2010
      %v2078 = vunpack.c.h.b16 %v2010
      %v2079 = vunpack.c.l.b16 %v2011
      %v2080 = vunpack.c.h.b16 %v2011
      %v2081 = vunpack.c.l.b16 %v2012
      %v2082 = vunpack.c.h.b16 %v2012
      %v2083 = vunpack.c.l.b16 %v2013
      %v2084 = vunpack.c.h.b16 %v2013
      %v2085 = vunpack.c.l.b16 %v2014
      %v2086 = vunpack.c.h.b16 %v2014
      %v2087 = vunpack.c.l.b16 %v2015
      %v2088 = vunpack.c.h.b16 %v2015
      %v2089 = vunpack.c.l.b16 %v2016
      %v2090 = vunpack.c.h.b16 %v2016
      %v2091 = vunpack.c.l.b16 %v2017
      %v2092 = vunpack.c.h.b16 %v2017
      %v2093 = vunpack.c.l.b16 %v2018
      %v2094 = vunpack.c.h.b16 %v2018
      %v2095 = vunpack.c.l.b16 %v2019
      %v2096 = vunpack.c.h.b16 %v2019
      %v2097 = vunpack.c.l.b16 %v2020
      %v2098 = vunpack.c.h.b16 %v2020
      %v2099 = vunpack.c.l.b16 %v2021
      %v2100 = vunpack.c.h.b16 %v2021
      %v2101 = vunpack.c.l.b16 %v2022
      %v2102 = vunpack.c.h.b16 %v2022
      %v2103 = vunpack.c.l.b16 %v2023
      %v2104 = vunpack.c.h.b16 %v2023
      %v2105 = vunpack.c.l.b16 %v2024
      %v2106 = vunpack.c.h.b16 %v2024
      %v2107 = vunpack.c.l.b16 %v2025
      %v2108 = vunpack.c.h.b16 %v2025
      %v2109 = vunpack.c.l.b16 %v2026
      %v2110 = vunpack.c.h.b16 %v2026
      %v2111 = vunpack.c.l.b16 %v2027
      %v2112 = vunpack.c.h.b16 %v2027
      %v2113 = vunpack.c.l.b16 %v2028
      %v2114 = vunpack.c.h.b16 %v2028
      %v2115 = vunpack.c.l.b16 %v2029
      %v2116 = vunpack.c.h.b16 %v2029
      %v2117 = vunpack.c.l.b16 %v2030
      %v2118 = vunpack.c.h.b16 %v2030
      %v2119 = vunpack.c.l.b16 %v2031
      %v2120 = vunpack.c.h.b16 %v2031
      %v2121 = vunpack.c.l.b16 %v2032
      %v2122 = vunpack.c.h.b16 %v2032
      %v2123 = vunpack.c.l.b16 %v2033
      %v2124 = vunpack.c.h.b16 %v2033
      %v2125 = vunpack.c.l.b16 %v2034
      %v2126 = vunpack.c.h.b16 %v2034
      %v2127 = vunpack.c.l.b16 %v2035
      %v2128 = vunpack.c.h.b16 %v2035
      %v2129 = vunpack.c.l.b16 %v2036
      %v2130 = vunpack.c.h.b16 %v2036
      %v2131 = vunpack.c.l.b16 %v2037
      %v2132 = vunpack.c.h.b16 %v2037
      %v2133 = vunpack.c.l.b16 %v2038
      %v2134 = vunpack.c.h.b16 %v2038
      %v2135 = vpack.c.b16 %v2071, %v2071
      %v2136 = vpack.c.b16 %v2072, %v2072
      %v2137 = vpack.c.b16 %v2073, %v2073
      %v2138 = vpack.c.b16 %v2074, %v2074
      %v2139 = vpack.c.b16 %v2075, %v2075
      %v2140 = vpack.c.b16 %v2076, %v2076
      %v2141 = vpack.c.b16 %v2077, %v2077
      %v2142 = vpack.c.b16 %v2078, %v2078
      %v2143 = vpack.c.b16 %v2079, %v2079
      %v2144 = vpack.c.b16 %v2080, %v2080
      %v2145 = vpack.c.b16 %v2081, %v2081
      %v2146 = vpack.c.b16 %v2082, %v2082
      %v2147 = vpack.c.b16 %v2083, %v2083
      %v2148 = vpack.c.b16 %v2084, %v2084
      %v2149 = vpack.c.b16 %v2085, %v2085
      %v2150 = vpack.c.b16 %v2086, %v2086
      %v2151 = vpack.c.b16 %v2087, %v2087
      %v2152 = vpack.c.b16 %v2088, %v2088
      %v2153 = vpack.c.b16 %v2089, %v2089
      %v2154 = vpack.c.b16 %v2090, %v2090
      %v2155 = vpack.c.b16 %v2091, %v2091
      %v2156 = vpack.c.b16 %v2092, %v2092
      %v2157 = vpack.c.b16 %v2093, %v2093
      %v2158 = vpack.c.b16 %v2094, %v2094
      %v2159 = vpack.c.b16 %v2095, %v2095
      %v2160 = vpack.c.b16 %v2096, %v2096
      %v2161 = vpack.c.b16 %v2097, %v2097
      %v2162 = vpack.c.b16 %v2098, %v2098
      %v2163 = vpack.c.b16 %v2099, %v2099
      %v2164 = vpack.c.b16 %v2100, %v2100
      %v2165 = vpack.c.b16 %v2101, %v2101
      %v2166 = vpack.c.b16 %v2102, %v2102
      %v2167 = vpack.c.b16 %v2103, %v2103
      %v2168 = vpack.c.b16 %v2104, %v2104
      %v2169 = vpack.c.b16 %v2105, %v2105
      %v2170 = vpack.c.b16 %v2106, %v2106
      %v2171 = vpack.c.b16 %v2107, %v2107
      %v2172 = vpack.c.b16 %v2108, %v2108
      %v2173 = vpack.c.b16 %v2109, %v2109
      %v2174 = vpack.c.b16 %v2110, %v2110
      %v2175 = vpack.c.b16 %v2111, %v2111
      %v2176 = vpack.c.b16 %v2112, %v2112
      %v2177 = vpack.c.b16 %v2113, %v2113
      %v2178 = vpack.c.b16 %v2114, %v2114
      %v2179 = vpack.c.b16 %v2115, %v2115
      %v2180 = vpack.c.b16 %v2116, %v2116
      %v2181 = vpack.c.b16 %v2117, %v2117
      %v2182 = vpack.c.b16 %v2118, %v2118
      %v2183 = vpack.c.b16 %v2119, %v2119
      %v2184 = vpack.c.b16 %v2120, %v2120
      %v2185 = vpack.c.b16 %v2121, %v2121
      %v2186 = vpack.c.b16 %v2122, %v2122
      %v2187 = vpack.c.b16 %v2123, %v2123
      %v2188 = vpack.c.b16 %v2124, %v2124
      %v2189 = vpack.c.b16 %v2125, %v2125
      %v2190 = vpack.c.b16 %v2126, %v2126
      %v2191 = vpack.c.b16 %v2127, %v2127
      %v2192 = vpack.c.b16 %v2128, %v2128
      %v2193 = vpack.c.b16 %v2129, %v2129
      %v2194 = vpack.c.b16 %v2130, %v2130
      %v2195 = vpack.c.b16 %v2131, %v2131
      %v2196 = vpack.c.b16 %v2132, %v2132
      %v2197 = vpack.c.b16 %v2133, %v2133
      %v2198 = vpack.c.b16 %v2134, %v2134
      %2263 = vst [vmem:[%s203] sm:$0xf] %v2135
      %2264 = vst [vmem:[%s203 + $0x4] sm:$0xf] %v2136
      %2265 = vst [vmem:[%s203 + $0x8] sm:$0xf] %v2137
      %2266 = vst [vmem:[%s203 + $0xc] sm:$0xf] %v2138
      %2267 = vst [vmem:[%s203 + $0x10] sm:$0xf] %v2139
      %2268 = vst [vmem:[%s203 + $0x14] sm:$0xf] %v2140
      %2269 = vst [vmem:[%s203 + $0x18] sm:$0xf] %v2141
      %2270 = vst [vmem:[%s203 + $0x1c] sm:$0xf] %v2142
      %2271 = vst [vmem:[%s203 + $0x20] sm:$0xf] %v2143
      %2272 = vst [vmem:[%s203 + $0x24] sm:$0xf] %v2144
      %2273 = vst [vmem:[%s203 + $0x28] sm:$0xf] %v2145
      %2274 = vst [vmem:[%s203 + $0x2c] sm:$0xf] %v2146
      %2275 = vst [vmem:[%s203 + $0x30] sm:$0xf] %v2147
      %2276 = vst [vmem:[%s203 + $0x34] sm:$0xf] %v2148
      %2277 = vst [vmem:[%s203 + $0x38] sm:$0xf] %v2149
      %2278 = vst [vmem:[%s203 + $0x3c] sm:$0xf] %v2150
      %2279 = vst [vmem:[%s203 + $0x40] sm:$0xf] %v2151
      %2280 = vst [vmem:[%s203 + $0x44] sm:$0xf] %v2152
      %2281 = vst [vmem:[%s203 + $0x48] sm:$0xf] %v2153
      %2282 = vst [vmem:[%s203 + $0x4c] sm:$0xf] %v2154
      %2283 = vst [vmem:[%s203 + $0x50] sm:$0xf] %v2155
      %2284 = vst [vmem:[%s203 + $0x54] sm:$0xf] %v2156
      %2285 = vst [vmem:[%s203 + $0x58] sm:$0xf] %v2157
      %2286 = vst [vmem:[%s203 + $0x5c] sm:$0xf] %v2158
      %2287 = vst [vmem:[%s203 + $0x60] sm:$0xf] %v2159
      %2288 = vst [vmem:[%s203 + $0x64] sm:$0xf] %v2160
      %2289 = vst [vmem:[%s203 + $0x68] sm:$0xf] %v2161
      %2290 = vst [vmem:[%s203 + $0x6c] sm:$0xf] %v2162
      %2291 = vst [vmem:[%s203 + $0x70] sm:$0xf] %v2163
      %2292 = vst [vmem:[%s203 + $0x74] sm:$0xf] %v2164
      %2293 = vst [vmem:[%s203 + $0x78] sm:$0xf] %v2165
      %2294 = vst [vmem:[%s203 + $0x7c] sm:$0xf] %v2166
      %2295 = vst [vmem:[%s203 + $0x80] sm:$0xf] %v2167
      %2296 = vst [vmem:[%s203 + $0x84] sm:$0xf] %v2168
      %2297 = vst [vmem:[%s203 + $0x88] sm:$0xf] %v2169
      %2298 = vst [vmem:[%s203 + $0x8c] sm:$0xf] %v2170
      %2299 = vst [vmem:[%s203 + $0x90] sm:$0xf] %v2171
      %2300 = vst [vmem:[%s203 + $0x94] sm:$0xf] %v2172
      %2301 = vst [vmem:[%s203 + $0x98] sm:$0xf] %v2173
      %2302 = vst [vmem:[%s203 + $0x9c] sm:$0xf] %v2174
      %2303 = vst [vmem:[%s203 + $0xa0] sm:$0xf] %v2175
      %2304 = vst [vmem:[%s203 + $0xa4] sm:$0xf] %v2176
      %2305 = vst [vmem:[%s203 + $0xa8] sm:$0xf] %v2177
      %2306 = vst [vmem:[%s203 + $0xac] sm:$0xf] %v2178
      %2307 = vst [vmem:[%s203 + $0xb0] sm:$0xf] %v2179
      %2308 = vst [vmem:[%s203 + $0xb4] sm:$0xf] %v2180
      %2309 = vst [vmem:[%s203 + $0xb8] sm:$0xf] %v2181
      %2310 = vst [vmem:[%s203 + $0xbc] sm:$0xf] %v2182
      %2311 = vst [vmem:[%s203 + $0xc0] sm:$0xf] %v2183
      %2312 = vst [vmem:[%s203 + $0xc4] sm:$0xf] %v2184
      %2313 = vst [vmem:[%s203 + $0xc8] sm:$0xf] %v2185
      %2314 = vst [vmem:[%s203 + $0xcc] sm:$0xf] %v2186
      %2315 = vst [vmem:[%s203 + $0xd0] sm:$0xf] %v2187
      %2316 = vst [vmem:[%s203 + $0xd4] sm:$0xf] %v2188
      %2317 = vst [vmem:[%s203 + $0xd8] sm:$0xf] %v2189
      %2318 = vst [vmem:[%s203 + $0xdc] sm:$0xf] %v2190
      %2319 = vst [vmem:[%s203 + $0xe0] sm:$0xf] %v2191
      %2320 = vst [vmem:[%s203 + $0xe4] sm:$0xf] %v2192
      %2321 = vst [vmem:[%s203 + $0xe8] sm:$0xf] %v2193
      %2322 = vst [vmem:[%s203 + $0xec] sm:$0xf] %v2194
      %2323 = vst [vmem:[%s203 + $0xf0] sm:$0xf] %v2195
      %2324 = vst [vmem:[%s203 + $0xf4] sm:$0xf] %v2196
      %2325 = vst [vmem:[%s203 + $0xf8] sm:$0xf] %v2197
      %2326 = vst [vmem:[%s203 + $0xfc] sm:$0xf] %v2198
      %s2327 = smul.u32 64, %s18
      %p2328 = scmp.lt.s32.totalorder %s2327, 127
      %s2329 = scalar_select %p2328, %s2327, 127
      %s2330 = smul.addr %s2329, 4
      %s2331 = scalar_lea.vmem %s3, %s2330
      // Predicated region
      $region33: #{discriminator3d_forward.5} parent=31 // pred_check
        %p2332 = pneg %p114
      $region34: #{discriminator3d_forward.5} parent=31 // pred_check_branch
        %2334 = sbr.rel (%p2332) target = $region36
      $region35: #{discriminator3d_forward.5} parent=31 // pred_region
        %s2335 = smul.u32 64, %s18
      $region36: #{discriminator3d_forward.5} parent=31 // pred_fallthru
        _
    $region32: #{discriminator3d_forward.5} parent=5 // pred_fallthru
      _
    %p2336 = scmp.le.s32.totalorder 2, %s9
    // Predicated region
    $region37: #{discriminator3d_forward.5} parent=5 // pred_check
      %p2337 = pneg %p2336
    $region38: #{discriminator3d_forward.5} parent=5 // pred_check_branch
      %2339 = sbr.rel (%p2337) target = $region40
    $region39: #{discriminator3d_forward.5} parent=5 // pred_region
      %s2340 = ssub.s32 %s9, 2
      // Predicated region
      $region41: #{discriminator3d_forward.5} parent=39 // pred_check
        %p2341 = pneg %p120
      $region42: #{discriminator3d_forward.5} parent=39 // pred_check_branch
        %2343 = sbr.rel (%p2341) target = $region44
      $region43: #{discriminator3d_forward.5} parent=39 // pred_region
        %s2344 = smul.u32 64, %s20
        %p2345 = scmp.lt.s32.totalorder %s2344, 127
        %s2346 = scalar_select %p2345, %s2344, 127
        %s2347 = smul.addr %s2346, 4
        %s2348 = scalar_lea.vmem %s3, %s2347
      $region44: #{discriminator3d_forward.5} parent=39 // pred_fallthru
        _
    $region40: #{discriminator3d_forward.5} parent=5 // pred_fallthru
      _
  $region6: #{discriminator3d_forward.5} parent=0 // loop_footer
    %s13 = sadd.s32 1, %s9
  $region7: #{discriminator3d_forward.5} parent=0 // loop_footer_branch
    %8 = sbr.rel target = $region3
  $region8: #{discriminator3d_forward.5} parent=0 // loop_exit
    _

// kernel: discriminator3d_forward.6
$region0: #{discriminator3d_forward.6}
  #allocation0 [shape = 'u32[]', space=smem, size = 0x4, offset = 0x4, fixed_abs, tag = 'smem constant byte address 0x4 - core index']
  #allocation1 [shape = 'u32[144,128]{1,0:T(1,128)}', space=vmem, size = 0x12000, scoped, tag = 'internal scratch']
  %s0 = inlined_call_operand.vmem [shape: bf16[128,1024], index: 0, kind: input, shape index: {}]
  %s1 = inlined_call_operand.vmem [shape: bf16[1024,128], index: 1, kind: input, shape index: {}]
  %s2 = inlined_call_operand.vmem [shape: f32[1,128], index: 2, kind: input, shape index: {}]
  %s3 = inlined_call_operand.vmem [shape: bf16[128,128], index: 3, kind: output, shape index: {}]
  %s4 = sld [smem:[#allocation0]]
  $region22: #{discriminator3d_forward.6} parent=0
    _
  %s6 = ssub.s32 1, %s4
  %s7 = scalar_select 0, %s6, %s4
  // Predicated region
  $region2: #{discriminator3d_forward.6} parent=0 // pred_check
    _
  $region3: #{discriminator3d_forward.6} parent=0 // pred_check_branch
    %9 = sbr.rel (0) target = $region5
  $region4: #{discriminator3d_forward.6} parent=0 // pred_region
    _
  $region5: #{discriminator3d_forward.6} parent=0 // pred_fallthru
    _
  // Predicated region
  $region6: #{discriminator3d_forward.6} parent=0 // pred_check
    _
  $region7: #{discriminator3d_forward.6} parent=0 // pred_check_branch
    %11 = sbr.rel (0) target = $region9
  $region8: #{discriminator3d_forward.6} parent=0 // pred_region
    _
  $region9: #{discriminator3d_forward.6} parent=0 // pred_fallthru
    _
  // Predicated region
  $region10: #{discriminator3d_forward.6} parent=0 // pred_check
    _
  $region11: #{discriminator3d_forward.6} parent=0 // pred_check_branch
    %13 = sbr.rel (0) target = $region13
  $region12: #{discriminator3d_forward.6} parent=0 // pred_region
    _
  $region13: #{discriminator3d_forward.6} parent=0 // pred_fallthru
    _
  %v15 = vld [vmem:[%s0] sm:$0xff]
  %v16 = vld [vmem:[%s0 + $0x8] sm:$0xff]
  %v17 = vld [vmem:[%s0 + $0x10] sm:$0xff]
  %v18 = vld [vmem:[%s0 + $0x18] sm:$0xff]
  %v19 = vld [vmem:[%s0 + $0x20] sm:$0xff]
  %v20 = vld [vmem:[%s0 + $0x28] sm:$0xff]
  %v21 = vld [vmem:[%s0 + $0x30] sm:$0xff]
  %v22 = vld [vmem:[%s0 + $0x38] sm:$0xff]
  %v23 = vld [vmem:[%s0 + $0x40] sm:$0xff]
  %v24 = vld [vmem:[%s0 + $0x48] sm:$0xff]
  %v25 = vld [vmem:[%s0 + $0x50] sm:$0xff]
  %v26 = vld [vmem:[%s0 + $0x58] sm:$0xff]
  %v27 = vld [vmem:[%s0 + $0x60] sm:$0xff]
  %v28 = vld [vmem:[%s0 + $0x68] sm:$0xff]
  %v29 = vld [vmem:[%s0 + $0x70] sm:$0xff]
  %v30 = vld [vmem:[%s0 + $0x78] sm:$0xff]
  %v31 = vld [vmem:[%s0 + $0x80] sm:$0xff]
  %v32 = vld [vmem:[%s0 + $0x88] sm:$0xff]
  %v33 = vld [vmem:[%s0 + $0x90] sm:$0xff]
  %v34 = vld [vmem:[%s0 + $0x98] sm:$0xff]
  %v35 = vld [vmem:[%s0 + $0xa0] sm:$0xff]
  %v36 = vld [vmem:[%s0 + $0xa8] sm:$0xff]
  %v37 = vld [vmem:[%s0 + $0xb0] sm:$0xff]
  %v38 = vld [vmem:[%s0 + $0xb8] sm:$0xff]
  %v39 = vld [vmem:[%s0 + $0xc0] sm:$0xff]
  %v40 = vld [vmem:[%s0 + $0xc8] sm:$0xff]
  %v41 = vld [vmem:[%s0 + $0xd0] sm:$0xff]
  %v42 = vld [vmem:[%s0 + $0xd8] sm:$0xff]
  %v43 = vld [vmem:[%s0 + $0xe0] sm:$0xff]
  %v44 = vld [vmem:[%s0 + $0xe8] sm:$0xff]
  %v45 = vld [vmem:[%s0 + $0xf0] sm:$0xff]
  %v46 = vld [vmem:[%s0 + $0xf8] sm:$0xff]
  %v47 = vld [vmem:[%s0 + $0x100] sm:$0xff]
  %v48 = vld [vmem:[%s0 + $0x108] sm:$0xff]
  %v49 = vld [vmem:[%s0 + $0x110] sm:$0xff]
  %v50 = vld [vmem:[%s0 + $0x118] sm:$0xff]
  %v51 = vld [vmem:[%s0 + $0x120] sm:$0xff]
  %v52 = vld [vmem:[%s0 + $0x128] sm:$0xff]
  %v53 = vld [vmem:[%s0 + $0x130] sm:$0xff]
  %v54 = vld [vmem:[%s0 + $0x138] sm:$0xff]
  %v55 = vld [vmem:[%s0 + $0x140] sm:$0xff]
  %v56 = vld [vmem:[%s0 + $0x148] sm:$0xff]
  %v57 = vld [vmem:[%s0 + $0x150] sm:$0xff]
  %v58 = vld [vmem:[%s0 + $0x158] sm:$0xff]
  %v59 = vld [vmem:[%s0 + $0x160] sm:$0xff]
  %v60 = vld [vmem:[%s0 + $0x168] sm:$0xff]
  %v61 = vld [vmem:[%s0 + $0x170] sm:$0xff]
  %v62 = vld [vmem:[%s0 + $0x178] sm:$0xff]
  %v63 = vld [vmem:[%s0 + $0x180] sm:$0xff]
  %v64 = vld [vmem:[%s0 + $0x188] sm:$0xff]
  %v65 = vld [vmem:[%s0 + $0x190] sm:$0xff]
  %v66 = vld [vmem:[%s0 + $0x198] sm:$0xff]
  %v67 = vld [vmem:[%s0 + $0x1a0] sm:$0xff]
  %v68 = vld [vmem:[%s0 + $0x1a8] sm:$0xff]
  %v69 = vld [vmem:[%s0 + $0x1b0] sm:$0xff]
  %v70 = vld [vmem:[%s0 + $0x1b8] sm:$0xff]
  %v71 = vld [vmem:[%s0 + $0x1c0] sm:$0xff]
  %v72 = vld [vmem:[%s0 + $0x1c8] sm:$0xff]
  %v73 = vld [vmem:[%s0 + $0x1d0] sm:$0xff]
  %v74 = vld [vmem:[%s0 + $0x1d8] sm:$0xff]
  %v75 = vld [vmem:[%s0 + $0x1e0] sm:$0xff]
  %v76 = vld [vmem:[%s0 + $0x1e8] sm:$0xff]
  %v77 = vld [vmem:[%s0 + $0x1f0] sm:$0xff]
  %v78 = vld [vmem:[%s0 + $0x1f8] sm:$0xff]
  %v79 = vld [vmem:[%s1] sm:$0xf]
  %v80 = vld [vmem:[%s1 + $0x4] sm:$0xf]
  %v81 = vld [vmem:[%s1 + $0x8] sm:$0xf]
  %v82 = vld [vmem:[%s1 + $0xc] sm:$0xf]
  %v83 = vld [vmem:[%s1 + $0x10] sm:$0xf]
  %v84 = vld [vmem:[%s1 + $0x14] sm:$0xf]
  %v85 = vld [vmem:[%s1 + $0x18] sm:$0xf]
  %v86 = vld [vmem:[%s1 + $0x1c] sm:$0xf]
  %v87 = vld [vmem:[%s1 + $0x20] sm:$0xf]
  %v88 = vld [vmem:[%s1 + $0x24] sm:$0xf]
  %v89 = vld [vmem:[%s1 + $0x28] sm:$0xf]
  %v90 = vld [vmem:[%s1 + $0x2c] sm:$0xf]
  %v91 = vld [vmem:[%s1 + $0x30] sm:$0xf]
  %v92 = vld [vmem:[%s1 + $0x34] sm:$0xf]
  %v93 = vld [vmem:[%s1 + $0x38] sm:$0xf]
  %v94 = vld [vmem:[%s1 + $0x3c] sm:$0xf]
  %v95 = vld [vmem:[%s1 + $0x40] sm:$0xf]
  %v96 = vld [vmem:[%s1 + $0x44] sm:$0xf]
  %v97 = vld [vmem:[%s1 + $0x48] sm:$0xf]
  %v98 = vld [vmem:[%s1 + $0x4c] sm:$0xf]
  %v99 = vld [vmem:[%s1 + $0x50] sm:$0xf]
  %v100 = vld [vmem:[%s1 + $0x54] sm:$0xf]
  %v101 = vld [vmem:[%s1 + $0x58] sm:$0xf]
  %v102 = vld [vmem:[%s1 + $0x5c] sm:$0xf]
  %v103 = vld [vmem:[%s1 + $0x60] sm:$0xf]
  %v104 = vld [vmem:[%s1 + $0x64] sm:$0xf]
  %v105 = vld [vmem:[%s1 + $0x68] sm:$0xf]
  %v106 = vld [vmem:[%s1 + $0x6c] sm:$0xf]
  %v107 = vld [vmem:[%s1 + $0x70] sm:$0xf]
  %v108 = vld [vmem:[%s1 + $0x74] sm:$0xf]
  %v109 = vld [vmem:[%s1 + $0x78] sm:$0xf]
  %v110 = vld [vmem:[%s1 + $0x7c] sm:$0xf]
  %v111 = vld [vmem:[%s1 + $0x80] sm:$0xf]
  %v112 = vld [vmem:[%s1 + $0x84] sm:$0xf]
  %v113 = vld [vmem:[%s1 + $0x88] sm:$0xf]
  %v114 = vld [vmem:[%s1 + $0x8c] sm:$0xf]
  %v115 = vld [vmem:[%s1 + $0x90] sm:$0xf]
  %v116 = vld [vmem:[%s1 + $0x94] sm:$0xf]
  %v117 = vld [vmem:[%s1 + $0x98] sm:$0xf]
  %v118 = vld [vmem:[%s1 + $0x9c] sm:$0xf]
  %v119 = vld [vmem:[%s1 + $0xa0] sm:$0xf]
  %v120 = vld [vmem:[%s1 + $0xa4] sm:$0xf]
  %v121 = vld [vmem:[%s1 + $0xa8] sm:$0xf]
  %v122 = vld [vmem:[%s1 + $0xac] sm:$0xf]
  %v123 = vld [vmem:[%s1 + $0xb0] sm:$0xf]
  %v124 = vld [vmem:[%s1 + $0xb4] sm:$0xf]
  %v125 = vld [vmem:[%s1 + $0xb8] sm:$0xf]
  %v126 = vld [vmem:[%s1 + $0xbc] sm:$0xf]
  %v127 = vld [vmem:[%s1 + $0xc0] sm:$0xf]
  %v128 = vld [vmem:[%s1 + $0xc4] sm:$0xf]
  %v129 = vld [vmem:[%s1 + $0xc8] sm:$0xf]
  %v130 = vld [vmem:[%s1 + $0xcc] sm:$0xf]
  %v131 = vld [vmem:[%s1 + $0xd0] sm:$0xf]
  %v132 = vld [vmem:[%s1 + $0xd4] sm:$0xf]
  %v133 = vld [vmem:[%s1 + $0xd8] sm:$0xf]
  %v134 = vld [vmem:[%s1 + $0xdc] sm:$0xf]
  %v135 = vld [vmem:[%s1 + $0xe0] sm:$0xf]
  %v136 = vld [vmem:[%s1 + $0xe4] sm:$0xf]
  %v137 = vld [vmem:[%s1 + $0xe8] sm:$0xf]
  %v138 = vld [vmem:[%s1 + $0xec] sm:$0xf]
  %v139 = vld [vmem:[%s1 + $0xf0] sm:$0xf]
  %v140 = vld [vmem:[%s1 + $0xf4] sm:$0xf]
  %v141 = vld [vmem:[%s1 + $0xf8] sm:$0xf]
  %v142 = vld [vmem:[%s1 + $0xfc] sm:$0xf]
  %v143 = vld [vmem:[%s1 + $0x100] sm:$0xf]
  %v144 = vld [vmem:[%s1 + $0x104] sm:$0xf]
  %v145 = vld [vmem:[%s1 + $0x108] sm:$0xf]
  %v146 = vld [vmem:[%s1 + $0x10c] sm:$0xf]
  %v147 = vld [vmem:[%s1 + $0x110] sm:$0xf]
  %v148 = vld [vmem:[%s1 + $0x114] sm:$0xf]
  %v149 = vld [vmem:[%s1 + $0x118] sm:$0xf]
  %v150 = vld [vmem:[%s1 + $0x11c] sm:$0xf]
  %v151 = vld [vmem:[%s1 + $0x120] sm:$0xf]
  %v152 = vld [vmem:[%s1 + $0x124] sm:$0xf]
  %v153 = vld [vmem:[%s1 + $0x128] sm:$0xf]
  %v154 = vld [vmem:[%s1 + $0x12c] sm:$0xf]
  %v155 = vld [vmem:[%s1 + $0x130] sm:$0xf]
  %v156 = vld [vmem:[%s1 + $0x134] sm:$0xf]
  %v157 = vld [vmem:[%s1 + $0x138] sm:$0xf]
  %v158 = vld [vmem:[%s1 + $0x13c] sm:$0xf]
  %v159 = vld [vmem:[%s1 + $0x140] sm:$0xf]
  %v160 = vld [vmem:[%s1 + $0x144] sm:$0xf]
  %v161 = vld [vmem:[%s1 + $0x148] sm:$0xf]
  %v162 = vld [vmem:[%s1 + $0x14c] sm:$0xf]
  %v163 = vld [vmem:[%s1 + $0x150] sm:$0xf]
  %v164 = vld [vmem:[%s1 + $0x154] sm:$0xf]
  %v165 = vld [vmem:[%s1 + $0x158] sm:$0xf]
  %v166 = vld [vmem:[%s1 + $0x15c] sm:$0xf]
  %v167 = vld [vmem:[%s1 + $0x160] sm:$0xf]
  %v168 = vld [vmem:[%s1 + $0x164] sm:$0xf]
  %v169 = vld [vmem:[%s1 + $0x168] sm:$0xf]
  %v170 = vld [vmem:[%s1 + $0x16c] sm:$0xf]
  %v171 = vld [vmem:[%s1 + $0x170] sm:$0xf]
  %v172 = vld [vmem:[%s1 + $0x174] sm:$0xf]
  %v173 = vld [vmem:[%s1 + $0x178] sm:$0xf]
  %v174 = vld [vmem:[%s1 + $0x17c] sm:$0xf]
  %v175 = vld [vmem:[%s1 + $0x180] sm:$0xf]
  %v176 = vld [vmem:[%s1 + $0x184] sm:$0xf]
  %v177 = vld [vmem:[%s1 + $0x188] sm:$0xf]
  %v178 = vld [vmem:[%s1 + $0x18c] sm:$0xf]
  %v179 = vld [vmem:[%s1 + $0x190] sm:$0xf]
  %v180 = vld [vmem:[%s1 + $0x194] sm:$0xf]
  %v181 = vld [vmem:[%s1 + $0x198] sm:$0xf]
  %v182 = vld [vmem:[%s1 + $0x19c] sm:$0xf]
  %v183 = vld [vmem:[%s1 + $0x1a0] sm:$0xf]
  %v184 = vld [vmem:[%s1 + $0x1a4] sm:$0xf]
  %v185 = vld [vmem:[%s1 + $0x1a8] sm:$0xf]
  %v186 = vld [vmem:[%s1 + $0x1ac] sm:$0xf]
  %v187 = vld [vmem:[%s1 + $0x1b0] sm:$0xf]
  %v188 = vld [vmem:[%s1 + $0x1b4] sm:$0xf]
  %v189 = vld [vmem:[%s1 + $0x1b8] sm:$0xf]
  %v190 = vld [vmem:[%s1 + $0x1bc] sm:$0xf]
  %v191 = vld [vmem:[%s1 + $0x1c0] sm:$0xf]
  %v192 = vld [vmem:[%s1 + $0x1c4] sm:$0xf]
  %v193 = vld [vmem:[%s1 + $0x1c8] sm:$0xf]
  %v194 = vld [vmem:[%s1 + $0x1cc] sm:$0xf]
  %v195 = vld [vmem:[%s1 + $0x1d0] sm:$0xf]
  %v196 = vld [vmem:[%s1 + $0x1d4] sm:$0xf]
  %v197 = vld [vmem:[%s1 + $0x1d8] sm:$0xf]
  %v198 = vld [vmem:[%s1 + $0x1dc] sm:$0xf]
  %v199 = vld [vmem:[%s1 + $0x1e0] sm:$0xf]
  %v200 = vld [vmem:[%s1 + $0x1e4] sm:$0xf]
  %v201 = vld [vmem:[%s1 + $0x1e8] sm:$0xf]
  %v202 = vld [vmem:[%s1 + $0x1ec] sm:$0xf]
  %v203 = vld [vmem:[%s1 + $0x1f0] sm:$0xf]
  %v204 = vld [vmem:[%s1 + $0x1f4] sm:$0xf]
  %v205 = vld [vmem:[%s1 + $0x1f8] sm:$0xf]
  %v206 = vld [vmem:[%s1 + $0x1fc] sm:$0xf]
  %v207 = vld [vmem:[%s2] sm:$0x1]
  %v209 = vlaneseq
  %v210 = vshrl.u32 %v209, 7
  %v211 = vsub.s32 0, %v210
  %v212 = vrot.slane %v207, %v211
  %v278 = vunpack.c.l.b16 %v15
  %v279 = vunpack.c.h.b16 %v15
  %v280 = vunpack.c.l.b16 %v16
  %v281 = vunpack.c.h.b16 %v16
  %v282 = vunpack.c.l.b16 %v17
  %v283 = vunpack.c.h.b16 %v17
  %v284 = vunpack.c.l.b16 %v18
  %v285 = vunpack.c.h.b16 %v18
  %v286 = vunpack.c.l.b16 %v19
  %v287 = vunpack.c.h.b16 %v19
  %v288 = vunpack.c.l.b16 %v20
  %v289 = vunpack.c.h.b16 %v20
  %v290 = vunpack.c.l.b16 %v21
  %v291 = vunpack.c.h.b16 %v21
  %v292 = vunpack.c.l.b16 %v22
  %v293 = vunpack.c.h.b16 %v22
  %v294 = vunpack.c.l.b16 %v23
  %v295 = vunpack.c.h.b16 %v23
  %v296 = vunpack.c.l.b16 %v24
  %v297 = vunpack.c.h.b16 %v24
  %v298 = vunpack.c.l.b16 %v25
  %v299 = vunpack.c.h.b16 %v25
  %v300 = vunpack.c.l.b16 %v26
  %v301 = vunpack.c.h.b16 %v26
  %v302 = vunpack.c.l.b16 %v27
  %v303 = vunpack.c.h.b16 %v27
  %v304 = vunpack.c.l.b16 %v28
  %v305 = vunpack.c.h.b16 %v28
  %v306 = vunpack.c.l.b16 %v29
  %v307 = vunpack.c.h.b16 %v29
  %v308 = vunpack.c.l.b16 %v30
  %v309 = vunpack.c.h.b16 %v30
  %v310 = vunpack.c.l.b16 %v31
  %v311 = vunpack.c.h.b16 %v31
  %v312 = vunpack.c.l.b16 %v32
  %v313 = vunpack.c.h.b16 %v32
  %v314 = vunpack.c.l.b16 %v33
  %v315 = vunpack.c.h.b16 %v33
  %v316 = vunpack.c.l.b16 %v34
  %v317 = vunpack.c.h.b16 %v34
  %v318 = vunpack.c.l.b16 %v35
  %v319 = vunpack.c.h.b16 %v35
  %v320 = vunpack.c.l.b16 %v36
  %v321 = vunpack.c.h.b16 %v36
  %v322 = vunpack.c.l.b16 %v37
  %v323 = vunpack.c.h.b16 %v37
  %v324 = vunpack.c.l.b16 %v38
  %v325 = vunpack.c.h.b16 %v38
  %v326 = vunpack.c.l.b16 %v39
  %v327 = vunpack.c.h.b16 %v39
  %v328 = vunpack.c.l.b16 %v40
  %v329 = vunpack.c.h.b16 %v40
  %v330 = vunpack.c.l.b16 %v41
  %v331 = vunpack.c.h.b16 %v41
  %v332 = vunpack.c.l.b16 %v42
  %v333 = vunpack.c.h.b16 %v42
  %v334 = vunpack.c.l.b16 %v43
  %v335 = vunpack.c.h.b16 %v43
  %v336 = vunpack.c.l.b16 %v44
  %v337 = vunpack.c.h.b16 %v44
  %v338 = vunpack.c.l.b16 %v45
  %v339 = vunpack.c.h.b16 %v45
  %v340 = vunpack.c.l.b16 %v46
  %v341 = vunpack.c.h.b16 %v46
  %v342 = vunpack.c.l.b16 %v47
  %v343 = vunpack.c.h.b16 %v47
  %v344 = vunpack.c.l.b16 %v48
  %v345 = vunpack.c.h.b16 %v48
  %v346 = vunpack.c.l.b16 %v49
  %v347 = vunpack.c.h.b16 %v49
  %v348 = vunpack.c.l.b16 %v50
  %v349 = vunpack.c.h.b16 %v50
  %v350 = vunpack.c.l.b16 %v51
  %v351 = vunpack.c.h.b16 %v51
  %v352 = vunpack.c.l.b16 %v52
  %v353 = vunpack.c.h.b16 %v52
  %v354 = vunpack.c.l.b16 %v53
  %v355 = vunpack.c.h.b16 %v53
  %v356 = vunpack.c.l.b16 %v54
  %v357 = vunpack.c.h.b16 %v54
  %v358 = vunpack.c.l.b16 %v55
  %v359 = vunpack.c.h.b16 %v55
  %v360 = vunpack.c.l.b16 %v56
  %v361 = vunpack.c.h.b16 %v56
  %v362 = vunpack.c.l.b16 %v57
  %v363 = vunpack.c.h.b16 %v57
  %v364 = vunpack.c.l.b16 %v58
  %v365 = vunpack.c.h.b16 %v58
  %v366 = vunpack.c.l.b16 %v59
  %v367 = vunpack.c.h.b16 %v59
  %v368 = vunpack.c.l.b16 %v60
  %v369 = vunpack.c.h.b16 %v60
  %v370 = vunpack.c.l.b16 %v61
  %v371 = vunpack.c.h.b16 %v61
  %v372 = vunpack.c.l.b16 %v62
  %v373 = vunpack.c.h.b16 %v62
  %v374 = vunpack.c.l.b16 %v63
  %v375 = vunpack.c.h.b16 %v63
  %v376 = vunpack.c.l.b16 %v64
  %v377 = vunpack.c.h.b16 %v64
  %v378 = vunpack.c.l.b16 %v65
  %v379 = vunpack.c.h.b16 %v65
  %v380 = vunpack.c.l.b16 %v66
  %v381 = vunpack.c.h.b16 %v66
  %v382 = vunpack.c.l.b16 %v67
  %v383 = vunpack.c.h.b16 %v67
  %v384 = vunpack.c.l.b16 %v68
  %v385 = vunpack.c.h.b16 %v68
  %v386 = vunpack.c.l.b16 %v69
  %v387 = vunpack.c.h.b16 %v69
  %v388 = vunpack.c.l.b16 %v70
  %v389 = vunpack.c.h.b16 %v70
  %v390 = vunpack.c.l.b16 %v71
  %v391 = vunpack.c.h.b16 %v71
  %v392 = vunpack.c.l.b16 %v72
  %v393 = vunpack.c.h.b16 %v72
  %v394 = vunpack.c.l.b16 %v73
  %v395 = vunpack.c.h.b16 %v73
  %v396 = vunpack.c.l.b16 %v74
  %v397 = vunpack.c.h.b16 %v74
  %v398 = vunpack.c.l.b16 %v75
  %v399 = vunpack.c.h.b16 %v75
  %v400 = vunpack.c.l.b16 %v76
  %v401 = vunpack.c.h.b16 %v76
  %v402 = vunpack.c.l.b16 %v77
  %v403 = vunpack.c.h.b16 %v77
  %v404 = vunpack.c.l.b16 %v78
  %v405 = vunpack.c.h.b16 %v78
  %v406 = vpack.c.b16 %v286, %v278
  %v407 = vpack.c.b16 %v287, %v279
  %v408 = vpack.c.b16 %v288, %v280
  %v409 = vpack.c.b16 %v289, %v281
  %v410 = vpack.c.b16 %v290, %v282
  %v411 = vpack.c.b16 %v291, %v283
  %v412 = vpack.c.b16 %v292, %v284
  %v413 = vpack.c.b16 %v293, %v285
  %v414 = vpack.c.b16 %v302, %v294
  %v415 = vpack.c.b16 %v303, %v295
  %v416 = vpack.c.b16 %v304, %v296
  %v417 = vpack.c.b16 %v305, %v297
  %v418 = vpack.c.b16 %v306, %v298
  %v419 = vpack.c.b16 %v307, %v299
  %v420 = vpack.c.b16 %v308, %v300
  %v421 = vpack.c.b16 %v309, %v301
  %v422 = vpack.c.b16 %v318, %v310
  %v423 = vpack.c.b16 %v319, %v311
  %v424 = vpack.c.b16 %v320, %v312
  %v425 = vpack.c.b16 %v321, %v313
  %v426 = vpack.c.b16 %v322, %v314
  %v427 = vpack.c.b16 %v323, %v315
  %v428 = vpack.c.b16 %v324, %v316
  %v429 = vpack.c.b16 %v325, %v317
  %v430 = vpack.c.b16 %v334, %v326
  %v431 = vpack.c.b16 %v335, %v327
  %v432 = vpack.c.b16 %v336, %v328
  %v433 = vpack.c.b16 %v337, %v329
  %v434 = vpack.c.b16 %v338, %v330
  %v435 = vpack.c.b16 %v339, %v331
  %v436 = vpack.c.b16 %v340, %v332
  %v437 = vpack.c.b16 %v341, %v333
  %v438 = vpack.c.b16 %v350, %v342
  %v439 = vpack.c.b16 %v351, %v343
  %v440 = vpack.c.b16 %v352, %v344
  %v441 = vpack.c.b16 %v353, %v345
  %v442 = vpack.c.b16 %v354, %v346
  %v443 = vpack.c.b16 %v355, %v347
  %v444 = vpack.c.b16 %v356, %v348
  %v445 = vpack.c.b16 %v357, %v349
  %v446 = vpack.c.b16 %v366, %v358
  %v447 = vpack.c.b16 %v367, %v359
  %v448 = vpack.c.b16 %v368, %v360
  %v449 = vpack.c.b16 %v369, %v361
  %v450 = vpack.c.b16 %v370, %v362
  %v451 = vpack.c.b16 %v371, %v363
  %v452 = vpack.c.b16 %v372, %v364
  %v453 = vpack.c.b16 %v373, %v365
  %v454 = vpack.c.b16 %v382, %v374
  %v455 = vpack.c.b16 %v383, %v375
  %v456 = vpack.c.b16 %v384, %v376
  %v457 = vpack.c.b16 %v385, %v377
  %v458 = vpack.c.b16 %v386, %v378
  %v459 = vpack.c.b16 %v387, %v379
  %v460 = vpack.c.b16 %v388, %v380
  %v461 = vpack.c.b16 %v389, %v381
  %v462 = vpack.c.b16 %v398, %v390
  %v463 = vpack.c.b16 %v399, %v391
  %v464 = vpack.c.b16 %v400, %v392
  %v465 = vpack.c.b16 %v401, %v393
  %v466 = vpack.c.b16 %v402, %v394
  %v467 = vpack.c.b16 %v403, %v395
  %v468 = vpack.c.b16 %v404, %v396
  %v469 = vpack.c.b16 %v405, %v397
  %v662 = vunpack.c.l.b16 %v79
  %v663 = vunpack.c.l.b16 %v80
  %v664 = vunpack.c.l.b16 %v81
  %v665 = vunpack.c.l.b16 %v82
  %v666 = vunpack.c.l.b16 %v83
  %v667 = vunpack.c.l.b16 %v84
  %v668 = vunpack.c.l.b16 %v85
  %v669 = vunpack.c.l.b16 %v86
  %v670 = vunpack.c.l.b16 %v87
  %v671 = vunpack.c.l.b16 %v88
  %v672 = vunpack.c.l.b16 %v89
  %v673 = vunpack.c.l.b16 %v90
  %v674 = vunpack.c.l.b16 %v91
  %v675 = vunpack.c.l.b16 %v92
  %v676 = vunpack.c.l.b16 %v93
  %v677 = vunpack.c.l.b16 %v94
  %v678 = vunpack.c.l.b16 %v95
  %v679 = vunpack.c.l.b16 %v96
  %v680 = vunpack.c.l.b16 %v97
  %v681 = vunpack.c.l.b16 %v98
  %v682 = vunpack.c.l.b16 %v99
  %v683 = vunpack.c.l.b16 %v100
  %v684 = vunpack.c.l.b16 %v101
  %v685 = vunpack.c.l.b16 %v102
  %v686 = vunpack.c.l.b16 %v103
  %v687 = vunpack.c.l.b16 %v104
  %v688 = vunpack.c.l.b16 %v105
  %v689 = vunpack.c.l.b16 %v106
  %v690 = vunpack.c.l.b16 %v107
  %v691 = vunpack.c.l.b16 %v108
  %v692 = vunpack.c.l.b16 %v109
  %v693 = vunpack.c.l.b16 %v110
  %v694 = vunpack.c.l.b16 %v111
  %v695 = vunpack.c.l.b16 %v112
  %v696 = vunpack.c.l.b16 %v113
  %v697 = vunpack.c.l.b16 %v114
  %v698 = vunpack.c.l.b16 %v115
  %v699 = vunpack.c.l.b16 %v116
  %v700 = vunpack.c.l.b16 %v117
  %v701 = vunpack.c.l.b16 %v118
  %v702 = vunpack.c.l.b16 %v119
  %v703 = vunpack.c.l.b16 %v120
  %v704 = vunpack.c.l.b16 %v121
  %v705 = vunpack.c.l.b16 %v122
  %v706 = vunpack.c.l.b16 %v123
  %v707 = vunpack.c.l.b16 %v124
  %v708 = vunpack.c.l.b16 %v125
  %v709 = vunpack.c.l.b16 %v126
  %v710 = vunpack.c.l.b16 %v127
  %v711 = vunpack.c.l.b16 %v128
  %v712 = vunpack.c.l.b16 %v129
  %v713 = vunpack.c.l.b16 %v130
  %v714 = vunpack.c.l.b16 %v131
  %v715 = vunpack.c.l.b16 %v132
  %v716 = vunpack.c.l.b16 %v133
  %v717 = vunpack.c.l.b16 %v134
  %v718 = vunpack.c.l.b16 %v135
  %v719 = vunpack.c.l.b16 %v136
  %v720 = vunpack.c.l.b16 %v137
  %v721 = vunpack.c.l.b16 %v138
  %v722 = vunpack.c.l.b16 %v139
  %v723 = vunpack.c.l.b16 %v140
  %v724 = vunpack.c.l.b16 %v141
  %v725 = vunpack.c.l.b16 %v142
  %v726 = vunpack.c.l.b16 %v143
  %v727 = vunpack.c.l.b16 %v144
  %v728 = vunpack.c.l.b16 %v145
  %v729 = vunpack.c.l.b16 %v146
  %v730 = vunpack.c.l.b16 %v147
  %v731 = vunpack.c.l.b16 %v148
  %v732 = vunpack.c.l.b16 %v149
  %v733 = vunpack.c.l.b16 %v150
  %v734 = vunpack.c.l.b16 %v151
  %v735 = vunpack.c.l.b16 %v152
  %v736 = vunpack.c.l.b16 %v153
  %v737 = vunpack.c.l.b16 %v154
  %v738 = vunpack.c.l.b16 %v155
  %v739 = vunpack.c.l.b16 %v156
  %v740 = vunpack.c.l.b16 %v157
  %v741 = vunpack.c.l.b16 %v158
  %v742 = vunpack.c.l.b16 %v159
  %v743 = vunpack.c.l.b16 %v160
  %v744 = vunpack.c.l.b16 %v161
  %v745 = vunpack.c.l.b16 %v162
  %v746 = vunpack.c.l.b16 %v163
  %v747 = vunpack.c.l.b16 %v164
  %v748 = vunpack.c.l.b16 %v165
  %v749 = vunpack.c.l.b16 %v166
  %v750 = vunpack.c.l.b16 %v167
  %v751 = vunpack.c.l.b16 %v168
  %v752 = vunpack.c.l.b16 %v169
  %v753 = vunpack.c.l.b16 %v170
  %v754 = vunpack.c.l.b16 %v171
  %v755 = vunpack.c.l.b16 %v172
  %v756 = vunpack.c.l.b16 %v173
  %v757 = vunpack.c.l.b16 %v174
  %v758 = vunpack.c.l.b16 %v175
  %v759 = vunpack.c.l.b16 %v176
  %v760 = vunpack.c.l.b16 %v177
  %v761 = vunpack.c.l.b16 %v178
  %v762 = vunpack.c.l.b16 %v179
  %v763 = vunpack.c.l.b16 %v180
  %v764 = vunpack.c.l.b16 %v181
  %v765 = vunpack.c.l.b16 %v182
  %v766 = vunpack.c.l.b16 %v183
  %v767 = vunpack.c.l.b16 %v184
  %v768 = vunpack.c.l.b16 %v185
  %v769 = vunpack.c.l.b16 %v186
  %v770 = vunpack.c.l.b16 %v187
  %v771 = vunpack.c.l.b16 %v188
  %v772 = vunpack.c.l.b16 %v189
  %v773 = vunpack.c.l.b16 %v190
  %v774 = vunpack.c.l.b16 %v191
  %v775 = vunpack.c.l.b16 %v192
  %v776 = vunpack.c.l.b16 %v193
  %v777 = vunpack.c.l.b16 %v194
  %v778 = vunpack.c.l.b16 %v195
  %v779 = vunpack.c.l.b16 %v196
  %v780 = vunpack.c.l.b16 %v197
  %v781 = vunpack.c.l.b16 %v198
  %v782 = vunpack.c.l.b16 %v199
  %v783 = vunpack.c.l.b16 %v200
  %v784 = vunpack.c.l.b16 %v201
  %v785 = vunpack.c.l.b16 %v202
  %v786 = vunpack.c.l.b16 %v203
  %v787 = vunpack.c.l.b16 %v204
  %v788 = vunpack.c.l.b16 %v205
  %v789 = vunpack.c.l.b16 %v206
  %v790 = vpack.c.b16 %v663, %v662
  %v791 = vpack.c.b16 %v665, %v664
  %v792 = vpack.c.b16 %v667, %v666
  %v793 = vpack.c.b16 %v669, %v668
  %v794 = vpack.c.b16 %v671, %v670
  %v795 = vpack.c.b16 %v673, %v672
  %v796 = vpack.c.b16 %v675, %v674
  %v797 = vpack.c.b16 %v677, %v676
  %v798 = vpack.c.b16 %v679, %v678
  %v799 = vpack.c.b16 %v681, %v680
  %v800 = vpack.c.b16 %v683, %v682
  %v801 = vpack.c.b16 %v685, %v684
  %v802 = vpack.c.b16 %v687, %v686
  %v803 = vpack.c.b16 %v689, %v688
  %v804 = vpack.c.b16 %v691, %v690
  %v805 = vpack.c.b16 %v693, %v692
  %v806 = vpack.c.b16 %v695, %v694
  %v807 = vpack.c.b16 %v697, %v696
  %v808 = vpack.c.b16 %v699, %v698
  %v809 = vpack.c.b16 %v701, %v700
  %v810 = vpack.c.b16 %v703, %v702
  %v811 = vpack.c.b16 %v705, %v704
  %v812 = vpack.c.b16 %v707, %v706
  %v813 = vpack.c.b16 %v709, %v708
  %v814 = vpack.c.b16 %v711, %v710
  %v815 = vpack.c.b16 %v713, %v712
  %v816 = vpack.c.b16 %v715, %v714
  %v817 = vpack.c.b16 %v717, %v716
  %v818 = vpack.c.b16 %v719, %v718
  %v819 = vpack.c.b16 %v721, %v720
  %v820 = vpack.c.b16 %v723, %v722
  %v821 = vpack.c.b16 %v725, %v724
  %v822 = vpack.c.b16 %v727, %v726
  %v823 = vpack.c.b16 %v729, %v728
  %v824 = vpack.c.b16 %v731, %v730
  %v825 = vpack.c.b16 %v733, %v732
  %v826 = vpack.c.b16 %v735, %v734
  %v827 = vpack.c.b16 %v737, %v736
  %v828 = vpack.c.b16 %v739, %v738
  %v829 = vpack.c.b16 %v741, %v740
  %v830 = vpack.c.b16 %v743, %v742
  %v831 = vpack.c.b16 %v745, %v744
  %v832 = vpack.c.b16 %v747, %v746
  %v833 = vpack.c.b16 %v749, %v748
  %v834 = vpack.c.b16 %v751, %v750
  %v835 = vpack.c.b16 %v753, %v752
  %v836 = vpack.c.b16 %v755, %v754
  %v837 = vpack.c.b16 %v757, %v756
  %v838 = vpack.c.b16 %v759, %v758
  %v839 = vpack.c.b16 %v761, %v760
  %v840 = vpack.c.b16 %v763, %v762
  %v841 = vpack.c.b16 %v765, %v764
  %v842 = vpack.c.b16 %v767, %v766
  %v843 = vpack.c.b16 %v769, %v768
  %v844 = vpack.c.b16 %v771, %v770
  %v845 = vpack.c.b16 %v773, %v772
  %v846 = vpack.c.b16 %v775, %v774
  %v847 = vpack.c.b16 %v777, %v776
  %v848 = vpack.c.b16 %v779, %v778
  %v849 = vpack.c.b16 %v781, %v780
  %v850 = vpack.c.b16 %v783, %v782
  %v851 = vpack.c.b16 %v785, %v784
  %v852 = vpack.c.b16 %v787, %v786
  %v853 = vpack.c.b16 %v789, %v788
  %918 = vmatprep.subr.bf16.mxu0 0
  %919 = vmatpush1.bf16.msra.mxu0 %v790
  %920 = vmatprep.subr.bf16.mxu0 0
  %921 = vmatpush1.bf16.msra.mxu0 %v791
  %922 = vmatprep.subr.bf16.mxu0 0
  %923 = vmatpush1.bf16.msra.mxu0 %v792
  %924 = vmatprep.subr.bf16.mxu0 0
  %925 = vmatpush1.bf16.msra.mxu0 %v793
  %926 = vmatprep.subr.bf16.mxu0 0
  %927 = vmatpush1.bf16.msra.mxu0 %v794
  %928 = vmatprep.subr.bf16.mxu0 0
  %929 = vmatpush1.bf16.msra.mxu0 %v795
  %930 = vmatprep.subr.bf16.mxu0 0
  %931 = vmatpush1.bf16.msra.mxu0 %v796
  %932 = vmatprep.subr.bf16.mxu0 0
  %933 = vmatpush1.bf16.msra.mxu0 %v797
  %934 = vmatprep.subr.bf16.mxu0 0
  %935 = vmatpush1.bf16.msra.mxu0 %v798
  %936 = vmatprep.subr.bf16.mxu0 0
  %937 = vmatpush1.bf16.msra.mxu0 %v799
  %938 = vmatprep.subr.bf16.mxu0 0
  %939 = vmatpush1.bf16.msra.mxu0 %v800
  %940 = vmatprep.subr.bf16.mxu0 0
  %941 = vmatpush1.bf16.msra.mxu0 %v801
  %942 = vmatprep.subr.bf16.mxu0 0
  %943 = vmatpush1.bf16.msra.mxu0 %v802
  %944 = vmatprep.subr.bf16.mxu0 0
  %945 = vmatpush1.bf16.msra.mxu0 %v803
  %946 = vmatprep.subr.bf16.mxu0 0
  %947 = vmatpush1.bf16.msra.mxu0 %v804
  %948 = vmatprep.subr.bf16.mxu0 0
  %949 = vmatpush1.bf16.msra.mxu0 %v805
  %950 = vmatprep.mubr.bf16.mxu0 %v407
  %951 = vmatmul.mubr.bf16.gmra.mrb[0].mxu0 %v406
  %v952 = vpop.f32.mrb[0].mxu0
  %v953 = vadd.f32 %v212, %v952
  %v954 = vpop.f32.mrb[0].mxu0
  %v955 = vpop.f32.mrb[0].mxu0
  %v956 = vadd.f32 %v212, %v955
  %v957 = vpop.f32.mrb[0].mxu0
  %958 = vmatprep.mubr.bf16.mxu0 %v415
  %959 = vmatmul.mubr.bf16.gmra.mrb[0].mxu0 %v414
  %v960 = vpop.f32.mrb[0].mxu0
  %v961 = vadd.f32 %v212, %v960
  %v962 = vpop.f32.mrb[0].mxu0
  %v963 = vpop.f32.mrb[0].mxu0
  %v964 = vadd.f32 %v212, %v963
  %v965 = vpop.f32.mrb[0].mxu0
  %966 = vmatprep.mubr.bf16.mxu0 %v423
  %967 = vmatmul.mubr.bf16.gmra.mrb[0].mxu0 %v422
  %v968 = vpop.f32.mrb[0].mxu0
  %v969 = vadd.f32 %v212, %v968
  %v970 = vpop.f32.mrb[0].mxu0
  %v971 = vpop.f32.mrb[0].mxu0
  %v972 = vadd.f32 %v212, %v971
  %v973 = vpop.f32.mrb[0].mxu0
  %974 = vmatprep.mubr.bf16.mxu0 %v431
  %975 = vmatmul.mubr.bf16.gmra.mrb[0].mxu0 %v430
  %v976 = vpop.f32.mrb[0].mxu0
  %v977 = vadd.f32 %v212, %v976
  %v978 = vpop.f32.mrb[0].mxu0
  %v979 = vpop.f32.mrb[0].mxu0
  %v980 = vadd.f32 %v212, %v979
  %v981 = vpop.f32.mrb[0].mxu0
  %982 = vmatprep.mubr.bf16.mxu0 %v439
  %983 = vmatmul.mubr.bf16.gmra.mrb[0].mxu0 %v438
  %v984 = vpop.f32.mrb[0].mxu0
  %v985 = vadd.f32 %v212, %v984
  %v986 = vpop.f32.mrb[0].mxu0
  %v987 = vpop.f32.mrb[0].mxu0
  %v988 = vadd.f32 %v212, %v987
  %v989 = vpop.f32.mrb[0].mxu0
  %990 = vmatprep.mubr.bf16.mxu0 %v447
  %991 = vmatmul.mubr.bf16.gmra.mrb[0].mxu0 %v446
  %v992 = vpop.f32.mrb[0].mxu0
  %v993 = vadd.f32 %v212, %v992
  %v994 = vpop.f32.mrb[0].mxu0
  %v995 = vpop.f32.mrb[0].mxu0
  %v996 = vadd.f32 %v212, %v995
  %v997 = vpop.f32.mrb[0].mxu0
  %998 = vmatprep.mubr.bf16.mxu0 %v455
  %999 = vmatmul.mubr.bf16.gmra.mrb[0].mxu0 %v454
  %v1000 = vpop.f32.mrb[0].mxu0
  %v1001 = vadd.f32 %v212, %v1000
  %v1002 = vpop.f32.mrb[0].mxu0
  %v1003 = vpop.f32.mrb[0].mxu0
  %v1004 = vadd.f32 %v212, %v1003
  %v1005 = vpop.f32.mrb[0].mxu0
  %1006 = vmatprep.mubr.bf16.mxu0 %v463
  %1007 = vmatmul.mubr.bf16.gmra.mrb[0].mxu0 %v462
  %v1008 = vpop.f32.mrb[0].mxu0
  %v1009 = vadd.f32 %v212, %v1008
  %v1010 = vpop.f32.mrb[0].mxu0
  %v1011 = vpop.f32.mrb[0].mxu0
  %v1012 = vadd.f32 %v212, %v1011
  %v1013 = vpop.f32.mrb[0].mxu0
  %1014 = vdwg.mxu0
  %1015 = vmatprep.subr.bf16.mxu0 0
  %1016 = vmatpush1.bf16.msra.mxu0 %v806
  %1017 = vmatprep.subr.bf16.mxu0 0
  %1018 = vmatpush1.bf16.msra.mxu0 %v807
  %1019 = vmatprep.subr.bf16.mxu0 0
  %1020 = vmatpush1.bf16.msra.mxu0 %v808
  %1021 = vmatprep.subr.bf16.mxu0 0
  %1022 = vmatpush1.bf16.msra.mxu0 %v809
  %1023 = vmatprep.subr.bf16.mxu0 0
  %1024 = vmatpush1.bf16.msra.mxu0 %v810
  %1025 = vmatprep.subr.bf16.mxu0 0
  %1026 = vmatpush1.bf16.msra.mxu0 %v811
  %1027 = vmatprep.subr.bf16.mxu0 0
  %1028 = vmatpush1.bf16.msra.mxu0 %v812
  %1029 = vmatprep.subr.bf16.mxu0 0
  %1030 = vmatpush1.bf16.msra.mxu0 %v813
  %1031 = vmatprep.subr.bf16.mxu0 0
  %1032 = vmatpush1.bf16.msra.mxu0 %v814
  %1033 = vmatprep.subr.bf16.mxu0 0
  %1034 = vmatpush1.bf16.msra.mxu0 %v815
  %1035 = vmatprep.subr.bf16.mxu0 0
  %1036 = vmatpush1.bf16.msra.mxu0 %v816
  %1037 = vmatprep.subr.bf16.mxu0 0
  %1038 = vmatpush1.bf16.msra.mxu0 %v817
  %1039 = vmatprep.subr.bf16.mxu0 0
  %1040 = vmatpush1.bf16.msra.mxu0 %v818
  %1041 = vmatprep.subr.bf16.mxu0 0
  %1042 = vmatpush1.bf16.msra.mxu0 %v819
  %1043 = vmatprep.subr.bf16.mxu0 0
  %1044 = vmatpush1.bf16.msra.mxu0 %v820
  %1045 = vmatprep.subr.bf16.mxu0 0
  %1046 = vmatpush1.bf16.msra.mxu0 %v821
  %1047 = vmatprep.mubr.bf16.mxu0 %v409
  %1048 = vmatmul.mubr.bf16.gmra.mrb[0].mxu0 %v408
  %v1049 = vpop.f32.mrb[0].mxu0
  %v1050 = vadd.f32 %v953, %v1049
  %v1051 = vpop.f32.mrb[0].mxu0
  %v1052 = vpop.f32.mrb[0].mxu0
  %v1053 = vadd.f32 %v956, %v1052
  %v1054 = vpop.f32.mrb[0].mxu0
  %1055 = vmatprep.mubr.bf16.mxu0 %v417
  %1056 = vmatmul.mubr.bf16.gmra.mrb[0].mxu0 %v416
  %v1057 = vpop.f32.mrb[0].mxu0
  %v1058 = vadd.f32 %v961, %v1057
  %v1059 = vpop.f32.mrb[0].mxu0
  %v1060 = vpop.f32.mrb[0].mxu0
  %v1061 = vadd.f32 %v964, %v1060
  %v1062 = vpop.f32.mrb[0].mxu0
  %1063 = vmatprep.mubr.bf16.mxu0 %v425
  %1064 = vmatmul.mubr.bf16.gmra.mrb[0].mxu0 %v424
  %v1065 = vpop.f32.mrb[0].mxu0
  %v1066 = vadd.f32 %v969, %v1065
  %v1067 = vpop.f32.mrb[0].mxu0
  %v1068 = vpop.f32.mrb[0].mxu0
  %v1069 = vadd.f32 %v972, %v1068
  %v1070 = vpop.f32.mrb[0].mxu0
  %1071 = vmatprep.mubr.bf16.mxu0 %v433
  %1072 = vmatmul.mubr.bf16.gmra.mrb[0].mxu0 %v432
  %v1073 = vpop.f32.mrb[0].mxu0
  %v1074 = vadd.f32 %v977, %v1073
  %v1075 = vpop.f32.mrb[0].mxu0
  %v1076 = vpop.f32.mrb[0].mxu0
  %v1077 = vadd.f32 %v980, %v1076
  %v1078 = vpop.f32.mrb[0].mxu0
  %1079 = vmatprep.mubr.bf16.mxu0 %v441
  %1080 = vmatmul.mubr.bf16.gmra.mrb[0].mxu0 %v440
  %v1081 = vpop.f32.mrb[0].mxu0
  %v1082 = vadd.f32 %v985, %v1081
  %v1083 = vpop.f32.mrb[0].mxu0
  %v1084 = vpop.f32.mrb[0].mxu0
  %v1085 = vadd.f32 %v988, %v1084
  %v1086 = vpop.f32.mrb[0].mxu0
  %1087 = vmatprep.mubr.bf16.mxu0 %v449
  %1088 = vmatmul.mubr.bf16.gmra.mrb[0].mxu0 %v448
  %v1089 = vpop.f32.mrb[0].mxu0
  %v1090 = vadd.f32 %v993, %v1089
  %v1091 = vpop.f32.mrb[0].mxu0
  %v1092 = vpop.f32.mrb[0].mxu0
  %v1093 = vadd.f32 %v996, %v1092
  %v1094 = vpop.f32.mrb[0].mxu0
  %1095 = vmatprep.mubr.bf16.mxu0 %v457
  %1096 = vmatmul.mubr.bf16.gmra.mrb[0].mxu0 %v456
  %v1097 = vpop.f32.mrb[0].mxu0
  %v1098 = vadd.f32 %v1001, %v1097
  %v1099 = vpop.f32.mrb[0].mxu0
  %v1100 = vpop.f32.mrb[0].mxu0
  %v1101 = vadd.f32 %v1004, %v1100
  %v1102 = vpop.f32.mrb[0].mxu0
  %1103 = vmatprep.mubr.bf16.mxu0 %v465
  %1104 = vmatmul.mubr.bf16.gmra.mrb[0].mxu0 %v464
  %v1105 = vpop.f32.mrb[0].mxu0
  %v1106 = vadd.f32 %v1009, %v1105
  %v1107 = vpop.f32.mrb[0].mxu0
  %v1108 = vpop.f32.mrb[0].mxu0
  %v1109 = vadd.f32 %v1012, %v1108
  %v1110 = vpop.f32.mrb[0].mxu0
  %1111 = vdwg.mxu0
  %1112 = vmatprep.subr.bf16.mxu0 0
  %1113 = vmatpush1.bf16.msra.mxu0 %v822
  %1114 = vmatprep.subr.bf16.mxu0 0
  %1115 = vmatpush1.bf16.msra.mxu0 %v823
  %1116 = vmatprep.subr.bf16.mxu0 0
  %1117 = vmatpush1.bf16.msra.mxu0 %v824
  %1118 = vmatprep.subr.bf16.mxu0 0
  %1119 = vmatpush1.bf16.msra.mxu0 %v825
  %1120 = vmatprep.subr.bf16.mxu0 0
  %1121 = vmatpush1.bf16.msra.mxu0 %v826
  %1122 = vmatprep.subr.bf16.mxu0 0
  %1123 = vmatpush1.bf16.msra.mxu0 %v827
  %1124 = vmatprep.subr.bf16.mxu0 0
  %1125 = vmatpush1.bf16.msra.mxu0 %v828
  %1126 = vmatprep.subr.bf16.mxu0 0
  %1127 = vmatpush1.bf16.msra.mxu0 %v829
  %1128 = vmatprep.subr.bf16.mxu0 0
  %1129 = vmatpush1.bf16.msra.mxu0 %v830
  %1130 = vmatprep.subr.bf16.mxu0 0
  %1131 = vmatpush1.bf16.msra.mxu0 %v831
  %1132 = vmatprep.subr.bf16.mxu0 0
  %1133 = vmatpush1.bf16.msra.mxu0 %v832
  %1134 = vmatprep.subr.bf16.mxu0 0
  %1135 = vmatpush1.bf16.msra.mxu0 %v833
  %1136 = vmatprep.subr.bf16.mxu0 0
  %1137 = vmatpush1.bf16.msra.mxu0 %v834
  %1138 = vmatprep.subr.bf16.mxu0 0
  %1139 = vmatpush1.bf16.msra.mxu0 %v835
  %1140 = vmatprep.subr.bf16.mxu0 0
  %1141 = vmatpush1.bf16.msra.mxu0 %v836
  %1142 = vmatprep.subr.bf16.mxu0 0
  %1143 = vmatpush1.bf16.msra.mxu0 %v837
  %1144 = vmatprep.mubr.bf16.mxu0 %v411
  %1145 = vmatmul.mubr.bf16.gmra.mrb[0].mxu0 %v410
  %v1146 = vpop.f32.mrb[0].mxu0
  %v1147 = vadd.f32 %v1050, %v1146
  %v1148 = vpop.f32.mrb[0].mxu0
  %v1149 = vpop.f32.mrb[0].mxu0
  %v1150 = vadd.f32 %v1053, %v1149
  %v1151 = vpop.f32.mrb[0].mxu0
  %1152 = vmatprep.mubr.bf16.mxu0 %v419
  %1153 = vmatmul.mubr.bf16.gmra.mrb[0].mxu0 %v418
  %v1154 = vpop.f32.mrb[0].mxu0
  %v1155 = vadd.f32 %v1058, %v1154
  %v1156 = vpop.f32.mrb[0].mxu0
  %v1157 = vpop.f32.mrb[0].mxu0
  %v1158 = vadd.f32 %v1061, %v1157
  %v1159 = vpop.f32.mrb[0].mxu0
  %1160 = vmatprep.mubr.bf16.mxu0 %v427
  %1161 = vmatmul.mubr.bf16.gmra.mrb[0].mxu0 %v426
  %v1162 = vpop.f32.mrb[0].mxu0
  %v1163 = vadd.f32 %v1066, %v1162
  %v1164 = vpop.f32.mrb[0].mxu0
  %v1165 = vpop.f32.mrb[0].mxu0
  %v1166 = vadd.f32 %v1069, %v1165
  %v1167 = vpop.f32.mrb[0].mxu0
  %1168 = vmatprep.mubr.bf16.mxu0 %v435
  %1169 = vmatmul.mubr.bf16.gmra.mrb[0].mxu0 %v434
  %v1170 = vpop.f32.mrb[0].mxu0
  %v1171 = vadd.f32 %v1074, %v1170
  %v1172 = vpop.f32.mrb[0].mxu0
  %v1173 = vpop.f32.mrb[0].mxu0
  %v1174 = vadd.f32 %v1077, %v1173
  %v1175 = vpop.f32.mrb[0].mxu0
  %1176 = vmatprep.mubr.bf16.mxu0 %v443
  %1177 = vmatmul.mubr.bf16.gmra.mrb[0].mxu0 %v442
  %v1178 = vpop.f32.mrb[0].mxu0
  %v1179 = vadd.f32 %v1082, %v1178
  %v1180 = vpop.f32.mrb[0].mxu0
  %v1181 = vpop.f32.mrb[0].mxu0
  %v1182 = vadd.f32 %v1085, %v1181
  %v1183 = vpop.f32.mrb[0].mxu0
  %1184 = vmatprep.mubr.bf16.mxu0 %v451
  %1185 = vmatmul.mubr.bf16.gmra.mrb[0].mxu0 %v450
  %v1186 = vpop.f32.mrb[0].mxu0
  %v1187 = vadd.f32 %v1090, %v1186
  %v1188 = vpop.f32.mrb[0].mxu0
  %v1189 = vpop.f32.mrb[0].mxu0
  %v1190 = vadd.f32 %v1093, %v1189
  %v1191 = vpop.f32.mrb[0].mxu0
  %1192 = vmatprep.mubr.bf16.mxu0 %v459
  %1193 = vmatmul.mubr.bf16.gmra.mrb[0].mxu0 %v458
  %v1194 = vpop.f32.mrb[0].mxu0
  %v1195 = vadd.f32 %v1098, %v1194
  %v1196 = vpop.f32.mrb[0].mxu0
  %v1197 = vpop.f32.mrb[0].mxu0
  %v1198 = vadd.f32 %v1101, %v1197
  %v1199 = vpop.f32.mrb[0].mxu0
  %1200 = vmatprep.mubr.bf16.mxu0 %v467
  %1201 = vmatmul.mubr.bf16.gmra.mrb[0].mxu0 %v466
  %v1202 = vpop.f32.mrb[0].mxu0
  %v1203 = vadd.f32 %v1106, %v1202
  %v1204 = vpop.f32.mrb[0].mxu0
  %v1205 = vpop.f32.mrb[0].mxu0
  %v1206 = vadd.f32 %v1109, %v1205
  %v1207 = vpop.f32.mrb[0].mxu0
  %1208 = vdwg.mxu0
  %1209 = vmatprep.subr.bf16.mxu0 0
  %1210 = vmatpush1.bf16.msra.mxu0 %v838
  %1211 = vmatprep.subr.bf16.mxu0 0
  %1212 = vmatpush1.bf16.msra.mxu0 %v839
  %1213 = vmatprep.subr.bf16.mxu0 0
  %1214 = vmatpush1.bf16.msra.mxu0 %v840
  %1215 = vmatprep.subr.bf16.mxu0 0
  %1216 = vmatpush1.bf16.msra.mxu0 %v841
  %1217 = vmatprep.subr.bf16.mxu0 0
  %1218 = vmatpush1.bf16.msra.mxu0 %v842
  %1219 = vmatprep.subr.bf16.mxu0 0
  %1220 = vmatpush1.bf16.msra.mxu0 %v843
  %1221 = vmatprep.subr.bf16.mxu0 0
  %1222 = vmatpush1.bf16.msra.mxu0 %v844
  %1223 = vmatprep.subr.bf16.mxu0 0
  %1224 = vmatpush1.bf16.msra.mxu0 %v845
  %1225 = vmatprep.subr.bf16.mxu0 0
  %1226 = vmatpush1.bf16.msra.mxu0 %v846
  %1227 = vmatprep.subr.bf16.mxu0 0
  %1228 = vmatpush1.bf16.msra.mxu0 %v847
  %1229 = vmatprep.subr.bf16.mxu0 0
  %1230 = vmatpush1.bf16.msra.mxu0 %v848
  %1231 = vmatprep.subr.bf16.mxu0 0
  %1232 = vmatpush1.bf16.msra.mxu0 %v849
  %1233 = vmatprep.subr.bf16.mxu0 0
  %1234 = vmatpush1.bf16.msra.mxu0 %v850
  %1235 = vmatprep.subr.bf16.mxu0 0
  %1236 = vmatpush1.bf16.msra.mxu0 %v851
  %1237 = vmatprep.subr.bf16.mxu0 0
  %1238 = vmatpush1.bf16.msra.mxu0 %v852
  %1239 = vmatprep.subr.bf16.mxu0 0
  %1240 = vmatpush1.bf16.msra.mxu0 %v853
  %1241 = vmatprep.mubr.bf16.mxu0 %v413
  %1242 = vmatmul.mubr.bf16.gmra.mrb[0].mxu0 %v412
  %v1243 = vpop.f32.mrb[0].mxu0
  %v1244 = vadd.f32 %v1147, %v1243
  %v1245 = vpop.f32.mrb[0].mxu0
  %v1246 = vpop.f32.mrb[0].mxu0
  %v1247 = vadd.f32 %v1150, %v1246
  %v1248 = vpop.f32.mrb[0].mxu0
  %1249 = vmatprep.mubr.bf16.mxu0 %v421
  %1250 = vmatmul.mubr.bf16.gmra.mrb[0].mxu0 %v420
  %v1251 = vpop.f32.mrb[0].mxu0
  %v1252 = vadd.f32 %v1155, %v1251
  %v1253 = vpop.f32.mrb[0].mxu0
  %v1254 = vpop.f32.mrb[0].mxu0
  %v1255 = vadd.f32 %v1158, %v1254
  %v1256 = vpop.f32.mrb[0].mxu0
  %1257 = vmatprep.mubr.bf16.mxu0 %v429
  %1258 = vmatmul.mubr.bf16.gmra.mrb[0].mxu0 %v428
  %v1259 = vpop.f32.mrb[0].mxu0
  %v1260 = vadd.f32 %v1163, %v1259
  %v1261 = vpop.f32.mrb[0].mxu0
  %v1262 = vpop.f32.mrb[0].mxu0
  %v1263 = vadd.f32 %v1166, %v1262
  %v1264 = vpop.f32.mrb[0].mxu0
  %1265 = vmatprep.mubr.bf16.mxu0 %v437
  %1266 = vmatmul.mubr.bf16.gmra.mrb[0].mxu0 %v436
  %v1267 = vpop.f32.mrb[0].mxu0
  %v1268 = vadd.f32 %v1171, %v1267
  %v1269 = vpop.f32.mrb[0].mxu0
  %v1270 = vpop.f32.mrb[0].mxu0
  %v1271 = vadd.f32 %v1174, %v1270
  %v1272 = vpop.f32.mrb[0].mxu0
  %1273 = vmatprep.mubr.bf16.mxu0 %v445
  %1274 = vmatmul.mubr.bf16.gmra.mrb[0].mxu0 %v444
  %v1275 = vpop.f32.mrb[0].mxu0
  %v1276 = vadd.f32 %v1179, %v1275
  %v1277 = vpop.f32.mrb[0].mxu0
  %v1278 = vpop.f32.mrb[0].mxu0
  %v1279 = vadd.f32 %v1182, %v1278
  %v1280 = vpop.f32.mrb[0].mxu0
  %1281 = vmatprep.mubr.bf16.mxu0 %v453
  %1282 = vmatmul.mubr.bf16.gmra.mrb[0].mxu0 %v452
  %v1283 = vpop.f32.mrb[0].mxu0
  %v1284 = vadd.f32 %v1187, %v1283
  %v1285 = vpop.f32.mrb[0].mxu0
  %v1286 = vpop.f32.mrb[0].mxu0
  %v1287 = vadd.f32 %v1190, %v1286
  %v1288 = vpop.f32.mrb[0].mxu0
  %1289 = vmatprep.mubr.bf16.mxu0 %v461
  %1290 = vmatmul.mubr.bf16.gmra.mrb[0].mxu0 %v460
  %v1291 = vpop.f32.mrb[0].mxu0
  %v1292 = vadd.f32 %v1195, %v1291
  %v1293 = vpop.f32.mrb[0].mxu0
  %v1294 = vpop.f32.mrb[0].mxu0
  %v1295 = vadd.f32 %v1198, %v1294
  %v1296 = vpop.f32.mrb[0].mxu0
  %1297 = vmatprep.mubr.bf16.mxu0 %v469
  %1298 = vmatmul.mubr.bf16.gmra.mrb[0].mxu0 %v468
  %v1299 = vpop.f32.mrb[0].mxu0
  %v1300 = vadd.f32 %v1203, %v1299
  %v1301 = vpop.f32.mrb[0].mxu0
  %v1302 = vpop.f32.mrb[0].mxu0
  %v1303 = vadd.f32 %v1206, %v1302
  %v1304 = vpop.f32.mrb[0].mxu0
  %1305 = vdwg.mxu0
  %vm1306 = vcmp.ge.f32.partialorder %v1244, 0.0
  %vm1307 = vcmp.ge.f32.partialorder %v1247, 0.0
  %vm1308 = vcmp.ge.f32.partialorder %v1252, 0.0
  %vm1309 = vcmp.ge.f32.partialorder %v1255, 0.0
  %vm1310 = vcmp.ge.f32.partialorder %v1260, 0.0
  %vm1311 = vcmp.ge.f32.partialorder %v1263, 0.0
  %vm1312 = vcmp.ge.f32.partialorder %v1268, 0.0
  %vm1313 = vcmp.ge.f32.partialorder %v1271, 0.0
  %vm1314 = vcmp.ge.f32.partialorder %v1276, 0.0
  %vm1315 = vcmp.ge.f32.partialorder %v1279, 0.0
  %vm1316 = vcmp.ge.f32.partialorder %v1284, 0.0
  %vm1317 = vcmp.ge.f32.partialorder %v1287, 0.0
  %vm1318 = vcmp.ge.f32.partialorder %v1292, 0.0
  %vm1319 = vcmp.ge.f32.partialorder %v1295, 0.0
  %vm1320 = vcmp.ge.f32.partialorder %v1300, 0.0
  %vm1321 = vcmp.ge.f32.partialorder %v1303, 0.0
  %v1322 = vmul.f32 %v1244, 0.2
  %v1323 = vmul.f32 %v1247, 0.2
  %v1324 = vmul.f32 %v1252, 0.2
  %v1325 = vmul.f32 %v1255, 0.2
  %v1326 = vmul.f32 %v1260, 0.2
  %v1327 = vmul.f32 %v1263, 0.2
  %v1328 = vmul.f32 %v1268, 0.2
  %v1329 = vmul.f32 %v1271, 0.2
  %v1330 = vmul.f32 %v1276, 0.2
  %v1331 = vmul.f32 %v1279, 0.2
  %v1332 = vmul.f32 %v1284, 0.2
  %v1333 = vmul.f32 %v1287, 0.2
  %v1334 = vmul.f32 %v1292, 0.2
  %v1335 = vmul.f32 %v1295, 0.2
  %v1336 = vmul.f32 %v1300, 0.2
  %v1337 = vmul.f32 %v1303, 0.2
  %v1338 = vsel %vm1306, %v1244, %v1322
  %v1339 = vsel %vm1307, %v1247, %v1323
  %v1340 = vsel %vm1308, %v1252, %v1324
  %v1341 = vsel %vm1309, %v1255, %v1325
  %v1342 = vsel %vm1310, %v1260, %v1326
  %v1343 = vsel %vm1311, %v1263, %v1327
  %v1344 = vsel %vm1312, %v1268, %v1328
  %v1345 = vsel %vm1313, %v1271, %v1329
  %v1346 = vsel %vm1314, %v1276, %v1330
  %v1347 = vsel %vm1315, %v1279, %v1331
  %v1348 = vsel %vm1316, %v1284, %v1332
  %v1349 = vsel %vm1317, %v1287, %v1333
  %v1350 = vsel %vm1318, %v1292, %v1334
  %v1351 = vsel %vm1319, %v1295, %v1335
  %v1352 = vsel %vm1320, %v1300, %v1336
  %v1353 = vsel %vm1321, %v1303, %v1337
  %v1354 = vpack.c.bf16 %v1339, %v1338
  %v1355 = vpack.c.bf16 %v1341, %v1340
  %v1356 = vpack.c.bf16 %v1343, %v1342
  %v1357 = vpack.c.bf16 %v1345, %v1344
  %v1358 = vpack.c.bf16 %v1347, %v1346
  %v1359 = vpack.c.bf16 %v1349, %v1348
  %v1360 = vpack.c.bf16 %v1351, %v1350
  %v1361 = vpack.c.bf16 %v1353, %v1352
  %v1370 = vunpack.c.l.b16 %v1354
  %v1371 = vunpack.c.h.b16 %v1354
  %v1372 = vunpack.c.l.b16 %v1355
  %v1373 = vunpack.c.h.b16 %v1355
  %v1374 = vunpack.c.l.b16 %v1356
  %v1375 = vunpack.c.h.b16 %v1356
  %v1376 = vunpack.c.l.b16 %v1357
  %v1377 = vunpack.c.h.b16 %v1357
  %v1378 = vunpack.c.l.b16 %v1358
  %v1379 = vunpack.c.h.b16 %v1358
  %v1380 = vunpack.c.l.b16 %v1359
  %v1381 = vunpack.c.h.b16 %v1359
  %v1382 = vunpack.c.l.b16 %v1360
  %v1383 = vunpack.c.h.b16 %v1360
  %v1384 = vunpack.c.l.b16 %v1361
  %v1385 = vunpack.c.h.b16 %v1361
  %v1386 = vpack.c.b16 %v1370, %v1370
  %v1387 = vpack.c.b16 %v1371, %v1371
  %v1388 = vpack.c.b16 %v1372, %v1372
  %v1389 = vpack.c.b16 %v1373, %v1373
  %v1390 = vpack.c.b16 %v1374, %v1374
  %v1391 = vpack.c.b16 %v1375, %v1375
  %v1392 = vpack.c.b16 %v1376, %v1376
  %v1393 = vpack.c.b16 %v1377, %v1377
  %v1394 = vpack.c.b16 %v1378, %v1378
  %v1395 = vpack.c.b16 %v1379, %v1379
  %v1396 = vpack.c.b16 %v1380, %v1380
  %v1397 = vpack.c.b16 %v1381, %v1381
  %v1398 = vpack.c.b16 %v1382, %v1382
  %v1399 = vpack.c.b16 %v1383, %v1383
  %v1400 = vpack.c.b16 %v1384, %v1384
  %v1401 = vpack.c.b16 %v1385, %v1385
  %1418 = vst [vmem:[%s3] sm:$0xf] %v1386
  %1419 = vst [vmem:[%s3 + $0x4] sm:$0xf] %v1387
  %1420 = vst [vmem:[%s3 + $0x8] sm:$0xf] %v1388
  %1421 = vst [vmem:[%s3 + $0xc] sm:$0xf] %v1389
  %1422 = vst [vmem:[%s3 + $0x10] sm:$0xf] %v1390
  %1423 = vst [vmem:[%s3 + $0x14] sm:$0xf] %v1391
  %1424 = vst [vmem:[%s3 + $0x18] sm:$0xf] %v1392
  %1425 = vst [vmem:[%s3 + $0x1c] sm:$0xf] %v1393
  %1426 = vst [vmem:[%s3 + $0x20] sm:$0xf] %v1394
  %1427 = vst [vmem:[%s3 + $0x24] sm:$0xf] %v1395
  %1428 = vst [vmem:[%s3 + $0x28] sm:$0xf] %v1396
  %1429 = vst [vmem:[%s3 + $0x2c] sm:$0xf] %v1397
  %1430 = vst [vmem:[%s3 + $0x30] sm:$0xf] %v1398
  %1431 = vst [vmem:[%s3 + $0x34] sm:$0xf] %v1399
  %1432 = vst [vmem:[%s3 + $0x38] sm:$0xf] %v1400
  %1433 = vst [vmem:[%s3 + $0x3c] sm:$0xf] %v1401
  // Predicated region
  $region14: #{discriminator3d_forward.6} parent=0 // pred_check
    _
  $region15: #{discriminator3d_forward.6} parent=0 // pred_check_branch
    %1435 = sbr.rel (0) target = $region17
  $region16: #{discriminator3d_forward.6} parent=0 // pred_region
    _
  $region17: #{discriminator3d_forward.6} parent=0 // pred_fallthru
    _
  // Predicated region
  $region18: #{discriminator3d_forward.6} parent=0 // pred_check
    _
  $region19: #{discriminator3d_forward.6} parent=0 // pred_check_branch
    %1437 = sbr.rel (0) target = $region21
  $region20: #{discriminator3d_forward.6} parent=0 // pred_region
    _
  $region21: #{discriminator3d_forward.6} parent=0 // pred_fallthru
    _

// kernel: discriminator3d_forward.7
$region0: #{discriminator3d_forward.7}
  #allocation0 [shape = 'u32[]', space=smem, size = 0x4, offset = 0x4, fixed_abs, tag = 'smem constant byte address 0x4 - core index']
  #allocation1 [shape = 'u32[144,128]{1,0:T(1,128)}', space=vmem, size = 0x12000, scoped, tag = 'internal scratch']
  #allocation2 [shape = 'f32[128,128]{1,0:T(8,128)}', space=vmem, size = 0x10000, scoped, tag = 'scratch operand']
  %s0 = inlined_call_operand.vmem [shape: bf16[128,3072], index: 0, kind: input, shape index: {}]
  %s1 = inlined_call_operand.vmem [shape: bf16[3072,128], index: 1, kind: input, shape index: {}]
  %s2 = inlined_call_operand.vmem [shape: f32[1,128], index: 2, kind: input, shape index: {}]
  %s3 = inlined_call_operand.vmem [shape: f32[128,128], index: 3, kind: output, shape index: {}]
  %s4 = sld [smem:[#allocation0]]
  $region76: #{discriminator3d_forward.7} parent=0
    _
  %s6 = ssub.s32 1, %s4
  %s7 = scalar_select 0, %s6, %s4
  $region1: #{discriminator3d_forward.7} parent=0
    #allocation3 [shape = 'u8[786432]{0}', space=vmem, size = 0xc0000, scoped, tag = 'input window, operand 0']
    loop: start=0, step=1, limit=4
    $region2: #{discriminator3d_forward.7} parent=1 // loop_pre_header
      _
    $region3: #{discriminator3d_forward.7} parent=1 // loop_header
      %s9 = sphi 0, %s13
      %p10 = scmp.ge.s32.totalorder %s9, 4
      %s16 = sphi 0, %s28
      %s17 = sphi 0, %s24
      %s18 = sphi 0, %s16
      %s19 = sphi 0, %s17
      %s20 = sphi 0, %s18
      %s21 = sphi 0, %s19
      %s33 = sphi 0, %s35
      %s36 = sphi 0, %s33
      %s37 = sphi 0, %s36
      %s53 = sphi 0, %s37
      %s57 = sphi 0, %s57
      %s59 = sphi 0, %s57
      %s60 = sphi 0, %s59
      %s74 = sphi 0, %s60
      %s78 = sphi 0, %s78
      %s80 = sphi 0, %s78
      %s81 = sphi 0, %s80
      %s95 = sphi 0, %s81
      %s101 = sphi 0, %s103
      %s104 = sphi 0, %s101
      %s105 = sphi 0, %s104
      %s121 = sphi 0, %s105
    $region4: #{discriminator3d_forward.7} parent=1 // loop_header_branch
      %12 = sbr.rel (%p10) target = $region8
    $region5: #{discriminator3d_forward.7} parent=1 // loop_body
      %s14 = ssub.s32 %s9, 1
      %s15 = ssub.s32 %s9, 2
      %s22 = sadd.s32 1, %s17
      %p23 = scmp.ge.s32.totalorder %s22, 2
      %s24 = scalar_select %p23, 0, %s22
      %s25 = sadd.s32 1, %s16
      %s26 = scalar_select %p23, %s25, %s16
      %p27 = scmp.ge.s32.totalorder %s26, 1
      %s28 = scalar_select %p27, 0, %s26
      %s29 = ssub.s32 %s16, %s28
      %s30 = ssub.s32 %s17, %s24
      %s31 = sor.u32 %s29, %s30
      %p32 = scmp.eq.s32.totalorder %s31, 0
      %s34 = sadd.s32 %s33, 1
      %s35 = scalar_select %p32, %s33, %s34
      %p38 = pneg %p32
      %p39 = scmp.eq.s32.totalorder %s9, 1
      %p40 = por %p38, %p39
      %p41 = scmp.ne.s32.totalorder %s33, %s36
      %p42 = scmp.eq.s32.totalorder %s9, 0
      %p43 = por %p41, %p42
      %p44 = scmp.ne.s32.totalorder %s33, %s36
      %p45 = scmp.eq.s32.totalorder %s14, 1
      %p46 = por %p44, %p45
      %p47 = scmp.ne.s32.totalorder %s36, %s37
      %p48 = scmp.eq.s32.totalorder %s14, 0
      %p49 = por %p47, %p48
      %p50 = scmp.ne.s32.totalorder %s36, %s37
      %p51 = scmp.eq.s32.totalorder %s15, 1
      %p52 = por %p50, %p51
      %p54 = scmp.ne.s32.totalorder %s37, %s53
      %p55 = scmp.eq.s32.totalorder %s15, 0
      %p56 = por %p54, %p55
      %s58 = sadd.s32 %s57, 1
      %p61 = scmp.eq.s32.totalorder %s9, 1
      %p62 = scmp.ne.s32.totalorder %s57, %s59
      %p63 = scmp.eq.s32.totalorder %s9, 0
      %p64 = por %p62, %p63
      %p65 = scmp.ne.s32.totalorder %s57, %s59
      %p66 = scmp.eq.s32.totalorder %s14, 1
      %p67 = por %p65, %p66
      %p68 = scmp.ne.s32.totalorder %s59, %s60
      %p69 = scmp.eq.s32.totalorder %s14, 0
      %p70 = por %p68, %p69
      %p71 = scmp.ne.s32.totalorder %s59, %s60
      %p72 = scmp.eq.s32.totalorder %s15, 1
      %p73 = por %p71, %p72
      %p75 = scmp.ne.s32.totalorder %s60, %s74
      %p76 = scmp.eq.s32.totalorder %s15, 0
      %p77 = por %p75, %p76
      %s79 = sadd.s32 %s78, 1
      %p82 = scmp.eq.s32.totalorder %s9, 1
      %p83 = scmp.ne.s32.totalorder %s78, %s80
      %p84 = scmp.eq.s32.totalorder %s9, 0
      %p85 = por %p83, %p84
      %p86 = scmp.ne.s32.totalorder %s78, %s80
      %p87 = scmp.eq.s32.totalorder %s14, 1
      %p88 = por %p86, %p87
      %p89 = scmp.ne.s32.totalorder %s80, %s81
      %p90 = scmp.eq.s32.totalorder %s14, 0
      %p91 = por %p89, %p90
      %p92 = scmp.ne.s32.totalorder %s80, %s81
      %p93 = scmp.eq.s32.totalorder %s15, 1
      %p94 = por %p92, %p93
      %p96 = scmp.ne.s32.totalorder %s81, %s95
      %p97 = scmp.eq.s32.totalorder %s15, 0
      %p98 = por %p96, %p97
      %s99 = ssub.s32 %s16, %s28
      %p100 = scmp.eq.s32.totalorder %s99, 0
      %s102 = sadd.s32 %s101, 1
      %s103 = scalar_select %p100, %s101, %s102
      %p106 = pneg %p100
      %p107 = scmp.eq.s32.totalorder %s9, 1
      %p108 = por %p106, %p107
      %p109 = scmp.ne.s32.totalorder %s101, %s104
      %p110 = scmp.eq.s32.totalorder %s9, 0
      %p111 = por %p109, %p110
      %p112 = scmp.ne.s32.totalorder %s101, %s104
      %p113 = scmp.eq.s32.totalorder %s14, 1
      %p114 = por %p112, %p113
      %p115 = scmp.ne.s32.totalorder %s104, %s105
      %p116 = scmp.eq.s32.totalorder %s14, 0
      %p117 = por %p115, %p116
      %p118 = scmp.ne.s32.totalorder %s104, %s105
      %p119 = scmp.eq.s32.totalorder %s15, 1
      %p120 = por %p118, %p119
      %p122 = scmp.ne.s32.totalorder %s105, %s121
      %p123 = scmp.eq.s32.totalorder %s15, 0
      %p124 = por %p122, %p123
      %p125 = scmp.le.s32.totalorder 1, %s9
      %p126 = scmp.lt.s32.totalorder %s9, 3
      %p127 = pnand %p125, %p126
      %p128 = pneg %p127
      // Predicated region
      $region9: #{discriminator3d_forward.7} parent=5 // pred_check
        _
      $region10: #{discriminator3d_forward.7} parent=5 // pred_check_branch
        %130 = sbr.rel (%p127) target = $region12
      $region11: #{discriminator3d_forward.7} parent=5 // pred_region
        %s131 = ssub.s32 %s9, 1
        // Predicated region
        $region13: #{discriminator3d_forward.7} parent=11 // pred_check
          %p132 = pneg %p70
        $region14: #{discriminator3d_forward.7} parent=11 // pred_check_branch
          %134 = sbr.rel (%p132) target = $region16
        $region15: #{discriminator3d_forward.7} parent=11 // pred_region
          _
        $region16: #{discriminator3d_forward.7} parent=11 // pred_fallthru
          _
        // Predicated region
        $region17: #{discriminator3d_forward.7} parent=11 // pred_check
          %p135 = pneg %p91
        $region18: #{discriminator3d_forward.7} parent=11 // pred_check_branch
          %137 = sbr.rel (%p135) target = $region20
        $region19: #{discriminator3d_forward.7} parent=11 // pred_region
          _
        $region20: #{discriminator3d_forward.7} parent=11 // pred_fallthru
          _
      $region12: #{discriminator3d_forward.7} parent=5 // pred_fallthru
        _
      %p138 = scmp.lt.s32.totalorder %s9, 2
      // Predicated region
      $region21: #{discriminator3d_forward.7} parent=5 // pred_check
        %p139 = pneg %p138
      $region22: #{discriminator3d_forward.7} parent=5 // pred_check_branch
        %141 = sbr.rel (%p139) target = $region24
      $region23: #{discriminator3d_forward.7} parent=5 // pred_region
        // Predicated region
        $region25: #{discriminator3d_forward.7} parent=23 // pred_check
          %p142 = pneg %p43
        $region26: #{discriminator3d_forward.7} parent=23 // pred_check_branch
          %144 = sbr.rel (%p142) target = $region28
        $region27: #{discriminator3d_forward.7} parent=23 // pred_region
          %s145 = sand.u32 %s33, 1
          %s146 = sand.u32 %s33, 1
          %s147 = smul.addr %s146, 768
          %s148 = scalar_lea.vmem [#allocation3], %s147
          %s149 = smul.u32 16, %s16
          %s150 = smul.u32 12, %s17
          %s151 = smul.addr %s149, 24
          %s152 = sadd.s32 %s150, %s151
          %s153 = smul.addr %s152, 4
          %s154 = scalar_lea.vmem %s0, %s153
          // Predicated region
          $region29: #{discriminator3d_forward.7} parent=27 // pred_check
            _
          $region30: #{discriminator3d_forward.7} parent=27 // pred_check_branch
            %156 = sbr.rel (0) target = $region32
          $region31: #{discriminator3d_forward.7} parent=27 // pred_region
            // Predicated region
            $region33: #{discriminator3d_forward.7} parent=31 // pred_check
              _
            $region34: #{discriminator3d_forward.7} parent=31 // pred_check_branch
              %158 = sbr.rel (0) target = $region36
            $region35: #{discriminator3d_forward.7} parent=31 // pred_region
              loop: start=0, step=1, limit=1
              $region37: #{discriminator3d_forward.7} parent=35 // loop_pre_header
                _
              $region38: #{discriminator3d_forward.7} parent=35 // loop_header
                %s160 = sphi 0, %s164
                %p161 = scmp.ge.s32.totalorder %s160, 1
                %s165 = sphi %s154, %s154
                %s166 = sphi %s148, %s148
              $region39: #{discriminator3d_forward.7} parent=35 // loop_header_branch
                %163 = sbr.rel (%p161) target = $region43
              $region40: #{discriminator3d_forward.7} parent=35 // loop_body
                %v167 = vld [vmem:[%s165] sm:$0xff]
                %168 = vst [vmem:[%s166] sm:$0xff] %v167
                %v169 = vld [vmem:[%s165 + $0x8] sm:$0xff]
                %170 = vst [vmem:[%s166 + $0x8] sm:$0xff] %v169
                %v171 = vld [vmem:[%s165 + $0x10] sm:$0xff]
                %172 = vst [vmem:[%s166 + $0x10] sm:$0xff] %v171
                %v173 = vld [vmem:[%s165 + $0x18] sm:$0xff]
                %174 = vst [vmem:[%s166 + $0x18] sm:$0xff] %v173
                %v175 = vld [vmem:[%s165 + $0x20] sm:$0xff]
                %176 = vst [vmem:[%s166 + $0x20] sm:$0xff] %v175
                %v177 = vld [vmem:[%s165 + $0x28] sm:$0xff]
                %178 = vst [vmem:[%s166 + $0x28] sm:$0xff] %v177
                %v179 = vld [vmem:[%s165 + $0x60] sm:$0xff]
                %180 = vst [vmem:[%s166 + $0x30] sm:$0xff] %v179
                %v181 = vld [vmem:[%s165 + $0x68] sm:$0xff]
                %182 = vst [vmem:[%s166 + $0x38] sm:$0xff] %v181
                %v183 = vld [vmem:[%s165 + $0x70] sm:$0xff]
                %184 = vst [vmem:[%s166 + $0x40] sm:$0xff] %v183
                %v185 = vld [vmem:[%s165 + $0x78] sm:$0xff]
                %186 = vst [vmem:[%s166 + $0x48] sm:$0xff] %v185
                %v187 = vld [vmem:[%s165 + $0x80] sm:$0xff]
                %188 = vst [vmem:[%s166 + $0x50] sm:$0xff] %v187
                %v189 = vld [vmem:[%s165 + $0x88] sm:$0xff]
                %190 = vst [vmem:[%s166 + $0x58] sm:$0xff] %v189
                %v191 = vld [vmem:[%s165 + $0xc0] sm:$0xff]
                %192 = vst [vmem:[%s166 + $0x60] sm:$0xff] %v191
                %v193 = vld [vmem:[%s165 + $0xc8] sm:$0xff]
                %194 = vst [vmem:[%s166 + $0x68] sm:$0xff] %v193
                %v195 = vld [vmem:[%s165 + $0xd0] sm:$0xff]
                %196 = vst [vmem:[%s166 + $0x70] sm:$0xff] %v195
                %v197 = vld [vmem:[%s165 + $0xd8] sm:$0xff]
                %198 = vst [vmem:[%s166 + $0x78] sm:$0xff] %v197
                %v199 = vld [vmem:[%s165 + $0xe0] sm:$0xff]
                %200 = vst [vmem:[%s166 + $0x80] sm:$0xff] %v199
                %v201 = vld [vmem:[%s165 + $0xe8] sm:$0xff]
                %202 = vst [vmem:[%s166 + $0x88] sm:$0xff] %v201
                %v203 = vld [vmem:[%s165 + $0x120] sm:$0xff]
                %204 = vst [vmem:[%s166 + $0x90] sm:$0xff] %v203
                %v205 = vld [vmem:[%s165 + $0x128] sm:$0xff]
                %206 = vst [vmem:[%s166 + $0x98] sm:$0xff] %v205
                %v207 = vld [vmem:[%s165 + $0x130] sm:$0xff]
                %208 = vst [vmem:[%s166 + $0xa0] sm:$0xff] %v207
                %v209 = vld [vmem:[%s165 + $0x138] sm:$0xff]
                %210 = vst [vmem:[%s166 + $0xa8] sm:$0xff] %v209
                %v211 = vld [vmem:[%s165 + $0x140] sm:$0xff]
                %212 = vst [vmem:[%s166 + $0xb0] sm:$0xff] %v211
                %v213 = vld [vmem:[%s165 + $0x148] sm:$0xff]
                %214 = vst [vmem:[%s166 + $0xb8] sm:$0xff] %v213
                %v215 = vld [vmem:[%s165 + $0x180] sm:$0xff]
                %216 = vst [vmem:[%s166 + $0xc0] sm:$0xff] %v215
                %v217 = vld [vmem:[%s165 + $0x188] sm:$0xff]
                %218 = vst [vmem:[%s166 + $0xc8] sm:$0xff] %v217
                %v219 = vld [vmem:[%s165 + $0x190] sm:$0xff]
                %220 = vst [vmem:[%s166 + $0xd0] sm:$0xff] %v219
                %v221 = vld [vmem:[%s165 + $0x198] sm:$0xff]
                %222 = vst [vmem:[%s166 + $0xd8] sm:$0xff] %v221
                %v223 = vld [vmem:[%s165 + $0x1a0] sm:$0xff]
                %224 = vst [vmem:[%s166 + $0xe0] sm:$0xff] %v223
                %v225 = vld [vmem:[%s165 + $0x1a8] sm:$0xff]
                %226 = vst [vmem:[%s166 + $0xe8] sm:$0xff] %v225
                %v227 = vld [vmem:[%s165 + $0x1e0] sm:$0xff]
                %228 = vst [vmem:[%s166 + $0xf0] sm:$0xff] %v227
                %v229 = vld [vmem:[%s165 + $0x1e8] sm:$0xff]
                %230 = vst [vmem:[%s166 + $0xf8] sm:$0xff] %v229
                %v231 = vld [vmem:[%s165 + $0x1f0] sm:$0xff]
                %232 = vst [vmem:[%s166 + $0x100] sm:$0xff] %v231
                %v233 = vld [vmem:[%s165 + $0x1f8] sm:$0xff]
                %234 = vst [vmem:[%s166 + $0x108] sm:$0xff] %v233
                %v235 = vld [vmem:[%s165 + $0x200] sm:$0xff]
                %236 = vst [vmem:[%s166 + $0x110] sm:$0xff] %v235
                %v237 = vld [vmem:[%s165 + $0x208] sm:$0xff]
                %238 = vst [vmem:[%s166 + $0x118] sm:$0xff] %v237
                %v239 = vld [vmem:[%s165 + $0x240] sm:$0xff]
                %240 = vst [vmem:[%s166 + $0x120] sm:$0xff] %v239
                %v241 = vld [vmem:[%s165 + $0x248] sm:$0xff]
                %242 = vst [vmem:[%s166 + $0x128] sm:$0xff] %v241
                %v243 = vld [vmem:[%s165 + $0x250] sm:$0xff]
                %244 = vst [vmem:[%s166 + $0x130] sm:$0xff] %v243
                %v245 = vld [vmem:[%s165 + $0x258] sm:$0xff]
                %246 = vst [vmem:[%s166 + $0x138] sm:$0xff] %v245
                %v247 = vld [vmem:[%s165 + $0x260] sm:$0xff]
                %248 = vst [vmem:[%s166 + $0x140] sm:$0xff] %v247
                %v249 = vld [vmem:[%s165 + $0x268] sm:$0xff]
                %250 = vst [vmem:[%s166 + $0x148] sm:$0xff] %v249
                %v251 = vld [vmem:[%s165 + $0x2a0] sm:$0xff]
                %252 = vst [vmem:[%s166 + $0x150] sm:$0xff] %v251
                %v253 = vld [vmem:[%s165 + $0x2a8] sm:$0xff]
                %254 = vst [vmem:[%s166 + $0x158] sm:$0xff] %v253
                %v255 = vld [vmem:[%s165 + $0x2b0] sm:$0xff]
                %256 = vst [vmem:[%s166 + $0x160] sm:$0xff] %v255
                %v257 = vld [vmem:[%s165 + $0x2b8] sm:$0xff]
                %258 = vst [vmem:[%s166 + $0x168] sm:$0xff] %v257
                %v259 = vld [vmem:[%s165 + $0x2c0] sm:$0xff]
                %260 = vst [vmem:[%s166 + $0x170] sm:$0xff] %v259
                %v261 = vld [vmem:[%s165 + $0x2c8] sm:$0xff]
                %262 = vst [vmem:[%s166 + $0x178] sm:$0xff] %v261
                %v263 = vld [vmem:[%s165 + $0x300] sm:$0xff]
                %264 = vst [vmem:[%s166 + $0x180] sm:$0xff] %v263
                %v265 = vld [vmem:[%s165 + $0x308] sm:$0xff]
                %266 = vst [vmem:[%s166 + $0x188] sm:$0xff] %v265
                %v267 = vld [vmem:[%s165 + $0x310] sm:$0xff]
                %268 = vst [vmem:[%s166 + $0x190] sm:$0xff] %v267
                %v269 = vld [vmem:[%s165 + $0x318] sm:$0xff]
                %270 = vst [vmem:[%s166 + $0x198] sm:$0xff] %v269
                %v271 = vld [vmem:[%s165 + $0x320] sm:$0xff]
                %272 = vst [vmem:[%s166 + $0x1a0] sm:$0xff] %v271
                %v273 = vld [vmem:[%s165 + $0x328] sm:$0xff]
                %274 = vst [vmem:[%s166 + $0x1a8] sm:$0xff] %v273
                %v275 = vld [vmem:[%s165 + $0x360] sm:$0xff]
                %276 = vst [vmem:[%s166 + $0x1b0] sm:$0xff] %v275
                %v277 = vld [vmem:[%s165 + $0x368] sm:$0xff]
                %278 = vst [vmem:[%s166 + $0x1b8] sm:$0xff] %v277
                %v279 = vld [vmem:[%s165 + $0x370] sm:$0xff]
                %280 = vst [vmem:[%s166 + $0x1c0] sm:$0xff] %v279
                %v281 = vld [vmem:[%s165 + $0x378] sm:$0xff]
                %282 = vst [vmem:[%s166 + $0x1c8] sm:$0xff] %v281
                %v283 = vld [vmem:[%s165 + $0x380] sm:$0xff]
                %284 = vst [vmem:[%s166 + $0x1d0] sm:$0xff] %v283
                %v285 = vld [vmem:[%s165 + $0x388] sm:$0xff]
                %286 = vst [vmem:[%s166 + $0x1d8] sm:$0xff] %v285
                %v287 = vld [vmem:[%s165 + $0x3c0] sm:$0xff]
                %288 = vst [vmem:[%s166 + $0x1e0] sm:$0xff] %v287
                %v289 = vld [vmem:[%s165 + $0x3c8] sm:$0xff]
                %290 = vst [vmem:[%s166 + $0x1e8] sm:$0xff] %v289
                %v291 = vld [vmem:[%s165 + $0x3d0] sm:$0xff]
                %292 = vst [vmem:[%s166 + $0x1f0] sm:$0xff] %v291
                %v293 = vld [vmem:[%s165 + $0x3d8] sm:$0xff]
                %294 = vst [vmem:[%s166 + $0x1f8] sm:$0xff] %v293
                %v295 = vld [vmem:[%s165 + $0x3e0] sm:$0xff]
                %296 = vst [vmem:[%s166 + $0x200] sm:$0xff] %v295
                %v297 = vld [vmem:[%s165 + $0x3e8] sm:$0xff]
                %298 = vst [vmem:[%s166 + $0x208] sm:$0xff] %v297
                %v299 = vld [vmem:[%s165 + $0x420] sm:$0xff]
                %300 = vst [vmem:[%s166 + $0x210] sm:$0xff] %v299
                %v301 = vld [vmem:[%s165 + $0x428] sm:$0xff]
                %302 = vst [vmem:[%s166 + $0x218] sm:$0xff] %v301
                %v303 = vld [vmem:[%s165 + $0x430] sm:$0xff]
                %304 = vst [vmem:[%s166 + $0x220] sm:$0xff] %v303
                %v305 = vld [vmem:[%s165 + $0x438] sm:$0xff]
                %306 = vst [vmem:[%s166 + $0x228] sm:$0xff] %v305
                %v307 = vld [vmem:[%s165 + $0x440] sm:$0xff]
                %308 = vst [vmem:[%s166 + $0x230] sm:$0xff] %v307
                %v309 = vld [vmem:[%s165 + $0x448] sm:$0xff]
                %310 = vst [vmem:[%s166 + $0x238] sm:$0xff] %v309
                %v311 = vld [vmem:[%s165 + $0x480] sm:$0xff]
                %312 = vst [vmem:[%s166 + $0x240] sm:$0xff] %v311
                %v313 = vld [vmem:[%s165 + $0x488] sm:$0xff]
                %314 = vst [vmem:[%s166 + $0x248] sm:$0xff] %v313
                %v315 = vld [vmem:[%s165 + $0x490] sm:$0xff]
                %316 = vst [vmem:[%s166 + $0x250] sm:$0xff] %v315
                %v317 = vld [vmem:[%s165 + $0x498] sm:$0xff]
                %318 = vst [vmem:[%s166 + $0x258] sm:$0xff] %v317
                %v319 = vld [vmem:[%s165 + $0x4a0] sm:$0xff]
                %320 = vst [vmem:[%s166 + $0x260] sm:$0xff] %v319
                %v321 = vld [vmem:[%s165 + $0x4a8] sm:$0xff]
                %322 = vst [vmem:[%s166 + $0x268] sm:$0xff] %v321
                %v323 = vld [vmem:[%s165 + $0x4e0] sm:$0xff]
                %324 = vst [vmem:[%s166 + $0x270] sm:$0xff] %v323
                %v325 = vld [vmem:[%s165 + $0x4e8] sm:$0xff]
                %326 = vst [vmem:[%s166 + $0x278] sm:$0xff] %v325
                %v327 = vld [vmem:[%s165 + $0x4f0] sm:$0xff]
                %328 = vst [vmem:[%s166 + $0x280] sm:$0xff] %v327
                %v329 = vld [vmem:[%s165 + $0x4f8] sm:$0xff]
                %330 = vst [vmem:[%s166 + $0x288] sm:$0xff] %v329
                %v331 = vld [vmem:[%s165 + $0x500] sm:$0xff]
                %332 = vst [vmem:[%s166 + $0x290] sm:$0xff] %v331
                %v333 = vld [vmem:[%s165 + $0x508] sm:$0xff]
                %334 = vst [vmem:[%s166 + $0x298] sm:$0xff] %v333
                %v335 = vld [vmem:[%s165 + $0x540] sm:$0xff]
                %336 = vst [vmem:[%s166 + $0x2a0] sm:$0xff] %v335
                %v337 = vld [vmem:[%s165 + $0x548] sm:$0xff]
                %338 = vst [vmem:[%s166 + $0x2a8] sm:$0xff] %v337
                %v339 = vld [vmem:[%s165 + $0x550] sm:$0xff]
                %340 = vst [vmem:[%s166 + $0x2b0] sm:$0xff] %v339
                %v341 = vld [vmem:[%s165 + $0x558] sm:$0xff]
                %342 = vst [vmem:[%s166 + $0x2b8] sm:$0xff] %v341
                %v343 = vld [vmem:[%s165 + $0x560] sm:$0xff]
                %344 = vst [vmem:[%s166 + $0x2c0] sm:$0xff] %v343
                %v345 = vld [vmem:[%s165 + $0x568] sm:$0xff]
                %346 = vst [vmem:[%s166 + $0x2c8] sm:$0xff] %v345
                %v347 = vld [vmem:[%s165 + $0x5a0] sm:$0xff]
                %348 = vst [vmem:[%s166 + $0x2d0] sm:$0xff] %v347
                %v349 = vld [vmem:[%s165 + $0x5a8] sm:$0xff]
                %350 = vst [vmem:[%s166 + $0x2d8] sm:$0xff] %v349
                %v351 = vld [vmem:[%s165 + $0x5b0] sm:$0xff]
                %352 = vst [vmem:[%s166 + $0x2e0] sm:$0xff] %v351
                %v353 = vld [vmem:[%s165 + $0x5b8] sm:$0xff]
                %354 = vst [vmem:[%s166 + $0x2e8] sm:$0xff] %v353
                %v355 = vld [vmem:[%s165 + $0x5c0] sm:$0xff]
                %356 = vst [vmem:[%s166 + $0x2f0] sm:$0xff] %v355
                %v357 = vld [vmem:[%s165 + $0x5c8] sm:$0xff]
                %358 = vst [vmem:[%s166 + $0x2f8] sm:$0xff] %v357
              $region41: #{discriminator3d_forward.7} parent=35 // loop_footer
                %s164 = sadd.s32 1, %s160
              $region42: #{discriminator3d_forward.7} parent=35 // loop_footer_branch
                %159 = sbr.rel target = $region38
              $region43: #{discriminator3d_forward.7} parent=35 // loop_exit
                _
            $region36: #{discriminator3d_forward.7} parent=31 // pred_fallthru
              _
            // Predicated region
            $region44: #{discriminator3d_forward.7} parent=31 // pred_check
              _
            $region45: #{discriminator3d_forward.7} parent=31 // pred_check_branch
              %360 = sbr.rel target = $region47
            $region46: #{discriminator3d_forward.7} parent=31 // pred_region
              _
            $region47: #{discriminator3d_forward.7} parent=31 // pred_fallthru
              _
          $region32: #{discriminator3d_forward.7} parent=27 // pred_fallthru
            _
          %361 = vnop
        $region28: #{discriminator3d_forward.7} parent=23 // pred_fallthru
          _
      $region24: #{discriminator3d_forward.7} parent=5 // pred_fallthru
        _
      %p362 = scmp.le.s32.totalorder 1, %s9
      %p363 = scmp.lt.s32.totalorder %s9, 3
      %p364 = pnand %p362, %p363
      %p365 = pneg %p364
      // Predicated region
      $region48: #{discriminator3d_forward.7} parent=5 // pred_check
        _
      $region49: #{discriminator3d_forward.7} parent=5 // pred_check_branch
        %367 = sbr.rel (%p364) target = $region51
      $region50: #{discriminator3d_forward.7} parent=5 // pred_region
        %s368 = ssub.s32 %s9, 1
        %s369 = sand.u32 %s36, 1
        %s370 = sand.u32 %s36, 1
        %s371 = smul.addr %s370, 768
        %s372 = scalar_lea.vmem [#allocation3], %s371
        // Predicated region
        $region52: #{discriminator3d_forward.7} parent=50 // pred_check
          %p373 = pneg %p49
        $region53: #{discriminator3d_forward.7} parent=50 // pred_check_branch
          %375 = sbr.rel (%p373) target = $region55
        $region54: #{discriminator3d_forward.7} parent=50 // pred_region
          _
        $region55: #{discriminator3d_forward.7} parent=50 // pred_fallthru
          _
        %s376 = sand.u32 %s36, 1
        %s377 = sand.u32 %s36, 1
        %s378 = smul.addr %s377, 768
        %s379 = scalar_lea.vmem [#allocation3], %s378
        %p380 = pneg %p49
        %p381 = pneg %p46
        %p382 = pneg %p70
        %p383 = pneg %p67
        %p384 = pneg %p91
        %p385 = pneg %p88
        %p386 = pneg %p117
        %p387 = pneg %p114
        %s388 = smul.u32 16, %s18
        %p389 = scmp.lt.s32.totalorder %s388, 15
        %s390 = scalar_select %p389, %s388, 15
        %s391 = smul.addr %s390, 8
        %s392 = scalar_lea.vmem %s3, %s391
        %s393 = smul.u32 16, %s18
        %s394 = smul.u32 12, %s19
        %s395 = smul.u32 16, %s18
        %p396 = scmp.lt.s32.totalorder %s395, 15
        %s397 = scalar_select %p396, %s395, 15
        %s398 = smul.addr %s397, 8
        %s399 = scalar_lea.vmem %s3, %s398
        %s400 = smul.u32 16, %s18
        %p402 = scmp.eq.s32.totalorder %s19, 0
        // Predicated region
        $region56: #{discriminator3d_forward.7} parent=50 // pred_check
          %p403 = pneg %p402
        $region57: #{discriminator3d_forward.7} parent=50 // pred_check_branch
          %405 = sbr.rel (%p403) target = $region59
        $region58: #{discriminator3d_forward.7} parent=50 // pred_region
          %406 = vst [vmem:[#allocation2] sm:$0xff] 0.0
          %407 = vst [vmem:[#allocation2 + $0x8] sm:$0xff] 0.0
          %408 = vst [vmem:[#allocation2 + $0x10] sm:$0xff] 0.0
          %409 = vst [vmem:[#allocation2 + $0x18] sm:$0xff] 0.0
          %410 = vst [vmem:[#allocation2 + $0x20] sm:$0xff] 0.0
          %411 = vst [vmem:[#allocation2 + $0x28] sm:$0xff] 0.0
          %412 = vst [vmem:[#allocation2 + $0x30] sm:$0xff] 0.0
          %413 = vst [vmem:[#allocation2 + $0x38] sm:$0xff] 0.0
          %414 = vst [vmem:[#allocation2 + $0x40] sm:$0xff] 0.0
          %415 = vst [vmem:[#allocation2 + $0x48] sm:$0xff] 0.0
          %416 = vst [vmem:[#allocation2 + $0x50] sm:$0xff] 0.0
          %417 = vst [vmem:[#allocation2 + $0x58] sm:$0xff] 0.0
          %418 = vst [vmem:[#allocation2 + $0x60] sm:$0xff] 0.0
          %419 = vst [vmem:[#allocation2 + $0x68] sm:$0xff] 0.0
          %420 = vst [vmem:[#allocation2 + $0x70] sm:$0xff] 0.0
          %421 = vst [vmem:[#allocation2 + $0x78] sm:$0xff] 0.0
        $region59: #{discriminator3d_forward.7} parent=50 // pred_fallthru
          _
        %s422 = smul.u32 %s19, 1536
        %v423 = vld [vmem:[#allocation2] sm:$0xff]
        %v424 = vld [vmem:[#allocation2 + $0x8] sm:$0xff]
        %v425 = vld [vmem:[#allocation2 + $0x10] sm:$0xff]
        %v426 = vld [vmem:[#allocation2 + $0x18] sm:$0xff]
        %v427 = vld [vmem:[#allocation2 + $0x20] sm:$0xff]
        %v428 = vld [vmem:[#allocation2 + $0x28] sm:$0xff]
        %v429 = vld [vmem:[#allocation2 + $0x30] sm:$0xff]
        %v430 = vld [vmem:[#allocation2 + $0x38] sm:$0xff]
        %v431 = vld [vmem:[#allocation2 + $0x40] sm:$0xff]
        %v432 = vld [vmem:[#allocation2 + $0x48] sm:$0xff]
        %v433 = vld [vmem:[#allocation2 + $0x50] sm:$0xff]
        %v434 = vld [vmem:[#allocation2 + $0x58] sm:$0xff]
        %v435 = vld [vmem:[#allocation2 + $0x60] sm:$0xff]
        %v436 = vld [vmem:[#allocation2 + $0x68] sm:$0xff]
        %v437 = vld [vmem:[#allocation2 + $0x70] sm:$0xff]
        %v438 = vld [vmem:[#allocation2 + $0x78] sm:$0xff]
        %v439 = vld [vmem:[%s372] sm:$0xff]
        %v440 = vld [vmem:[%s372 + $0x8] sm:$0xff]
        %v441 = vld [vmem:[%s372 + $0x10] sm:$0xff]
        %v442 = vld [vmem:[%s372 + $0x18] sm:$0xff]
        %v443 = vld [vmem:[%s372 + $0x20] sm:$0xff]
        %v444 = vld [vmem:[%s372 + $0x28] sm:$0xff]
        %v445 = vld [vmem:[%s372 + $0x30] sm:$0xff]
        %v446 = vld [vmem:[%s372 + $0x38] sm:$0xff]
        %v447 = vld [vmem:[%s372 + $0x40] sm:$0xff]
        %v448 = vld [vmem:[%s372 + $0x48] sm:$0xff]
        %v449 = vld [vmem:[%s372 + $0x50] sm:$0xff]
        %v450 = vld [vmem:[%s372 + $0x58] sm:$0xff]
        %v451 = vld [vmem:[%s372 + $0x60] sm:$0xff]
        %v452 = vld [vmem:[%s372 + $0x68] sm:$0xff]
        %v453 = vld [vmem:[%s372 + $0x70] sm:$0xff]
        %v454 = vld [vmem:[%s372 + $0x78] sm:$0xff]
        %v455 = vld [vmem:[%s372 + $0x80] sm:$0xff]
        %v456 = vld [vmem:[%s372 + $0x88] sm:$0xff]
        %v457 = vld [vmem:[%s372 + $0x90] sm:$0xff]
        %v458 = vld [vmem:[%s372 + $0x98] sm:$0xff]
        %v459 = vld [vmem:[%s372 + $0xa0] sm:$0xff]
        %v460 = vld [vmem:[%s372 + $0xa8] sm:$0xff]
        %v461 = vld [vmem:[%s372 + $0xb0] sm:$0xff]
        %v462 = vld [vmem:[%s372 + $0xb8] sm:$0xff]
        %v463 = vld [vmem:[%s372 + $0xc0] sm:$0xff]
        %v464 = vld [vmem:[%s372 + $0xc8] sm:$0xff]
        %v465 = vld [vmem:[%s372 + $0xd0] sm:$0xff]
        %v466 = vld [vmem:[%s372 + $0xd8] sm:$0xff]
        %v467 = vld [vmem:[%s372 + $0xe0] sm:$0xff]
        %v468 = vld [vmem:[%s372 + $0xe8] sm:$0xff]
        %v469 = vld [vmem:[%s372 + $0xf0] sm:$0xff]
        %v470 = vld [vmem:[%s372 + $0xf8] sm:$0xff]
        %v471 = vld [vmem:[%s372 + $0x100] sm:$0xff]
        %v472 = vld [vmem:[%s372 + $0x108] sm:$0xff]
        %v473 = vld [vmem:[%s372 + $0x110] sm:$0xff]
        %v474 = vld [vmem:[%s372 + $0x118] sm:$0xff]
        %v475 = vld [vmem:[%s372 + $0x120] sm:$0xff]
        %v476 = vld [vmem:[%s372 + $0x128] sm:$0xff]
        %v477 = vld [vmem:[%s372 + $0x130] sm:$0xff]
        %v478 = vld [vmem:[%s372 + $0x138] sm:$0xff]
        %v479 = vld [vmem:[%s372 + $0x140] sm:$0xff]
        %v480 = vld [vmem:[%s372 + $0x148] sm:$0xff]
        %v481 = vld [vmem:[%s372 + $0x150] sm:$0xff]
        %v482 = vld [vmem:[%s372 + $0x158] sm:$0xff]
        %v483 = vld [vmem:[%s372 + $0x160] sm:$0xff]
        %v484 = vld [vmem:[%s372 + $0x168] sm:$0xff]
        %v485 = vld [vmem:[%s372 + $0x170] sm:$0xff]
        %v486 = vld [vmem:[%s372 + $0x178] sm:$0xff]
        %v487 = vld [vmem:[%s372 + $0x180] sm:$0xff]
        %v488 = vld [vmem:[%s372 + $0x188] sm:$0xff]
        %v489 = vld [vmem:[%s372 + $0x190] sm:$0xff]
        %v490 = vld [vmem:[%s372 + $0x198] sm:$0xff]
        %v491 = vld [vmem:[%s372 + $0x1a0] sm:$0xff]
        %v492 = vld [vmem:[%s372 + $0x1a8] sm:$0xff]
        %v493 = vld [vmem:[%s372 + $0x1b0] sm:$0xff]
        %v494 = vld [vmem:[%s372 + $0x1b8] sm:$0xff]
        %v495 = vld [vmem:[%s372 + $0x1c0] sm:$0xff]
        %v496 = vld [vmem:[%s372 + $0x1c8] sm:$0xff]
        %v497 = vld [vmem:[%s372 + $0x1d0] sm:$0xff]
        %v498 = vld [vmem:[%s372 + $0x1d8] sm:$0xff]
        %v499 = vld [vmem:[%s372 + $0x1e0] sm:$0xff]
        %v500 = vld [vmem:[%s372 + $0x1e8] sm:$0xff]
        %v501 = vld [vmem:[%s372 + $0x1f0] sm:$0xff]
        %v502 = vld [vmem:[%s372 + $0x1f8] sm:$0xff]
        %v503 = vld [vmem:[%s372 + $0x200] sm:$0xff]
        %v504 = vld [vmem:[%s372 + $0x208] sm:$0xff]
        %v505 = vld [vmem:[%s372 + $0x210] sm:$0xff]
        %v506 = vld [vmem:[%s372 + $0x218] sm:$0xff]
        %v507 = vld [vmem:[%s372 + $0x220] sm:$0xff]
        %v508 = vld [vmem:[%s372 + $0x228] sm:$0xff]
        %v509 = vld [vmem:[%s372 + $0x230] sm:$0xff]
        %v510 = vld [vmem:[%s372 + $0x238] sm:$0xff]
        %v511 = vld [vmem:[%s372 + $0x240] sm:$0xff]
        %v512 = vld [vmem:[%s372 + $0x248] sm:$0xff]
        %v513 = vld [vmem:[%s372 + $0x250] sm:$0xff]
        %v514 = vld [vmem:[%s372 + $0x258] sm:$0xff]
        %v515 = vld [vmem:[%s372 + $0x260] sm:$0xff]
        %v516 = vld [vmem:[%s372 + $0x268] sm:$0xff]
        %v517 = vld [vmem:[%s372 + $0x270] sm:$0xff]
        %v518 = vld [vmem:[%s372 + $0x278] sm:$0xff]
        %v519 = vld [vmem:[%s372 + $0x280] sm:$0xff]
        %v520 = vld [vmem:[%s372 + $0x288] sm:$0xff]
        %v521 = vld [vmem:[%s372 + $0x290] sm:$0xff]
        %v522 = vld [vmem:[%s372 + $0x298] sm:$0xff]
        %v523 = vld [vmem:[%s372 + $0x2a0] sm:$0xff]
        %v524 = vld [vmem:[%s372 + $0x2a8] sm:$0xff]
        %v525 = vld [vmem:[%s372 + $0x2b0] sm:$0xff]
        %v526 = vld [vmem:[%s372 + $0x2b8] sm:$0xff]
        %v527 = vld [vmem:[%s372 + $0x2c0] sm:$0xff]
        %v528 = vld [vmem:[%s372 + $0x2c8] sm:$0xff]
        %v529 = vld [vmem:[%s372 + $0x2d0] sm:$0xff]
        %v530 = vld [vmem:[%s372 + $0x2d8] sm:$0xff]
        %v531 = vld [vmem:[%s372 + $0x2e0] sm:$0xff]
        %v532 = vld [vmem:[%s372 + $0x2e8] sm:$0xff]
        %v533 = vld [vmem:[%s372 + $0x2f0] sm:$0xff]
        %v534 = vld [vmem:[%s372 + $0x2f8] sm:$0xff]
        %s535 = sshra.s32 %s422, 3
        %s536 = sand.u32 %s422, 7
        %s537 = smul.addr %s535, 4
        %s538 = scalar_lea.vmem %s1, %s537
        %v539 = vld [vmem:[%s538] sm:$0xf]
        %v540 = vld [vmem:[%s538 + $0x4] sm:$0xf]
        %v541 = vld [vmem:[%s538 + $0x8] sm:$0xf]
        %v542 = vld [vmem:[%s538 + $0xc] sm:$0xf]
        %v543 = vld [vmem:[%s538 + $0x10] sm:$0xf]
        %v544 = vld [vmem:[%s538 + $0x14] sm:$0xf]
        %v545 = vld [vmem:[%s538 + $0x18] sm:$0xf]
        %v546 = vld [vmem:[%s538 + $0x1c] sm:$0xf]
        %v547 = vld [vmem:[%s538 + $0x20] sm:$0xf]
        %v548 = vld [vmem:[%s538 + $0x24] sm:$0xf]
        %v549 = vld [vmem:[%s538 + $0x28] sm:$0xf]
        %v550 = vld [vmem:[%s538 + $0x2c] sm:$0xf]
        %v551 = vld [vmem:[%s538 + $0x30] sm:$0xf]
        %v552 = vld [vmem:[%s538 + $0x34] sm:$0xf]
        %v553 = vld [vmem:[%s538 + $0x38] sm:$0xf]
        %v554 = vld [vmem:[%s538 + $0x3c] sm:$0xf]
        %v555 = vld [vmem:[%s538 + $0x40] sm:$0xf]
        %v556 = vld [vmem:[%s538 + $0x44] sm:$0xf]
        %v557 = vld [vmem:[%s538 + $0x48] sm:$0xf]
        %v558 = vld [vmem:[%s538 + $0x4c] sm:$0xf]
        %v559 = vld [vmem:[%s538 + $0x50] sm:$0xf]
        %v560 = vld [vmem:[%s538 + $0x54] sm:$0xf]
        %v561 = vld [vmem:[%s538 + $0x58] sm:$0xf]
        %v562 = vld [vmem:[%s538 + $0x5c] sm:$0xf]
        %v563 = vld [vmem:[%s538 + $0x60] sm:$0xf]
        %v564 = vld [vmem:[%s538 + $0x64] sm:$0xf]
        %v565 = vld [vmem:[%s538 + $0x68] sm:$0xf]
        %v566 = vld [vmem:[%s538 + $0x6c] sm:$0xf]
        %v567 = vld [vmem:[%s538 + $0x70] sm:$0xf]
        %v568 = vld [vmem:[%s538 + $0x74] sm:$0xf]
        %v569 = vld [vmem:[%s538 + $0x78] sm:$0xf]
        %v570 = vld [vmem:[%s538 + $0x7c] sm:$0xf]
        %v571 = vld [vmem:[%s538 + $0x80] sm:$0xf]
        %v572 = vld [vmem:[%s538 + $0x84] sm:$0xf]
        %v573 = vld [vmem:[%s538 + $0x88] sm:$0xf]
        %v574 = vld [vmem:[%s538 + $0x8c] sm:$0xf]
        %v575 = vld [vmem:[%s538 + $0x90] sm:$0xf]
        %v576 = vld [vmem:[%s538 + $0x94] sm:$0xf]
        %v577 = vld [vmem:[%s538 + $0x98] sm:$0xf]
        %v578 = vld [vmem:[%s538 + $0x9c] sm:$0xf]
        %v579 = vld [vmem:[%s538 + $0xa0] sm:$0xf]
        %v580 = vld [vmem:[%s538 + $0xa4] sm:$0xf]
        %v581 = vld [vmem:[%s538 + $0xa8] sm:$0xf]
        %v582 = vld [vmem:[%s538 + $0xac] sm:$0xf]
        %v583 = vld [vmem:[%s538 + $0xb0] sm:$0xf]
        %v584 = vld [vmem:[%s538 + $0xb4] sm:$0xf]
        %v585 = vld [vmem:[%s538 + $0xb8] sm:$0xf]
        %v586 = vld [vmem:[%s538 + $0xbc] sm:$0xf]
        %v587 = vld [vmem:[%s538 + $0xc0] sm:$0xf]
        %v588 = vld [vmem:[%s538 + $0xc4] sm:$0xf]
        %v589 = vld [vmem:[%s538 + $0xc8] sm:$0xf]
        %v590 = vld [vmem:[%s538 + $0xcc] sm:$0xf]
        %v591 = vld [vmem:[%s538 + $0xd0] sm:$0xf]
        %v592 = vld [vmem:[%s538 + $0xd4] sm:$0xf]
        %v593 = vld [vmem:[%s538 + $0xd8] sm:$0xf]
        %v594 = vld [vmem:[%s538 + $0xdc] sm:$0xf]
        %v595 = vld [vmem:[%s538 + $0xe0] sm:$0xf]
        %v596 = vld [vmem:[%s538 + $0xe4] sm:$0xf]
        %v597 = vld [vmem:[%s538 + $0xe8] sm:$0xf]
        %v598 = vld [vmem:[%s538 + $0xec] sm:$0xf]
        %v599 = vld [vmem:[%s538 + $0xf0] sm:$0xf]
        %v600 = vld [vmem:[%s538 + $0xf4] sm:$0xf]
        %v601 = vld [vmem:[%s538 + $0xf8] sm:$0xf]
        %v602 = vld [vmem:[%s538 + $0xfc] sm:$0xf]
        %v603 = vld [vmem:[%s538 + $0x100] sm:$0xf]
        %v604 = vld [vmem:[%s538 + $0x104] sm:$0xf]
        %v605 = vld [vmem:[%s538 + $0x108] sm:$0xf]
        %v606 = vld [vmem:[%s538 + $0x10c] sm:$0xf]
        %v607 = vld [vmem:[%s538 + $0x110] sm:$0xf]
        %v608 = vld [vmem:[%s538 + $0x114] sm:$0xf]
        %v609 = vld [vmem:[%s538 + $0x118] sm:$0xf]
        %v610 = vld [vmem:[%s538 + $0x11c] sm:$0xf]
        %v611 = vld [vmem:[%s538 + $0x120] sm:$0xf]
        %v612 = vld [vmem:[%s538 + $0x124] sm:$0xf]
        %v613 = vld [vmem:[%s538 + $0x128] sm:$0xf]
        %v614 = vld [vmem:[%s538 + $0x12c] sm:$0xf]
        %v615 = vld [vmem:[%s538 + $0x130] sm:$0xf]
        %v616 = vld [vmem:[%s538 + $0x134] sm:$0xf]
        %v617 = vld [vmem:[%s538 + $0x138] sm:$0xf]
        %v618 = vld [vmem:[%s538 + $0x13c] sm:$0xf]
        %v619 = vld [vmem:[%s538 + $0x140] sm:$0xf]
        %v620 = vld [vmem:[%s538 + $0x144] sm:$0xf]
        %v621 = vld [vmem:[%s538 + $0x148] sm:$0xf]
        %v622 = vld [vmem:[%s538 + $0x14c] sm:$0xf]
        %v623 = vld [vmem:[%s538 + $0x150] sm:$0xf]
        %v624 = vld [vmem:[%s538 + $0x154] sm:$0xf]
        %v625 = vld [vmem:[%s538 + $0x158] sm:$0xf]
        %v626 = vld [vmem:[%s538 + $0x15c] sm:$0xf]
        %v627 = vld [vmem:[%s538 + $0x160] sm:$0xf]
        %v628 = vld [vmem:[%s538 + $0x164] sm:$0xf]
        %v629 = vld [vmem:[%s538 + $0x168] sm:$0xf]
        %v630 = vld [vmem:[%s538 + $0x16c] sm:$0xf]
        %v631 = vld [vmem:[%s538 + $0x170] sm:$0xf]
        %v632 = vld [vmem:[%s538 + $0x174] sm:$0xf]
        %v633 = vld [vmem:[%s538 + $0x178] sm:$0xf]
        %v634 = vld [vmem:[%s538 + $0x17c] sm:$0xf]
        %v635 = vld [vmem:[%s538 + $0x180] sm:$0xf]
        %v636 = vld [vmem:[%s538 + $0x184] sm:$0xf]
        %v637 = vld [vmem:[%s538 + $0x188] sm:$0xf]
        %v638 = vld [vmem:[%s538 + $0x18c] sm:$0xf]
        %v639 = vld [vmem:[%s538 + $0x190] sm:$0xf]
        %v640 = vld [vmem:[%s538 + $0x194] sm:$0xf]
        %v641 = vld [vmem:[%s538 + $0x198] sm:$0xf]
        %v642 = vld [vmem:[%s538 + $0x19c] sm:$0xf]
        %v643 = vld [vmem:[%s538 + $0x1a0] sm:$0xf]
        %v644 = vld [vmem:[%s538 + $0x1a4] sm:$0xf]
        %v645 = vld [vmem:[%s538 + $0x1a8] sm:$0xf]
        %v646 = vld [vmem:[%s538 + $0x1ac] sm:$0xf]
        %v647 = vld [vmem:[%s538 + $0x1b0] sm:$0xf]
        %v648 = vld [vmem:[%s538 + $0x1b4] sm:$0xf]
        %v649 = vld [vmem:[%s538 + $0x1b8] sm:$0xf]
        %v650 = vld [vmem:[%s538 + $0x1bc] sm:$0xf]
        %v651 = vld [vmem:[%s538 + $0x1c0] sm:$0xf]
        %v652 = vld [vmem:[%s538 + $0x1c4] sm:$0xf]
        %v653 = vld [vmem:[%s538 + $0x1c8] sm:$0xf]
        %v654 = vld [vmem:[%s538 + $0x1cc] sm:$0xf]
        %v655 = vld [vmem:[%s538 + $0x1d0] sm:$0xf]
        %v656 = vld [vmem:[%s538 + $0x1d4] sm:$0xf]
        %v657 = vld [vmem:[%s538 + $0x1d8] sm:$0xf]
        %v658 = vld [vmem:[%s538 + $0x1dc] sm:$0xf]
        %v659 = vld [vmem:[%s538 + $0x1e0] sm:$0xf]
        %v660 = vld [vmem:[%s538 + $0x1e4] sm:$0xf]
        %v661 = vld [vmem:[%s538 + $0x1e8] sm:$0xf]
        %v662 = vld [vmem:[%s538 + $0x1ec] sm:$0xf]
        %v663 = vld [vmem:[%s538 + $0x1f0] sm:$0xf]
        %v664 = vld [vmem:[%s538 + $0x1f4] sm:$0xf]
        %v665 = vld [vmem:[%s538 + $0x1f8] sm:$0xf]
        %v666 = vld [vmem:[%s538 + $0x1fc] sm:$0xf]
        %v667 = vld [vmem:[%s538 + $0x200] sm:$0xf]
        %v668 = vld [vmem:[%s538 + $0x204] sm:$0xf]
        %v669 = vld [vmem:[%s538 + $0x208] sm:$0xf]
        %v670 = vld [vmem:[%s538 + $0x20c] sm:$0xf]
        %v671 = vld [vmem:[%s538 + $0x210] sm:$0xf]
        %v672 = vld [vmem:[%s538 + $0x214] sm:$0xf]
        %v673 = vld [vmem:[%s538 + $0x218] sm:$0xf]
        %v674 = vld [vmem:[%s538 + $0x21c] sm:$0xf]
        %v675 = vld [vmem:[%s538 + $0x220] sm:$0xf]
        %v676 = vld [vmem:[%s538 + $0x224] sm:$0xf]
        %v677 = vld [vmem:[%s538 + $0x228] sm:$0xf]
        %v678 = vld [vmem:[%s538 + $0x22c] sm:$0xf]
        %v679 = vld [vmem:[%s538 + $0x230] sm:$0xf]
        %v680 = vld [vmem:[%s538 + $0x234] sm:$0xf]
        %v681 = vld [vmem:[%s538 + $0x238] sm:$0xf]
        %v682 = vld [vmem:[%s538 + $0x23c] sm:$0xf]
        %v683 = vld [vmem:[%s538 + $0x240] sm:$0xf]
        %v684 = vld [vmem:[%s538 + $0x244] sm:$0xf]
        %v685 = vld [vmem:[%s538 + $0x248] sm:$0xf]
        %v686 = vld [vmem:[%s538 + $0x24c] sm:$0xf]
        %v687 = vld [vmem:[%s538 + $0x250] sm:$0xf]
        %v688 = vld [vmem:[%s538 + $0x254] sm:$0xf]
        %v689 = vld [vmem:[%s538 + $0x258] sm:$0xf]
        %v690 = vld [vmem:[%s538 + $0x25c] sm:$0xf]
        %v691 = vld [vmem:[%s538 + $0x260] sm:$0xf]
        %v692 = vld [vmem:[%s538 + $0x264] sm:$0xf]
        %v693 = vld [vmem:[%s538 + $0x268] sm:$0xf]
        %v694 = vld [vmem:[%s538 + $0x26c] sm:$0xf]
        %v695 = vld [vmem:[%s538 + $0x270] sm:$0xf]
        %v696 = vld [vmem:[%s538 + $0x274] sm:$0xf]
        %v697 = vld [vmem:[%s538 + $0x278] sm:$0xf]
        %v698 = vld [vmem:[%s538 + $0x27c] sm:$0xf]
        %v699 = vld [vmem:[%s538 + $0x280] sm:$0xf]
        %v700 = vld [vmem:[%s538 + $0x284] sm:$0xf]
        %v701 = vld [vmem:[%s538 + $0x288] sm:$0xf]
        %v702 = vld [vmem:[%s538 + $0x28c] sm:$0xf]
        %v703 = vld [vmem:[%s538 + $0x290] sm:$0xf]
        %v704 = vld [vmem:[%s538 + $0x294] sm:$0xf]
        %v705 = vld [vmem:[%s538 + $0x298] sm:$0xf]
        %v706 = vld [vmem:[%s538 + $0x29c] sm:$0xf]
        %v707 = vld [vmem:[%s538 + $0x2a0] sm:$0xf]
        %v708 = vld [vmem:[%s538 + $0x2a4] sm:$0xf]
        %v709 = vld [vmem:[%s538 + $0x2a8] sm:$0xf]
        %v710 = vld [vmem:[%s538 + $0x2ac] sm:$0xf]
        %v711 = vld [vmem:[%s538 + $0x2b0] sm:$0xf]
        %v712 = vld [vmem:[%s538 + $0x2b4] sm:$0xf]
        %v713 = vld [vmem:[%s538 + $0x2b8] sm:$0xf]
        %v714 = vld [vmem:[%s538 + $0x2bc] sm:$0xf]
        %v715 = vld [vmem:[%s538 + $0x2c0] sm:$0xf]
        %v716 = vld [vmem:[%s538 + $0x2c4] sm:$0xf]
        %v717 = vld [vmem:[%s538 + $0x2c8] sm:$0xf]
        %v718 = vld [vmem:[%s538 + $0x2cc] sm:$0xf]
        %v719 = vld [vmem:[%s538 + $0x2d0] sm:$0xf]
        %v720 = vld [vmem:[%s538 + $0x2d4] sm:$0xf]
        %v721 = vld [vmem:[%s538 + $0x2d8] sm:$0xf]
        %v722 = vld [vmem:[%s538 + $0x2dc] sm:$0xf]
        %v723 = vld [vmem:[%s538 + $0x2e0] sm:$0xf]
        %v724 = vld [vmem:[%s538 + $0x2e4] sm:$0xf]
        %v725 = vld [vmem:[%s538 + $0x2e8] sm:$0xf]
        %v726 = vld [vmem:[%s538 + $0x2ec] sm:$0xf]
        %v727 = vld [vmem:[%s538 + $0x2f0] sm:$0xf]
        %v728 = vld [vmem:[%s538 + $0x2f4] sm:$0xf]
        %v729 = vld [vmem:[%s538 + $0x2f8] sm:$0xf]
        %v730 = vld [vmem:[%s538 + $0x2fc] sm:$0xf]
        %v827 = vunpack.c.l.b16 %v439
        %v828 = vunpack.c.h.b16 %v439
        %v829 = vunpack.c.l.b16 %v440
        %v830 = vunpack.c.h.b16 %v440
        %v831 = vunpack.c.l.b16 %v441
        %v832 = vunpack.c.h.b16 %v441
        %v833 = vunpack.c.l.b16 %v442
        %v834 = vunpack.c.h.b16 %v442
        %v835 = vunpack.c.l.b16 %v443
        %v836 = vunpack.c.h.b16 %v443
        %v837 = vunpack.c.l.b16 %v444
        %v838 = vunpack.c.h.b16 %v444
        %v839 = vunpack.c.l.b16 %v445
        %v840 = vunpack.c.h.b16 %v445
        %v841 = vunpack.c.l.b16 %v446
        %v842 = vunpack.c.h.b16 %v446
        %v843 = vunpack.c.l.b16 %v447
        %v844 = vunpack.c.h.b16 %v447
        %v845 = vunpack.c.l.b16 %v448
        %v846 = vunpack.c.h.b16 %v448
        %v847 = vunpack.c.l.b16 %v449
        %v848 = vunpack.c.h.b16 %v449
        %v849 = vunpack.c.l.b16 %v450
        %v850 = vunpack.c.h.b16 %v450
        %v851 = vunpack.c.l.b16 %v451
        %v852 = vunpack.c.h.b16 %v451
        %v853 = vunpack.c.l.b16 %v452
        %v854 = vunpack.c.h.b16 %v452
        %v855 = vunpack.c.l.b16 %v453
        %v856 = vunpack.c.h.b16 %v453
        %v857 = vunpack.c.l.b16 %v454
        %v858 = vunpack.c.h.b16 %v454
        %v859 = vunpack.c.l.b16 %v455
        %v860 = vunpack.c.h.b16 %v455
        %v861 = vunpack.c.l.b16 %v456
        %v862 = vunpack.c.h.b16 %v456
        %v863 = vunpack.c.l.b16 %v457
        %v864 = vunpack.c.h.b16 %v457
        %v865 = vunpack.c.l.b16 %v458
        %v866 = vunpack.c.h.b16 %v458
        %v867 = vunpack.c.l.b16 %v459
        %v868 = vunpack.c.h.b16 %v459
        %v869 = vunpack.c.l.b16 %v460
        %v870 = vunpack.c.h.b16 %v460
        %v871 = vunpack.c.l.b16 %v461
        %v872 = vunpack.c.h.b16 %v461
        %v873 = vunpack.c.l.b16 %v462
        %v874 = vunpack.c.h.b16 %v462
        %v875 = vunpack.c.l.b16 %v463
        %v876 = vunpack.c.h.b16 %v463
        %v877 = vunpack.c.l.b16 %v464
        %v878 = vunpack.c.h.b16 %v464
        %v879 = vunpack.c.l.b16 %v465
        %v880 = vunpack.c.h.b16 %v465
        %v881 = vunpack.c.l.b16 %v466
        %v882 = vunpack.c.h.b16 %v466
        %v883 = vunpack.c.l.b16 %v467
        %v884 = vunpack.c.h.b16 %v467
        %v885 = vunpack.c.l.b16 %v468
        %v886 = vunpack.c.h.b16 %v468
        %v887 = vunpack.c.l.b16 %v469
        %v888 = vunpack.c.h.b16 %v469
        %v889 = vunpack.c.l.b16 %v470
        %v890 = vunpack.c.h.b16 %v470
        %v891 = vunpack.c.l.b16 %v471
        %v892 = vunpack.c.h.b16 %v471
        %v893 = vunpack.c.l.b16 %v472
        %v894 = vunpack.c.h.b16 %v472
        %v895 = vunpack.c.l.b16 %v473
        %v896 = vunpack.c.h.b16 %v473
        %v897 = vunpack.c.l.b16 %v474
        %v898 = vunpack.c.h.b16 %v474
        %v899 = vunpack.c.l.b16 %v475
        %v900 = vunpack.c.h.b16 %v475
        %v901 = vunpack.c.l.b16 %v476
        %v902 = vunpack.c.h.b16 %v476
        %v903 = vunpack.c.l.b16 %v477
        %v904 = vunpack.c.h.b16 %v477
        %v905 = vunpack.c.l.b16 %v478
        %v906 = vunpack.c.h.b16 %v478
        %v907 = vunpack.c.l.b16 %v479
        %v908 = vunpack.c.h.b16 %v479
        %v909 = vunpack.c.l.b16 %v480
        %v910 = vunpack.c.h.b16 %v480
        %v911 = vunpack.c.l.b16 %v481
        %v912 = vunpack.c.h.b16 %v481
        %v913 = vunpack.c.l.b16 %v482
        %v914 = vunpack.c.h.b16 %v482
        %v915 = vunpack.c.l.b16 %v483
        %v916 = vunpack.c.h.b16 %v483
        %v917 = vunpack.c.l.b16 %v484
        %v918 = vunpack.c.h.b16 %v484
        %v919 = vunpack.c.l.b16 %v485
        %v920 = vunpack.c.h.b16 %v485
        %v921 = vunpack.c.l.b16 %v486
        %v922 = vunpack.c.h.b16 %v486
        %v923 = vunpack.c.l.b16 %v487
        %v924 = vunpack.c.h.b16 %v487
        %v925 = vunpack.c.l.b16 %v488
        %v926 = vunpack.c.h.b16 %v488
        %v927 = vunpack.c.l.b16 %v489
        %v928 = vunpack.c.h.b16 %v489
        %v929 = vunpack.c.l.b16 %v490
        %v930 = vunpack.c.h.b16 %v490
        %v931 = vunpack.c.l.b16 %v491
        %v932 = vunpack.c.h.b16 %v491
        %v933 = vunpack.c.l.b16 %v492
        %v934 = vunpack.c.h.b16 %v492
        %v935 = vunpack.c.l.b16 %v493
        %v936 = vunpack.c.h.b16 %v493
        %v937 = vunpack.c.l.b16 %v494
        %v938 = vunpack.c.h.b16 %v494
        %v939 = vunpack.c.l.b16 %v495
        %v940 = vunpack.c.h.b16 %v495
        %v941 = vunpack.c.l.b16 %v496
        %v942 = vunpack.c.h.b16 %v496
        %v943 = vunpack.c.l.b16 %v497
        %v944 = vunpack.c.h.b16 %v497
        %v945 = vunpack.c.l.b16 %v498
        %v946 = vunpack.c.h.b16 %v498
        %v947 = vunpack.c.l.b16 %v499
        %v948 = vunpack.c.h.b16 %v499
        %v949 = vunpack.c.l.b16 %v500
        %v950 = vunpack.c.h.b16 %v500
        %v951 = vunpack.c.l.b16 %v501
        %v952 = vunpack.c.h.b16 %v501
        %v953 = vunpack.c.l.b16 %v502
        %v954 = vunpack.c.h.b16 %v502
        %v955 = vunpack.c.l.b16 %v503
        %v956 = vunpack.c.h.b16 %v503
        %v957 = vunpack.c.l.b16 %v504
        %v958 = vunpack.c.h.b16 %v504
        %v959 = vunpack.c.l.b16 %v505
        %v960 = vunpack.c.h.b16 %v505
        %v961 = vunpack.c.l.b16 %v506
        %v962 = vunpack.c.h.b16 %v506
        %v963 = vunpack.c.l.b16 %v507
        %v964 = vunpack.c.h.b16 %v507
        %v965 = vunpack.c.l.b16 %v508
        %v966 = vunpack.c.h.b16 %v508
        %v967 = vunpack.c.l.b16 %v509
        %v968 = vunpack.c.h.b16 %v509
        %v969 = vunpack.c.l.b16 %v510
        %v970 = vunpack.c.h.b16 %v510
        %v971 = vunpack.c.l.b16 %v511
        %v972 = vunpack.c.h.b16 %v511
        %v973 = vunpack.c.l.b16 %v512
        %v974 = vunpack.c.h.b16 %v512
        %v975 = vunpack.c.l.b16 %v513
        %v976 = vunpack.c.h.b16 %v513
        %v977 = vunpack.c.l.b16 %v514
        %v978 = vunpack.c.h.b16 %v514
        %v979 = vunpack.c.l.b16 %v515
        %v980 = vunpack.c.h.b16 %v515
        %v981 = vunpack.c.l.b16 %v516
        %v982 = vunpack.c.h.b16 %v516
        %v983 = vunpack.c.l.b16 %v517
        %v984 = vunpack.c.h.b16 %v517
        %v985 = vunpack.c.l.b16 %v518
        %v986 = vunpack.c.h.b16 %v518
        %v987 = vunpack.c.l.b16 %v519
        %v988 = vunpack.c.h.b16 %v519
        %v989 = vunpack.c.l.b16 %v520
        %v990 = vunpack.c.h.b16 %v520
        %v991 = vunpack.c.l.b16 %v521
        %v992 = vunpack.c.h.b16 %v521
        %v993 = vunpack.c.l.b16 %v522
        %v994 = vunpack.c.h.b16 %v522
        %v995 = vunpack.c.l.b16 %v523
        %v996 = vunpack.c.h.b16 %v523
        %v997 = vunpack.c.l.b16 %v524
        %v998 = vunpack.c.h.b16 %v524
        %v999 = vunpack.c.l.b16 %v525
        %v1000 = vunpack.c.h.b16 %v525
        %v1001 = vunpack.c.l.b16 %v526
        %v1002 = vunpack.c.h.b16 %v526
        %v1003 = vunpack.c.l.b16 %v527
        %v1004 = vunpack.c.h.b16 %v527
        %v1005 = vunpack.c.l.b16 %v528
        %v1006 = vunpack.c.h.b16 %v528
        %v1007 = vunpack.c.l.b16 %v529
        %v1008 = vunpack.c.h.b16 %v529
        %v1009 = vunpack.c.l.b16 %v530
        %v1010 = vunpack.c.h.b16 %v530
        %v1011 = vunpack.c.l.b16 %v531
        %v1012 = vunpack.c.h.b16 %v531
        %v1013 = vunpack.c.l.b16 %v532
        %v1014 = vunpack.c.h.b16 %v532
        %v1015 = vunpack.c.l.b16 %v533
        %v1016 = vunpack.c.h.b16 %v533
        %v1017 = vunpack.c.l.b16 %v534
        %v1018 = vunpack.c.h.b16 %v534
        %v1019 = vpack.c.b16 %v839, %v827
        %v1020 = vpack.c.b16 %v840, %v828
        %v1021 = vpack.c.b16 %v841, %v829
        %v1022 = vpack.c.b16 %v842, %v830
        %v1023 = vpack.c.b16 %v843, %v831
        %v1024 = vpack.c.b16 %v844, %v832
        %v1025 = vpack.c.b16 %v845, %v833
        %v1026 = vpack.c.b16 %v846, %v834
        %v1027 = vpack.c.b16 %v847, %v835
        %v1028 = vpack.c.b16 %v848, %v836
        %v1029 = vpack.c.b16 %v849, %v837
        %v1030 = vpack.c.b16 %v850, %v838
        %v1031 = vpack.c.b16 %v863, %v851
        %v1032 = vpack.c.b16 %v864, %v852
        %v1033 = vpack.c.b16 %v865, %v853
        %v1034 = vpack.c.b16 %v866, %v854
        %v1035 = vpack.c.b16 %v867, %v855
        %v1036 = vpack.c.b16 %v868, %v856
        %v1037 = vpack.c.b16 %v869, %v857
        %v1038 = vpack.c.b16 %v870, %v858
        %v1039 = vpack.c.b16 %v871, %v859
        %v1040 = vpack.c.b16 %v872, %v860
        %v1041 = vpack.c.b16 %v873, %v861
        %v1042 = vpack.c.b16 %v874, %v862
        %v1043 = vpack.c.b16 %v887, %v875
        %v1044 = vpack.c.b16 %v888, %v876
        %v1045 = vpack.c.b16 %v889, %v877
        %v1046 = vpack.c.b16 %v890, %v878
        %v1047 = vpack.c.b16 %v891, %v879
        %v1048 = vpack.c.b16 %v892, %v880
        %v1049 = vpack.c.b16 %v893, %v881
        %v1050 = vpack.c.b16 %v894, %v882
        %v1051 = vpack.c.b16 %v895, %v883
        %v1052 = vpack.c.b16 %v896, %v884
        %v1053 = vpack.c.b16 %v897, %v885
        %v1054 = vpack.c.b16 %v898, %v886
        %v1055 = vpack.c.b16 %v911, %v899
        %v1056 = vpack.c.b16 %v912, %v900
        %v1057 = vpack.c.b16 %v913, %v901
        %v1058 = vpack.c.b16 %v914, %v902
        %v1059 = vpack.c.b16 %v915, %v903
        %v1060 = vpack.c.b16 %v916, %v904
        %v1061 = vpack.c.b16 %v917, %v905
        %v1062 = vpack.c.b16 %v918, %v906
        %v1063 = vpack.c.b16 %v919, %v907
        %v1064 = vpack.c.b16 %v920, %v908
        %v1065 = vpack.c.b16 %v921, %v909
        %v1066 = vpack.c.b16 %v922, %v910
        %v1067 = vpack.c.b16 %v935, %v923
        %v1068 = vpack.c.b16 %v936, %v924
        %v1069 = vpack.c.b16 %v937, %v925
        %v1070 = vpack.c.b16 %v938, %v926
        %v1071 = vpack.c.b16 %v939, %v927
        %v1072 = vpack.c.b16 %v940, %v928
        %v1073 = vpack.c.b16 %v941, %v929
        %v1074 = vpack.c.b16 %v942, %v930
        %v1075 = vpack.c.b16 %v943, %v931
        %v1076 = vpack.c.b16 %v944, %v932
        %v1077 = vpack.c.b16 %v945, %v933
        %v1078 = vpack.c.b16 %v946, %v934
        %v1079 = vpack.c.b16 %v959, %v947
        %v1080 = vpack.c.b16 %v960, %v948
        %v1081 = vpack.c.b16 %v961, %v949
        %v1082 = vpack.c.b16 %v962, %v950
        %v1083 = vpack.c.b16 %v963, %v951
        %v1084 = vpack.c.b16 %v964, %v952
        %v1085 = vpack.c.b16 %v965, %v953
        %v1086 = vpack.c.b16 %v966, %v954
        %v1087 = vpack.c.b16 %v967, %v955
        %v1088 = vpack.c.b16 %v968, %v956
        %v1089 = vpack.c.b16 %v969, %v957
        %v1090 = vpack.c.b16 %v970, %v958
        %v1091 = vpack.c.b16 %v983, %v971
        %v1092 = vpack.c.b16 %v984, %v972
        %v1093 = vpack.c.b16 %v985, %v973
        %v1094 = vpack.c.b16 %v986, %v974
        %v1095 = vpack.c.b16 %v987, %v975
        %v1096 = vpack.c.b16 %v988, %v976
        %v1097 = vpack.c.b16 %v989, %v977
        %v1098 = vpack.c.b16 %v990, %v978
        %v1099 = vpack.c.b16 %v991, %v979
        %v1100 = vpack.c.b16 %v992, %v980
        %v1101 = vpack.c.b16 %v993, %v981
        %v1102 = vpack.c.b16 %v994, %v982
        %v1103 = vpack.c.b16 %v1007, %v995
        %v1104 = vpack.c.b16 %v1008, %v996
        %v1105 = vpack.c.b16 %v1009, %v997
        %v1106 = vpack.c.b16 %v1010, %v998
        %v1107 = vpack.c.b16 %v1011, %v999
        %v1108 = vpack.c.b16 %v1012, %v1000
        %v1109 = vpack.c.b16 %v1013, %v1001
        %v1110 = vpack.c.b16 %v1014, %v1002
        %v1111 = vpack.c.b16 %v1015, %v1003
        %v1112 = vpack.c.b16 %v1016, %v1004
        %v1113 = vpack.c.b16 %v1017, %v1005
        %v1114 = vpack.c.b16 %v1018, %v1006
        %v1403 = vunpack.c.l.b16 %v539
        %v1404 = vunpack.c.l.b16 %v540
        %v1405 = vunpack.c.l.b16 %v541
        %v1406 = vunpack.c.l.b16 %v542
        %v1407 = vunpack.c.l.b16 %v543
        %v1408 = vunpack.c.l.b16 %v544
        %v1409 = vunpack.c.l.b16 %v545
        %v1410 = vunpack.c.l.b16 %v546
        %v1411 = vunpack.c.l.b16 %v547
        %v1412 = vunpack.c.l.b16 %v548
        %v1413 = vunpack.c.l.b16 %v549
        %v1414 = vunpack.c.l.b16 %v550
        %v1415 = vunpack.c.l.b16 %v551
        %v1416 = vunpack.c.l.b16 %v552
        %v1417 = vunpack.c.l.b16 %v553
        %v1418 = vunpack.c.l.b16 %v554
        %v1419 = vunpack.c.l.b16 %v555
        %v1420 = vunpack.c.l.b16 %v556
        %v1421 = vunpack.c.l.b16 %v557
        %v1422 = vunpack.c.l.b16 %v558
        %v1423 = vunpack.c.l.b16 %v559
        %v1424 = vunpack.c.l.b16 %v560
        %v1425 = vunpack.c.l.b16 %v561
        %v1426 = vunpack.c.l.b16 %v562
        %v1427 = vunpack.c.l.b16 %v563
        %v1428 = vunpack.c.l.b16 %v564
        %v1429 = vunpack.c.l.b16 %v565
        %v1430 = vunpack.c.l.b16 %v566
        %v1431 = vunpack.c.l.b16 %v567
        %v1432 = vunpack.c.l.b16 %v568
        %v1433 = vunpack.c.l.b16 %v569
        %v1434 = vunpack.c.l.b16 %v570
        %v1435 = vunpack.c.l.b16 %v571
        %v1436 = vunpack.c.l.b16 %v572
        %v1437 = vunpack.c.l.b16 %v573
        %v1438 = vunpack.c.l.b16 %v574
        %v1439 = vunpack.c.l.b16 %v575
        %v1440 = vunpack.c.l.b16 %v576
        %v1441 = vunpack.c.l.b16 %v577
        %v1442 = vunpack.c.l.b16 %v578
        %v1443 = vunpack.c.l.b16 %v579
        %v1444 = vunpack.c.l.b16 %v580
        %v1445 = vunpack.c.l.b16 %v581
        %v1446 = vunpack.c.l.b16 %v582
        %v1447 = vunpack.c.l.b16 %v583
        %v1448 = vunpack.c.l.b16 %v584
        %v1449 = vunpack.c.l.b16 %v585
        %v1450 = vunpack.c.l.b16 %v586
        %v1451 = vunpack.c.l.b16 %v587
        %v1452 = vunpack.c.l.b16 %v588
        %v1453 = vunpack.c.l.b16 %v589
        %v1454 = vunpack.c.l.b16 %v590
        %v1455 = vunpack.c.l.b16 %v591
        %v1456 = vunpack.c.l.b16 %v592
        %v1457 = vunpack.c.l.b16 %v593
        %v1458 = vunpack.c.l.b16 %v594
        %v1459 = vunpack.c.l.b16 %v595
        %v1460 = vunpack.c.l.b16 %v596
        %v1461 = vunpack.c.l.b16 %v597
        %v1462 = vunpack.c.l.b16 %v598
        %v1463 = vunpack.c.l.b16 %v599
        %v1464 = vunpack.c.l.b16 %v600
        %v1465 = vunpack.c.l.b16 %v601
        %v1466 = vunpack.c.l.b16 %v602
        %v1467 = vunpack.c.l.b16 %v603
        %v1468 = vunpack.c.l.b16 %v604
        %v1469 = vunpack.c.l.b16 %v605
        %v1470 = vunpack.c.l.b16 %v606
        %v1471 = vunpack.c.l.b16 %v607
        %v1472 = vunpack.c.l.b16 %v608
        %v1473 = vunpack.c.l.b16 %v609
        %v1474 = vunpack.c.l.b16 %v610
        %v1475 = vunpack.c.l.b16 %v611
        %v1476 = vunpack.c.l.b16 %v612
        %v1477 = vunpack.c.l.b16 %v613
        %v1478 = vunpack.c.l.b16 %v614
        %v1479 = vunpack.c.l.b16 %v615
        %v1480 = vunpack.c.l.b16 %v616
        %v1481 = vunpack.c.l.b16 %v617
        %v1482 = vunpack.c.l.b16 %v618
        %v1483 = vunpack.c.l.b16 %v619
        %v1484 = vunpack.c.l.b16 %v620
        %v1485 = vunpack.c.l.b16 %v621
        %v1486 = vunpack.c.l.b16 %v622
        %v1487 = vunpack.c.l.b16 %v623
        %v1488 = vunpack.c.l.b16 %v624
        %v1489 = vunpack.c.l.b16 %v625
        %v1490 = vunpack.c.l.b16 %v626
        %v1491 = vunpack.c.l.b16 %v627
        %v1492 = vunpack.c.l.b16 %v628
        %v1493 = vunpack.c.l.b16 %v629
        %v1494 = vunpack.c.l.b16 %v630
        %v1495 = vunpack.c.l.b16 %v631
        %v1496 = vunpack.c.l.b16 %v632
        %v1497 = vunpack.c.l.b16 %v633
        %v1498 = vunpack.c.l.b16 %v634
        %v1499 = vunpack.c.l.b16 %v635
        %v1500 = vunpack.c.l.b16 %v636
        %v1501 = vunpack.c.l.b16 %v637
        %v1502 = vunpack.c.l.b16 %v638
        %v1503 = vunpack.c.l.b16 %v639
        %v1504 = vunpack.c.l.b16 %v640
        %v1505 = vunpack.c.l.b16 %v641
        %v1506 = vunpack.c.l.b16 %v642
        %v1507 = vunpack.c.l.b16 %v643
        %v1508 = vunpack.c.l.b16 %v644
        %v1509 = vunpack.c.l.b16 %v645
        %v1510 = vunpack.c.l.b16 %v646
        %v1511 = vunpack.c.l.b16 %v647
        %v1512 = vunpack.c.l.b16 %v648
        %v1513 = vunpack.c.l.b16 %v649
        %v1514 = vunpack.c.l.b16 %v650
        %v1515 = vunpack.c.l.b16 %v651
        %v1516 = vunpack.c.l.b16 %v652
        %v1517 = vunpack.c.l.b16 %v653
        %v1518 = vunpack.c.l.b16 %v654
        %v1519 = vunpack.c.l.b16 %v655
        %v1520 = vunpack.c.l.b16 %v656
        %v1521 = vunpack.c.l.b16 %v657
        %v1522 = vunpack.c.l.b16 %v658
        %v1523 = vunpack.c.l.b16 %v659
        %v1524 = vunpack.c.l.b16 %v660
        %v1525 = vunpack.c.l.b16 %v661
        %v1526 = vunpack.c.l.b16 %v662
        %v1527 = vunpack.c.l.b16 %v663
        %v1528 = vunpack.c.l.b16 %v664
        %v1529 = vunpack.c.l.b16 %v665
        %v1530 = vunpack.c.l.b16 %v666
        %v1531 = vunpack.c.l.b16 %v667
        %v1532 = vunpack.c.l.b16 %v668
        %v1533 = vunpack.c.l.b16 %v669
        %v1534 = vunpack.c.l.b16 %v670
        %v1535 = vunpack.c.l.b16 %v671
        %v1536 = vunpack.c.l.b16 %v672
        %v1537 = vunpack.c.l.b16 %v673
        %v1538 = vunpack.c.l.b16 %v674
        %v1539 = vunpack.c.l.b16 %v675
        %v1540 = vunpack.c.l.b16 %v676
        %v1541 = vunpack.c.l.b16 %v677
        %v1542 = vunpack.c.l.b16 %v678
        %v1543 = vunpack.c.l.b16 %v679
        %v1544 = vunpack.c.l.b16 %v680
        %v1545 = vunpack.c.l.b16 %v681
        %v1546 = vunpack.c.l.b16 %v682
        %v1547 = vunpack.c.l.b16 %v683
        %v1548 = vunpack.c.l.b16 %v684
        %v1549 = vunpack.c.l.b16 %v685
        %v1550 = vunpack.c.l.b16 %v686
        %v1551 = vunpack.c.l.b16 %v687
        %v1552 = vunpack.c.l.b16 %v688
        %v1553 = vunpack.c.l.b16 %v689
        %v1554 = vunpack.c.l.b16 %v690
        %v1555 = vunpack.c.l.b16 %v691
        %v1556 = vunpack.c.l.b16 %v692
        %v1557 = vunpack.c.l.b16 %v693
        %v1558 = vunpack.c.l.b16 %v694
        %v1559 = vunpack.c.l.b16 %v695
        %v1560 = vunpack.c.l.b16 %v696
        %v1561 = vunpack.c.l.b16 %v697
        %v1562 = vunpack.c.l.b16 %v698
        %v1563 = vunpack.c.l.b16 %v699
        %v1564 = vunpack.c.l.b16 %v700
        %v1565 = vunpack.c.l.b16 %v701
        %v1566 = vunpack.c.l.b16 %v702
        %v1567 = vunpack.c.l.b16 %v703
        %v1568 = vunpack.c.l.b16 %v704
        %v1569 = vunpack.c.l.b16 %v705
        %v1570 = vunpack.c.l.b16 %v706
        %v1571 = vunpack.c.l.b16 %v707
        %v1572 = vunpack.c.l.b16 %v708
        %v1573 = vunpack.c.l.b16 %v709
        %v1574 = vunpack.c.l.b16 %v710
        %v1575 = vunpack.c.l.b16 %v711
        %v1576 = vunpack.c.l.b16 %v712
        %v1577 = vunpack.c.l.b16 %v713
        %v1578 = vunpack.c.l.b16 %v714
        %v1579 = vunpack.c.l.b16 %v715
        %v1580 = vunpack.c.l.b16 %v716
        %v1581 = vunpack.c.l.b16 %v717
        %v1582 = vunpack.c.l.b16 %v718
        %v1583 = vunpack.c.l.b16 %v719
        %v1584 = vunpack.c.l.b16 %v720
        %v1585 = vunpack.c.l.b16 %v721
        %v1586 = vunpack.c.l.b16 %v722
        %v1587 = vunpack.c.l.b16 %v723
        %v1588 = vunpack.c.l.b16 %v724
        %v1589 = vunpack.c.l.b16 %v725
        %v1590 = vunpack.c.l.b16 %v726
        %v1591 = vunpack.c.l.b16 %v727
        %v1592 = vunpack.c.l.b16 %v728
        %v1593 = vunpack.c.l.b16 %v729
        %v1594 = vunpack.c.l.b16 %v730
        %v1595 = vpack.c.b16 %v1404, %v1403
        %v1596 = vpack.c.b16 %v1406, %v1405
        %v1597 = vpack.c.b16 %v1408, %v1407
        %v1598 = vpack.c.b16 %v1410, %v1409
        %v1599 = vpack.c.b16 %v1412, %v1411
        %v1600 = vpack.c.b16 %v1414, %v1413
        %v1601 = vpack.c.b16 %v1416, %v1415
        %v1602 = vpack.c.b16 %v1418, %v1417
        %v1603 = vpack.c.b16 %v1420, %v1419
        %v1604 = vpack.c.b16 %v1422, %v1421
        %v1605 = vpack.c.b16 %v1424, %v1423
        %v1606 = vpack.c.b16 %v1426, %v1425
        %v1607 = vpack.c.b16 %v1428, %v1427
        %v1608 = vpack.c.b16 %v1430, %v1429
        %v1609 = vpack.c.b16 %v1432, %v1431
        %v1610 = vpack.c.b16 %v1434, %v1433
        %v1611 = vpack.c.b16 %v1436, %v1435
        %v1612 = vpack.c.b16 %v1438, %v1437
        %v1613 = vpack.c.b16 %v1440, %v1439
        %v1614 = vpack.c.b16 %v1442, %v1441
        %v1615 = vpack.c.b16 %v1444, %v1443
        %v1616 = vpack.c.b16 %v1446, %v1445
        %v1617 = vpack.c.b16 %v1448, %v1447
        %v1618 = vpack.c.b16 %v1450, %v1449
        %v1619 = vpack.c.b16 %v1452, %v1451
        %v1620 = vpack.c.b16 %v1454, %v1453
        %v1621 = vpack.c.b16 %v1456, %v1455
        %v1622 = vpack.c.b16 %v1458, %v1457
        %v1623 = vpack.c.b16 %v1460, %v1459
        %v1624 = vpack.c.b16 %v1462, %v1461
        %v1625 = vpack.c.b16 %v1464, %v1463
        %v1626 = vpack.c.b16 %v1466, %v1465
        %v1627 = vpack.c.b16 %v1468, %v1467
        %v1628 = vpack.c.b16 %v1470, %v1469
        %v1629 = vpack.c.b16 %v1472, %v1471
        %v1630 = vpack.c.b16 %v1474, %v1473
        %v1631 = vpack.c.b16 %v1476, %v1475
        %v1632 = vpack.c.b16 %v1478, %v1477
        %v1633 = vpack.c.b16 %v1480, %v1479
        %v1634 = vpack.c.b16 %v1482, %v1481
        %v1635 = vpack.c.b16 %v1484, %v1483
        %v1636 = vpack.c.b16 %v1486, %v1485
        %v1637 = vpack.c.b16 %v1488, %v1487
        %v1638 = vpack.c.b16 %v1490, %v1489
        %v1639 = vpack.c.b16 %v1492, %v1491
        %v1640 = vpack.c.b16 %v1494, %v1493
        %v1641 = vpack.c.b16 %v1496, %v1495
        %v1642 = vpack.c.b16 %v1498, %v1497
        %v1643 = vpack.c.b16 %v1500, %v1499
        %v1644 = vpack.c.b16 %v1502, %v1501
        %v1645 = vpack.c.b16 %v1504, %v1503
        %v1646 = vpack.c.b16 %v1506, %v1505
        %v1647 = vpack.c.b16 %v1508, %v1507
        %v1648 = vpack.c.b16 %v1510, %v1509
        %v1649 = vpack.c.b16 %v1512, %v1511
        %v1650 = vpack.c.b16 %v1514, %v1513
        %v1651 = vpack.c.b16 %v1516, %v1515
        %v1652 = vpack.c.b16 %v1518, %v1517
        %v1653 = vpack.c.b16 %v1520, %v1519
        %v1654 = vpack.c.b16 %v1522, %v1521
        %v1655 = vpack.c.b16 %v1524, %v1523
        %v1656 = vpack.c.b16 %v1526, %v1525
        %v1657 = vpack.c.b16 %v1528, %v1527
        %v1658 = vpack.c.b16 %v1530, %v1529
        %v1659 = vpack.c.b16 %v1532, %v1531
        %v1660 = vpack.c.b16 %v1534, %v1533
        %v1661 = vpack.c.b16 %v1536, %v1535
        %v1662 = vpack.c.b16 %v1538, %v1537
        %v1663 = vpack.c.b16 %v1540, %v1539
        %v1664 = vpack.c.b16 %v1542, %v1541
        %v1665 = vpack.c.b16 %v1544, %v1543
        %v1666 = vpack.c.b16 %v1546, %v1545
        %v1667 = vpack.c.b16 %v1548, %v1547
        %v1668 = vpack.c.b16 %v1550, %v1549
        %v1669 = vpack.c.b16 %v1552, %v1551
        %v1670 = vpack.c.b16 %v1554, %v1553
        %v1671 = vpack.c.b16 %v1556, %v1555
        %v1672 = vpack.c.b16 %v1558, %v1557
        %v1673 = vpack.c.b16 %v1560, %v1559
        %v1674 = vpack.c.b16 %v1562, %v1561
        %v1675 = vpack.c.b16 %v1564, %v1563
        %v1676 = vpack.c.b16 %v1566, %v1565
        %v1677 = vpack.c.b16 %v1568, %v1567
        %v1678 = vpack.c.b16 %v1570, %v1569
        %v1679 = vpack.c.b16 %v1572, %v1571
        %v1680 = vpack.c.b16 %v1574, %v1573
        %v1681 = vpack.c.b16 %v1576, %v1575
        %v1682 = vpack.c.b16 %v1578, %v1577
        %v1683 = vpack.c.b16 %v1580, %v1579
        %v1684 = vpack.c.b16 %v1582, %v1581
        %v1685 = vpack.c.b16 %v1584, %v1583
        %v1686 = vpack.c.b16 %v1586, %v1585
        %v1687 = vpack.c.b16 %v1588, %v1587
        %v1688 = vpack.c.b16 %v1590, %v1589
        %v1689 = vpack.c.b16 %v1592, %v1591
        %v1690 = vpack.c.b16 %v1594, %v1593
        %1787 = vmatprep.subr.bf16.mxu0 0
        %1788 = vmatpush1.bf16.msra.mxu0 %v1595
        %1789 = vmatprep.subr.bf16.mxu0 0
        %1790 = vmatpush1.bf16.msra.mxu0 %v1596
        %1791 = vmatprep.subr.bf16.mxu0 0
        %1792 = vmatpush1.bf16.msra.mxu0 %v1597
        %1793 = vmatprep.subr.bf16.mxu0 0
        %1794 = vmatpush1.bf16.msra.mxu0 %v1598
        %1795 = vmatprep.subr.bf16.mxu0 0
        %1796 = vmatpush1.bf16.msra.mxu0 %v1599
        %1797 = vmatprep.subr.bf16.mxu0 0
        %1798 = vmatpush1.bf16.msra.mxu0 %v1600
        %1799 = vmatprep.subr.bf16.mxu0 0
        %1800 = vmatpush1.bf16.msra.mxu0 %v1601
        %1801 = vmatprep.subr.bf16.mxu0 0
        %1802 = vmatpush1.bf16.msra.mxu0 %v1602
        %1803 = vmatprep.subr.bf16.mxu0 0
        %1804 = vmatpush1.bf16.msra.mxu0 %v1603
        %1805 = vmatprep.subr.bf16.mxu0 0
        %1806 = vmatpush1.bf16.msra.mxu0 %v1604
        %1807 = vmatprep.subr.bf16.mxu0 0
        %1808 = vmatpush1.bf16.msra.mxu0 %v1605
        %1809 = vmatprep.subr.bf16.mxu0 0
        %1810 = vmatpush1.bf16.msra.mxu0 %v1606
        %1811 = vmatprep.subr.bf16.mxu0 0
        %1812 = vmatpush1.bf16.msra.mxu0 %v1607
        %1813 = vmatprep.subr.bf16.mxu0 0
        %1814 = vmatpush1.bf16.msra.mxu0 %v1608
        %1815 = vmatprep.subr.bf16.mxu0 0
        %1816 = vmatpush1.bf16.msra.mxu0 %v1609
        %1817 = vmatprep.subr.bf16.mxu0 0
        %1818 = vmatpush1.bf16.msra.mxu0 %v1610
        %1819 = vmatprep.mubr.bf16.mxu0 %v1020
        %1820 = vmatmul.mubr.bf16.gmra.mrb[0].mxu0 %v1019
        %v1821 = vpop.f32.mrb[0].mxu0
        %v1822 = vadd.f32 0.0, %v1821
        %v1823 = vpop.f32.mrb[0].mxu0
        %v1824 = vpop.f32.mrb[0].mxu0
        %v1825 = vadd.f32 0.0, %v1824
        %v1826 = vpop.f32.mrb[0].mxu0
        %1827 = vmatprep.mubr.bf16.mxu0 %v1032
        %1828 = vmatmul.mubr.bf16.gmra.mrb[0].mxu0 %v1031
        %v1829 = vpop.f32.mrb[0].mxu0
        %v1830 = vadd.f32 0.0, %v1829
        %v1831 = vpop.f32.mrb[0].mxu0
        %v1832 = vpop.f32.mrb[0].mxu0
        %v1833 = vadd.f32 0.0, %v1832
        %v1834 = vpop.f32.mrb[0].mxu0
        %1835 = vmatprep.mubr.bf16.mxu0 %v1044
        %1836 = vmatmul.mubr.bf16.gmra.mrb[0].mxu0 %v1043
        %v1837 = vpop.f32.mrb[0].mxu0
        %v1838 = vadd.f32 0.0, %v1837
        %v1839 = vpop.f32.mrb[0].mxu0
        %v1840 = vpop.f32.mrb[0].mxu0
        %v1841 = vadd.f32 0.0, %v1840
        %v1842 = vpop.f32.mrb[0].mxu0
        %1843 = vmatprep.mubr.bf16.mxu0 %v1056
        %1844 = vmatmul.mubr.bf16.gmra.mrb[0].mxu0 %v1055
        %v1845 = vpop.f32.mrb[0].mxu0
        %v1846 = vadd.f32 0.0, %v1845
        %v1847 = vpop.f32.mrb[0].mxu0
        %v1848 = vpop.f32.mrb[0].mxu0
        %v1849 = vadd.f32 0.0, %v1848
        %v1850 = vpop.f32.mrb[0].mxu0
        %1851 = vmatprep.mubr.bf16.mxu0 %v1068
        %1852 = vmatmul.mubr.bf16.gmra.mrb[0].mxu0 %v1067
        %v1853 = vpop.f32.mrb[0].mxu0
        %v1854 = vadd.f32 0.0, %v1853
        %v1855 = vpop.f32.mrb[0].mxu0
        %v1856 = vpop.f32.mrb[0].mxu0
        %v1857 = vadd.f32 0.0, %v1856
        %v1858 = vpop.f32.mrb[0].mxu0
        %1859 = vmatprep.mubr.bf16.mxu0 %v1080
        %1860 = vmatmul.mubr.bf16.gmra.mrb[0].mxu0 %v1079
        %v1861 = vpop.f32.mrb[0].mxu0
        %v1862 = vadd.f32 0.0, %v1861
        %v1863 = vpop.f32.mrb[0].mxu0
        %v1864 = vpop.f32.mrb[0].mxu0
        %v1865 = vadd.f32 0.0, %v1864
        %v1866 = vpop.f32.mrb[0].mxu0
        %1867 = vmatprep.mubr.bf16.mxu0 %v1092
        %1868 = vmatmul.mubr.bf16.gmra.mrb[0].mxu0 %v1091
        %v1869 = vpop.f32.mrb[0].mxu0
        %v1870 = vadd.f32 0.0, %v1869
        %v1871 = vpop.f32.mrb[0].mxu0
        %v1872 = vpop.f32.mrb[0].mxu0
        %v1873 = vadd.f32 0.0, %v1872
        %v1874 = vpop.f32.mrb[0].mxu0
        %1875 = vmatprep.mubr.bf16.mxu0 %v1104
        %1876 = vmatmul.mubr.bf16.gmra.mrb[0].mxu0 %v1103
        %v1877 = vpop.f32.mrb[0].mxu0
        %v1878 = vadd.f32 0.0, %v1877
        %v1879 = vpop.f32.mrb[0].mxu0
        %v1880 = vpop.f32.mrb[0].mxu0
        %v1881 = vadd.f32 0.0, %v1880
        %v1882 = vpop.f32.mrb[0].mxu0
        %1883 = vdwg.mxu0
        %1884 = vmatprep.subr.bf16.mxu0 0
        %1885 = vmatpush1.bf16.msra.mxu0 %v1611
        %1886 = vmatprep.subr.bf16.mxu0 0
        %1887 = vmatpush1.bf16.msra.mxu0 %v1612
        %1888 = vmatprep.subr.bf16.mxu0 0
        %1889 = vmatpush1.bf16.msra.mxu0 %v1613
        %1890 = vmatprep.subr.bf16.mxu0 0
        %1891 = vmatpush1.bf16.msra.mxu0 %v1614
        %1892 = vmatprep.subr.bf16.mxu0 0
        %1893 = vmatpush1.bf16.msra.mxu0 %v1615
        %1894 = vmatprep.subr.bf16.mxu0 0
        %1895 = vmatpush1.bf16.msra.mxu0 %v1616
        %1896 = vmatprep.subr.bf16.mxu0 0
        %1897 = vmatpush1.bf16.msra.mxu0 %v1617
        %1898 = vmatprep.subr.bf16.mxu0 0
        %1899 = vmatpush1.bf16.msra.mxu0 %v1618
        %1900 = vmatprep.subr.bf16.mxu0 0
        %1901 = vmatpush1.bf16.msra.mxu0 %v1619
        %1902 = vmatprep.subr.bf16.mxu0 0
        %1903 = vmatpush1.bf16.msra.mxu0 %v1620
        %1904 = vmatprep.subr.bf16.mxu0 0
        %1905 = vmatpush1.bf16.msra.mxu0 %v1621
        %1906 = vmatprep.subr.bf16.mxu0 0
        %1907 = vmatpush1.bf16.msra.mxu0 %v1622
        %1908 = vmatprep.subr.bf16.mxu0 0
        %1909 = vmatpush1.bf16.msra.mxu0 %v1623
        %1910 = vmatprep.subr.bf16.mxu0 0
        %1911 = vmatpush1.bf16.msra.mxu0 %v1624
        %1912 = vmatprep.subr.bf16.mxu0 0
        %1913 = vmatpush1.bf16.msra.mxu0 %v1625
        %1914 = vmatprep.subr.bf16.mxu0 0
        %1915 = vmatpush1.bf16.msra.mxu0 %v1626
        %1916 = vmatprep.mubr.bf16.mxu0 %v1022
        %1917 = vmatmul.mubr.bf16.gmra.mrb[0].mxu0 %v1021
        %v1918 = vpop.f32.mrb[0].mxu0
        %v1919 = vadd.f32 %v1822, %v1918
        %v1920 = vpop.f32.mrb[0].mxu0
        %v1921 = vpop.f32.mrb[0].mxu0
        %v1922 = vadd.f32 %v1825, %v1921
        %v1923 = vpop.f32.mrb[0].mxu0
        %1924 = vmatprep.mubr.bf16.mxu0 %v1034
        %1925 = vmatmul.mubr.bf16.gmra.mrb[0].mxu0 %v1033
        %v1926 = vpop.f32.mrb[0].mxu0
        %v1927 = vadd.f32 %v1830, %v1926
        %v1928 = vpop.f32.mrb[0].mxu0
        %v1929 = vpop.f32.mrb[0].mxu0
        %v1930 = vadd.f32 %v1833, %v1929
        %v1931 = vpop.f32.mrb[0].mxu0
        %1932 = vmatprep.mubr.bf16.mxu0 %v1046
        %1933 = vmatmul.mubr.bf16.gmra.mrb[0].mxu0 %v1045
        %v1934 = vpop.f32.mrb[0].mxu0
        %v1935 = vadd.f32 %v1838, %v1934
        %v1936 = vpop.f32.mrb[0].mxu0
        %v1937 = vpop.f32.mrb[0].mxu0
        %v1938 = vadd.f32 %v1841, %v1937
        %v1939 = vpop.f32.mrb[0].mxu0
        %1940 = vmatprep.mubr.bf16.mxu0 %v1058
        %1941 = vmatmul.mubr.bf16.gmra.mrb[0].mxu0 %v1057
        %v1942 = vpop.f32.mrb[0].mxu0
        %v1943 = vadd.f32 %v1846, %v1942
        %v1944 = vpop.f32.mrb[0].mxu0
        %v1945 = vpop.f32.mrb[0].mxu0
        %v1946 = vadd.f32 %v1849, %v1945
        %v1947 = vpop.f32.mrb[0].mxu0
        %1948 = vmatprep.mubr.bf16.mxu0 %v1070
        %1949 = vmatmul.mubr.bf16.gmra.mrb[0].mxu0 %v1069
        %v1950 = vpop.f32.mrb[0].mxu0
        %v1951 = vadd.f32 %v1854, %v1950
        %v1952 = vpop.f32.mrb[0].mxu0
        %v1953 = vpop.f32.mrb[0].mxu0
        %v1954 = vadd.f32 %v1857, %v1953
        %v1955 = vpop.f32.mrb[0].mxu0
        %1956 = vmatprep.mubr.bf16.mxu0 %v1082
        %1957 = vmatmul.mubr.bf16.gmra.mrb[0].mxu0 %v1081
        %v1958 = vpop.f32.mrb[0].mxu0
        %v1959 = vadd.f32 %v1862, %v1958
        %v1960 = vpop.f32.mrb[0].mxu0
        %v1961 = vpop.f32.mrb[0].mxu0
        %v1962 = vadd.f32 %v1865, %v1961
        %v1963 = vpop.f32.mrb[0].mxu0
        %1964 = vmatprep.mubr.bf16.mxu0 %v1094
        %1965 = vmatmul.mubr.bf16.gmra.mrb[0].mxu0 %v1093
        %v1966 = vpop.f32.mrb[0].mxu0
        %v1967 = vadd.f32 %v1870, %v1966
        %v1968 = vpop.f32.mrb[0].mxu0
        %v1969 = vpop.f32.mrb[0].mxu0
        %v1970 = vadd.f32 %v1873, %v1969
        %v1971 = vpop.f32.mrb[0].mxu0
        %1972 = vmatprep.mubr.bf16.mxu0 %v1106
        %1973 = vmatmul.mubr.bf16.gmra.mrb[0].mxu0 %v1105
        %v1974 = vpop.f32.mrb[0].mxu0
        %v1975 = vadd.f32 %v1878, %v1974
        %v1976 = vpop.f32.mrb[0].mxu0
        %v1977 = vpop.f32.mrb[0].mxu0
        %v1978 = vadd.f32 %v1881, %v1977
        %v1979 = vpop.f32.mrb[0].mxu0
        %1980 = vdwg.mxu0
        %1981 = vmatprep.subr.bf16.mxu0 0
        %1982 = vmatpush1.bf16.msra.mxu0 %v1627
        %1983 = vmatprep.subr.bf16.mxu0 0
        %1984 = vmatpush1.bf16.msra.mxu0 %v1628
        %1985 = vmatprep.subr.bf16.mxu0 0
        %1986 = vmatpush1.bf16.msra.mxu0 %v1629
        %1987 = vmatprep.subr.bf16.mxu0 0
        %1988 = vmatpush1.bf16.msra.mxu0 %v1630
        %1989 = vmatprep.subr.bf16.mxu0 0
        %1990 = vmatpush1.bf16.msra.mxu0 %v1631
        %1991 = vmatprep.subr.bf16.mxu0 0
        %1992 = vmatpush1.bf16.msra.mxu0 %v1632
        %1993 = vmatprep.subr.bf16.mxu0 0
        %1994 = vmatpush1.bf16.msra.mxu0 %v1633
        %1995 = vmatprep.subr.bf16.mxu0 0
        %1996 = vmatpush1.bf16.msra.mxu0 %v1634
        %1997 = vmatprep.subr.bf16.mxu0 0
        %1998 = vmatpush1.bf16.msra.mxu0 %v1635
        %1999 = vmatprep.subr.bf16.mxu0 0
        %2000 = vmatpush1.bf16.msra.mxu0 %v1636
        %2001 = vmatprep.subr.bf16.mxu0 0
        %2002 = vmatpush1.bf16.msra.mxu0 %v1637
        %2003 = vmatprep.subr.bf16.mxu0 0
        %2004 = vmatpush1.bf16.msra.mxu0 %v1638
        %2005 = vmatprep.subr.bf16.mxu0 0
        %2006 = vmatpush1.bf16.msra.mxu0 %v1639
        %2007 = vmatprep.subr.bf16.mxu0 0
        %2008 = vmatpush1.bf16.msra.mxu0 %v1640
        %2009 = vmatprep.subr.bf16.mxu0 0
        %2010 = vmatpush1.bf16.msra.mxu0 %v1641
        %2011 = vmatprep.subr.bf16.mxu0 0
        %2012 = vmatpush1.bf16.msra.mxu0 %v1642
        %2013 = vmatprep.mubr.bf16.mxu0 %v1024
        %2014 = vmatmul.mubr.bf16.gmra.mrb[0].mxu0 %v1023
        %v2015 = vpop.f32.mrb[0].mxu0
        %v2016 = vadd.f32 %v1919, %v2015
        %v2017 = vpop.f32.mrb[0].mxu0
        %v2018 = vpop.f32.mrb[0].mxu0
        %v2019 = vadd.f32 %v1922, %v2018
        %v2020 = vpop.f32.mrb[0].mxu0
        %2021 = vmatprep.mubr.bf16.mxu0 %v1036
        %2022 = vmatmul.mubr.bf16.gmra.mrb[0].mxu0 %v1035
        %v2023 = vpop.f32.mrb[0].mxu0
        %v2024 = vadd.f32 %v1927, %v2023
        %v2025 = vpop.f32.mrb[0].mxu0
        %v2026 = vpop.f32.mrb[0].mxu0
        %v2027 = vadd.f32 %v1930, %v2026
        %v2028 = vpop.f32.mrb[0].mxu0
        %2029 = vmatprep.mubr.bf16.mxu0 %v1048
        %2030 = vmatmul.mubr.bf16.gmra.mrb[0].mxu0 %v1047
        %v2031 = vpop.f32.mrb[0].mxu0
        %v2032 = vadd.f32 %v1935, %v2031
        %v2033 = vpop.f32.mrb[0].mxu0
        %v2034 = vpop.f32.mrb[0].mxu0
        %v2035 = vadd.f32 %v1938, %v2034
        %v2036 = vpop.f32.mrb[0].mxu0
        %2037 = vmatprep.mubr.bf16.mxu0 %v1060
        %2038 = vmatmul.mubr.bf16.gmra.mrb[0].mxu0 %v1059
        %v2039 = vpop.f32.mrb[0].mxu0
        %v2040 = vadd.f32 %v1943, %v2039
        %v2041 = vpop.f32.mrb[0].mxu0
        %v2042 = vpop.f32.mrb[0].mxu0
        %v2043 = vadd.f32 %v1946, %v2042
        %v2044 = vpop.f32.mrb[0].mxu0
        %2045 = vmatprep.mubr.bf16.mxu0 %v1072
        %2046 = vmatmul.mubr.bf16.gmra.mrb[0].mxu0 %v1071
        %v2047 = vpop.f32.mrb[0].mxu0
        %v2048 = vadd.f32 %v1951, %v2047
        %v2049 = vpop.f32.mrb[0].mxu0
        %v2050 = vpop.f32.mrb[0].mxu0
        %v2051 = vadd.f32 %v1954, %v2050
        %v2052 = vpop.f32.mrb[0].mxu0
        %2053 = vmatprep.mubr.bf16.mxu0 %v1084
        %2054 = vmatmul.mubr.bf16.gmra.mrb[0].mxu0 %v1083
        %v2055 = vpop.f32.mrb[0].mxu0
        %v2056 = vadd.f32 %v1959, %v2055
        %v2057 = vpop.f32.mrb[0].mxu0
        %v2058 = vpop.f32.mrb[0].mxu0
        %v2059 = vadd.f32 %v1962, %v2058
        %v2060 = vpop.f32.mrb[0].mxu0
        %2061 = vmatprep.mubr.bf16.mxu0 %v1096
        %2062 = vmatmul.mubr.bf16.gmra.mrb[0].mxu0 %v1095
        %v2063 = vpop.f32.mrb[0].mxu0
        %v2064 = vadd.f32 %v1967, %v2063
        %v2065 = vpop.f32.mrb[0].mxu0
        %v2066 = vpop.f32.mrb[0].mxu0
        %v2067 = vadd.f32 %v1970, %v2066
        %v2068 = vpop.f32.mrb[0].mxu0
        %2069 = vmatprep.mubr.bf16.mxu0 %v1108
        %2070 = vmatmul.mubr.bf16.gmra.mrb[0].mxu0 %v1107
        %v2071 = vpop.f32.mrb[0].mxu0
        %v2072 = vadd.f32 %v1975, %v2071
        %v2073 = vpop.f32.mrb[0].mxu0
        %v2074 = vpop.f32.mrb[0].mxu0
        %v2075 = vadd.f32 %v1978, %v2074
        %v2076 = vpop.f32.mrb[0].mxu0
        %2077 = vdwg.mxu0
        %2078 = vmatprep.subr.bf16.mxu0 0
        %2079 = vmatpush1.bf16.msra.mxu0 %v1643
        %2080 = vmatprep.subr.bf16.mxu0 0
        %2081 = vmatpush1.bf16.msra.mxu0 %v1644
        %2082 = vmatprep.subr.bf16.mxu0 0
        %2083 = vmatpush1.bf16.msra.mxu0 %v1645
        %2084 = vmatprep.subr.bf16.mxu0 0
        %2085 = vmatpush1.bf16.msra.mxu0 %v1646
        %2086 = vmatprep.subr.bf16.mxu0 0
        %2087 = vmatpush1.bf16.msra.mxu0 %v1647
        %2088 = vmatprep.subr.bf16.mxu0 0
        %2089 = vmatpush1.bf16.msra.mxu0 %v1648
        %2090 = vmatprep.subr.bf16.mxu0 0
        %2091 = vmatpush1.bf16.msra.mxu0 %v1649
        %2092 = vmatprep.subr.bf16.mxu0 0
        %2093 = vmatpush1.bf16.msra.mxu0 %v1650
        %2094 = vmatprep.subr.bf16.mxu0 0
        %2095 = vmatpush1.bf16.msra.mxu0 %v1651
        %2096 = vmatprep.subr.bf16.mxu0 0
        %2097 = vmatpush1.bf16.msra.mxu0 %v1652
        %2098 = vmatprep.subr.bf16.mxu0 0
        %2099 = vmatpush1.bf16.msra.mxu0 %v1653
        %2100 = vmatprep.subr.bf16.mxu0 0
        %2101 = vmatpush1.bf16.msra.mxu0 %v1654
        %2102 = vmatprep.subr.bf16.mxu0 0
        %2103 = vmatpush1.bf16.msra.mxu0 %v1655
        %2104 = vmatprep.subr.bf16.mxu0 0
        %2105 = vmatpush1.bf16.msra.mxu0 %v1656
        %2106 = vmatprep.subr.bf16.mxu0 0
        %2107 = vmatpush1.bf16.msra.mxu0 %v1657
        %2108 = vmatprep.subr.bf16.mxu0 0
        %2109 = vmatpush1.bf16.msra.mxu0 %v1658
        %2110 = vmatprep.mubr.bf16.mxu0 %v1026
        %2111 = vmatmul.mubr.bf16.gmra.mrb[0].mxu0 %v1025
        %v2112 = vpop.f32.mrb[0].mxu0
        %v2113 = vadd.f32 %v2016, %v2112
        %v2114 = vpop.f32.mrb[0].mxu0
        %v2115 = vpop.f32.mrb[0].mxu0
        %v2116 = vadd.f32 %v2019, %v2115
        %v2117 = vpop.f32.mrb[0].mxu0
        %2118 = vmatprep.mubr.bf16.mxu0 %v1038
        %2119 = vmatmul.mubr.bf16.gmra.mrb[0].mxu0 %v1037
        %v2120 = vpop.f32.mrb[0].mxu0
        %v2121 = vadd.f32 %v2024, %v2120
        %v2122 = vpop.f32.mrb[0].mxu0
        %v2123 = vpop.f32.mrb[0].mxu0
        %v2124 = vadd.f32 %v2027, %v2123
        %v2125 = vpop.f32.mrb[0].mxu0
        %2126 = vmatprep.mubr.bf16.mxu0 %v1050
        %2127 = vmatmul.mubr.bf16.gmra.mrb[0].mxu0 %v1049
        %v2128 = vpop.f32.mrb[0].mxu0
        %v2129 = vadd.f32 %v2032, %v2128
        %v2130 = vpop.f32.mrb[0].mxu0
        %v2131 = vpop.f32.mrb[0].mxu0
        %v2132 = vadd.f32 %v2035, %v2131
        %v2133 = vpop.f32.mrb[0].mxu0
        %2134 = vmatprep.mubr.bf16.mxu0 %v1062
        %2135 = vmatmul.mubr.bf16.gmra.mrb[0].mxu0 %v1061
        %v2136 = vpop.f32.mrb[0].mxu0
        %v2137 = vadd.f32 %v2040, %v2136
        %v2138 = vpop.f32.mrb[0].mxu0
        %v2139 = vpop.f32.mrb[0].mxu0
        %v2140 = vadd.f32 %v2043, %v2139
        %v2141 = vpop.f32.mrb[0].mxu0
        %2142 = vmatprep.mubr.bf16.mxu0 %v1074
        %2143 = vmatmul.mubr.bf16.gmra.mrb[0].mxu0 %v1073
        %v2144 = vpop.f32.mrb[0].mxu0
        %v2145 = vadd.f32 %v2048, %v2144
        %v2146 = vpop.f32.mrb[0].mxu0
        %v2147 = vpop.f32.mrb[0].mxu0
        %v2148 = vadd.f32 %v2051, %v2147
        %v2149 = vpop.f32.mrb[0].mxu0
        %2150 = vmatprep.mubr.bf16.mxu0 %v1086
        %2151 = vmatmul.mubr.bf16.gmra.mrb[0].mxu0 %v1085
        %v2152 = vpop.f32.mrb[0].mxu0
        %v2153 = vadd.f32 %v2056, %v2152
        %v2154 = vpop.f32.mrb[0].mxu0
        %v2155 = vpop.f32.mrb[0].mxu0
        %v2156 = vadd.f32 %v2059, %v2155
        %v2157 = vpop.f32.mrb[0].mxu0
        %2158 = vmatprep.mubr.bf16.mxu0 %v1098
        %2159 = vmatmul.mubr.bf16.gmra.mrb[0].mxu0 %v1097
        %v2160 = vpop.f32.mrb[0].mxu0
        %v2161 = vadd.f32 %v2064, %v2160
        %v2162 = vpop.f32.mrb[0].mxu0
        %v2163 = vpop.f32.mrb[0].mxu0
        %v2164 = vadd.f32 %v2067, %v2163
        %v2165 = vpop.f32.mrb[0].mxu0
        %2166 = vmatprep.mubr.bf16.mxu0 %v1110
        %2167 = vmatmul.mubr.bf16.gmra.mrb[0].mxu0 %v1109
        %v2168 = vpop.f32.mrb[0].mxu0
        %v2169 = vadd.f32 %v2072, %v2168
        %v2170 = vpop.f32.mrb[0].mxu0
        %v2171 = vpop.f32.mrb[0].mxu0
        %v2172 = vadd.f32 %v2075, %v2171
        %v2173 = vpop.f32.mrb[0].mxu0
        %2174 = vdwg.mxu0
        %2175 = vmatprep.subr.bf16.mxu0 0
        %2176 = vmatpush1.bf16.msra.mxu0 %v1659
        %2177 = vmatprep.subr.bf16.mxu0 0
        %2178 = vmatpush1.bf16.msra.mxu0 %v1660
        %2179 = vmatprep.subr.bf16.mxu0 0
        %2180 = vmatpush1.bf16.msra.mxu0 %v1661
        %2181 = vmatprep.subr.bf16.mxu0 0
        %2182 = vmatpush1.bf16.msra.mxu0 %v1662
        %2183 = vmatprep.subr.bf16.mxu0 0
        %2184 = vmatpush1.bf16.msra.mxu0 %v1663
        %2185 = vmatprep.subr.bf16.mxu0 0
        %2186 = vmatpush1.bf16.msra.mxu0 %v1664
        %2187 = vmatprep.subr.bf16.mxu0 0
        %2188 = vmatpush1.bf16.msra.mxu0 %v1665
        %2189 = vmatprep.subr.bf16.mxu0 0
        %2190 = vmatpush1.bf16.msra.mxu0 %v1666
        %2191 = vmatprep.subr.bf16.mxu0 0
        %2192 = vmatpush1.bf16.msra.mxu0 %v1667
        %2193 = vmatprep.subr.bf16.mxu0 0
        %2194 = vmatpush1.bf16.msra.mxu0 %v1668
        %2195 = vmatprep.subr.bf16.mxu0 0
        %2196 = vmatpush1.bf16.msra.mxu0 %v1669
        %2197 = vmatprep.subr.bf16.mxu0 0
        %2198 = vmatpush1.bf16.msra.mxu0 %v1670
        %2199 = vmatprep.subr.bf16.mxu0 0
        %2200 = vmatpush1.bf16.msra.mxu0 %v1671
        %2201 = vmatprep.subr.bf16.mxu0 0
        %2202 = vmatpush1.bf16.msra.mxu0 %v1672
        %2203 = vmatprep.subr.bf16.mxu0 0
        %2204 = vmatpush1.bf16.msra.mxu0 %v1673
        %2205 = vmatprep.subr.bf16.mxu0 0
        %2206 = vmatpush1.bf16.msra.mxu0 %v1674
        %2207 = vmatprep.mubr.bf16.mxu0 %v1028
        %2208 = vmatmul.mubr.bf16.gmra.mrb[0].mxu0 %v1027
        %v2209 = vpop.f32.mrb[0].mxu0
        %v2210 = vadd.f32 %v2113, %v2209
        %v2211 = vpop.f32.mrb[0].mxu0
        %v2212 = vpop.f32.mrb[0].mxu0
        %v2213 = vadd.f32 %v2116, %v2212
        %v2214 = vpop.f32.mrb[0].mxu0
        %2215 = vmatprep.mubr.bf16.mxu0 %v1040
        %2216 = vmatmul.mubr.bf16.gmra.mrb[0].mxu0 %v1039
        %v2217 = vpop.f32.mrb[0].mxu0
        %v2218 = vadd.f32 %v2121, %v2217
        %v2219 = vpop.f32.mrb[0].mxu0
        %v2220 = vpop.f32.mrb[0].mxu0
        %v2221 = vadd.f32 %v2124, %v2220
        %v2222 = vpop.f32.mrb[0].mxu0
        %2223 = vmatprep.mubr.bf16.mxu0 %v1052
        %2224 = vmatmul.mubr.bf16.gmra.mrb[0].mxu0 %v1051
        %v2225 = vpop.f32.mrb[0].mxu0
        %v2226 = vadd.f32 %v2129, %v2225
        %v2227 = vpop.f32.mrb[0].mxu0
        %v2228 = vpop.f32.mrb[0].mxu0
        %v2229 = vadd.f32 %v2132, %v2228
        %v2230 = vpop.f32.mrb[0].mxu0
        %2231 = vmatprep.mubr.bf16.mxu0 %v1064
        %2232 = vmatmul.mubr.bf16.gmra.mrb[0].mxu0 %v1063
        %v2233 = vpop.f32.mrb[0].mxu0
        %v2234 = vadd.f32 %v2137, %v2233
        %v2235 = vpop.f32.mrb[0].mxu0
        %v2236 = vpop.f32.mrb[0].mxu0
        %v2237 = vadd.f32 %v2140, %v2236
        %v2238 = vpop.f32.mrb[0].mxu0
        %2239 = vmatprep.mubr.bf16.mxu0 %v1076
        %2240 = vmatmul.mubr.bf16.gmra.mrb[0].mxu0 %v1075
        %v2241 = vpop.f32.mrb[0].mxu0
        %v2242 = vadd.f32 %v2145, %v2241
        %v2243 = vpop.f32.mrb[0].mxu0
        %v2244 = vpop.f32.mrb[0].mxu0
        %v2245 = vadd.f32 %v2148, %v2244
        %v2246 = vpop.f32.mrb[0].mxu0
        %2247 = vmatprep.mubr.bf16.mxu0 %v1088
        %2248 = vmatmul.mubr.bf16.gmra.mrb[0].mxu0 %v1087
        %v2249 = vpop.f32.mrb[0].mxu0
        %v2250 = vadd.f32 %v2153, %v2249
        %v2251 = vpop.f32.mrb[0].mxu0
        %v2252 = vpop.f32.mrb[0].mxu0
        %v2253 = vadd.f32 %v2156, %v2252
        %v2254 = vpop.f32.mrb[0].mxu0
        %2255 = vmatprep.mubr.bf16.mxu0 %v1100
        %2256 = vmatmul.mubr.bf16.gmra.mrb[0].mxu0 %v1099
        %v2257 = vpop.f32.mrb[0].mxu0
        %v2258 = vadd.f32 %v2161, %v2257
        %v2259 = vpop.f32.mrb[0].mxu0
        %v2260 = vpop.f32.mrb[0].mxu0
        %v2261 = vadd.f32 %v2164, %v2260
        %v2262 = vpop.f32.mrb[0].mxu0
        %2263 = vmatprep.mubr.bf16.mxu0 %v1112
        %2264 = vmatmul.mubr.bf16.gmra.mrb[0].mxu0 %v1111
        %v2265 = vpop.f32.mrb[0].mxu0
        %v2266 = vadd.f32 %v2169, %v2265
        %v2267 = vpop.f32.mrb[0].mxu0
        %v2268 = vpop.f32.mrb[0].mxu0
        %v2269 = vadd.f32 %v2172, %v2268
        %v2270 = vpop.f32.mrb[0].mxu0
        %2271 = vdwg.mxu0
        %2272 = vmatprep.subr.bf16.mxu0 0
        %2273 = vmatpush1.bf16.msra.mxu0 %v1675
        %2274 = vmatprep.subr.bf16.mxu0 0
        %2275 = vmatpush1.bf16.msra.mxu0 %v1676
        %2276 = vmatprep.subr.bf16.mxu0 0
        %2277 = vmatpush1.bf16.msra.mxu0 %v1677
        %2278 = vmatprep.subr.bf16.mxu0 0
        %2279 = vmatpush1.bf16.msra.mxu0 %v1678
        %2280 = vmatprep.subr.bf16.mxu0 0
        %2281 = vmatpush1.bf16.msra.mxu0 %v1679
        %2282 = vmatprep.subr.bf16.mxu0 0
        %2283 = vmatpush1.bf16.msra.mxu0 %v1680
        %2284 = vmatprep.subr.bf16.mxu0 0
        %2285 = vmatpush1.bf16.msra.mxu0 %v1681
        %2286 = vmatprep.subr.bf16.mxu0 0
        %2287 = vmatpush1.bf16.msra.mxu0 %v1682
        %2288 = vmatprep.subr.bf16.mxu0 0
        %2289 = vmatpush1.bf16.msra.mxu0 %v1683
        %2290 = vmatprep.subr.bf16.mxu0 0
        %2291 = vmatpush1.bf16.msra.mxu0 %v1684
        %2292 = vmatprep.subr.bf16.mxu0 0
        %2293 = vmatpush1.bf16.msra.mxu0 %v1685
        %2294 = vmatprep.subr.bf16.mxu0 0
        %2295 = vmatpush1.bf16.msra.mxu0 %v1686
        %2296 = vmatprep.subr.bf16.mxu0 0
        %2297 = vmatpush1.bf16.msra.mxu0 %v1687
        %2298 = vmatprep.subr.bf16.mxu0 0
        %2299 = vmatpush1.bf16.msra.mxu0 %v1688
        %2300 = vmatprep.subr.bf16.mxu0 0
        %2301 = vmatpush1.bf16.msra.mxu0 %v1689
        %2302 = vmatprep.subr.bf16.mxu0 0
        %2303 = vmatpush1.bf16.msra.mxu0 %v1690
        %2304 = vmatprep.mubr.bf16.mxu0 %v1030
        %2305 = vmatmul.mubr.bf16.gmra.mrb[0].mxu0 %v1029
        %v2306 = vpop.f32.mrb[0].mxu0
        %v2307 = vadd.f32 %v2210, %v2306
        %v2308 = vpop.f32.mrb[0].mxu0
        %v2309 = vpop.f32.mrb[0].mxu0
        %v2310 = vadd.f32 %v2213, %v2309
        %v2311 = vpop.f32.mrb[0].mxu0
        %2312 = vmatprep.mubr.bf16.mxu0 %v1042
        %2313 = vmatmul.mubr.bf16.gmra.mrb[0].mxu0 %v1041
        %v2314 = vpop.f32.mrb[0].mxu0
        %v2315 = vadd.f32 %v2218, %v2314
        %v2316 = vpop.f32.mrb[0].mxu0
        %v2317 = vpop.f32.mrb[0].mxu0
        %v2318 = vadd.f32 %v2221, %v2317
        %v2319 = vpop.f32.mrb[0].mxu0
        %2320 = vmatprep.mubr.bf16.mxu0 %v1054
        %2321 = vmatmul.mubr.bf16.gmra.mrb[0].mxu0 %v1053
        %v2322 = vpop.f32.mrb[0].mxu0
        %v2323 = vadd.f32 %v2226, %v2322
        %v2324 = vpop.f32.mrb[0].mxu0
        %v2325 = vpop.f32.mrb[0].mxu0
        %v2326 = vadd.f32 %v2229, %v2325
        %v2327 = vpop.f32.mrb[0].mxu0
        %2328 = vmatprep.mubr.bf16.mxu0 %v1066
        %2329 = vmatmul.mubr.bf16.gmra.mrb[0].mxu0 %v1065
        %v2330 = vpop.f32.mrb[0].mxu0
        %v2331 = vadd.f32 %v2234, %v2330
        %v2332 = vpop.f32.mrb[0].mxu0
        %v2333 = vpop.f32.mrb[0].mxu0
        %v2334 = vadd.f32 %v2237, %v2333
        %v2335 = vpop.f32.mrb[0].mxu0
        %2336 = vmatprep.mubr.bf16.mxu0 %v1078
        %2337 = vmatmul.mubr.bf16.gmra.mrb[0].mxu0 %v1077
        %v2338 = vpop.f32.mrb[0].mxu0
        %v2339 = vadd.f32 %v2242, %v2338
        %v2340 = vpop.f32.mrb[0].mxu0
        %v2341 = vpop.f32.mrb[0].mxu0
        %v2342 = vadd.f32 %v2245, %v2341
        %v2343 = vpop.f32.mrb[0].mxu0
        %2344 = vmatprep.mubr.bf16.mxu0 %v1090
        %2345 = vmatmul.mubr.bf16.gmra.mrb[0].mxu0 %v1089
        %v2346 = vpop.f32.mrb[0].mxu0
        %v2347 = vadd.f32 %v2250, %v2346
        %v2348 = vpop.f32.mrb[0].mxu0
        %v2349 = vpop.f32.mrb[0].mxu0
        %v2350 = vadd.f32 %v2253, %v2349
        %v2351 = vpop.f32.mrb[0].mxu0
        %2352 = vmatprep.mubr.bf16.mxu0 %v1102
        %2353 = vmatmul.mubr.bf16.gmra.mrb[0].mxu0 %v1101
        %v2354 = vpop.f32.mrb[0].mxu0
        %v2355 = vadd.f32 %v2258, %v2354
        %v2356 = vpop.f32.mrb[0].mxu0
        %v2357 = vpop.f32.mrb[0].mxu0
        %v2358 = vadd.f32 %v2261, %v2357
        %v2359 = vpop.f32.mrb[0].mxu0
        %2360 = vmatprep.mubr.bf16.mxu0 %v1114
        %2361 = vmatmul.mubr.bf16.gmra.mrb[0].mxu0 %v1113
        %v2362 = vpop.f32.mrb[0].mxu0
        %v2363 = vadd.f32 %v2266, %v2362
        %v2364 = vpop.f32.mrb[0].mxu0
        %v2365 = vpop.f32.mrb[0].mxu0
        %v2366 = vadd.f32 %v2269, %v2365
        %v2367 = vpop.f32.mrb[0].mxu0
        %2368 = vdwg.mxu0
        %v2369 = vadd.f32 %v423, %v2307
        %v2370 = vadd.f32 %v424, %v2310
        %v2371 = vadd.f32 %v425, %v2315
        %v2372 = vadd.f32 %v426, %v2318
        %v2373 = vadd.f32 %v427, %v2323
        %v2374 = vadd.f32 %v428, %v2326
        %v2375 = vadd.f32 %v429, %v2331
        %v2376 = vadd.f32 %v430, %v2334
        %v2377 = vadd.f32 %v431, %v2339
        %v2378 = vadd.f32 %v432, %v2342
        %v2379 = vadd.f32 %v433, %v2347
        %v2380 = vadd.f32 %v434, %v2350
        %v2381 = vadd.f32 %v435, %v2355
        %v2382 = vadd.f32 %v436, %v2358
        %v2383 = vadd.f32 %v437, %v2363
        %v2384 = vadd.f32 %v438, %v2366
        %2385 = vst [vmem:[#allocation2] sm:$0xff] %v2369
        %2386 = vst [vmem:[#allocation2 + $0x8] sm:$0xff] %v2370
        %2387 = vst [vmem:[#allocation2 + $0x10] sm:$0xff] %v2371
        %2388 = vst [vmem:[#allocation2 + $0x18] sm:$0xff] %v2372
        %2389 = vst [vmem:[#allocation2 + $0x20] sm:$0xff] %v2373
        %2390 = vst [vmem:[#allocation2 + $0x28] sm:$0xff] %v2374
        %2391 = vst [vmem:[#allocation2 + $0x30] sm:$0xff] %v2375
        %2392 = vst [vmem:[#allocation2 + $0x38] sm:$0xff] %v2376
        %2393 = vst [vmem:[#allocation2 + $0x40] sm:$0xff] %v2377
        %2394 = vst [vmem:[#allocation2 + $0x48] sm:$0xff] %v2378
        %2395 = vst [vmem:[#allocation2 + $0x50] sm:$0xff] %v2379
        %2396 = vst [vmem:[#allocation2 + $0x58] sm:$0xff] %v2380
        %2397 = vst [vmem:[#allocation2 + $0x60] sm:$0xff] %v2381
        %2398 = vst [vmem:[#allocation2 + $0x68] sm:$0xff] %v2382
        %2399 = vst [vmem:[#allocation2 + $0x70] sm:$0xff] %v2383
        %2400 = vst [vmem:[#allocation2 + $0x78] sm:$0xff] %v2384
        %p2401 = scmp.eq.s32.totalorder %s19, 1
        // Predicated region
        $region60: #{discriminator3d_forward.7} parent=50 // pred_check
          %p2402 = pneg %p2401
        $region61: #{discriminator3d_forward.7} parent=50 // pred_check_branch
          %2404 = sbr.rel (%p2402) target = $region63
        $region62: #{discriminator3d_forward.7} parent=50 // pred_region
          %v2405 = vld [vmem:[#allocation2] sm:$0xff]
          %v2406 = vld [vmem:[#allocation2 + $0x8] sm:$0xff]
          %v2407 = vld [vmem:[#allocation2 + $0x10] sm:$0xff]
          %v2408 = vld [vmem:[#allocation2 + $0x18] sm:$0xff]
          %v2409 = vld [vmem:[#allocation2 + $0x20] sm:$0xff]
          %v2410 = vld [vmem:[#allocation2 + $0x28] sm:$0xff]
          %v2411 = vld [vmem:[#allocation2 + $0x30] sm:$0xff]
          %v2412 = vld [vmem:[#allocation2 + $0x38] sm:$0xff]
          %v2413 = vld [vmem:[#allocation2 + $0x40] sm:$0xff]
          %v2414 = vld [vmem:[#allocation2 + $0x48] sm:$0xff]
          %v2415 = vld [vmem:[#allocation2 + $0x50] sm:$0xff]
          %v2416 = vld [vmem:[#allocation2 + $0x58] sm:$0xff]
          %v2417 = vld [vmem:[#allocation2 + $0x60] sm:$0xff]
          %v2418 = vld [vmem:[#allocation2 + $0x68] sm:$0xff]
          %v2419 = vld [vmem:[#allocation2 + $0x70] sm:$0xff]
          %v2420 = vld [vmem:[#allocation2 + $0x78] sm:$0xff]
          %v2421 = vld [vmem:[%s2] sm:$0x1]
          %v2423 = vlaneseq
          %v2424 = vshrl.u32 %v2423, 7
          %v2425 = vsub.s32 0, %v2424
          %v2426 = vrot.slane %v2421, %v2425
          %v2428 = vadd.f32 %v2405, %v2426
          %v2429 = vadd.f32 %v2406, %v2426
          %v2430 = vadd.f32 %v2407, %v2426
          %v2431 = vadd.f32 %v2408, %v2426
          %v2432 = vadd.f32 %v2409, %v2426
          %v2433 = vadd.f32 %v2410, %v2426
          %v2434 = vadd.f32 %v2411, %v2426
          %v2435 = vadd.f32 %v2412, %v2426
          %v2436 = vadd.f32 %v2413, %v2426
          %v2437 = vadd.f32 %v2414, %v2426
          %v2438 = vadd.f32 %v2415, %v2426
          %v2439 = vadd.f32 %v2416, %v2426
          %v2440 = vadd.f32 %v2417, %v2426
          %v2441 = vadd.f32 %v2418, %v2426
          %v2442 = vadd.f32 %v2419, %v2426
          %v2443 = vadd.f32 %v2420, %v2426
          %2444 = vst [vmem:[%s399] sm:$0xff] %v2428
          %2445 = vst [vmem:[%s399 + $0x8] sm:$0xff] %v2429
          %2446 = vst [vmem:[%s399 + $0x10] sm:$0xff] %v2430
          %2447 = vst [vmem:[%s399 + $0x18] sm:$0xff] %v2431
          %2448 = vst [vmem:[%s399 + $0x20] sm:$0xff] %v2432
          %2449 = vst [vmem:[%s399 + $0x28] sm:$0xff] %v2433
          %2450 = vst [vmem:[%s399 + $0x30] sm:$0xff] %v2434
          %2451 = vst [vmem:[%s399 + $0x38] sm:$0xff] %v2435
          %2452 = vst [vmem:[%s399 + $0x40] sm:$0xff] %v2436
          %2453 = vst [vmem:[%s399 + $0x48] sm:$0xff] %v2437
          %2454 = vst [vmem:[%s399 + $0x50] sm:$0xff] %v2438
          %2455 = vst [vmem:[%s399 + $0x58] sm:$0xff] %v2439
          %2456 = vst [vmem:[%s399 + $0x60] sm:$0xff] %v2440
          %2457 = vst [vmem:[%s399 + $0x68] sm:$0xff] %v2441
          %2458 = vst [vmem:[%s399 + $0x70] sm:$0xff] %v2442
          %2459 = vst [vmem:[%s399 + $0x78] sm:$0xff] %v2443
        $region63: #{discriminator3d_forward.7} parent=50 // pred_fallthru
          _
        %s2460 = smul.u32 16, %s18
        %p2461 = scmp.lt.s32.totalorder %s2460, 15
        %s2462 = scalar_select %p2461, %s2460, 15
        %s2463 = smul.addr %s2462, 8
        %s2464 = scalar_lea.vmem %s3, %s2463
        // Predicated region
        $region64: #{discriminator3d_forward.7} parent=50 // pred_check
          %p2465 = pneg %p114
        $region65: #{discriminator3d_forward.7} parent=50 // pred_check_branch
          %2467 = sbr.rel (%p2465) target = $region67
        $region66: #{discriminator3d_forward.7} parent=50 // pred_region
          %s2468 = smul.u32 16, %s18
        $region67: #{discriminator3d_forward.7} parent=50 // pred_fallthru
          _
        // Predicated region
        $region68: #{discriminator3d_forward.7} parent=50 // pred_check
          %p2469 = pneg %p114
        $region69: #{discriminator3d_forward.7} parent=50 // pred_check_branch
          %2471 = sbr.rel (%p2469) target = $region71
        $region70: #{discriminator3d_forward.7} parent=50 // pred_region
          %s2472 = smul.u32 16, %s18
          %p2473 = scmp.lt.s32.totalorder %s2472, 15
          %s2474 = scalar_select %p2473, %s2472, 15
          %s2475 = smul.addr %s2474, 8
          %s2476 = scalar_lea.vmem %s3, %s2475
        $region71: #{discriminator3d_forward.7} parent=50 // pred_fallthru
          _
      $region51: #{discriminator3d_forward.7} parent=5 // pred_fallthru
        _
      %p2477 = scmp.le.s32.totalorder 2, %s9
      // Predicated region
      $region72: #{discriminator3d_forward.7} parent=5 // pred_check
        %p2478 = pneg %p2477
      $region73: #{discriminator3d_forward.7} parent=5 // pred_check_branch
        %2480 = sbr.rel (%p2478) target = $region75
      $region74: #{discriminator3d_forward.7} parent=5 // pred_region
        %s2481 = ssub.s32 %s9, 2
      $region75: #{discriminator3d_forward.7} parent=5 // pred_fallthru
        _
    $region6: #{discriminator3d_forward.7} parent=1 // loop_footer
      %s13 = sadd.s32 1, %s9
    $region7: #{discriminator3d_forward.7} parent=1 // loop_footer_branch
      %8 = sbr.rel target = $region3
    $region8: #{discriminator3d_forward.7} parent=1 // loop_exit
      _

</llo_original>
